<compile_context>
chip_gen: v7x
topology: tpu7x:2x2x1
jax: 0.10.0
libtpu: 0.0.40
codegen_flags: <defaults>
</compile_context>

<pallas_src>
import jax
import jax.numpy as jnp
from jax.experimental import pallas as pl
from jax.experimental.pallas import tpu as pltpu

# ----------------------------- configuration -------------------------------
N_PRED = 4            # config['N_PRED']  (out width of final Linear, per spec)
N_HIST = 16           # config['N_HIST'] == in_channels == out_channels of GATConv
BATCH = 2
N_NODES = 8
HEADS = 8
H1 = 32               # lstm1 hidden size (logical)
H1P = 128             # lstm1 hidden padded so each gate is a full 128-lane slice
H2 = 128              # lstm2 hidden size
N_TOTAL = BATCH * N_NODES


# --------------------------- fused forward kernel ---------------------------
def st_gat_kernel(x_ref, adj_ref, wflat_ref, vcat_ref, gbias_ref,
                  wih1_ref, whh1_ref, b1_ref, wih2_ref, whh2_ref, b2_ref,
                  wlin_ref, blin_ref, out_ref):
    N, F, H = N_TOTAL, N_HIST, HEADS

    x = x_ref[...]                                        # (N, F) = (16, 16)

    # --------------------------------- GAT -----------------------------------
    # All-head projection in one 128-lane-wide matmul:
    #   hh_all[:, h*F:(h+1)*F] = x @ W_h
    hh_all = jnp.dot(x, wflat_ref[...], preferred_element_type=jnp.float32)   # (16, 128)
    # Attention scores via precomputed v = W_h @ a_h (one small matmul):
    #   a_all[n, h]   = <a_src_h, W_h x_n>,  a_all[n, H+h] = <a_dst_h, W_h x_n>
    a_all = jnp.dot(x, vcat_ref[...], preferred_element_type=jnp.float32)     # (16, 2H)
    a_dst = a_all[:, H:]                                  # (N, H) target scores (columns)
    a_src_t = jnp.transpose(a_all)[:H, :]                 # (H, N) source scores (rows)

    # Hoisted adjacency mask: adj[i, j] = 1 iff edge j -> i (self loops included).
    mask_bias = jnp.where(adj_ref[...] > 0.0, 0.0, -1e30)                     # (N, N)

    alphas = []
    for h in range(H):                                    # static unroll, VPU/EUP only
        e = a_dst[:, h:h + 1] + a_src_t[h:h + 1, :]       # e[i, j] for edge j -> i
        e = jnp.where(e > 0, e, 0.2 * e)                  # LeakyReLU(0.2)
        e = e + mask_bias
        e = e - jnp.max(e, axis=1, keepdims=True)
        p = jnp.exp(e)                                    # masked entries underflow to 0
        alpha = p * pl.reciprocal(jnp.sum(p, axis=1, keepdims=True), approx=True)
        alphas.append(alpha)
    alpha_stacked = jnp.concatenate(alphas, axis=0)       # (H*N, N) = (128, 16)

    # One aggregation matmul for all heads; per-head results are the diagonal
    # (N, F) blocks of G. concat=False -> mean over heads, then bias.
    G = jnp.dot(alpha_stacked, hh_all, preferred_element_type=jnp.float32)    # (128, 128)
    acc = G[0:N, 0:F]
    for h in range(1, H):
        acc = acc + G[h * N:(h + 1) * N, h * F:(h + 1) * F]
    gat_out = acc * (1.0 / H) + gbias_ref[...]            # (N_total, n_hist) = (16, 16)
    # TODO(synk): F.dropout with p=0.0 (eval mode) is identity -> skipped.

    # ----------------------- LSTM1 -> LSTM2 -> Linear ------------------------
    # reshape(batch, n_nodes, n_hist) + movedim(2, 0) is fused into the hoisted
    # LSTM1 input projection via a transposed-LHS matmul (no transpose op):
    #   xproj_b[t, :] = gat_out[b*nn:(b+1)*nn, t]^T @ wih1  (+ LSTM1 bias folded in)
    wih1 = wih1_ref[...]                                  # (n_nodes, 4*H1P)
    b1 = b1_ref[...]                                      # (1, 4*H1P)
    xprojs = []
    for b in range(BATCH):
        g_b = gat_out[b * N_NODES:(b + 1) * N_NODES, :]   # (n_nodes, T)
        xp = jax.lax.dot_general(g_b, wih1, (((0,), (0,)), ((), ())),
                                 preferred_element_type=jnp.float32)          # (T, 4*H1P)
        xprojs.append(xp + b1)

    whh1 = whh1_ref[...]                                  # (H1P, 4*H1P)
    wih2 = wih2_ref[...]                                  # (H1P, 4*H2)
    whh2 = whh2_ref[...]                                  # (H2, 4*H2)
    b2 = b2_ref[...]                                      # (1, 4*H2)

    def gate_split(g, hid):                               # PyTorch gate order: i, f, g, o
        i = jax.nn.sigmoid(g[:, 0 * hid:1 * hid])
        f = jax.nn.sigmoid(g[:, 1 * hid:2 * hid])
        gg = jnp.tanh(g[:, 2 * hid:3 * hid])
        o = jax.nn.sigmoid(g[:, 3 * hid:4 * hid])
        return i, f, gg, o

    h1 = jnp.zeros((BATCH, H1P), jnp.float32)
    c1 = jnp.zeros((BATCH, H1P), jnp.float32)
    h2 = jnp.zeros((BATCH, H2), jnp.float32)
    c2 = jnp.zeros((BATCH, H2), jnp.float32)

    for t in range(N_HIST):                               # fully unrolled serial recurrence
        xg = jnp.concatenate([xp[t:t + 1, :] for xp in xprojs], axis=0)       # (B, 4*H1P)
        g1 = xg + jnp.dot(h1, whh1, preferred_element_type=jnp.float32)
        i1, f1, gg1, o1 = gate_split(g1, H1P)
        c1 = f1 * c1 + i1 * gg1
        h1 = o1 * jnp.tanh(c1)

        g2 = (jnp.dot(h1, wih2, preferred_element_type=jnp.float32)
              + jnp.dot(h2, whh2, preferred_element_type=jnp.float32) + b2)
        i2, f2, gg2, o2 = gate_split(g2, H2)
        c2 = f2 * c2 + i2 * gg2
        h2 = o2 * jnp.tanh(c2)

    # x = squeeze(lstm2_out[-1]); Linear(128 -> n_pred); final reshapes are identity.
    out_ref[...] = (jnp.dot(h2, wlin_ref[...], preferred_element_type=jnp.float32)
                    + blin_ref[...])


def st_gat_forward(x, adj, kp):
    return pl.pallas_call(
        st_gat_kernel,
        out_shape=jax.ShapeDtypeStruct((BATCH, N_PRED), jnp.float32),
        in_specs=[pl.BlockSpec(memory_space=pltpu.MemorySpace.VMEM)] * 13,
        out_specs=pl.BlockSpec(memory_space=pltpu.MemorySpace.VMEM),
    )(x, adj, kp['w_flat'], kp['v_cat'], kp['gat_bias'],
      kp['wih1_p'], kp['whh1_p'], kp['b1_p'], kp['wih2_p'], kp['whh2'],
      kp['b2'], kp['wlin'], kp['blin'])


# --------------------- parameter layout prep (one-time) ----------------------
def prepare_params(p):
    """Reshape / pad logical module parameters into the kernel layout."""
    w = p['gat_w']                                        # (H, F_in, F_out)
    # hh_all = x @ w_flat with w_flat[k, h*F+f] = W_h[k, f]
    w_flat = jnp.transpose(w, (1, 0, 2)).reshape(N_HIST, HEADS * N_HIST)
    # Attention score vectors folded through W: v[:, h] = W_h @ a_h
    v_src = jnp.einsum('hkf,hf->kh', w, p['gat_asrc'])
    v_dst = jnp.einsum('hkf,hf->kh', w, p['gat_adst'])
    v_cat = jnp.concatenate([v_src, v_dst], axis=1)       # (F_in, 2H)

    # LSTM1: pad each gate from 32 to 128 lanes (vreg-aligned gate slices).
    # Padded weights / bias are zero, so gate preacts in the padding are 0 ->
    # c_pad stays 0 and h_pad = 0.5*tanh(0) = 0 exactly; wih2's padded rows are
    # zero too, so LSTM2 is unaffected.
    wih1, whh1, b1, wih2 = p['wih1'], p['whh1'], p['b1'], p['wih2']
    wih1_p = jnp.zeros((N_NODES, 4 * H1P), jnp.float32)
    whh1_p = jnp.zeros((H1P, 4 * H1P), jnp.float32)
    b1_p = jnp.zeros((1, 4 * H1P), jnp.float32)
    for k in range(4):
        wih1_p = wih1_p.at[:, k * H1P:k * H1P + H1].set(wih1[:, k * H1:(k + 1) * H1])
        whh1_p = whh1_p.at[:H1, k * H1P:k * H1P + H1].set(whh1[:, k * H1:(k + 1) * H1])
        b1_p = b1_p.at[:, k * H1P:k * H1P + H1].set(b1[:, k * H1:(k + 1) * H1])
    wih2_p = jnp.zeros((H1P, 4 * H2), jnp.float32).at[:H1, :].set(wih2)

    return {
        'w_flat': w_flat, 'v_cat': v_cat, 'gat_bias': p['gat_bias'],
        'wih1_p': wih1_p, 'whh1_p': whh1_p, 'b1_p': b1_p,
        'wih2_p': wih2_p, 'whh2': p['whh2'], 'b2': p['b2'],
        'wlin': p['wlin'], 'blin': p['blin'],
    }


# ------------------------------- parameters ----------------------------------
def init_params(key):
    ks = jax.random.split(key, 10)

    def u(k, shape, scale=0.1):
        return jax.random.uniform(k, shape, jnp.float32, -scale, scale)

    return {
        # GATConv: per-head linear map, attention vectors, output bias (concat=False)
        'gat_w': u(ks[0], (HEADS, N_HIST, N_HIST)),
        'gat_asrc': u(ks[1], (HEADS, N_HIST)),
        'gat_adst': u(ks[2], (HEADS, N_HIST)),
        'gat_bias': u(ks[3], (1, N_HIST)),
        # LSTM1 (input=n_nodes, hidden=32): weights stored (in, 4*hid) for
        # right-multiplication; bias = b_ih + b_hh, zero-init as in the module.
        'wih1': u(ks[4], (N_NODES, 4 * H1)),
        'whh1': u(ks[5], (H1, 4 * H1)),
        'b1': jnp.zeros((1, 4 * H1), jnp.float32),
        # LSTM2 (input=32, hidden=128): module's second init loop re-inits lstm1
        # (copy/paste in the reference), so lstm2 keeps nonzero default init.
        'wih2': u(ks[6], (H1, 4 * H2)),
        'whh2': u(ks[7], (H2, 4 * H2)),
        'b2': u(ks[8], (1, 4 * H2)),
        # Linear(128 -> n_pred)
        'wlin': u(ks[9], (H2, N_PRED)),
        'blin': jnp.zeros((1, N_PRED), jnp.float32),
    }


def build_adjacency():
    # Dense stand-in for data.edge_index: ring graph per batch-graph
    # (block-diagonal) + self loops; adj[i, j] = 1 iff edge j -> i.
    adj = [[0.0] * N_TOTAL for _ in range(N_TOTAL)]
    for b in range(BATCH):
        off = b * N_NODES
        for i in range(N_NODES):
            adj[off + i][off + i] = 1.0
            adj[off + i][off + (i - 1) % N_NODES] = 1.0
            adj[off + i][off + (i + 1) % N_NODES] = 1.0
    return jnp.asarray(adj, dtype=jnp.float32)


# ----------------------------------- main ------------------------------------
if __name__ == "__main__":
    key = jax.random.PRNGKey(0)
    k_x, k_p = jax.random.split(key)

    x = jax.random.normal(k_x, (N_TOTAL, N_HIST), jnp.float32)   # data.x
    adj = build_adjacency()                                       # dense edge_index
    params = init_params(k_p)
    kparams = jax.tree_util.tree_map(jnp.asarray, prepare_params(params))

    fwd = jax.jit(st_gat_forward)
    out = fwd(x, adj, kparams)
    out = jax.block_until_ready(out)

    assert out.shape == (BATCH * 1, N_PRED), out.shape
    assert out.dtype == jnp.float32
    print("KERNEL_OK")
</pallas_src>

<mosaic_0001>
module attributes {stable_mosaic.version = 11 : i64} {
  func.func @st_gat_kernel(%arg0: memref<16x16xf32, #tpu.memory_space<vmem>>, %arg1: memref<16x16xf32, #tpu.memory_space<vmem>>, %arg2: memref<16x128xf32, #tpu.memory_space<vmem>>, %arg3: memref<16x16xf32, #tpu.memory_space<vmem>>, %arg4: memref<1x16xf32, #tpu.memory_space<vmem>>, %arg5: memref<8x512xf32, #tpu.memory_space<vmem>>, %arg6: memref<128x512xf32, #tpu.memory_space<vmem>>, %arg7: memref<1x512xf32, #tpu.memory_space<vmem>>, %arg8: memref<128x512xf32, #tpu.memory_space<vmem>>, %arg9: memref<128x512xf32, #tpu.memory_space<vmem>>, %arg10: memref<1x512xf32, #tpu.memory_space<vmem>>, %arg11: memref<128x4xf32, #tpu.memory_space<vmem>>, %arg12: memref<1x4xf32, #tpu.memory_space<vmem>>, %arg13: memref<2x4xf32, #tpu.memory_space<vmem>>) attributes {dimension_semantics = [], scalar_prefetch = 0 : i64, scratch_operands = 0 : i64, tpu.core_type = #tpu.core_type<tc>} {
    %c0 = arith.constant 0 : index
    %c0_0 = arith.constant 0 : index
    %0 = vector.load %arg0[%c0, %c0_0] : memref<16x16xf32, #tpu.memory_space<vmem>>, vector<16x16xf32>
    %c0_1 = arith.constant 0 : index
    %c0_2 = arith.constant 0 : index
    %1 = vector.load %arg2[%c0_1, %c0_2] : memref<16x128xf32, #tpu.memory_space<vmem>>, vector<16x128xf32>
    %cst = arith.constant dense<0.000000e+00> : vector<16x128xf32>
    %2 = tpu.matmul %0, %1, %cst {dimension_numbers = #tpu.dot_dimension_numbers<[1], [0], [0], [1], [0, 0, 1, 1], [], []>} : vector<16x16xf32>, vector<16x128xf32>, vector<16x128xf32> -> vector<16x128xf32>
    %c0_3 = arith.constant 0 : index
    %c0_4 = arith.constant 0 : index
    %3 = vector.load %arg3[%c0_3, %c0_4] : memref<16x16xf32, #tpu.memory_space<vmem>>, vector<16x16xf32>
    %cst_5 = arith.constant dense<0.000000e+00> : vector<16x16xf32>
    %4 = tpu.matmul %0, %3, %cst_5 {dimension_numbers = #tpu.dot_dimension_numbers<[1], [0], [0], [1], [0, 0, 1, 1], [], []>} : vector<16x16xf32>, vector<16x16xf32>, vector<16x16xf32> -> vector<16x16xf32>
    %5 = vector.extract_strided_slice %4 {offsets = [0, 8], sizes = [16, 8], strides = [1, 1]} : vector<16x16xf32> to vector<16x8xf32>
    %6 = tpu.transpose %4, [1, 0] : vector<16x16xf32> -> vector<16x16xf32>
    %7 = vector.extract_strided_slice %6 {offsets = [0, 0], sizes = [8, 16], strides = [1, 1]} : vector<16x16xf32> to vector<8x16xf32>
    %c0_6 = arith.constant 0 : index
    %c0_7 = arith.constant 0 : index
    %8 = vector.load %arg1[%c0_6, %c0_7] : memref<16x16xf32, #tpu.memory_space<vmem>>, vector<16x16xf32>
    %cst_8 = arith.constant 0.000000e+00 : f32
    %9 = vector.broadcast %cst_8 : f32 to vector<16x16xf32>
    %10 = arith.cmpf ogt, %8, %9 : vector<16x16xf32>
    %cst_9 = arith.constant 0.000000e+00 : f32
    %cst_10 = arith.constant -1.000000e+30 : f32
    %11 = vector.broadcast %cst_9 : f32 to vector<16x16xf32>
    %12 = vector.broadcast %cst_10 : f32 to vector<16x16xf32>
    %13 = arith.select %10, %11, %12 : vector<16x16xi1>, vector<16x16xf32>
    %14 = vector.extract_strided_slice %5 {offsets = [0, 0], sizes = [16, 1], strides = [1, 1]} : vector<16x8xf32> to vector<16x1xf32>
    %15 = vector.extract_strided_slice %7 {offsets = [0, 0], sizes = [1, 16], strides = [1, 1]} : vector<8x16xf32> to vector<1x16xf32>
    %16 = vector.broadcast %14 : vector<16x1xf32> to vector<16x16xf32>
    %17 = vector.broadcast %15 : vector<1x16xf32> to vector<16x16xf32>
    %18 = arith.addf %16, %17 : vector<16x16xf32>
    %cst_11 = arith.constant 0.000000e+00 : f32
    %19 = vector.broadcast %cst_11 : f32 to vector<16x16xf32>
    %20 = arith.cmpf ogt, %18, %19 : vector<16x16xf32>
    %cst_12 = arith.constant 2.000000e-01 : f32
    %21 = vector.broadcast %cst_12 : f32 to vector<16x16xf32>
    %22 = arith.mulf %21, %18 : vector<16x16xf32>
    %23 = arith.select %20, %18, %22 : vector<16x16xi1>, vector<16x16xf32>
    %24 = arith.addf %23, %13 : vector<16x16xf32>
    %cst_13 = arith.constant dense<0xFF800000> : vector<16xf32>
    %25 = vector.multi_reduction <maximumf>, %24, %cst_13 [1] : vector<16x16xf32> to vector<16xf32>
    %26 = vector.shape_cast %25 : vector<16xf32> to vector<16x1xf32>
    %27 = vector.broadcast %26 : vector<16x1xf32> to vector<16x16xf32>
    %28 = arith.subf %24, %27 : vector<16x16xf32>
    %29 = math.exp %28 : vector<16x16xf32>
    %cst_14 = arith.constant dense<0.000000e+00> : vector<16xf32>
    %30 = vector.multi_reduction <add>, %29, %cst_14 [1] : vector<16x16xf32> to vector<16xf32>
    %31 = vector.shape_cast %30 : vector<16xf32> to vector<16x1xf32>
    %32 = tpu.reciprocal %31 {approx = true} : vector<16x1xf32> -> vector<16x1xf32>
    %33 = vector.broadcast %32 : vector<16x1xf32> to vector<16x16xf32>
    %34 = arith.mulf %29, %33 : vector<16x16xf32>
    %35 = vector.extract_strided_slice %5 {offsets = [0, 1], sizes = [16, 1], strides = [1, 1]} : vector<16x8xf32> to vector<16x1xf32>
    %36 = vector.extract_strided_slice %7 {offsets = [1, 0], sizes = [1, 16], strides = [1, 1]} : vector<8x16xf32> to vector<1x16xf32>
    %37 = vector.broadcast %35 : vector<16x1xf32> to vector<16x16xf32>
    %38 = vector.broadcast %36 : vector<1x16xf32> to vector<16x16xf32>
    %39 = arith.addf %37, %38 : vector<16x16xf32>
    %cst_15 = arith.constant 0.000000e+00 : f32
    %40 = vector.broadcast %cst_15 : f32 to vector<16x16xf32>
    %41 = arith.cmpf ogt, %39, %40 : vector<16x16xf32>
    %cst_16 = arith.constant 2.000000e-01 : f32
    %42 = vector.broadcast %cst_16 : f32 to vector<16x16xf32>
    %43 = arith.mulf %42, %39 : vector<16x16xf32>
    %44 = arith.select %41, %39, %43 : vector<16x16xi1>, vector<16x16xf32>
    %45 = arith.addf %44, %13 : vector<16x16xf32>
    %cst_17 = arith.constant dense<0xFF800000> : vector<16xf32>
    %46 = vector.multi_reduction <maximumf>, %45, %cst_17 [1] : vector<16x16xf32> to vector<16xf32>
    %47 = vector.shape_cast %46 : vector<16xf32> to vector<16x1xf32>
    %48 = vector.broadcast %47 : vector<16x1xf32> to vector<16x16xf32>
    %49 = arith.subf %45, %48 : vector<16x16xf32>
    %50 = math.exp %49 : vector<16x16xf32>
    %cst_18 = arith.constant dense<0.000000e+00> : vector<16xf32>
    %51 = vector.multi_reduction <add>, %50, %cst_18 [1] : vector<16x16xf32> to vector<16xf32>
    %52 = vector.shape_cast %51 : vector<16xf32> to vector<16x1xf32>
    %53 = tpu.reciprocal %52 {approx = true} : vector<16x1xf32> -> vector<16x1xf32>
    %54 = vector.broadcast %53 : vector<16x1xf32> to vector<16x16xf32>
    %55 = arith.mulf %50, %54 : vector<16x16xf32>
    %56 = vector.extract_strided_slice %5 {offsets = [0, 2], sizes = [16, 1], strides = [1, 1]} : vector<16x8xf32> to vector<16x1xf32>
    %57 = vector.extract_strided_slice %7 {offsets = [2, 0], sizes = [1, 16], strides = [1, 1]} : vector<8x16xf32> to vector<1x16xf32>
    %58 = vector.broadcast %56 : vector<16x1xf32> to vector<16x16xf32>
    %59 = vector.broadcast %57 : vector<1x16xf32> to vector<16x16xf32>
    %60 = arith.addf %58, %59 : vector<16x16xf32>
    %cst_19 = arith.constant 0.000000e+00 : f32
    %61 = vector.broadcast %cst_19 : f32 to vector<16x16xf32>
    %62 = arith.cmpf ogt, %60, %61 : vector<16x16xf32>
    %cst_20 = arith.constant 2.000000e-01 : f32
    %63 = vector.broadcast %cst_20 : f32 to vector<16x16xf32>
    %64 = arith.mulf %63, %60 : vector<16x16xf32>
    %65 = arith.select %62, %60, %64 : vector<16x16xi1>, vector<16x16xf32>
    %66 = arith.addf %65, %13 : vector<16x16xf32>
    %cst_21 = arith.constant dense<0xFF800000> : vector<16xf32>
    %67 = vector.multi_reduction <maximumf>, %66, %cst_21 [1] : vector<16x16xf32> to vector<16xf32>
    %68 = vector.shape_cast %67 : vector<16xf32> to vector<16x1xf32>
    %69 = vector.broadcast %68 : vector<16x1xf32> to vector<16x16xf32>
    %70 = arith.subf %66, %69 : vector<16x16xf32>
    %71 = math.exp %70 : vector<16x16xf32>
    %cst_22 = arith.constant dense<0.000000e+00> : vector<16xf32>
    %72 = vector.multi_reduction <add>, %71, %cst_22 [1] : vector<16x16xf32> to vector<16xf32>
    %73 = vector.shape_cast %72 : vector<16xf32> to vector<16x1xf32>
    %74 = tpu.reciprocal %73 {approx = true} : vector<16x1xf32> -> vector<16x1xf32>
    %75 = vector.broadcast %74 : vector<16x1xf32> to vector<16x16xf32>
    %76 = arith.mulf %71, %75 : vector<16x16xf32>
    %77 = vector.extract_strided_slice %5 {offsets = [0, 3], sizes = [16, 1], strides = [1, 1]} : vector<16x8xf32> to vector<16x1xf32>
    %78 = vector.extract_strided_slice %7 {offsets = [3, 0], sizes = [1, 16], strides = [1, 1]} : vector<8x16xf32> to vector<1x16xf32>
    %79 = vector.broadcast %77 : vector<16x1xf32> to vector<16x16xf32>
    %80 = vector.broadcast %78 : vector<1x16xf32> to vector<16x16xf32>
    %81 = arith.addf %79, %80 : vector<16x16xf32>
    %cst_23 = arith.constant 0.000000e+00 : f32
    %82 = vector.broadcast %cst_23 : f32 to vector<16x16xf32>
    %83 = arith.cmpf ogt, %81, %82 : vector<16x16xf32>
    %cst_24 = arith.constant 2.000000e-01 : f32
    %84 = vector.broadcast %cst_24 : f32 to vector<16x16xf32>
    %85 = arith.mulf %84, %81 : vector<16x16xf32>
    %86 = arith.select %83, %81, %85 : vector<16x16xi1>, vector<16x16xf32>
    %87 = arith.addf %86, %13 : vector<16x16xf32>
    %cst_25 = arith.constant dense<0xFF800000> : vector<16xf32>
    %88 = vector.multi_reduction <maximumf>, %87, %cst_25 [1] : vector<16x16xf32> to vector<16xf32>
    %89 = vector.shape_cast %88 : vector<16xf32> to vector<16x1xf32>
    %90 = vector.broadcast %89 : vector<16x1xf32> to vector<16x16xf32>
    %91 = arith.subf %87, %90 : vector<16x16xf32>
    %92 = math.exp %91 : vector<16x16xf32>
    %cst_26 = arith.constant dense<0.000000e+00> : vector<16xf32>
    %93 = vector.multi_reduction <add>, %92, %cst_26 [1] : vector<16x16xf32> to vector<16xf32>
    %94 = vector.shape_cast %93 : vector<16xf32> to vector<16x1xf32>
    %95 = tpu.reciprocal %94 {approx = true} : vector<16x1xf32> -> vector<16x1xf32>
    %96 = vector.broadcast %95 : vector<16x1xf32> to vector<16x16xf32>
    %97 = arith.mulf %92, %96 : vector<16x16xf32>
    %98 = vector.extract_strided_slice %5 {offsets = [0, 4], sizes = [16, 1], strides = [1, 1]} : vector<16x8xf32> to vector<16x1xf32>
    %99 = vector.extract_strided_slice %7 {offsets = [4, 0], sizes = [1, 16], strides = [1, 1]} : vector<8x16xf32> to vector<1x16xf32>
    %100 = vector.broadcast %98 : vector<16x1xf32> to vector<16x16xf32>
    %101 = vector.broadcast %99 : vector<1x16xf32> to vector<16x16xf32>
    %102 = arith.addf %100, %101 : vector<16x16xf32>
    %cst_27 = arith.constant 0.000000e+00 : f32
    %103 = vector.broadcast %cst_27 : f32 to vector<16x16xf32>
    %104 = arith.cmpf ogt, %102, %103 : vector<16x16xf32>
    %cst_28 = arith.constant 2.000000e-01 : f32
    %105 = vector.broadcast %cst_28 : f32 to vector<16x16xf32>
    %106 = arith.mulf %105, %102 : vector<16x16xf32>
    %107 = arith.select %104, %102, %106 : vector<16x16xi1>, vector<16x16xf32>
    %108 = arith.addf %107, %13 : vector<16x16xf32>
    %cst_29 = arith.constant dense<0xFF800000> : vector<16xf32>
    %109 = vector.multi_reduction <maximumf>, %108, %cst_29 [1] : vector<16x16xf32> to vector<16xf32>
    %110 = vector.shape_cast %109 : vector<16xf32> to vector<16x1xf32>
    %111 = vector.broadcast %110 : vector<16x1xf32> to vector<16x16xf32>
    %112 = arith.subf %108, %111 : vector<16x16xf32>
    %113 = math.exp %112 : vector<16x16xf32>
    %cst_30 = arith.constant dense<0.000000e+00> : vector<16xf32>
    %114 = vector.multi_reduction <add>, %113, %cst_30 [1] : vector<16x16xf32> to vector<16xf32>
    %115 = vector.shape_cast %114 : vector<16xf32> to vector<16x1xf32>
    %116 = tpu.reciprocal %115 {approx = true} : vector<16x1xf32> -> vector<16x1xf32>
    %117 = vector.broadcast %116 : vector<16x1xf32> to vector<16x16xf32>
    %118 = arith.mulf %113, %117 : vector<16x16xf32>
    %119 = vector.extract_strided_slice %5 {offsets = [0, 5], sizes = [16, 1], strides = [1, 1]} : vector<16x8xf32> to vector<16x1xf32>
    %120 = vector.extract_strided_slice %7 {offsets = [5, 0], sizes = [1, 16], strides = [1, 1]} : vector<8x16xf32> to vector<1x16xf32>
    %121 = vector.broadcast %119 : vector<16x1xf32> to vector<16x16xf32>
    %122 = vector.broadcast %120 : vector<1x16xf32> to vector<16x16xf32>
    %123 = arith.addf %121, %122 : vector<16x16xf32>
    %cst_31 = arith.constant 0.000000e+00 : f32
    %124 = vector.broadcast %cst_31 : f32 to vector<16x16xf32>
    %125 = arith.cmpf ogt, %123, %124 : vector<16x16xf32>
    %cst_32 = arith.constant 2.000000e-01 : f32
    %126 = vector.broadcast %cst_32 : f32 to vector<16x16xf32>
    %127 = arith.mulf %126, %123 : vector<16x16xf32>
    %128 = arith.select %125, %123, %127 : vector<16x16xi1>, vector<16x16xf32>
    %129 = arith.addf %128, %13 : vector<16x16xf32>
    %cst_33 = arith.constant dense<0xFF800000> : vector<16xf32>
    %130 = vector.multi_reduction <maximumf>, %129, %cst_33 [1] : vector<16x16xf32> to vector<16xf32>
    %131 = vector.shape_cast %130 : vector<16xf32> to vector<16x1xf32>
    %132 = vector.broadcast %131 : vector<16x1xf32> to vector<16x16xf32>
    %133 = arith.subf %129, %132 : vector<16x16xf32>
    %134 = math.exp %133 : vector<16x16xf32>
    %cst_34 = arith.constant dense<0.000000e+00> : vector<16xf32>
    %135 = vector.multi_reduction <add>, %134, %cst_34 [1] : vector<16x16xf32> to vector<16xf32>
    %136 = vector.shape_cast %135 : vector<16xf32> to vector<16x1xf32>
    %137 = tpu.reciprocal %136 {approx = true} : vector<16x1xf32> -> vector<16x1xf32>
    %138 = vector.broadcast %137 : vector<16x1xf32> to vector<16x16xf32>
    %139 = arith.mulf %134, %138 : vector<16x16xf32>
    %140 = vector.extract_strided_slice %5 {offsets = [0, 6], sizes = [16, 1], strides = [1, 1]} : vector<16x8xf32> to vector<16x1xf32>
    %141 = vector.extract_strided_slice %7 {offsets = [6, 0], sizes = [1, 16], strides = [1, 1]} : vector<8x16xf32> to vector<1x16xf32>
    %142 = vector.broadcast %140 : vector<16x1xf32> to vector<16x16xf32>
    %143 = vector.broadcast %141 : vector<1x16xf32> to vector<16x16xf32>
    %144 = arith.addf %142, %143 : vector<16x16xf32>
    %cst_35 = arith.constant 0.000000e+00 : f32
    %145 = vector.broadcast %cst_35 : f32 to vector<16x16xf32>
    %146 = arith.cmpf ogt, %144, %145 : vector<16x16xf32>
    %cst_36 = arith.constant 2.000000e-01 : f32
    %147 = vector.broadcast %cst_36 : f32 to vector<16x16xf32>
    %148 = arith.mulf %147, %144 : vector<16x16xf32>
    %149 = arith.select %146, %144, %148 : vector<16x16xi1>, vector<16x16xf32>
    %150 = arith.addf %149, %13 : vector<16x16xf32>
    %cst_37 = arith.constant dense<0xFF800000> : vector<16xf32>
    %151 = vector.multi_reduction <maximumf>, %150, %cst_37 [1] : vector<16x16xf32> to vector<16xf32>
    %152 = vector.shape_cast %151 : vector<16xf32> to vector<16x1xf32>
    %153 = vector.broadcast %152 : vector<16x1xf32> to vector<16x16xf32>
    %154 = arith.subf %150, %153 : vector<16x16xf32>
    %155 = math.exp %154 : vector<16x16xf32>
    %cst_38 = arith.constant dense<0.000000e+00> : vector<16xf32>
    %156 = vector.multi_reduction <add>, %155, %cst_38 [1] : vector<16x16xf32> to vector<16xf32>
    %157 = vector.shape_cast %156 : vector<16xf32> to vector<16x1xf32>
    %158 = tpu.reciprocal %157 {approx = true} : vector<16x1xf32> -> vector<16x1xf32>
    %159 = vector.broadcast %158 : vector<16x1xf32> to vector<16x16xf32>
    %160 = arith.mulf %155, %159 : vector<16x16xf32>
    %161 = vector.extract_strided_slice %5 {offsets = [0, 7], sizes = [16, 1], strides = [1, 1]} : vector<16x8xf32> to vector<16x1xf32>
    %162 = vector.extract_strided_slice %7 {offsets = [7, 0], sizes = [1, 16], strides = [1, 1]} : vector<8x16xf32> to vector<1x16xf32>
    %163 = vector.broadcast %161 : vector<16x1xf32> to vector<16x16xf32>
    %164 = vector.broadcast %162 : vector<1x16xf32> to vector<16x16xf32>
    %165 = arith.addf %163, %164 : vector<16x16xf32>
    %cst_39 = arith.constant 0.000000e+00 : f32
    %166 = vector.broadcast %cst_39 : f32 to vector<16x16xf32>
    %167 = arith.cmpf ogt, %165, %166 : vector<16x16xf32>
    %cst_40 = arith.constant 2.000000e-01 : f32
    %168 = vector.broadcast %cst_40 : f32 to vector<16x16xf32>
    %169 = arith.mulf %168, %165 : vector<16x16xf32>
    %170 = arith.select %167, %165, %169 : vector<16x16xi1>, vector<16x16xf32>
    %171 = arith.addf %170, %13 : vector<16x16xf32>
    %cst_41 = arith.constant dense<0xFF800000> : vector<16xf32>
    %172 = vector.multi_reduction <maximumf>, %171, %cst_41 [1] : vector<16x16xf32> to vector<16xf32>
    %173 = vector.shape_cast %172 : vector<16xf32> to vector<16x1xf32>
    %174 = vector.broadcast %173 : vector<16x1xf32> to vector<16x16xf32>
    %175 = arith.subf %171, %174 : vector<16x16xf32>
    %176 = math.exp %175 : vector<16x16xf32>
    %cst_42 = arith.constant dense<0.000000e+00> : vector<16xf32>
    %177 = vector.multi_reduction <add>, %176, %cst_42 [1] : vector<16x16xf32> to vector<16xf32>
    %178 = vector.shape_cast %177 : vector<16xf32> to vector<16x1xf32>
    %179 = tpu.reciprocal %178 {approx = true} : vector<16x1xf32> -> vector<16x1xf32>
    %180 = vector.broadcast %179 : vector<16x1xf32> to vector<16x16xf32>
    %181 = arith.mulf %176, %180 : vector<16x16xf32>
    %182 = tpu.concatenate %34, %55, %76, %97, %118, %139, %160, %181 in 0 : vector<16x16xf32>, vector<16x16xf32>, vector<16x16xf32>, vector<16x16xf32>, vector<16x16xf32>, vector<16x16xf32>, vector<16x16xf32>, vector<16x16xf32> -> vector<128x16xf32>
    %cst_43 = arith.constant dense<0.000000e+00> : vector<128x128xf32>
    %183 = tpu.matmul %182, %2, %cst_43 {dimension_numbers = #tpu.dot_dimension_numbers<[1], [0], [0], [1], [0, 0, 1, 1], [], []>} : vector<128x16xf32>, vector<16x128xf32>, vector<128x128xf32> -> vector<128x128xf32>
    %184 = vector.extract_strided_slice %183 {offsets = [0, 0], sizes = [16, 16], strides = [1, 1]} : vector<128x128xf32> to vector<16x16xf32>
    %185 = vector.extract_strided_slice %183 {offsets = [16, 16], sizes = [16, 16], strides = [1, 1]} : vector<128x128xf32> to vector<16x16xf32>
    %186 = arith.addf %184, %185 : vector<16x16xf32>
    %187 = vector.extract_strided_slice %183 {offsets = [32, 32], sizes = [16, 16], strides = [1, 1]} : vector<128x128xf32> to vector<16x16xf32>
    %188 = arith.addf %186, %187 : vector<16x16xf32>
    %189 = vector.extract_strided_slice %183 {offsets = [48, 48], sizes = [16, 16], strides = [1, 1]} : vector<128x128xf32> to vector<16x16xf32>
    %190 = arith.addf %188, %189 : vector<16x16xf32>
    %191 = vector.extract_strided_slice %183 {offsets = [64, 64], sizes = [16, 16], strides = [1, 1]} : vector<128x128xf32> to vector<16x16xf32>
    %192 = arith.addf %190, %191 : vector<16x16xf32>
    %193 = vector.extract_strided_slice %183 {offsets = [80, 80], sizes = [16, 16], strides = [1, 1]} : vector<128x128xf32> to vector<16x16xf32>
    %194 = arith.addf %192, %193 : vector<16x16xf32>
    %195 = vector.extract_strided_slice %183 {offsets = [96, 96], sizes = [16, 16], strides = [1, 1]} : vector<128x128xf32> to vector<16x16xf32>
    %196 = arith.addf %194, %195 : vector<16x16xf32>
    %197 = vector.extract_strided_slice %183 {offsets = [112, 112], sizes = [16, 16], strides = [1, 1]} : vector<128x128xf32> to vector<16x16xf32>
    %198 = arith.addf %196, %197 : vector<16x16xf32>
    %cst_44 = arith.constant 1.250000e-01 : f32
    %199 = vector.broadcast %cst_44 : f32 to vector<16x16xf32>
    %200 = arith.mulf %198, %199 : vector<16x16xf32>
    %c0_45 = arith.constant 0 : index
    %c0_46 = arith.constant 0 : index
    %201 = vector.load %arg4[%c0_45, %c0_46] : memref<1x16xf32, #tpu.memory_space<vmem>>, vector<1x16xf32>
    %202 = vector.broadcast %201 : vector<1x16xf32> to vector<16x16xf32>
    %203 = arith.addf %200, %202 : vector<16x16xf32>
    %c0_47 = arith.constant 0 : index
    %c0_48 = arith.constant 0 : index
    %204 = vector.load %arg5[%c0_47, %c0_48] : memref<8x512xf32, #tpu.memory_space<vmem>>, vector<8x512xf32>
    %c0_49 = arith.constant 0 : index
    %c0_50 = arith.constant 0 : index
    %205 = vector.load %arg7[%c0_49, %c0_50] : memref<1x512xf32, #tpu.memory_space<vmem>>, vector<1x512xf32>
    %206 = vector.extract_strided_slice %203 {offsets = [0, 0], sizes = [8, 16], strides = [1, 1]} : vector<16x16xf32> to vector<8x16xf32>
    %cst_51 = arith.constant dense<0.000000e+00> : vector<16x512xf32>
    %207 = tpu.matmul %206, %204, %cst_51 {dimension_numbers = #tpu.dot_dimension_numbers<[0], [0], [1], [1], [0, 1, 1, 1], [], []>} : vector<8x16xf32>, vector<8x512xf32>, vector<16x512xf32> -> vector<16x512xf32>
    %208 = vector.broadcast %205 : vector<1x512xf32> to vector<16x512xf32>
    %209 = arith.addf %207, %208 : vector<16x512xf32>
    %210 = vector.extract_strided_slice %203 {offsets = [8, 0], sizes = [8, 16], strides = [1, 1]} : vector<16x16xf32> to vector<8x16xf32>
    %cst_52 = arith.constant dense<0.000000e+00> : vector<16x512xf32>
    %211 = tpu.matmul %210, %204, %cst_52 {dimension_numbers = #tpu.dot_dimension_numbers<[0], [0], [1], [1], [0, 1, 1, 1], [], []>} : vector<8x16xf32>, vector<8x512xf32>, vector<16x512xf32> -> vector<16x512xf32>
    %212 = vector.broadcast %205 : vector<1x512xf32> to vector<16x512xf32>
    %213 = arith.addf %211, %212 : vector<16x512xf32>
    %c0_53 = arith.constant 0 : index
    %c0_54 = arith.constant 0 : index
    %214 = vector.load %arg6[%c0_53, %c0_54] : memref<128x512xf32, #tpu.memory_space<vmem>>, vector<128x512xf32>
    %c0_55 = arith.constant 0 : index
    %c0_56 = arith.constant 0 : index
    %215 = vector.load %arg8[%c0_55, %c0_56] : memref<128x512xf32, #tpu.memory_space<vmem>>, vector<128x512xf32>
    %c0_57 = arith.constant 0 : index
    %c0_58 = arith.constant 0 : index
    %216 = vector.load %arg9[%c0_57, %c0_58] : memref<128x512xf32, #tpu.memory_space<vmem>>, vector<128x512xf32>
    %c0_59 = arith.constant 0 : index
    %c0_60 = arith.constant 0 : index
    %217 = vector.load %arg10[%c0_59, %c0_60] : memref<1x512xf32, #tpu.memory_space<vmem>>, vector<1x512xf32>
    %cst_61 = arith.constant 0.000000e+00 : f32
    %218 = vector.broadcast %cst_61 : f32 to vector<2x128xf32>
    %cst_62 = arith.constant 0.000000e+00 : f32
    %219 = vector.broadcast %cst_62 : f32 to vector<2x128xf32>
    %cst_63 = arith.constant 0.000000e+00 : f32
    %220 = vector.broadcast %cst_63 : f32 to vector<2x128xf32>
    %cst_64 = arith.constant 0.000000e+00 : f32
    %221 = vector.broadcast %cst_64 : f32 to vector<2x128xf32>
    %222 = vector.extract_strided_slice %209 {offsets = [0, 0], sizes = [1, 512], strides = [1, 1]} : vector<16x512xf32> to vector<1x512xf32>
    %223 = vector.extract_strided_slice %213 {offsets = [0, 0], sizes = [1, 512], strides = [1, 1]} : vector<16x512xf32> to vector<1x512xf32>
    %224 = tpu.concatenate %222, %223 in 0 : vector<1x512xf32>, vector<1x512xf32> -> vector<2x512xf32>
    %cst_65 = arith.constant dense<0.000000e+00> : vector<2x512xf32>
    %225 = tpu.matmul %218, %214, %cst_65 {dimension_numbers = #tpu.dot_dimension_numbers<[1], [0], [0], [1], [0, 0, 1, 1], [], []>} : vector<2x128xf32>, vector<128x512xf32>, vector<2x512xf32> -> vector<2x512xf32>
    %226 = arith.addf %224, %225 : vector<2x512xf32>
    %227 = vector.extract_strided_slice %226 {offsets = [0, 0], sizes = [2, 128], strides = [1, 1]} : vector<2x512xf32> to vector<2x128xf32>
    %228 = arith.negf %227 : vector<2x128xf32>
    %229 = math.exp %228 : vector<2x128xf32>
    %cst_66 = arith.constant 1.000000e+00 : f32
    %230 = vector.broadcast %cst_66 : f32 to vector<2x128xf32>
    %231 = arith.addf %230, %229 : vector<2x128xf32>
    %232 = arith.divf %230, %231 : vector<2x128xf32>
    %233 = vector.extract_strided_slice %226 {offsets = [0, 128], sizes = [2, 128], strides = [1, 1]} : vector<2x512xf32> to vector<2x128xf32>
    %234 = arith.negf %233 : vector<2x128xf32>
    %235 = math.exp %234 : vector<2x128xf32>
    %cst_67 = arith.constant 1.000000e+00 : f32
    %236 = vector.broadcast %cst_67 : f32 to vector<2x128xf32>
    %237 = arith.addf %236, %235 : vector<2x128xf32>
    %238 = arith.divf %236, %237 : vector<2x128xf32>
    %239 = vector.extract_strided_slice %226 {offsets = [0, 256], sizes = [2, 128], strides = [1, 1]} : vector<2x512xf32> to vector<2x128xf32>
    %240 = math.tanh %239 : vector<2x128xf32>
    %241 = vector.extract_strided_slice %226 {offsets = [0, 384], sizes = [2, 128], strides = [1, 1]} : vector<2x512xf32> to vector<2x128xf32>
    %242 = arith.negf %241 : vector<2x128xf32>
    %243 = math.exp %242 : vector<2x128xf32>
    %cst_68 = arith.constant 1.000000e+00 : f32
    %244 = vector.broadcast %cst_68 : f32 to vector<2x128xf32>
    %245 = arith.addf %244, %243 : vector<2x128xf32>
    %246 = arith.divf %244, %245 : vector<2x128xf32>
    %247 = arith.mulf %238, %219 : vector<2x128xf32>
    %248 = arith.mulf %232, %240 : vector<2x128xf32>
    %249 = arith.addf %247, %248 : vector<2x128xf32>
    %250 = math.tanh %249 : vector<2x128xf32>
    %251 = arith.mulf %246, %250 : vector<2x128xf32>
    %cst_69 = arith.constant dense<0.000000e+00> : vector<2x512xf32>
    %252 = tpu.matmul %251, %215, %cst_69 {dimension_numbers = #tpu.dot_dimension_numbers<[1], [0], [0], [1], [0, 0, 1, 1], [], []>} : vector<2x128xf32>, vector<128x512xf32>, vector<2x512xf32> -> vector<2x512xf32>
    %cst_70 = arith.constant dense<0.000000e+00> : vector<2x512xf32>
    %253 = tpu.matmul %220, %216, %cst_70 {dimension_numbers = #tpu.dot_dimension_numbers<[1], [0], [0], [1], [0, 0, 1, 1], [], []>} : vector<2x128xf32>, vector<128x512xf32>, vector<2x512xf32> -> vector<2x512xf32>
    %254 = arith.addf %252, %253 : vector<2x512xf32>
    %255 = vector.broadcast %217 : vector<1x512xf32> to vector<2x512xf32>
    %256 = arith.addf %254, %255 : vector<2x512xf32>
    %257 = vector.extract_strided_slice %256 {offsets = [0, 0], sizes = [2, 128], strides = [1, 1]} : vector<2x512xf32> to vector<2x128xf32>
    %258 = arith.negf %257 : vector<2x128xf32>
    %259 = math.exp %258 : vector<2x128xf32>
    %cst_71 = arith.constant 1.000000e+00 : f32
    %260 = vector.broadcast %cst_71 : f32 to vector<2x128xf32>
    %261 = arith.addf %260, %259 : vector<2x128xf32>
    %262 = arith.divf %260, %261 : vector<2x128xf32>
    %263 = vector.extract_strided_slice %256 {offsets = [0, 128], sizes = [2, 128], strides = [1, 1]} : vector<2x512xf32> to vector<2x128xf32>
    %264 = arith.negf %263 : vector<2x128xf32>
    %265 = math.exp %264 : vector<2x128xf32>
    %cst_72 = arith.constant 1.000000e+00 : f32
    %266 = vector.broadcast %cst_72 : f32 to vector<2x128xf32>
    %267 = arith.addf %266, %265 : vector<2x128xf32>
    %268 = arith.divf %266, %267 : vector<2x128xf32>
    %269 = vector.extract_strided_slice %256 {offsets = [0, 256], sizes = [2, 128], strides = [1, 1]} : vector<2x512xf32> to vector<2x128xf32>
    %270 = math.tanh %269 : vector<2x128xf32>
    %271 = vector.extract_strided_slice %256 {offsets = [0, 384], sizes = [2, 128], strides = [1, 1]} : vector<2x512xf32> to vector<2x128xf32>
    %272 = arith.negf %271 : vector<2x128xf32>
    %273 = math.exp %272 : vector<2x128xf32>
    %cst_73 = arith.constant 1.000000e+00 : f32
    %274 = vector.broadcast %cst_73 : f32 to vector<2x128xf32>
    %275 = arith.addf %274, %273 : vector<2x128xf32>
    %276 = arith.divf %274, %275 : vector<2x128xf32>
    %277 = arith.mulf %268, %221 : vector<2x128xf32>
    %278 = arith.mulf %262, %270 : vector<2x128xf32>
    %279 = arith.addf %277, %278 : vector<2x128xf32>
    %280 = math.tanh %279 : vector<2x128xf32>
    %281 = arith.mulf %276, %280 : vector<2x128xf32>
    %282 = vector.extract_strided_slice %209 {offsets = [1, 0], sizes = [1, 512], strides = [1, 1]} : vector<16x512xf32> to vector<1x512xf32>
    %283 = vector.extract_strided_slice %213 {offsets = [1, 0], sizes = [1, 512], strides = [1, 1]} : vector<16x512xf32> to vector<1x512xf32>
    %284 = tpu.concatenate %282, %283 in 0 : vector<1x512xf32>, vector<1x512xf32> -> vector<2x512xf32>
    %cst_74 = arith.constant dense<0.000000e+00> : vector<2x512xf32>
    %285 = tpu.matmul %251, %214, %cst_74 {dimension_numbers = #tpu.dot_dimension_numbers<[1], [0], [0], [1], [0, 0, 1, 1], [], []>} : vector<2x128xf32>, vector<128x512xf32>, vector<2x512xf32> -> vector<2x512xf32>
    %286 = arith.addf %284, %285 : vector<2x512xf32>
    %287 = vector.extract_strided_slice %286 {offsets = [0, 0], sizes = [2, 128], strides = [1, 1]} : vector<2x512xf32> to vector<2x128xf32>
    %288 = arith.negf %287 : vector<2x128xf32>
    %289 = math.exp %288 : vector<2x128xf32>
    %cst_75 = arith.constant 1.000000e+00 : f32
    %290 = vector.broadcast %cst_75 : f32 to vector<2x128xf32>
    %291 = arith.addf %290, %289 : vector<2x128xf32>
    %292 = arith.divf %290, %291 : vector<2x128xf32>
    %293 = vector.extract_strided_slice %286 {offsets = [0, 128], sizes = [2, 128], strides = [1, 1]} : vector<2x512xf32> to vector<2x128xf32>
    %294 = arith.negf %293 : vector<2x128xf32>
    %295 = math.exp %294 : vector<2x128xf32>
    %cst_76 = arith.constant 1.000000e+00 : f32
    %296 = vector.broadcast %cst_76 : f32 to vector<2x128xf32>
    %297 = arith.addf %296, %295 : vector<2x128xf32>
    %298 = arith.divf %296, %297 : vector<2x128xf32>
    %299 = vector.extract_strided_slice %286 {offsets = [0, 256], sizes = [2, 128], strides = [1, 1]} : vector<2x512xf32> to vector<2x128xf32>
    %300 = math.tanh %299 : vector<2x128xf32>
    %301 = vector.extract_strided_slice %286 {offsets = [0, 384], sizes = [2, 128], strides = [1, 1]} : vector<2x512xf32> to vector<2x128xf32>
    %302 = arith.negf %301 : vector<2x128xf32>
    %303 = math.exp %302 : vector<2x128xf32>
    %cst_77 = arith.constant 1.000000e+00 : f32
    %304 = vector.broadcast %cst_77 : f32 to vector<2x128xf32>
    %305 = arith.addf %304, %303 : vector<2x128xf32>
    %306 = arith.divf %304, %305 : vector<2x128xf32>
    %307 = arith.mulf %298, %249 : vector<2x128xf32>
    %308 = arith.mulf %292, %300 : vector<2x128xf32>
    %309 = arith.addf %307, %308 : vector<2x128xf32>
    %310 = math.tanh %309 : vector<2x128xf32>
    %311 = arith.mulf %306, %310 : vector<2x128xf32>
    %cst_78 = arith.constant dense<0.000000e+00> : vector<2x512xf32>
    %312 = tpu.matmul %311, %215, %cst_78 {dimension_numbers = #tpu.dot_dimension_numbers<[1], [0], [0], [1], [0, 0, 1, 1], [], []>} : vector<2x128xf32>, vector<128x512xf32>, vector<2x512xf32> -> vector<2x512xf32>
    %cst_79 = arith.constant dense<0.000000e+00> : vector<2x512xf32>
    %313 = tpu.matmul %281, %216, %cst_79 {dimension_numbers = #tpu.dot_dimension_numbers<[1], [0], [0], [1], [0, 0, 1, 1], [], []>} : vector<2x128xf32>, vector<128x512xf32>, vector<2x512xf32> -> vector<2x512xf32>
    %314 = arith.addf %312, %313 : vector<2x512xf32>
    %315 = vector.broadcast %217 : vector<1x512xf32> to vector<2x512xf32>
    %316 = arith.addf %314, %315 : vector<2x512xf32>
    %317 = vector.extract_strided_slice %316 {offsets = [0, 0], sizes = [2, 128], strides = [1, 1]} : vector<2x512xf32> to vector<2x128xf32>
    %318 = arith.negf %317 : vector<2x128xf32>
    %319 = math.exp %318 : vector<2x128xf32>
    %cst_80 = arith.constant 1.000000e+00 : f32
    %320 = vector.broadcast %cst_80 : f32 to vector<2x128xf32>
    %321 = arith.addf %320, %319 : vector<2x128xf32>
    %322 = arith.divf %320, %321 : vector<2x128xf32>
    %323 = vector.extract_strided_slice %316 {offsets = [0, 128], sizes = [2, 128], strides = [1, 1]} : vector<2x512xf32> to vector<2x128xf32>
    %324 = arith.negf %323 : vector<2x128xf32>
    %325 = math.exp %324 : vector<2x128xf32>
    %cst_81 = arith.constant 1.000000e+00 : f32
    %326 = vector.broadcast %cst_81 : f32 to vector<2x128xf32>
    %327 = arith.addf %326, %325 : vector<2x128xf32>
    %328 = arith.divf %326, %327 : vector<2x128xf32>
    %329 = vector.extract_strided_slice %316 {offsets = [0, 256], sizes = [2, 128], strides = [1, 1]} : vector<2x512xf32> to vector<2x128xf32>
    %330 = math.tanh %329 : vector<2x128xf32>
    %331 = vector.extract_strided_slice %316 {offsets = [0, 384], sizes = [2, 128], strides = [1, 1]} : vector<2x512xf32> to vector<2x128xf32>
    %332 = arith.negf %331 : vector<2x128xf32>
    %333 = math.exp %332 : vector<2x128xf32>
    %cst_82 = arith.constant 1.000000e+00 : f32
    %334 = vector.broadcast %cst_82 : f32 to vector<2x128xf32>
    %335 = arith.addf %334, %333 : vector<2x128xf32>
    %336 = arith.divf %334, %335 : vector<2x128xf32>
    %337 = arith.mulf %328, %279 : vector<2x128xf32>
    %338 = arith.mulf %322, %330 : vector<2x128xf32>
    %339 = arith.addf %337, %338 : vector<2x128xf32>
    %340 = math.tanh %339 : vector<2x128xf32>
    %341 = arith.mulf %336, %340 : vector<2x128xf32>
    %342 = vector.extract_strided_slice %209 {offsets = [2, 0], sizes = [1, 512], strides = [1, 1]} : vector<16x512xf32> to vector<1x512xf32>
    %343 = vector.extract_strided_slice %213 {offsets = [2, 0], sizes = [1, 512], strides = [1, 1]} : vector<16x512xf32> to vector<1x512xf32>
    %344 = tpu.concatenate %342, %343 in 0 : vector<1x512xf32>, vector<1x512xf32> -> vector<2x512xf32>
    %cst_83 = arith.constant dense<0.000000e+00> : vector<2x512xf32>
    %345 = tpu.matmul %311, %214, %cst_83 {dimension_numbers = #tpu.dot_dimension_numbers<[1], [0], [0], [1], [0, 0, 1, 1], [], []>} : vector<2x128xf32>, vector<128x512xf32>, vector<2x512xf32> -> vector<2x512xf32>
    %346 = arith.addf %344, %345 : vector<2x512xf32>
    %347 = vector.extract_strided_slice %346 {offsets = [0, 0], sizes = [2, 128], strides = [1, 1]} : vector<2x512xf32> to vector<2x128xf32>
    %348 = arith.negf %347 : vector<2x128xf32>
    %349 = math.exp %348 : vector<2x128xf32>
    %cst_84 = arith.constant 1.000000e+00 : f32
    %350 = vector.broadcast %cst_84 : f32 to vector<2x128xf32>
    %351 = arith.addf %350, %349 : vector<2x128xf32>
    %352 = arith.divf %350, %351 : vector<2x128xf32>
    %353 = vector.extract_strided_slice %346 {offsets = [0, 128], sizes = [2, 128], strides = [1, 1]} : vector<2x512xf32> to vector<2x128xf32>
    %354 = arith.negf %353 : vector<2x128xf32>
    %355 = math.exp %354 : vector<2x128xf32>
    %cst_85 = arith.constant 1.000000e+00 : f32
    %356 = vector.broadcast %cst_85 : f32 to vector<2x128xf32>
    %357 = arith.addf %356, %355 : vector<2x128xf32>
    %358 = arith.divf %356, %357 : vector<2x128xf32>
    %359 = vector.extract_strided_slice %346 {offsets = [0, 256], sizes = [2, 128], strides = [1, 1]} : vector<2x512xf32> to vector<2x128xf32>
    %360 = math.tanh %359 : vector<2x128xf32>
    %361 = vector.extract_strided_slice %346 {offsets = [0, 384], sizes = [2, 128], strides = [1, 1]} : vector<2x512xf32> to vector<2x128xf32>
    %362 = arith.negf %361 : vector<2x128xf32>
    %363 = math.exp %362 : vector<2x128xf32>
    %cst_86 = arith.constant 1.000000e+00 : f32
    %364 = vector.broadcast %cst_86 : f32 to vector<2x128xf32>
    %365 = arith.addf %364, %363 : vector<2x128xf32>
    %366 = arith.divf %364, %365 : vector<2x128xf32>
    %367 = arith.mulf %358, %309 : vector<2x128xf32>
    %368 = arith.mulf %352, %360 : vector<2x128xf32>
    %369 = arith.addf %367, %368 : vector<2x128xf32>
    %370 = math.tanh %369 : vector<2x128xf32>
    %371 = arith.mulf %366, %370 : vector<2x128xf32>
    %cst_87 = arith.constant dense<0.000000e+00> : vector<2x512xf32>
    %372 = tpu.matmul %371, %215, %cst_87 {dimension_numbers = #tpu.dot_dimension_numbers<[1], [0], [0], [1], [0, 0, 1, 1], [], []>} : vector<2x128xf32>, vector<128x512xf32>, vector<2x512xf32> -> vector<2x512xf32>
    %cst_88 = arith.constant dense<0.000000e+00> : vector<2x512xf32>
    %373 = tpu.matmul %341, %216, %cst_88 {dimension_numbers = #tpu.dot_dimension_numbers<[1], [0], [0], [1], [0, 0, 1, 1], [], []>} : vector<2x128xf32>, vector<128x512xf32>, vector<2x512xf32> -> vector<2x512xf32>
    %374 = arith.addf %372, %373 : vector<2x512xf32>
    %375 = vector.broadcast %217 : vector<1x512xf32> to vector<2x512xf32>
    %376 = arith.addf %374, %375 : vector<2x512xf32>
    %377 = vector.extract_strided_slice %376 {offsets = [0, 0], sizes = [2, 128], strides = [1, 1]} : vector<2x512xf32> to vector<2x128xf32>
    %378 = arith.negf %377 : vector<2x128xf32>
    %379 = math.exp %378 : vector<2x128xf32>
    %cst_89 = arith.constant 1.000000e+00 : f32
    %380 = vector.broadcast %cst_89 : f32 to vector<2x128xf32>
    %381 = arith.addf %380, %379 : vector<2x128xf32>
    %382 = arith.divf %380, %381 : vector<2x128xf32>
    %383 = vector.extract_strided_slice %376 {offsets = [0, 128], sizes = [2, 128], strides = [1, 1]} : vector<2x512xf32> to vector<2x128xf32>
    %384 = arith.negf %383 : vector<2x128xf32>
    %385 = math.exp %384 : vector<2x128xf32>
    %cst_90 = arith.constant 1.000000e+00 : f32
    %386 = vector.broadcast %cst_90 : f32 to vector<2x128xf32>
    %387 = arith.addf %386, %385 : vector<2x128xf32>
    %388 = arith.divf %386, %387 : vector<2x128xf32>
    %389 = vector.extract_strided_slice %376 {offsets = [0, 256], sizes = [2, 128], strides = [1, 1]} : vector<2x512xf32> to vector<2x128xf32>
    %390 = math.tanh %389 : vector<2x128xf32>
    %391 = vector.extract_strided_slice %376 {offsets = [0, 384], sizes = [2, 128], strides = [1, 1]} : vector<2x512xf32> to vector<2x128xf32>
    %392 = arith.negf %391 : vector<2x128xf32>
    %393 = math.exp %392 : vector<2x128xf32>
    %cst_91 = arith.constant 1.000000e+00 : f32
    %394 = vector.broadcast %cst_91 : f32 to vector<2x128xf32>
    %395 = arith.addf %394, %393 : vector<2x128xf32>
    %396 = arith.divf %394, %395 : vector<2x128xf32>
    %397 = arith.mulf %388, %339 : vector<2x128xf32>
    %398 = arith.mulf %382, %390 : vector<2x128xf32>
    %399 = arith.addf %397, %398 : vector<2x128xf32>
    %400 = math.tanh %399 : vector<2x128xf32>
    %401 = arith.mulf %396, %400 : vector<2x128xf32>
    %402 = vector.extract_strided_slice %209 {offsets = [3, 0], sizes = [1, 512], strides = [1, 1]} : vector<16x512xf32> to vector<1x512xf32>
    %403 = vector.extract_strided_slice %213 {offsets = [3, 0], sizes = [1, 512], strides = [1, 1]} : vector<16x512xf32> to vector<1x512xf32>
    %404 = tpu.concatenate %402, %403 in 0 : vector<1x512xf32>, vector<1x512xf32> -> vector<2x512xf32>
    %cst_92 = arith.constant dense<0.000000e+00> : vector<2x512xf32>
    %405 = tpu.matmul %371, %214, %cst_92 {dimension_numbers = #tpu.dot_dimension_numbers<[1], [0], [0], [1], [0, 0, 1, 1], [], []>} : vector<2x128xf32>, vector<128x512xf32>, vector<2x512xf32> -> vector<2x512xf32>
    %406 = arith.addf %404, %405 : vector<2x512xf32>
    %407 = vector.extract_strided_slice %406 {offsets = [0, 0], sizes = [2, 128], strides = [1, 1]} : vector<2x512xf32> to vector<2x128xf32>
    %408 = arith.negf %407 : vector<2x128xf32>
    %409 = math.exp %408 : vector<2x128xf32>
    %cst_93 = arith.constant 1.000000e+00 : f32
    %410 = vector.broadcast %cst_93 : f32 to vector<2x128xf32>
    %411 = arith.addf %410, %409 : vector<2x128xf32>
    %412 = arith.divf %410, %411 : vector<2x128xf32>
    %413 = vector.extract_strided_slice %406 {offsets = [0, 128], sizes = [2, 128], strides = [1, 1]} : vector<2x512xf32> to vector<2x128xf32>
    %414 = arith.negf %413 : vector<2x128xf32>
    %415 = math.exp %414 : vector<2x128xf32>
    %cst_94 = arith.constant 1.000000e+00 : f32
    %416 = vector.broadcast %cst_94 : f32 to vector<2x128xf32>
    %417 = arith.addf %416, %415 : vector<2x128xf32>
    %418 = arith.divf %416, %417 : vector<2x128xf32>
    %419 = vector.extract_strided_slice %406 {offsets = [0, 256], sizes = [2, 128], strides = [1, 1]} : vector<2x512xf32> to vector<2x128xf32>
    %420 = math.tanh %419 : vector<2x128xf32>
    %421 = vector.extract_strided_slice %406 {offsets = [0, 384], sizes = [2, 128], strides = [1, 1]} : vector<2x512xf32> to vector<2x128xf32>
    %422 = arith.negf %421 : vector<2x128xf32>
    %423 = math.exp %422 : vector<2x128xf32>
    %cst_95 = arith.constant 1.000000e+00 : f32
    %424 = vector.broadcast %cst_95 : f32 to vector<2x128xf32>
    %425 = arith.addf %424, %423 : vector<2x128xf32>
    %426 = arith.divf %424, %425 : vector<2x128xf32>
    %427 = arith.mulf %418, %369 : vector<2x128xf32>
    %428 = arith.mulf %412, %420 : vector<2x128xf32>
    %429 = arith.addf %427, %428 : vector<2x128xf32>
    %430 = math.tanh %429 : vector<2x128xf32>
    %431 = arith.mulf %426, %430 : vector<2x128xf32>
    %cst_96 = arith.constant dense<0.000000e+00> : vector<2x512xf32>
    %432 = tpu.matmul %431, %215, %cst_96 {dimension_numbers = #tpu.dot_dimension_numbers<[1], [0], [0], [1], [0, 0, 1, 1], [], []>} : vector<2x128xf32>, vector<128x512xf32>, vector<2x512xf32> -> vector<2x512xf32>
    %cst_97 = arith.constant dense<0.000000e+00> : vector<2x512xf32>
    %433 = tpu.matmul %401, %216, %cst_97 {dimension_numbers = #tpu.dot_dimension_numbers<[1], [0], [0], [1], [0, 0, 1, 1], [], []>} : vector<2x128xf32>, vector<128x512xf32>, vector<2x512xf32> -> vector<2x512xf32>
    %434 = arith.addf %432, %433 : vector<2x512xf32>
    %435 = vector.broadcast %217 : vector<1x512xf32> to vector<2x512xf32>
    %436 = arith.addf %434, %435 : vector<2x512xf32>
    %437 = vector.extract_strided_slice %436 {offsets = [0, 0], sizes = [2, 128], strides = [1, 1]} : vector<2x512xf32> to vector<2x128xf32>
    %438 = arith.negf %437 : vector<2x128xf32>
    %439 = math.exp %438 : vector<2x128xf32>
    %cst_98 = arith.constant 1.000000e+00 : f32
    %440 = vector.broadcast %cst_98 : f32 to vector<2x128xf32>
    %441 = arith.addf %440, %439 : vector<2x128xf32>
    %442 = arith.divf %440, %441 : vector<2x128xf32>
    %443 = vector.extract_strided_slice %436 {offsets = [0, 128], sizes = [2, 128], strides = [1, 1]} : vector<2x512xf32> to vector<2x128xf32>
    %444 = arith.negf %443 : vector<2x128xf32>
    %445 = math.exp %444 : vector<2x128xf32>
    %cst_99 = arith.constant 1.000000e+00 : f32
    %446 = vector.broadcast %cst_99 : f32 to vector<2x128xf32>
    %447 = arith.addf %446, %445 : vector<2x128xf32>
    %448 = arith.divf %446, %447 : vector<2x128xf32>
    %449 = vector.extract_strided_slice %436 {offsets = [0, 256], sizes = [2, 128], strides = [1, 1]} : vector<2x512xf32> to vector<2x128xf32>
    %450 = math.tanh %449 : vector<2x128xf32>
    %451 = vector.extract_strided_slice %436 {offsets = [0, 384], sizes = [2, 128], strides = [1, 1]} : vector<2x512xf32> to vector<2x128xf32>
    %452 = arith.negf %451 : vector<2x128xf32>
    %453 = math.exp %452 : vector<2x128xf32>
    %cst_100 = arith.constant 1.000000e+00 : f32
    %454 = vector.broadcast %cst_100 : f32 to vector<2x128xf32>
    %455 = arith.addf %454, %453 : vector<2x128xf32>
    %456 = arith.divf %454, %455 : vector<2x128xf32>
    %457 = arith.mulf %448, %399 : vector<2x128xf32>
    %458 = arith.mulf %442, %450 : vector<2x128xf32>
    %459 = arith.addf %457, %458 : vector<2x128xf32>
    %460 = math.tanh %459 : vector<2x128xf32>
    %461 = arith.mulf %456, %460 : vector<2x128xf32>
    %462 = vector.extract_strided_slice %209 {offsets = [4, 0], sizes = [1, 512], strides = [1, 1]} : vector<16x512xf32> to vector<1x512xf32>
    %463 = vector.extract_strided_slice %213 {offsets = [4, 0], sizes = [1, 512], strides = [1, 1]} : vector<16x512xf32> to vector<1x512xf32>
    %464 = tpu.concatenate %462, %463 in 0 : vector<1x512xf32>, vector<1x512xf32> -> vector<2x512xf32>
    %cst_101 = arith.constant dense<0.000000e+00> : vector<2x512xf32>
    %465 = tpu.matmul %431, %214, %cst_101 {dimension_numbers = #tpu.dot_dimension_numbers<[1], [0], [0], [1], [0, 0, 1, 1], [], []>} : vector<2x128xf32>, vector<128x512xf32>, vector<2x512xf32> -> vector<2x512xf32>
    %466 = arith.addf %464, %465 : vector<2x512xf32>
    %467 = vector.extract_strided_slice %466 {offsets = [0, 0], sizes = [2, 128], strides = [1, 1]} : vector<2x512xf32> to vector<2x128xf32>
    %468 = arith.negf %467 : vector<2x128xf32>
    %469 = math.exp %468 : vector<2x128xf32>
    %cst_102 = arith.constant 1.000000e+00 : f32
    %470 = vector.broadcast %cst_102 : f32 to vector<2x128xf32>
    %471 = arith.addf %470, %469 : vector<2x128xf32>
    %472 = arith.divf %470, %471 : vector<2x128xf32>
    %473 = vector.extract_strided_slice %466 {offsets = [0, 128], sizes = [2, 128], strides = [1, 1]} : vector<2x512xf32> to vector<2x128xf32>
    %474 = arith.negf %473 : vector<2x128xf32>
    %475 = math.exp %474 : vector<2x128xf32>
    %cst_103 = arith.constant 1.000000e+00 : f32
    %476 = vector.broadcast %cst_103 : f32 to vector<2x128xf32>
    %477 = arith.addf %476, %475 : vector<2x128xf32>
    %478 = arith.divf %476, %477 : vector<2x128xf32>
    %479 = vector.extract_strided_slice %466 {offsets = [0, 256], sizes = [2, 128], strides = [1, 1]} : vector<2x512xf32> to vector<2x128xf32>
    %480 = math.tanh %479 : vector<2x128xf32>
    %481 = vector.extract_strided_slice %466 {offsets = [0, 384], sizes = [2, 128], strides = [1, 1]} : vector<2x512xf32> to vector<2x128xf32>
    %482 = arith.negf %481 : vector<2x128xf32>
    %483 = math.exp %482 : vector<2x128xf32>
    %cst_104 = arith.constant 1.000000e+00 : f32
    %484 = vector.broadcast %cst_104 : f32 to vector<2x128xf32>
    %485 = arith.addf %484, %483 : vector<2x128xf32>
    %486 = arith.divf %484, %485 : vector<2x128xf32>
    %487 = arith.mulf %478, %429 : vector<2x128xf32>
    %488 = arith.mulf %472, %480 : vector<2x128xf32>
    %489 = arith.addf %487, %488 : vector<2x128xf32>
    %490 = math.tanh %489 : vector<2x128xf32>
    %491 = arith.mulf %486, %490 : vector<2x128xf32>
    %cst_105 = arith.constant dense<0.000000e+00> : vector<2x512xf32>
    %492 = tpu.matmul %491, %215, %cst_105 {dimension_numbers = #tpu.dot_dimension_numbers<[1], [0], [0], [1], [0, 0, 1, 1], [], []>} : vector<2x128xf32>, vector<128x512xf32>, vector<2x512xf32> -> vector<2x512xf32>
    %cst_106 = arith.constant dense<0.000000e+00> : vector<2x512xf32>
    %493 = tpu.matmul %461, %216, %cst_106 {dimension_numbers = #tpu.dot_dimension_numbers<[1], [0], [0], [1], [0, 0, 1, 1], [], []>} : vector<2x128xf32>, vector<128x512xf32>, vector<2x512xf32> -> vector<2x512xf32>
    %494 = arith.addf %492, %493 : vector<2x512xf32>
    %495 = vector.broadcast %217 : vector<1x512xf32> to vector<2x512xf32>
    %496 = arith.addf %494, %495 : vector<2x512xf32>
    %497 = vector.extract_strided_slice %496 {offsets = [0, 0], sizes = [2, 128], strides = [1, 1]} : vector<2x512xf32> to vector<2x128xf32>
    %498 = arith.negf %497 : vector<2x128xf32>
    %499 = math.exp %498 : vector<2x128xf32>
    %cst_107 = arith.constant 1.000000e+00 : f32
    %500 = vector.broadcast %cst_107 : f32 to vector<2x128xf32>
    %501 = arith.addf %500, %499 : vector<2x128xf32>
    %502 = arith.divf %500, %501 : vector<2x128xf32>
    %503 = vector.extract_strided_slice %496 {offsets = [0, 128], sizes = [2, 128], strides = [1, 1]} : vector<2x512xf32> to vector<2x128xf32>
    %504 = arith.negf %503 : vector<2x128xf32>
    %505 = math.exp %504 : vector<2x128xf32>
    %cst_108 = arith.constant 1.000000e+00 : f32
    %506 = vector.broadcast %cst_108 : f32 to vector<2x128xf32>
    %507 = arith.addf %506, %505 : vector<2x128xf32>
    %508 = arith.divf %506, %507 : vector<2x128xf32>
    %509 = vector.extract_strided_slice %496 {offsets = [0, 256], sizes = [2, 128], strides = [1, 1]} : vector<2x512xf32> to vector<2x128xf32>
    %510 = math.tanh %509 : vector<2x128xf32>
    %511 = vector.extract_strided_slice %496 {offsets = [0, 384], sizes = [2, 128], strides = [1, 1]} : vector<2x512xf32> to vector<2x128xf32>
    %512 = arith.negf %511 : vector<2x128xf32>
    %513 = math.exp %512 : vector<2x128xf32>
    %cst_109 = arith.constant 1.000000e+00 : f32
    %514 = vector.broadcast %cst_109 : f32 to vector<2x128xf32>
    %515 = arith.addf %514, %513 : vector<2x128xf32>
    %516 = arith.divf %514, %515 : vector<2x128xf32>
    %517 = arith.mulf %508, %459 : vector<2x128xf32>
    %518 = arith.mulf %502, %510 : vector<2x128xf32>
    %519 = arith.addf %517, %518 : vector<2x128xf32>
    %520 = math.tanh %519 : vector<2x128xf32>
    %521 = arith.mulf %516, %520 : vector<2x128xf32>
    %522 = vector.extract_strided_slice %209 {offsets = [5, 0], sizes = [1, 512], strides = [1, 1]} : vector<16x512xf32> to vector<1x512xf32>
    %523 = vector.extract_strided_slice %213 {offsets = [5, 0], sizes = [1, 512], strides = [1, 1]} : vector<16x512xf32> to vector<1x512xf32>
    %524 = tpu.concatenate %522, %523 in 0 : vector<1x512xf32>, vector<1x512xf32> -> vector<2x512xf32>
    %cst_110 = arith.constant dense<0.000000e+00> : vector<2x512xf32>
    %525 = tpu.matmul %491, %214, %cst_110 {dimension_numbers = #tpu.dot_dimension_numbers<[1], [0], [0], [1], [0, 0, 1, 1], [], []>} : vector<2x128xf32>, vector<128x512xf32>, vector<2x512xf32> -> vector<2x512xf32>
    %526 = arith.addf %524, %525 : vector<2x512xf32>
    %527 = vector.extract_strided_slice %526 {offsets = [0, 0], sizes = [2, 128], strides = [1, 1]} : vector<2x512xf32> to vector<2x128xf32>
    %528 = arith.negf %527 : vector<2x128xf32>
    %529 = math.exp %528 : vector<2x128xf32>
    %cst_111 = arith.constant 1.000000e+00 : f32
    %530 = vector.broadcast %cst_111 : f32 to vector<2x128xf32>
    %531 = arith.addf %530, %529 : vector<2x128xf32>
    %532 = arith.divf %530, %531 : vector<2x128xf32>
    %533 = vector.extract_strided_slice %526 {offsets = [0, 128], sizes = [2, 128], strides = [1, 1]} : vector<2x512xf32> to vector<2x128xf32>
    %534 = arith.negf %533 : vector<2x128xf32>
    %535 = math.exp %534 : vector<2x128xf32>
    %cst_112 = arith.constant 1.000000e+00 : f32
    %536 = vector.broadcast %cst_112 : f32 to vector<2x128xf32>
    %537 = arith.addf %536, %535 : vector<2x128xf32>
    %538 = arith.divf %536, %537 : vector<2x128xf32>
    %539 = vector.extract_strided_slice %526 {offsets = [0, 256], sizes = [2, 128], strides = [1, 1]} : vector<2x512xf32> to vector<2x128xf32>
    %540 = math.tanh %539 : vector<2x128xf32>
    %541 = vector.extract_strided_slice %526 {offsets = [0, 384], sizes = [2, 128], strides = [1, 1]} : vector<2x512xf32> to vector<2x128xf32>
    %542 = arith.negf %541 : vector<2x128xf32>
    %543 = math.exp %542 : vector<2x128xf32>
    %cst_113 = arith.constant 1.000000e+00 : f32
    %544 = vector.broadcast %cst_113 : f32 to vector<2x128xf32>
    %545 = arith.addf %544, %543 : vector<2x128xf32>
    %546 = arith.divf %544, %545 : vector<2x128xf32>
    %547 = arith.mulf %538, %489 : vector<2x128xf32>
    %548 = arith.mulf %532, %540 : vector<2x128xf32>
    %549 = arith.addf %547, %548 : vector<2x128xf32>
    %550 = math.tanh %549 : vector<2x128xf32>
    %551 = arith.mulf %546, %550 : vector<2x128xf32>
    %cst_114 = arith.constant dense<0.000000e+00> : vector<2x512xf32>
    %552 = tpu.matmul %551, %215, %cst_114 {dimension_numbers = #tpu.dot_dimension_numbers<[1], [0], [0], [1], [0, 0, 1, 1], [], []>} : vector<2x128xf32>, vector<128x512xf32>, vector<2x512xf32> -> vector<2x512xf32>
    %cst_115 = arith.constant dense<0.000000e+00> : vector<2x512xf32>
    %553 = tpu.matmul %521, %216, %cst_115 {dimension_numbers = #tpu.dot_dimension_numbers<[1], [0], [0], [1], [0, 0, 1, 1], [], []>} : vector<2x128xf32>, vector<128x512xf32>, vector<2x512xf32> -> vector<2x512xf32>
    %554 = arith.addf %552, %553 : vector<2x512xf32>
    %555 = vector.broadcast %217 : vector<1x512xf32> to vector<2x512xf32>
    %556 = arith.addf %554, %555 : vector<2x512xf32>
    %557 = vector.extract_strided_slice %556 {offsets = [0, 0], sizes = [2, 128], strides = [1, 1]} : vector<2x512xf32> to vector<2x128xf32>
    %558 = arith.negf %557 : vector<2x128xf32>
    %559 = math.exp %558 : vector<2x128xf32>
    %cst_116 = arith.constant 1.000000e+00 : f32
    %560 = vector.broadcast %cst_116 : f32 to vector<2x128xf32>
    %561 = arith.addf %560, %559 : vector<2x128xf32>
    %562 = arith.divf %560, %561 : vector<2x128xf32>
    %563 = vector.extract_strided_slice %556 {offsets = [0, 128], sizes = [2, 128], strides = [1, 1]} : vector<2x512xf32> to vector<2x128xf32>
    %564 = arith.negf %563 : vector<2x128xf32>
    %565 = math.exp %564 : vector<2x128xf32>
    %cst_117 = arith.constant 1.000000e+00 : f32
    %566 = vector.broadcast %cst_117 : f32 to vector<2x128xf32>
    %567 = arith.addf %566, %565 : vector<2x128xf32>
    %568 = arith.divf %566, %567 : vector<2x128xf32>
    %569 = vector.extract_strided_slice %556 {offsets = [0, 256], sizes = [2, 128], strides = [1, 1]} : vector<2x512xf32> to vector<2x128xf32>
    %570 = math.tanh %569 : vector<2x128xf32>
    %571 = vector.extract_strided_slice %556 {offsets = [0, 384], sizes = [2, 128], strides = [1, 1]} : vector<2x512xf32> to vector<2x128xf32>
    %572 = arith.negf %571 : vector<2x128xf32>
    %573 = math.exp %572 : vector<2x128xf32>
    %cst_118 = arith.constant 1.000000e+00 : f32
    %574 = vector.broadcast %cst_118 : f32 to vector<2x128xf32>
    %575 = arith.addf %574, %573 : vector<2x128xf32>
    %576 = arith.divf %574, %575 : vector<2x128xf32>
    %577 = arith.mulf %568, %519 : vector<2x128xf32>
    %578 = arith.mulf %562, %570 : vector<2x128xf32>
    %579 = arith.addf %577, %578 : vector<2x128xf32>
    %580 = math.tanh %579 : vector<2x128xf32>
    %581 = arith.mulf %576, %580 : vector<2x128xf32>
    %582 = vector.extract_strided_slice %209 {offsets = [6, 0], sizes = [1, 512], strides = [1, 1]} : vector<16x512xf32> to vector<1x512xf32>
    %583 = vector.extract_strided_slice %213 {offsets = [6, 0], sizes = [1, 512], strides = [1, 1]} : vector<16x512xf32> to vector<1x512xf32>
    %584 = tpu.concatenate %582, %583 in 0 : vector<1x512xf32>, vector<1x512xf32> -> vector<2x512xf32>
    %cst_119 = arith.constant dense<0.000000e+00> : vector<2x512xf32>
    %585 = tpu.matmul %551, %214, %cst_119 {dimension_numbers = #tpu.dot_dimension_numbers<[1], [0], [0], [1], [0, 0, 1, 1], [], []>} : vector<2x128xf32>, vector<128x512xf32>, vector<2x512xf32> -> vector<2x512xf32>
    %586 = arith.addf %584, %585 : vector<2x512xf32>
    %587 = vector.extract_strided_slice %586 {offsets = [0, 0], sizes = [2, 128], strides = [1, 1]} : vector<2x512xf32> to vector<2x128xf32>
    %588 = arith.negf %587 : vector<2x128xf32>
    %589 = math.exp %588 : vector<2x128xf32>
    %cst_120 = arith.constant 1.000000e+00 : f32
    %590 = vector.broadcast %cst_120 : f32 to vector<2x128xf32>
    %591 = arith.addf %590, %589 : vector<2x128xf32>
    %592 = arith.divf %590, %591 : vector<2x128xf32>
    %593 = vector.extract_strided_slice %586 {offsets = [0, 128], sizes = [2, 128], strides = [1, 1]} : vector<2x512xf32> to vector<2x128xf32>
    %594 = arith.negf %593 : vector<2x128xf32>
    %595 = math.exp %594 : vector<2x128xf32>
    %cst_121 = arith.constant 1.000000e+00 : f32
    %596 = vector.broadcast %cst_121 : f32 to vector<2x128xf32>
    %597 = arith.addf %596, %595 : vector<2x128xf32>
    %598 = arith.divf %596, %597 : vector<2x128xf32>
    %599 = vector.extract_strided_slice %586 {offsets = [0, 256], sizes = [2, 128], strides = [1, 1]} : vector<2x512xf32> to vector<2x128xf32>
    %600 = math.tanh %599 : vector<2x128xf32>
    %601 = vector.extract_strided_slice %586 {offsets = [0, 384], sizes = [2, 128], strides = [1, 1]} : vector<2x512xf32> to vector<2x128xf32>
    %602 = arith.negf %601 : vector<2x128xf32>
    %603 = math.exp %602 : vector<2x128xf32>
    %cst_122 = arith.constant 1.000000e+00 : f32
    %604 = vector.broadcast %cst_122 : f32 to vector<2x128xf32>
    %605 = arith.addf %604, %603 : vector<2x128xf32>
    %606 = arith.divf %604, %605 : vector<2x128xf32>
    %607 = arith.mulf %598, %549 : vector<2x128xf32>
    %608 = arith.mulf %592, %600 : vector<2x128xf32>
    %609 = arith.addf %607, %608 : vector<2x128xf32>
    %610 = math.tanh %609 : vector<2x128xf32>
    %611 = arith.mulf %606, %610 : vector<2x128xf32>
    %cst_123 = arith.constant dense<0.000000e+00> : vector<2x512xf32>
    %612 = tpu.matmul %611, %215, %cst_123 {dimension_numbers = #tpu.dot_dimension_numbers<[1], [0], [0], [1], [0, 0, 1, 1], [], []>} : vector<2x128xf32>, vector<128x512xf32>, vector<2x512xf32> -> vector<2x512xf32>
    %cst_124 = arith.constant dense<0.000000e+00> : vector<2x512xf32>
    %613 = tpu.matmul %581, %216, %cst_124 {dimension_numbers = #tpu.dot_dimension_numbers<[1], [0], [0], [1], [0, 0, 1, 1], [], []>} : vector<2x128xf32>, vector<128x512xf32>, vector<2x512xf32> -> vector<2x512xf32>
    %614 = arith.addf %612, %613 : vector<2x512xf32>
    %615 = vector.broadcast %217 : vector<1x512xf32> to vector<2x512xf32>
    %616 = arith.addf %614, %615 : vector<2x512xf32>
    %617 = vector.extract_strided_slice %616 {offsets = [0, 0], sizes = [2, 128], strides = [1, 1]} : vector<2x512xf32> to vector<2x128xf32>
    %618 = arith.negf %617 : vector<2x128xf32>
    %619 = math.exp %618 : vector<2x128xf32>
    %cst_125 = arith.constant 1.000000e+00 : f32
    %620 = vector.broadcast %cst_125 : f32 to vector<2x128xf32>
    %621 = arith.addf %620, %619 : vector<2x128xf32>
    %622 = arith.divf %620, %621 : vector<2x128xf32>
    %623 = vector.extract_strided_slice %616 {offsets = [0, 128], sizes = [2, 128], strides = [1, 1]} : vector<2x512xf32> to vector<2x128xf32>
    %624 = arith.negf %623 : vector<2x128xf32>
    %625 = math.exp %624 : vector<2x128xf32>
    %cst_126 = arith.constant 1.000000e+00 : f32
    %626 = vector.broadcast %cst_126 : f32 to vector<2x128xf32>
    %627 = arith.addf %626, %625 : vector<2x128xf32>
    %628 = arith.divf %626, %627 : vector<2x128xf32>
    %629 = vector.extract_strided_slice %616 {offsets = [0, 256], sizes = [2, 128], strides = [1, 1]} : vector<2x512xf32> to vector<2x128xf32>
    %630 = math.tanh %629 : vector<2x128xf32>
    %631 = vector.extract_strided_slice %616 {offsets = [0, 384], sizes = [2, 128], strides = [1, 1]} : vector<2x512xf32> to vector<2x128xf32>
    %632 = arith.negf %631 : vector<2x128xf32>
    %633 = math.exp %632 : vector<2x128xf32>
    %cst_127 = arith.constant 1.000000e+00 : f32
    %634 = vector.broadcast %cst_127 : f32 to vector<2x128xf32>
    %635 = arith.addf %634, %633 : vector<2x128xf32>
    %636 = arith.divf %634, %635 : vector<2x128xf32>
    %637 = arith.mulf %628, %579 : vector<2x128xf32>
    %638 = arith.mulf %622, %630 : vector<2x128xf32>
    %639 = arith.addf %637, %638 : vector<2x128xf32>
    %640 = math.tanh %639 : vector<2x128xf32>
    %641 = arith.mulf %636, %640 : vector<2x128xf32>
    %642 = vector.extract_strided_slice %209 {offsets = [7, 0], sizes = [1, 512], strides = [1, 1]} : vector<16x512xf32> to vector<1x512xf32>
    %643 = vector.extract_strided_slice %213 {offsets = [7, 0], sizes = [1, 512], strides = [1, 1]} : vector<16x512xf32> to vector<1x512xf32>
    %644 = tpu.concatenate %642, %643 in 0 : vector<1x512xf32>, vector<1x512xf32> -> vector<2x512xf32>
    %cst_128 = arith.constant dense<0.000000e+00> : vector<2x512xf32>
    %645 = tpu.matmul %611, %214, %cst_128 {dimension_numbers = #tpu.dot_dimension_numbers<[1], [0], [0], [1], [0, 0, 1, 1], [], []>} : vector<2x128xf32>, vector<128x512xf32>, vector<2x512xf32> -> vector<2x512xf32>
    %646 = arith.addf %644, %645 : vector<2x512xf32>
    %647 = vector.extract_strided_slice %646 {offsets = [0, 0], sizes = [2, 128], strides = [1, 1]} : vector<2x512xf32> to vector<2x128xf32>
    %648 = arith.negf %647 : vector<2x128xf32>
    %649 = math.exp %648 : vector<2x128xf32>
    %cst_129 = arith.constant 1.000000e+00 : f32
    %650 = vector.broadcast %cst_129 : f32 to vector<2x128xf32>
    %651 = arith.addf %650, %649 : vector<2x128xf32>
    %652 = arith.divf %650, %651 : vector<2x128xf32>
    %653 = vector.extract_strided_slice %646 {offsets = [0, 128], sizes = [2, 128], strides = [1, 1]} : vector<2x512xf32> to vector<2x128xf32>
    %654 = arith.negf %653 : vector<2x128xf32>
    %655 = math.exp %654 : vector<2x128xf32>
    %cst_130 = arith.constant 1.000000e+00 : f32
    %656 = vector.broadcast %cst_130 : f32 to vector<2x128xf32>
    %657 = arith.addf %656, %655 : vector<2x128xf32>
    %658 = arith.divf %656, %657 : vector<2x128xf32>
    %659 = vector.extract_strided_slice %646 {offsets = [0, 256], sizes = [2, 128], strides = [1, 1]} : vector<2x512xf32> to vector<2x128xf32>
    %660 = math.tanh %659 : vector<2x128xf32>
    %661 = vector.extract_strided_slice %646 {offsets = [0, 384], sizes = [2, 128], strides = [1, 1]} : vector<2x512xf32> to vector<2x128xf32>
    %662 = arith.negf %661 : vector<2x128xf32>
    %663 = math.exp %662 : vector<2x128xf32>
    %cst_131 = arith.constant 1.000000e+00 : f32
    %664 = vector.broadcast %cst_131 : f32 to vector<2x128xf32>
    %665 = arith.addf %664, %663 : vector<2x128xf32>
    %666 = arith.divf %664, %665 : vector<2x128xf32>
    %667 = arith.mulf %658, %609 : vector<2x128xf32>
    %668 = arith.mulf %652, %660 : vector<2x128xf32>
    %669 = arith.addf %667, %668 : vector<2x128xf32>
    %670 = math.tanh %669 : vector<2x128xf32>
    %671 = arith.mulf %666, %670 : vector<2x128xf32>
    %cst_132 = arith.constant dense<0.000000e+00> : vector<2x512xf32>
    %672 = tpu.matmul %671, %215, %cst_132 {dimension_numbers = #tpu.dot_dimension_numbers<[1], [0], [0], [1], [0, 0, 1, 1], [], []>} : vector<2x128xf32>, vector<128x512xf32>, vector<2x512xf32> -> vector<2x512xf32>
    %cst_133 = arith.constant dense<0.000000e+00> : vector<2x512xf32>
    %673 = tpu.matmul %641, %216, %cst_133 {dimension_numbers = #tpu.dot_dimension_numbers<[1], [0], [0], [1], [0, 0, 1, 1], [], []>} : vector<2x128xf32>, vector<128x512xf32>, vector<2x512xf32> -> vector<2x512xf32>
    %674 = arith.addf %672, %673 : vector<2x512xf32>
    %675 = vector.broadcast %217 : vector<1x512xf32> to vector<2x512xf32>
    %676 = arith.addf %674, %675 : vector<2x512xf32>
    %677 = vector.extract_strided_slice %676 {offsets = [0, 0], sizes = [2, 128], strides = [1, 1]} : vector<2x512xf32> to vector<2x128xf32>
    %678 = arith.negf %677 : vector<2x128xf32>
    %679 = math.exp %678 : vector<2x128xf32>
    %cst_134 = arith.constant 1.000000e+00 : f32
    %680 = vector.broadcast %cst_134 : f32 to vector<2x128xf32>
    %681 = arith.addf %680, %679 : vector<2x128xf32>
    %682 = arith.divf %680, %681 : vector<2x128xf32>
    %683 = vector.extract_strided_slice %676 {offsets = [0, 128], sizes = [2, 128], strides = [1, 1]} : vector<2x512xf32> to vector<2x128xf32>
    %684 = arith.negf %683 : vector<2x128xf32>
    %685 = math.exp %684 : vector<2x128xf32>
    %cst_135 = arith.constant 1.000000e+00 : f32
    %686 = vector.broadcast %cst_135 : f32 to vector<2x128xf32>
    %687 = arith.addf %686, %685 : vector<2x128xf32>
    %688 = arith.divf %686, %687 : vector<2x128xf32>
    %689 = vector.extract_strided_slice %676 {offsets = [0, 256], sizes = [2, 128], strides = [1, 1]} : vector<2x512xf32> to vector<2x128xf32>
    %690 = math.tanh %689 : vector<2x128xf32>
    %691 = vector.extract_strided_slice %676 {offsets = [0, 384], sizes = [2, 128], strides = [1, 1]} : vector<2x512xf32> to vector<2x128xf32>
    %692 = arith.negf %691 : vector<2x128xf32>
    %693 = math.exp %692 : vector<2x128xf32>
    %cst_136 = arith.constant 1.000000e+00 : f32
    %694 = vector.broadcast %cst_136 : f32 to vector<2x128xf32>
    %695 = arith.addf %694, %693 : vector<2x128xf32>
    %696 = arith.divf %694, %695 : vector<2x128xf32>
    %697 = arith.mulf %688, %639 : vector<2x128xf32>
    %698 = arith.mulf %682, %690 : vector<2x128xf32>
    %699 = arith.addf %697, %698 : vector<2x128xf32>
    %700 = math.tanh %699 : vector<2x128xf32>
    %701 = arith.mulf %696, %700 : vector<2x128xf32>
    %702 = vector.extract_strided_slice %209 {offsets = [8, 0], sizes = [1, 512], strides = [1, 1]} : vector<16x512xf32> to vector<1x512xf32>
    %703 = vector.extract_strided_slice %213 {offsets = [8, 0], sizes = [1, 512], strides = [1, 1]} : vector<16x512xf32> to vector<1x512xf32>
    %704 = tpu.concatenate %702, %703 in 0 : vector<1x512xf32>, vector<1x512xf32> -> vector<2x512xf32>
    %cst_137 = arith.constant dense<0.000000e+00> : vector<2x512xf32>
    %705 = tpu.matmul %671, %214, %cst_137 {dimension_numbers = #tpu.dot_dimension_numbers<[1], [0], [0], [1], [0, 0, 1, 1], [], []>} : vector<2x128xf32>, vector<128x512xf32>, vector<2x512xf32> -> vector<2x512xf32>
    %706 = arith.addf %704, %705 : vector<2x512xf32>
    %707 = vector.extract_strided_slice %706 {offsets = [0, 0], sizes = [2, 128], strides = [1, 1]} : vector<2x512xf32> to vector<2x128xf32>
    %708 = arith.negf %707 : vector<2x128xf32>
    %709 = math.exp %708 : vector<2x128xf32>
    %cst_138 = arith.constant 1.000000e+00 : f32
    %710 = vector.broadcast %cst_138 : f32 to vector<2x128xf32>
    %711 = arith.addf %710, %709 : vector<2x128xf32>
    %712 = arith.divf %710, %711 : vector<2x128xf32>
    %713 = vector.extract_strided_slice %706 {offsets = [0, 128], sizes = [2, 128], strides = [1, 1]} : vector<2x512xf32> to vector<2x128xf32>
    %714 = arith.negf %713 : vector<2x128xf32>
    %715 = math.exp %714 : vector<2x128xf32>
    %cst_139 = arith.constant 1.000000e+00 : f32
    %716 = vector.broadcast %cst_139 : f32 to vector<2x128xf32>
    %717 = arith.addf %716, %715 : vector<2x128xf32>
    %718 = arith.divf %716, %717 : vector<2x128xf32>
    %719 = vector.extract_strided_slice %706 {offsets = [0, 256], sizes = [2, 128], strides = [1, 1]} : vector<2x512xf32> to vector<2x128xf32>
    %720 = math.tanh %719 : vector<2x128xf32>
    %721 = vector.extract_strided_slice %706 {offsets = [0, 384], sizes = [2, 128], strides = [1, 1]} : vector<2x512xf32> to vector<2x128xf32>
    %722 = arith.negf %721 : vector<2x128xf32>
    %723 = math.exp %722 : vector<2x128xf32>
    %cst_140 = arith.constant 1.000000e+00 : f32
    %724 = vector.broadcast %cst_140 : f32 to vector<2x128xf32>
    %725 = arith.addf %724, %723 : vector<2x128xf32>
    %726 = arith.divf %724, %725 : vector<2x128xf32>
    %727 = arith.mulf %718, %669 : vector<2x128xf32>
    %728 = arith.mulf %712, %720 : vector<2x128xf32>
    %729 = arith.addf %727, %728 : vector<2x128xf32>
    %730 = math.tanh %729 : vector<2x128xf32>
    %731 = arith.mulf %726, %730 : vector<2x128xf32>
    %cst_141 = arith.constant dense<0.000000e+00> : vector<2x512xf32>
    %732 = tpu.matmul %731, %215, %cst_141 {dimension_numbers = #tpu.dot_dimension_numbers<[1], [0], [0], [1], [0, 0, 1, 1], [], []>} : vector<2x128xf32>, vector<128x512xf32>, vector<2x512xf32> -> vector<2x512xf32>
    %cst_142 = arith.constant dense<0.000000e+00> : vector<2x512xf32>
    %733 = tpu.matmul %701, %216, %cst_142 {dimension_numbers = #tpu.dot_dimension_numbers<[1], [0], [0], [1], [0, 0, 1, 1], [], []>} : vector<2x128xf32>, vector<128x512xf32>, vector<2x512xf32> -> vector<2x512xf32>
    %734 = arith.addf %732, %733 : vector<2x512xf32>
    %735 = vector.broadcast %217 : vector<1x512xf32> to vector<2x512xf32>
    %736 = arith.addf %734, %735 : vector<2x512xf32>
    %737 = vector.extract_strided_slice %736 {offsets = [0, 0], sizes = [2, 128], strides = [1, 1]} : vector<2x512xf32> to vector<2x128xf32>
    %738 = arith.negf %737 : vector<2x128xf32>
    %739 = math.exp %738 : vector<2x128xf32>
    %cst_143 = arith.constant 1.000000e+00 : f32
    %740 = vector.broadcast %cst_143 : f32 to vector<2x128xf32>
    %741 = arith.addf %740, %739 : vector<2x128xf32>
    %742 = arith.divf %740, %741 : vector<2x128xf32>
    %743 = vector.extract_strided_slice %736 {offsets = [0, 128], sizes = [2, 128], strides = [1, 1]} : vector<2x512xf32> to vector<2x128xf32>
    %744 = arith.negf %743 : vector<2x128xf32>
    %745 = math.exp %744 : vector<2x128xf32>
    %cst_144 = arith.constant 1.000000e+00 : f32
    %746 = vector.broadcast %cst_144 : f32 to vector<2x128xf32>
    %747 = arith.addf %746, %745 : vector<2x128xf32>
    %748 = arith.divf %746, %747 : vector<2x128xf32>
    %749 = vector.extract_strided_slice %736 {offsets = [0, 256], sizes = [2, 128], strides = [1, 1]} : vector<2x512xf32> to vector<2x128xf32>
    %750 = math.tanh %749 : vector<2x128xf32>
    %751 = vector.extract_strided_slice %736 {offsets = [0, 384], sizes = [2, 128], strides = [1, 1]} : vector<2x512xf32> to vector<2x128xf32>
    %752 = arith.negf %751 : vector<2x128xf32>
    %753 = math.exp %752 : vector<2x128xf32>
    %cst_145 = arith.constant 1.000000e+00 : f32
    %754 = vector.broadcast %cst_145 : f32 to vector<2x128xf32>
    %755 = arith.addf %754, %753 : vector<2x128xf32>
    %756 = arith.divf %754, %755 : vector<2x128xf32>
    %757 = arith.mulf %748, %699 : vector<2x128xf32>
    %758 = arith.mulf %742, %750 : vector<2x128xf32>
    %759 = arith.addf %757, %758 : vector<2x128xf32>
    %760 = math.tanh %759 : vector<2x128xf32>
    %761 = arith.mulf %756, %760 : vector<2x128xf32>
    %762 = vector.extract_strided_slice %209 {offsets = [9, 0], sizes = [1, 512], strides = [1, 1]} : vector<16x512xf32> to vector<1x512xf32>
    %763 = vector.extract_strided_slice %213 {offsets = [9, 0], sizes = [1, 512], strides = [1, 1]} : vector<16x512xf32> to vector<1x512xf32>
    %764 = tpu.concatenate %762, %763 in 0 : vector<1x512xf32>, vector<1x512xf32> -> vector<2x512xf32>
    %cst_146 = arith.constant dense<0.000000e+00> : vector<2x512xf32>
    %765 = tpu.matmul %731, %214, %cst_146 {dimension_numbers = #tpu.dot_dimension_numbers<[1], [0], [0], [1], [0, 0, 1, 1], [], []>} : vector<2x128xf32>, vector<128x512xf32>, vector<2x512xf32> -> vector<2x512xf32>
    %766 = arith.addf %764, %765 : vector<2x512xf32>
    %767 = vector.extract_strided_slice %766 {offsets = [0, 0], sizes = [2, 128], strides = [1, 1]} : vector<2x512xf32> to vector<2x128xf32>
    %768 = arith.negf %767 : vector<2x128xf32>
    %769 = math.exp %768 : vector<2x128xf32>
    %cst_147 = arith.constant 1.000000e+00 : f32
    %770 = vector.broadcast %cst_147 : f32 to vector<2x128xf32>
    %771 = arith.addf %770, %769 : vector<2x128xf32>
    %772 = arith.divf %770, %771 : vector<2x128xf32>
    %773 = vector.extract_strided_slice %766 {offsets = [0, 128], sizes = [2, 128], strides = [1, 1]} : vector<2x512xf32> to vector<2x128xf32>
    %774 = arith.negf %773 : vector<2x128xf32>
    %775 = math.exp %774 : vector<2x128xf32>
    %cst_148 = arith.constant 1.000000e+00 : f32
    %776 = vector.broadcast %cst_148 : f32 to vector<2x128xf32>
    %777 = arith.addf %776, %775 : vector<2x128xf32>
    %778 = arith.divf %776, %777 : vector<2x128xf32>
    %779 = vector.extract_strided_slice %766 {offsets = [0, 256], sizes = [2, 128], strides = [1, 1]} : vector<2x512xf32> to vector<2x128xf32>
    %780 = math.tanh %779 : vector<2x128xf32>
    %781 = vector.extract_strided_slice %766 {offsets = [0, 384], sizes = [2, 128], strides = [1, 1]} : vector<2x512xf32> to vector<2x128xf32>
    %782 = arith.negf %781 : vector<2x128xf32>
    %783 = math.exp %782 : vector<2x128xf32>
    %cst_149 = arith.constant 1.000000e+00 : f32
    %784 = vector.broadcast %cst_149 : f32 to vector<2x128xf32>
    %785 = arith.addf %784, %783 : vector<2x128xf32>
    %786 = arith.divf %784, %785 : vector<2x128xf32>
    %787 = arith.mulf %778, %729 : vector<2x128xf32>
    %788 = arith.mulf %772, %780 : vector<2x128xf32>
    %789 = arith.addf %787, %788 : vector<2x128xf32>
    %790 = math.tanh %789 : vector<2x128xf32>
    %791 = arith.mulf %786, %790 : vector<2x128xf32>
    %cst_150 = arith.constant dense<0.000000e+00> : vector<2x512xf32>
    %792 = tpu.matmul %791, %215, %cst_150 {dimension_numbers = #tpu.dot_dimension_numbers<[1], [0], [0], [1], [0, 0, 1, 1], [], []>} : vector<2x128xf32>, vector<128x512xf32>, vector<2x512xf32> -> vector<2x512xf32>
    %cst_151 = arith.constant dense<0.000000e+00> : vector<2x512xf32>
    %793 = tpu.matmul %761, %216, %cst_151 {dimension_numbers = #tpu.dot_dimension_numbers<[1], [0], [0], [1], [0, 0, 1, 1], [], []>} : vector<2x128xf32>, vector<128x512xf32>, vector<2x512xf32> -> vector<2x512xf32>
    %794 = arith.addf %792, %793 : vector<2x512xf32>
    %795 = vector.broadcast %217 : vector<1x512xf32> to vector<2x512xf32>
    %796 = arith.addf %794, %795 : vector<2x512xf32>
    %797 = vector.extract_strided_slice %796 {offsets = [0, 0], sizes = [2, 128], strides = [1, 1]} : vector<2x512xf32> to vector<2x128xf32>
    %798 = arith.negf %797 : vector<2x128xf32>
    %799 = math.exp %798 : vector<2x128xf32>
    %cst_152 = arith.constant 1.000000e+00 : f32
    %800 = vector.broadcast %cst_152 : f32 to vector<2x128xf32>
    %801 = arith.addf %800, %799 : vector<2x128xf32>
    %802 = arith.divf %800, %801 : vector<2x128xf32>
    %803 = vector.extract_strided_slice %796 {offsets = [0, 128], sizes = [2, 128], strides = [1, 1]} : vector<2x512xf32> to vector<2x128xf32>
    %804 = arith.negf %803 : vector<2x128xf32>
    %805 = math.exp %804 : vector<2x128xf32>
    %cst_153 = arith.constant 1.000000e+00 : f32
    %806 = vector.broadcast %cst_153 : f32 to vector<2x128xf32>
    %807 = arith.addf %806, %805 : vector<2x128xf32>
    %808 = arith.divf %806, %807 : vector<2x128xf32>
    %809 = vector.extract_strided_slice %796 {offsets = [0, 256], sizes = [2, 128], strides = [1, 1]} : vector<2x512xf32> to vector<2x128xf32>
    %810 = math.tanh %809 : vector<2x128xf32>
    %811 = vector.extract_strided_slice %796 {offsets = [0, 384], sizes = [2, 128], strides = [1, 1]} : vector<2x512xf32> to vector<2x128xf32>
    %812 = arith.negf %811 : vector<2x128xf32>
    %813 = math.exp %812 : vector<2x128xf32>
    %cst_154 = arith.constant 1.000000e+00 : f32
    %814 = vector.broadcast %cst_154 : f32 to vector<2x128xf32>
    %815 = arith.addf %814, %813 : vector<2x128xf32>
    %816 = arith.divf %814, %815 : vector<2x128xf32>
    %817 = arith.mulf %808, %759 : vector<2x128xf32>
    %818 = arith.mulf %802, %810 : vector<2x128xf32>
    %819 = arith.addf %817, %818 : vector<2x128xf32>
    %820 = math.tanh %819 : vector<2x128xf32>
    %821 = arith.mulf %816, %820 : vector<2x128xf32>
    %822 = vector.extract_strided_slice %209 {offsets = [10, 0], sizes = [1, 512], strides = [1, 1]} : vector<16x512xf32> to vector<1x512xf32>
    %823 = vector.extract_strided_slice %213 {offsets = [10, 0], sizes = [1, 512], strides = [1, 1]} : vector<16x512xf32> to vector<1x512xf32>
    %824 = tpu.concatenate %822, %823 in 0 : vector<1x512xf32>, vector<1x512xf32> -> vector<2x512xf32>
    %cst_155 = arith.constant dense<0.000000e+00> : vector<2x512xf32>
    %825 = tpu.matmul %791, %214, %cst_155 {dimension_numbers = #tpu.dot_dimension_numbers<[1], [0], [0], [1], [0, 0, 1, 1], [], []>} : vector<2x128xf32>, vector<128x512xf32>, vector<2x512xf32> -> vector<2x512xf32>
    %826 = arith.addf %824, %825 : vector<2x512xf32>
    %827 = vector.extract_strided_slice %826 {offsets = [0, 0], sizes = [2, 128], strides = [1, 1]} : vector<2x512xf32> to vector<2x128xf32>
    %828 = arith.negf %827 : vector<2x128xf32>
    %829 = math.exp %828 : vector<2x128xf32>
    %cst_156 = arith.constant 1.000000e+00 : f32
    %830 = vector.broadcast %cst_156 : f32 to vector<2x128xf32>
    %831 = arith.addf %830, %829 : vector<2x128xf32>
    %832 = arith.divf %830, %831 : vector<2x128xf32>
    %833 = vector.extract_strided_slice %826 {offsets = [0, 128], sizes = [2, 128], strides = [1, 1]} : vector<2x512xf32> to vector<2x128xf32>
    %834 = arith.negf %833 : vector<2x128xf32>
    %835 = math.exp %834 : vector<2x128xf32>
    %cst_157 = arith.constant 1.000000e+00 : f32
    %836 = vector.broadcast %cst_157 : f32 to vector<2x128xf32>
    %837 = arith.addf %836, %835 : vector<2x128xf32>
    %838 = arith.divf %836, %837 : vector<2x128xf32>
    %839 = vector.extract_strided_slice %826 {offsets = [0, 256], sizes = [2, 128], strides = [1, 1]} : vector<2x512xf32> to vector<2x128xf32>
    %840 = math.tanh %839 : vector<2x128xf32>
    %841 = vector.extract_strided_slice %826 {offsets = [0, 384], sizes = [2, 128], strides = [1, 1]} : vector<2x512xf32> to vector<2x128xf32>
    %842 = arith.negf %841 : vector<2x128xf32>
    %843 = math.exp %842 : vector<2x128xf32>
    %cst_158 = arith.constant 1.000000e+00 : f32
    %844 = vector.broadcast %cst_158 : f32 to vector<2x128xf32>
    %845 = arith.addf %844, %843 : vector<2x128xf32>
    %846 = arith.divf %844, %845 : vector<2x128xf32>
    %847 = arith.mulf %838, %789 : vector<2x128xf32>
    %848 = arith.mulf %832, %840 : vector<2x128xf32>
    %849 = arith.addf %847, %848 : vector<2x128xf32>
    %850 = math.tanh %849 : vector<2x128xf32>
    %851 = arith.mulf %846, %850 : vector<2x128xf32>
    %cst_159 = arith.constant dense<0.000000e+00> : vector<2x512xf32>
    %852 = tpu.matmul %851, %215, %cst_159 {dimension_numbers = #tpu.dot_dimension_numbers<[1], [0], [0], [1], [0, 0, 1, 1], [], []>} : vector<2x128xf32>, vector<128x512xf32>, vector<2x512xf32> -> vector<2x512xf32>
    %cst_160 = arith.constant dense<0.000000e+00> : vector<2x512xf32>
    %853 = tpu.matmul %821, %216, %cst_160 {dimension_numbers = #tpu.dot_dimension_numbers<[1], [0], [0], [1], [0, 0, 1, 1], [], []>} : vector<2x128xf32>, vector<128x512xf32>, vector<2x512xf32> -> vector<2x512xf32>
    %854 = arith.addf %852, %853 : vector<2x512xf32>
    %855 = vector.broadcast %217 : vector<1x512xf32> to vector<2x512xf32>
    %856 = arith.addf %854, %855 : vector<2x512xf32>
    %857 = vector.extract_strided_slice %856 {offsets = [0, 0], sizes = [2, 128], strides = [1, 1]} : vector<2x512xf32> to vector<2x128xf32>
    %858 = arith.negf %857 : vector<2x128xf32>
    %859 = math.exp %858 : vector<2x128xf32>
    %cst_161 = arith.constant 1.000000e+00 : f32
    %860 = vector.broadcast %cst_161 : f32 to vector<2x128xf32>
    %861 = arith.addf %860, %859 : vector<2x128xf32>
    %862 = arith.divf %860, %861 : vector<2x128xf32>
    %863 = vector.extract_strided_slice %856 {offsets = [0, 128], sizes = [2, 128], strides = [1, 1]} : vector<2x512xf32> to vector<2x128xf32>
    %864 = arith.negf %863 : vector<2x128xf32>
    %865 = math.exp %864 : vector<2x128xf32>
    %cst_162 = arith.constant 1.000000e+00 : f32
    %866 = vector.broadcast %cst_162 : f32 to vector<2x128xf32>
    %867 = arith.addf %866, %865 : vector<2x128xf32>
    %868 = arith.divf %866, %867 : vector<2x128xf32>
    %869 = vector.extract_strided_slice %856 {offsets = [0, 256], sizes = [2, 128], strides = [1, 1]} : vector<2x512xf32> to vector<2x128xf32>
    %870 = math.tanh %869 : vector<2x128xf32>
    %871 = vector.extract_strided_slice %856 {offsets = [0, 384], sizes = [2, 128], strides = [1, 1]} : vector<2x512xf32> to vector<2x128xf32>
    %872 = arith.negf %871 : vector<2x128xf32>
    %873 = math.exp %872 : vector<2x128xf32>
    %cst_163 = arith.constant 1.000000e+00 : f32
    %874 = vector.broadcast %cst_163 : f32 to vector<2x128xf32>
    %875 = arith.addf %874, %873 : vector<2x128xf32>
    %876 = arith.divf %874, %875 : vector<2x128xf32>
    %877 = arith.mulf %868, %819 : vector<2x128xf32>
    %878 = arith.mulf %862, %870 : vector<2x128xf32>
    %879 = arith.addf %877, %878 : vector<2x128xf32>
    %880 = math.tanh %879 : vector<2x128xf32>
    %881 = arith.mulf %876, %880 : vector<2x128xf32>
    %882 = vector.extract_strided_slice %209 {offsets = [11, 0], sizes = [1, 512], strides = [1, 1]} : vector<16x512xf32> to vector<1x512xf32>
    %883 = vector.extract_strided_slice %213 {offsets = [11, 0], sizes = [1, 512], strides = [1, 1]} : vector<16x512xf32> to vector<1x512xf32>
    %884 = tpu.concatenate %882, %883 in 0 : vector<1x512xf32>, vector<1x512xf32> -> vector<2x512xf32>
    %cst_164 = arith.constant dense<0.000000e+00> : vector<2x512xf32>
    %885 = tpu.matmul %851, %214, %cst_164 {dimension_numbers = #tpu.dot_dimension_numbers<[1], [0], [0], [1], [0, 0, 1, 1], [], []>} : vector<2x128xf32>, vector<128x512xf32>, vector<2x512xf32> -> vector<2x512xf32>
    %886 = arith.addf %884, %885 : vector<2x512xf32>
    %887 = vector.extract_strided_slice %886 {offsets = [0, 0], sizes = [2, 128], strides = [1, 1]} : vector<2x512xf32> to vector<2x128xf32>
    %888 = arith.negf %887 : vector<2x128xf32>
    %889 = math.exp %888 : vector<2x128xf32>
    %cst_165 = arith.constant 1.000000e+00 : f32
    %890 = vector.broadcast %cst_165 : f32 to vector<2x128xf32>
    %891 = arith.addf %890, %889 : vector<2x128xf32>
    %892 = arith.divf %890, %891 : vector<2x128xf32>
    %893 = vector.extract_strided_slice %886 {offsets = [0, 128], sizes = [2, 128], strides = [1, 1]} : vector<2x512xf32> to vector<2x128xf32>
    %894 = arith.negf %893 : vector<2x128xf32>
    %895 = math.exp %894 : vector<2x128xf32>
    %cst_166 = arith.constant 1.000000e+00 : f32
    %896 = vector.broadcast %cst_166 : f32 to vector<2x128xf32>
    %897 = arith.addf %896, %895 : vector<2x128xf32>
    %898 = arith.divf %896, %897 : vector<2x128xf32>
    %899 = vector.extract_strided_slice %886 {offsets = [0, 256], sizes = [2, 128], strides = [1, 1]} : vector<2x512xf32> to vector<2x128xf32>
    %900 = math.tanh %899 : vector<2x128xf32>
    %901 = vector.extract_strided_slice %886 {offsets = [0, 384], sizes = [2, 128], strides = [1, 1]} : vector<2x512xf32> to vector<2x128xf32>
    %902 = arith.negf %901 : vector<2x128xf32>
    %903 = math.exp %902 : vector<2x128xf32>
    %cst_167 = arith.constant 1.000000e+00 : f32
    %904 = vector.broadcast %cst_167 : f32 to vector<2x128xf32>
    %905 = arith.addf %904, %903 : vector<2x128xf32>
    %906 = arith.divf %904, %905 : vector<2x128xf32>
    %907 = arith.mulf %898, %849 : vector<2x128xf32>
    %908 = arith.mulf %892, %900 : vector<2x128xf32>
    %909 = arith.addf %907, %908 : vector<2x128xf32>
    %910 = math.tanh %909 : vector<2x128xf32>
    %911 = arith.mulf %906, %910 : vector<2x128xf32>
    %cst_168 = arith.constant dense<0.000000e+00> : vector<2x512xf32>
    %912 = tpu.matmul %911, %215, %cst_168 {dimension_numbers = #tpu.dot_dimension_numbers<[1], [0], [0], [1], [0, 0, 1, 1], [], []>} : vector<2x128xf32>, vector<128x512xf32>, vector<2x512xf32> -> vector<2x512xf32>
    %cst_169 = arith.constant dense<0.000000e+00> : vector<2x512xf32>
    %913 = tpu.matmul %881, %216, %cst_169 {dimension_numbers = #tpu.dot_dimension_numbers<[1], [0], [0], [1], [0, 0, 1, 1], [], []>} : vector<2x128xf32>, vector<128x512xf32>, vector<2x512xf32> -> vector<2x512xf32>
    %914 = arith.addf %912, %913 : vector<2x512xf32>
    %915 = vector.broadcast %217 : vector<1x512xf32> to vector<2x512xf32>
    %916 = arith.addf %914, %915 : vector<2x512xf32>
    %917 = vector.extract_strided_slice %916 {offsets = [0, 0], sizes = [2, 128], strides = [1, 1]} : vector<2x512xf32> to vector<2x128xf32>
    %918 = arith.negf %917 : vector<2x128xf32>
    %919 = math.exp %918 : vector<2x128xf32>
    %cst_170 = arith.constant 1.000000e+00 : f32
    %920 = vector.broadcast %cst_170 : f32 to vector<2x128xf32>
    %921 = arith.addf %920, %919 : vector<2x128xf32>
    %922 = arith.divf %920, %921 : vector<2x128xf32>
    %923 = vector.extract_strided_slice %916 {offsets = [0, 128], sizes = [2, 128], strides = [1, 1]} : vector<2x512xf32> to vector<2x128xf32>
    %924 = arith.negf %923 : vector<2x128xf32>
    %925 = math.exp %924 : vector<2x128xf32>
    %cst_171 = arith.constant 1.000000e+00 : f32
    %926 = vector.broadcast %cst_171 : f32 to vector<2x128xf32>
    %927 = arith.addf %926, %925 : vector<2x128xf32>
    %928 = arith.divf %926, %927 : vector<2x128xf32>
    %929 = vector.extract_strided_slice %916 {offsets = [0, 256], sizes = [2, 128], strides = [1, 1]} : vector<2x512xf32> to vector<2x128xf32>
    %930 = math.tanh %929 : vector<2x128xf32>
    %931 = vector.extract_strided_slice %916 {offsets = [0, 384], sizes = [2, 128], strides = [1, 1]} : vector<2x512xf32> to vector<2x128xf32>
    %932 = arith.negf %931 : vector<2x128xf32>
    %933 = math.exp %932 : vector<2x128xf32>
    %cst_172 = arith.constant 1.000000e+00 : f32
    %934 = vector.broadcast %cst_172 : f32 to vector<2x128xf32>
    %935 = arith.addf %934, %933 : vector<2x128xf32>
    %936 = arith.divf %934, %935 : vector<2x128xf32>
    %937 = arith.mulf %928, %879 : vector<2x128xf32>
    %938 = arith.mulf %922, %930 : vector<2x128xf32>
    %939 = arith.addf %937, %938 : vector<2x128xf32>
    %940 = math.tanh %939 : vector<2x128xf32>
    %941 = arith.mulf %936, %940 : vector<2x128xf32>
    %942 = vector.extract_strided_slice %209 {offsets = [12, 0], sizes = [1, 512], strides = [1, 1]} : vector<16x512xf32> to vector<1x512xf32>
    %943 = vector.extract_strided_slice %213 {offsets = [12, 0], sizes = [1, 512], strides = [1, 1]} : vector<16x512xf32> to vector<1x512xf32>
    %944 = tpu.concatenate %942, %943 in 0 : vector<1x512xf32>, vector<1x512xf32> -> vector<2x512xf32>
    %cst_173 = arith.constant dense<0.000000e+00> : vector<2x512xf32>
    %945 = tpu.matmul %911, %214, %cst_173 {dimension_numbers = #tpu.dot_dimension_numbers<[1], [0], [0], [1], [0, 0, 1, 1], [], []>} : vector<2x128xf32>, vector<128x512xf32>, vector<2x512xf32> -> vector<2x512xf32>
    %946 = arith.addf %944, %945 : vector<2x512xf32>
    %947 = vector.extract_strided_slice %946 {offsets = [0, 0], sizes = [2, 128], strides = [1, 1]} : vector<2x512xf32> to vector<2x128xf32>
    %948 = arith.negf %947 : vector<2x128xf32>
    %949 = math.exp %948 : vector<2x128xf32>
    %cst_174 = arith.constant 1.000000e+00 : f32
    %950 = vector.broadcast %cst_174 : f32 to vector<2x128xf32>
    %951 = arith.addf %950, %949 : vector<2x128xf32>
    %952 = arith.divf %950, %951 : vector<2x128xf32>
    %953 = vector.extract_strided_slice %946 {offsets = [0, 128], sizes = [2, 128], strides = [1, 1]} : vector<2x512xf32> to vector<2x128xf32>
    %954 = arith.negf %953 : vector<2x128xf32>
    %955 = math.exp %954 : vector<2x128xf32>
    %cst_175 = arith.constant 1.000000e+00 : f32
    %956 = vector.broadcast %cst_175 : f32 to vector<2x128xf32>
    %957 = arith.addf %956, %955 : vector<2x128xf32>
    %958 = arith.divf %956, %957 : vector<2x128xf32>
    %959 = vector.extract_strided_slice %946 {offsets = [0, 256], sizes = [2, 128], strides = [1, 1]} : vector<2x512xf32> to vector<2x128xf32>
    %960 = math.tanh %959 : vector<2x128xf32>
    %961 = vector.extract_strided_slice %946 {offsets = [0, 384], sizes = [2, 128], strides = [1, 1]} : vector<2x512xf32> to vector<2x128xf32>
    %962 = arith.negf %961 : vector<2x128xf32>
    %963 = math.exp %962 : vector<2x128xf32>
    %cst_176 = arith.constant 1.000000e+00 : f32
    %964 = vector.broadcast %cst_176 : f32 to vector<2x128xf32>
    %965 = arith.addf %964, %963 : vector<2x128xf32>
    %966 = arith.divf %964, %965 : vector<2x128xf32>
    %967 = arith.mulf %958, %909 : vector<2x128xf32>
    %968 = arith.mulf %952, %960 : vector<2x128xf32>
    %969 = arith.addf %967, %968 : vector<2x128xf32>
    %970 = math.tanh %969 : vector<2x128xf32>
    %971 = arith.mulf %966, %970 : vector<2x128xf32>
    %cst_177 = arith.constant dense<0.000000e+00> : vector<2x512xf32>
    %972 = tpu.matmul %971, %215, %cst_177 {dimension_numbers = #tpu.dot_dimension_numbers<[1], [0], [0], [1], [0, 0, 1, 1], [], []>} : vector<2x128xf32>, vector<128x512xf32>, vector<2x512xf32> -> vector<2x512xf32>
    %cst_178 = arith.constant dense<0.000000e+00> : vector<2x512xf32>
    %973 = tpu.matmul %941, %216, %cst_178 {dimension_numbers = #tpu.dot_dimension_numbers<[1], [0], [0], [1], [0, 0, 1, 1], [], []>} : vector<2x128xf32>, vector<128x512xf32>, vector<2x512xf32> -> vector<2x512xf32>
    %974 = arith.addf %972, %973 : vector<2x512xf32>
    %975 = vector.broadcast %217 : vector<1x512xf32> to vector<2x512xf32>
    %976 = arith.addf %974, %975 : vector<2x512xf32>
    %977 = vector.extract_strided_slice %976 {offsets = [0, 0], sizes = [2, 128], strides = [1, 1]} : vector<2x512xf32> to vector<2x128xf32>
    %978 = arith.negf %977 : vector<2x128xf32>
    %979 = math.exp %978 : vector<2x128xf32>
    %cst_179 = arith.constant 1.000000e+00 : f32
    %980 = vector.broadcast %cst_179 : f32 to vector<2x128xf32>
    %981 = arith.addf %980, %979 : vector<2x128xf32>
    %982 = arith.divf %980, %981 : vector<2x128xf32>
    %983 = vector.extract_strided_slice %976 {offsets = [0, 128], sizes = [2, 128], strides = [1, 1]} : vector<2x512xf32> to vector<2x128xf32>
    %984 = arith.negf %983 : vector<2x128xf32>
    %985 = math.exp %984 : vector<2x128xf32>
    %cst_180 = arith.constant 1.000000e+00 : f32
    %986 = vector.broadcast %cst_180 : f32 to vector<2x128xf32>
    %987 = arith.addf %986, %985 : vector<2x128xf32>
    %988 = arith.divf %986, %987 : vector<2x128xf32>
    %989 = vector.extract_strided_slice %976 {offsets = [0, 256], sizes = [2, 128], strides = [1, 1]} : vector<2x512xf32> to vector<2x128xf32>
    %990 = math.tanh %989 : vector<2x128xf32>
    %991 = vector.extract_strided_slice %976 {offsets = [0, 384], sizes = [2, 128], strides = [1, 1]} : vector<2x512xf32> to vector<2x128xf32>
    %992 = arith.negf %991 : vector<2x128xf32>
    %993 = math.exp %992 : vector<2x128xf32>
    %cst_181 = arith.constant 1.000000e+00 : f32
    %994 = vector.broadcast %cst_181 : f32 to vector<2x128xf32>
    %995 = arith.addf %994, %993 : vector<2x128xf32>
    %996 = arith.divf %994, %995 : vector<2x128xf32>
    %997 = arith.mulf %988, %939 : vector<2x128xf32>
    %998 = arith.mulf %982, %990 : vector<2x128xf32>
    %999 = arith.addf %997, %998 : vector<2x128xf32>
    %1000 = math.tanh %999 : vector<2x128xf32>
    %1001 = arith.mulf %996, %1000 : vector<2x128xf32>
    %1002 = vector.extract_strided_slice %209 {offsets = [13, 0], sizes = [1, 512], strides = [1, 1]} : vector<16x512xf32> to vector<1x512xf32>
    %1003 = vector.extract_strided_slice %213 {offsets = [13, 0], sizes = [1, 512], strides = [1, 1]} : vector<16x512xf32> to vector<1x512xf32>
    %1004 = tpu.concatenate %1002, %1003 in 0 : vector<1x512xf32>, vector<1x512xf32> -> vector<2x512xf32>
    %cst_182 = arith.constant dense<0.000000e+00> : vector<2x512xf32>
    %1005 = tpu.matmul %971, %214, %cst_182 {dimension_numbers = #tpu.dot_dimension_numbers<[1], [0], [0], [1], [0, 0, 1, 1], [], []>} : vector<2x128xf32>, vector<128x512xf32>, vector<2x512xf32> -> vector<2x512xf32>
    %1006 = arith.addf %1004, %1005 : vector<2x512xf32>
    %1007 = vector.extract_strided_slice %1006 {offsets = [0, 0], sizes = [2, 128], strides = [1, 1]} : vector<2x512xf32> to vector<2x128xf32>
    %1008 = arith.negf %1007 : vector<2x128xf32>
    %1009 = math.exp %1008 : vector<2x128xf32>
    %cst_183 = arith.constant 1.000000e+00 : f32
    %1010 = vector.broadcast %cst_183 : f32 to vector<2x128xf32>
    %1011 = arith.addf %1010, %1009 : vector<2x128xf32>
    %1012 = arith.divf %1010, %1011 : vector<2x128xf32>
    %1013 = vector.extract_strided_slice %1006 {offsets = [0, 128], sizes = [2, 128], strides = [1, 1]} : vector<2x512xf32> to vector<2x128xf32>
    %1014 = arith.negf %1013 : vector<2x128xf32>
    %1015 = math.exp %1014 : vector<2x128xf32>
    %cst_184 = arith.constant 1.000000e+00 : f32
    %1016 = vector.broadcast %cst_184 : f32 to vector<2x128xf32>
    %1017 = arith.addf %1016, %1015 : vector<2x128xf32>
    %1018 = arith.divf %1016, %1017 : vector<2x128xf32>
    %1019 = vector.extract_strided_slice %1006 {offsets = [0, 256], sizes = [2, 128], strides = [1, 1]} : vector<2x512xf32> to vector<2x128xf32>
    %1020 = math.tanh %1019 : vector<2x128xf32>
    %1021 = vector.extract_strided_slice %1006 {offsets = [0, 384], sizes = [2, 128], strides = [1, 1]} : vector<2x512xf32> to vector<2x128xf32>
    %1022 = arith.negf %1021 : vector<2x128xf32>
    %1023 = math.exp %1022 : vector<2x128xf32>
    %cst_185 = arith.constant 1.000000e+00 : f32
    %1024 = vector.broadcast %cst_185 : f32 to vector<2x128xf32>
    %1025 = arith.addf %1024, %1023 : vector<2x128xf32>
    %1026 = arith.divf %1024, %1025 : vector<2x128xf32>
    %1027 = arith.mulf %1018, %969 : vector<2x128xf32>
    %1028 = arith.mulf %1012, %1020 : vector<2x128xf32>
    %1029 = arith.addf %1027, %1028 : vector<2x128xf32>
    %1030 = math.tanh %1029 : vector<2x128xf32>
    %1031 = arith.mulf %1026, %1030 : vector<2x128xf32>
    %cst_186 = arith.constant dense<0.000000e+00> : vector<2x512xf32>
    %1032 = tpu.matmul %1031, %215, %cst_186 {dimension_numbers = #tpu.dot_dimension_numbers<[1], [0], [0], [1], [0, 0, 1, 1], [], []>} : vector<2x128xf32>, vector<128x512xf32>, vector<2x512xf32> -> vector<2x512xf32>
    %cst_187 = arith.constant dense<0.000000e+00> : vector<2x512xf32>
    %1033 = tpu.matmul %1001, %216, %cst_187 {dimension_numbers = #tpu.dot_dimension_numbers<[1], [0], [0], [1], [0, 0, 1, 1], [], []>} : vector<2x128xf32>, vector<128x512xf32>, vector<2x512xf32> -> vector<2x512xf32>
    %1034 = arith.addf %1032, %1033 : vector<2x512xf32>
    %1035 = vector.broadcast %217 : vector<1x512xf32> to vector<2x512xf32>
    %1036 = arith.addf %1034, %1035 : vector<2x512xf32>
    %1037 = vector.extract_strided_slice %1036 {offsets = [0, 0], sizes = [2, 128], strides = [1, 1]} : vector<2x512xf32> to vector<2x128xf32>
    %1038 = arith.negf %1037 : vector<2x128xf32>
    %1039 = math.exp %1038 : vector<2x128xf32>
    %cst_188 = arith.constant 1.000000e+00 : f32
    %1040 = vector.broadcast %cst_188 : f32 to vector<2x128xf32>
    %1041 = arith.addf %1040, %1039 : vector<2x128xf32>
    %1042 = arith.divf %1040, %1041 : vector<2x128xf32>
    %1043 = vector.extract_strided_slice %1036 {offsets = [0, 128], sizes = [2, 128], strides = [1, 1]} : vector<2x512xf32> to vector<2x128xf32>
    %1044 = arith.negf %1043 : vector<2x128xf32>
    %1045 = math.exp %1044 : vector<2x128xf32>
    %cst_189 = arith.constant 1.000000e+00 : f32
    %1046 = vector.broadcast %cst_189 : f32 to vector<2x128xf32>
    %1047 = arith.addf %1046, %1045 : vector<2x128xf32>
    %1048 = arith.divf %1046, %1047 : vector<2x128xf32>
    %1049 = vector.extract_strided_slice %1036 {offsets = [0, 256], sizes = [2, 128], strides = [1, 1]} : vector<2x512xf32> to vector<2x128xf32>
    %1050 = math.tanh %1049 : vector<2x128xf32>
    %1051 = vector.extract_strided_slice %1036 {offsets = [0, 384], sizes = [2, 128], strides = [1, 1]} : vector<2x512xf32> to vector<2x128xf32>
    %1052 = arith.negf %1051 : vector<2x128xf32>
    %1053 = math.exp %1052 : vector<2x128xf32>
    %cst_190 = arith.constant 1.000000e+00 : f32
    %1054 = vector.broadcast %cst_190 : f32 to vector<2x128xf32>
    %1055 = arith.addf %1054, %1053 : vector<2x128xf32>
    %1056 = arith.divf %1054, %1055 : vector<2x128xf32>
    %1057 = arith.mulf %1048, %999 : vector<2x128xf32>
    %1058 = arith.mulf %1042, %1050 : vector<2x128xf32>
    %1059 = arith.addf %1057, %1058 : vector<2x128xf32>
    %1060 = math.tanh %1059 : vector<2x128xf32>
    %1061 = arith.mulf %1056, %1060 : vector<2x128xf32>
    %1062 = vector.extract_strided_slice %209 {offsets = [14, 0], sizes = [1, 512], strides = [1, 1]} : vector<16x512xf32> to vector<1x512xf32>
    %1063 = vector.extract_strided_slice %213 {offsets = [14, 0], sizes = [1, 512], strides = [1, 1]} : vector<16x512xf32> to vector<1x512xf32>
    %1064 = tpu.concatenate %1062, %1063 in 0 : vector<1x512xf32>, vector<1x512xf32> -> vector<2x512xf32>
    %cst_191 = arith.constant dense<0.000000e+00> : vector<2x512xf32>
    %1065 = tpu.matmul %1031, %214, %cst_191 {dimension_numbers = #tpu.dot_dimension_numbers<[1], [0], [0], [1], [0, 0, 1, 1], [], []>} : vector<2x128xf32>, vector<128x512xf32>, vector<2x512xf32> -> vector<2x512xf32>
    %1066 = arith.addf %1064, %1065 : vector<2x512xf32>
    %1067 = vector.extract_strided_slice %1066 {offsets = [0, 0], sizes = [2, 128], strides = [1, 1]} : vector<2x512xf32> to vector<2x128xf32>
    %1068 = arith.negf %1067 : vector<2x128xf32>
    %1069 = math.exp %1068 : vector<2x128xf32>
    %cst_192 = arith.constant 1.000000e+00 : f32
    %1070 = vector.broadcast %cst_192 : f32 to vector<2x128xf32>
    %1071 = arith.addf %1070, %1069 : vector<2x128xf32>
    %1072 = arith.divf %1070, %1071 : vector<2x128xf32>
    %1073 = vector.extract_strided_slice %1066 {offsets = [0, 128], sizes = [2, 128], strides = [1, 1]} : vector<2x512xf32> to vector<2x128xf32>
    %1074 = arith.negf %1073 : vector<2x128xf32>
    %1075 = math.exp %1074 : vector<2x128xf32>
    %cst_193 = arith.constant 1.000000e+00 : f32
    %1076 = vector.broadcast %cst_193 : f32 to vector<2x128xf32>
    %1077 = arith.addf %1076, %1075 : vector<2x128xf32>
    %1078 = arith.divf %1076, %1077 : vector<2x128xf32>
    %1079 = vector.extract_strided_slice %1066 {offsets = [0, 256], sizes = [2, 128], strides = [1, 1]} : vector<2x512xf32> to vector<2x128xf32>
    %1080 = math.tanh %1079 : vector<2x128xf32>
    %1081 = vector.extract_strided_slice %1066 {offsets = [0, 384], sizes = [2, 128], strides = [1, 1]} : vector<2x512xf32> to vector<2x128xf32>
    %1082 = arith.negf %1081 : vector<2x128xf32>
    %1083 = math.exp %1082 : vector<2x128xf32>
    %cst_194 = arith.constant 1.000000e+00 : f32
    %1084 = vector.broadcast %cst_194 : f32 to vector<2x128xf32>
    %1085 = arith.addf %1084, %1083 : vector<2x128xf32>
    %1086 = arith.divf %1084, %1085 : vector<2x128xf32>
    %1087 = arith.mulf %1078, %1029 : vector<2x128xf32>
    %1088 = arith.mulf %1072, %1080 : vector<2x128xf32>
    %1089 = arith.addf %1087, %1088 : vector<2x128xf32>
    %1090 = math.tanh %1089 : vector<2x128xf32>
    %1091 = arith.mulf %1086, %1090 : vector<2x128xf32>
    %cst_195 = arith.constant dense<0.000000e+00> : vector<2x512xf32>
    %1092 = tpu.matmul %1091, %215, %cst_195 {dimension_numbers = #tpu.dot_dimension_numbers<[1], [0], [0], [1], [0, 0, 1, 1], [], []>} : vector<2x128xf32>, vector<128x512xf32>, vector<2x512xf32> -> vector<2x512xf32>
    %cst_196 = arith.constant dense<0.000000e+00> : vector<2x512xf32>
    %1093 = tpu.matmul %1061, %216, %cst_196 {dimension_numbers = #tpu.dot_dimension_numbers<[1], [0], [0], [1], [0, 0, 1, 1], [], []>} : vector<2x128xf32>, vector<128x512xf32>, vector<2x512xf32> -> vector<2x512xf32>
    %1094 = arith.addf %1092, %1093 : vector<2x512xf32>
    %1095 = vector.broadcast %217 : vector<1x512xf32> to vector<2x512xf32>
    %1096 = arith.addf %1094, %1095 : vector<2x512xf32>
    %1097 = vector.extract_strided_slice %1096 {offsets = [0, 0], sizes = [2, 128], strides = [1, 1]} : vector<2x512xf32> to vector<2x128xf32>
    %1098 = arith.negf %1097 : vector<2x128xf32>
    %1099 = math.exp %1098 : vector<2x128xf32>
    %cst_197 = arith.constant 1.000000e+00 : f32
    %1100 = vector.broadcast %cst_197 : f32 to vector<2x128xf32>
    %1101 = arith.addf %1100, %1099 : vector<2x128xf32>
    %1102 = arith.divf %1100, %1101 : vector<2x128xf32>
    %1103 = vector.extract_strided_slice %1096 {offsets = [0, 128], sizes = [2, 128], strides = [1, 1]} : vector<2x512xf32> to vector<2x128xf32>
    %1104 = arith.negf %1103 : vector<2x128xf32>
    %1105 = math.exp %1104 : vector<2x128xf32>
    %cst_198 = arith.constant 1.000000e+00 : f32
    %1106 = vector.broadcast %cst_198 : f32 to vector<2x128xf32>
    %1107 = arith.addf %1106, %1105 : vector<2x128xf32>
    %1108 = arith.divf %1106, %1107 : vector<2x128xf32>
    %1109 = vector.extract_strided_slice %1096 {offsets = [0, 256], sizes = [2, 128], strides = [1, 1]} : vector<2x512xf32> to vector<2x128xf32>
    %1110 = math.tanh %1109 : vector<2x128xf32>
    %1111 = vector.extract_strided_slice %1096 {offsets = [0, 384], sizes = [2, 128], strides = [1, 1]} : vector<2x512xf32> to vector<2x128xf32>
    %1112 = arith.negf %1111 : vector<2x128xf32>
    %1113 = math.exp %1112 : vector<2x128xf32>
    %cst_199 = arith.constant 1.000000e+00 : f32
    %1114 = vector.broadcast %cst_199 : f32 to vector<2x128xf32>
    %1115 = arith.addf %1114, %1113 : vector<2x128xf32>
    %1116 = arith.divf %1114, %1115 : vector<2x128xf32>
    %1117 = arith.mulf %1108, %1059 : vector<2x128xf32>
    %1118 = arith.mulf %1102, %1110 : vector<2x128xf32>
    %1119 = arith.addf %1117, %1118 : vector<2x128xf32>
    %1120 = math.tanh %1119 : vector<2x128xf32>
    %1121 = arith.mulf %1116, %1120 : vector<2x128xf32>
    %1122 = vector.extract_strided_slice %209 {offsets = [15, 0], sizes = [1, 512], strides = [1, 1]} : vector<16x512xf32> to vector<1x512xf32>
    %1123 = vector.extract_strided_slice %213 {offsets = [15, 0], sizes = [1, 512], strides = [1, 1]} : vector<16x512xf32> to vector<1x512xf32>
    %1124 = tpu.concatenate %1122, %1123 in 0 : vector<1x512xf32>, vector<1x512xf32> -> vector<2x512xf32>
    %cst_200 = arith.constant dense<0.000000e+00> : vector<2x512xf32>
    %1125 = tpu.matmul %1091, %214, %cst_200 {dimension_numbers = #tpu.dot_dimension_numbers<[1], [0], [0], [1], [0, 0, 1, 1], [], []>} : vector<2x128xf32>, vector<128x512xf32>, vector<2x512xf32> -> vector<2x512xf32>
    %1126 = arith.addf %1124, %1125 : vector<2x512xf32>
    %1127 = vector.extract_strided_slice %1126 {offsets = [0, 0], sizes = [2, 128], strides = [1, 1]} : vector<2x512xf32> to vector<2x128xf32>
    %1128 = arith.negf %1127 : vector<2x128xf32>
    %1129 = math.exp %1128 : vector<2x128xf32>
    %cst_201 = arith.constant 1.000000e+00 : f32
    %1130 = vector.broadcast %cst_201 : f32 to vector<2x128xf32>
    %1131 = arith.addf %1130, %1129 : vector<2x128xf32>
    %1132 = arith.divf %1130, %1131 : vector<2x128xf32>
    %1133 = vector.extract_strided_slice %1126 {offsets = [0, 128], sizes = [2, 128], strides = [1, 1]} : vector<2x512xf32> to vector<2x128xf32>
    %1134 = arith.negf %1133 : vector<2x128xf32>
    %1135 = math.exp %1134 : vector<2x128xf32>
    %cst_202 = arith.constant 1.000000e+00 : f32
    %1136 = vector.broadcast %cst_202 : f32 to vector<2x128xf32>
    %1137 = arith.addf %1136, %1135 : vector<2x128xf32>
    %1138 = arith.divf %1136, %1137 : vector<2x128xf32>
    %1139 = vector.extract_strided_slice %1126 {offsets = [0, 256], sizes = [2, 128], strides = [1, 1]} : vector<2x512xf32> to vector<2x128xf32>
    %1140 = math.tanh %1139 : vector<2x128xf32>
    %1141 = vector.extract_strided_slice %1126 {offsets = [0, 384], sizes = [2, 128], strides = [1, 1]} : vector<2x512xf32> to vector<2x128xf32>
    %1142 = arith.negf %1141 : vector<2x128xf32>
    %1143 = math.exp %1142 : vector<2x128xf32>
    %cst_203 = arith.constant 1.000000e+00 : f32
    %1144 = vector.broadcast %cst_203 : f32 to vector<2x128xf32>
    %1145 = arith.addf %1144, %1143 : vector<2x128xf32>
    %1146 = arith.divf %1144, %1145 : vector<2x128xf32>
    %1147 = arith.mulf %1138, %1089 : vector<2x128xf32>
    %1148 = arith.mulf %1132, %1140 : vector<2x128xf32>
    %1149 = arith.addf %1147, %1148 : vector<2x128xf32>
    %1150 = math.tanh %1149 : vector<2x128xf32>
    %1151 = arith.mulf %1146, %1150 : vector<2x128xf32>
    %cst_204 = arith.constant dense<0.000000e+00> : vector<2x512xf32>
    %1152 = tpu.matmul %1151, %215, %cst_204 {dimension_numbers = #tpu.dot_dimension_numbers<[1], [0], [0], [1], [0, 0, 1, 1], [], []>} : vector<2x128xf32>, vector<128x512xf32>, vector<2x512xf32> -> vector<2x512xf32>
    %cst_205 = arith.constant dense<0.000000e+00> : vector<2x512xf32>
    %1153 = tpu.matmul %1121, %216, %cst_205 {dimension_numbers = #tpu.dot_dimension_numbers<[1], [0], [0], [1], [0, 0, 1, 1], [], []>} : vector<2x128xf32>, vector<128x512xf32>, vector<2x512xf32> -> vector<2x512xf32>
    %1154 = arith.addf %1152, %1153 : vector<2x512xf32>
    %1155 = vector.broadcast %217 : vector<1x512xf32> to vector<2x512xf32>
    %1156 = arith.addf %1154, %1155 : vector<2x512xf32>
    %1157 = vector.extract_strided_slice %1156 {offsets = [0, 0], sizes = [2, 128], strides = [1, 1]} : vector<2x512xf32> to vector<2x128xf32>
    %1158 = arith.negf %1157 : vector<2x128xf32>
    %1159 = math.exp %1158 : vector<2x128xf32>
    %cst_206 = arith.constant 1.000000e+00 : f32
    %1160 = vector.broadcast %cst_206 : f32 to vector<2x128xf32>
    %1161 = arith.addf %1160, %1159 : vector<2x128xf32>
    %1162 = arith.divf %1160, %1161 : vector<2x128xf32>
    %1163 = vector.extract_strided_slice %1156 {offsets = [0, 128], sizes = [2, 128], strides = [1, 1]} : vector<2x512xf32> to vector<2x128xf32>
    %1164 = arith.negf %1163 : vector<2x128xf32>
    %1165 = math.exp %1164 : vector<2x128xf32>
    %cst_207 = arith.constant 1.000000e+00 : f32
    %1166 = vector.broadcast %cst_207 : f32 to vector<2x128xf32>
    %1167 = arith.addf %1166, %1165 : vector<2x128xf32>
    %1168 = arith.divf %1166, %1167 : vector<2x128xf32>
    %1169 = vector.extract_strided_slice %1156 {offsets = [0, 256], sizes = [2, 128], strides = [1, 1]} : vector<2x512xf32> to vector<2x128xf32>
    %1170 = math.tanh %1169 : vector<2x128xf32>
    %1171 = vector.extract_strided_slice %1156 {offsets = [0, 384], sizes = [2, 128], strides = [1, 1]} : vector<2x512xf32> to vector<2x128xf32>
    %1172 = arith.negf %1171 : vector<2x128xf32>
    %1173 = math.exp %1172 : vector<2x128xf32>
    %cst_208 = arith.constant 1.000000e+00 : f32
    %1174 = vector.broadcast %cst_208 : f32 to vector<2x128xf32>
    %1175 = arith.addf %1174, %1173 : vector<2x128xf32>
    %1176 = arith.divf %1174, %1175 : vector<2x128xf32>
    %1177 = arith.mulf %1168, %1119 : vector<2x128xf32>
    %1178 = arith.mulf %1162, %1170 : vector<2x128xf32>
    %1179 = arith.addf %1177, %1178 : vector<2x128xf32>
    %1180 = math.tanh %1179 : vector<2x128xf32>
    %1181 = arith.mulf %1176, %1180 : vector<2x128xf32>
    %c0_209 = arith.constant 0 : index
    %c0_210 = arith.constant 0 : index
    %1182 = vector.load %arg11[%c0_209, %c0_210] : memref<128x4xf32, #tpu.memory_space<vmem>>, vector<128x4xf32>
    %cst_211 = arith.constant dense<0.000000e+00> : vector<2x4xf32>
    %1183 = tpu.matmul %1181, %1182, %cst_211 {dimension_numbers = #tpu.dot_dimension_numbers<[1], [0], [0], [1], [0, 0, 1, 1], [], []>} : vector<2x128xf32>, vector<128x4xf32>, vector<2x4xf32> -> vector<2x4xf32>
    %c0_212 = arith.constant 0 : index
    %c0_213 = arith.constant 0 : index
    %1184 = vector.load %arg12[%c0_212, %c0_213] : memref<1x4xf32, #tpu.memory_space<vmem>>, vector<1x4xf32>
    %1185 = vector.broadcast %1184 : vector<1x4xf32> to vector<2x4xf32>
    %1186 = arith.addf %1183, %1185 : vector<2x4xf32>
    %c0_214 = arith.constant 0 : index
    %c0_215 = arith.constant 0 : index
    %1187 = vector.load %arg13[%c0_214, %c0_215] : memref<2x4xf32, #tpu.memory_space<vmem>>, vector<2x4xf32>
    tpu.vector_store %arg13[%c0_214, %c0_215], %1186 {strides = array<i32>} : memref<2x4xf32, #tpu.memory_space<vmem>>, vector<2x4xf32>,
    return
  }
}

</mosaic_0001>

<llo_original>
// kernel: st_gat_forward.1
$region0: #{st_gat_forward.1}
  #allocation0 [shape = 'u32[]', space=smem, size = 0x4, offset = 0x4, fixed_abs, tag = 'smem constant byte address 0x4 - core index']
  #allocation1 [shape = 'u32[144,128]{1,0:T(1,128)}', space=vmem, size = 0x12000, scoped, tag = 'internal scratch']
  %s0 = inlined_call_operand.vmem [shape: f32[16,16], index: 0, kind: input, shape index: {}]
  %s1 = inlined_call_operand.vmem [shape: f32[16,16], index: 1, kind: input, shape index: {}]
  %s2 = inlined_call_operand.vmem [shape: f32[16,128], index: 2, kind: input, shape index: {}]
  %s3 = inlined_call_operand.vmem [shape: f32[16,16], index: 3, kind: input, shape index: {}]
  %s4 = inlined_call_operand.vmem [shape: f32[1,16], index: 4, kind: input, shape index: {}]
  %s5 = inlined_call_operand.vmem [shape: f32[8,512], index: 5, kind: input, shape index: {}]
  %s6 = inlined_call_operand.hbm [shape: f32[128,512], index: 6, kind: input, shape index: {}]
  %s7 = inlined_call_operand.vmem [shape: f32[1,512], index: 7, kind: input, shape index: {}]
  %s8 = inlined_call_operand.hbm [shape: f32[128,512], index: 8, kind: input, shape index: {}]
  %s9 = inlined_call_operand.hbm [shape: f32[128,512], index: 9, kind: input, shape index: {}]
  %s10 = inlined_call_operand.vmem [shape: f32[1,512], index: 10, kind: input, shape index: {}]
  %s11 = inlined_call_operand.vmem [shape: f32[128,4], index: 11, kind: input, shape index: {}]
  %s12 = inlined_call_operand.vmem [shape: f32[1,4], index: 12, kind: input, shape index: {}]
  %s13 = inlined_call_operand.hbm [shape: f32[2,4], index: 13, kind: output, shape index: {}]
  %s14 = sld [smem:[#allocation0]]
  $region74: #{st_gat_forward.1} parent=0
    _
  %s16 = ssub.s32 1, %s14
  %s17 = scalar_select 0, %s16, %s14
  $region1: #{st_gat_forward.1} parent=0
    #allocation2 [shape = 'u8[262144]{0}', space=vmem, size = 0x40000, scoped, tag = 'input window, operand 6, single buffered']
    #allocation3 [shape = 's32[1]{0}', space=sflag, size = 0x4, scoped, tag = 'scoped memory for st_gat_forward.1']
    #allocation4 [shape = 's32[1]{0}', space=sflag, size = 0x4, scoped, tag = 'scoped memory for st_gat_forward.1']
    #allocation5 [shape = 'u8[262144]{0}', space=vmem, size = 0x40000, scoped, tag = 'input window, operand 8, single buffered']
    #allocation6 [shape = 's32[1]{0}', space=sflag, size = 0x4, scoped, tag = 'scoped memory for st_gat_forward.1']
    #allocation7 [shape = 'u8[262144]{0}', space=vmem, size = 0x40000, scoped, tag = 'input window, operand 9, single buffered']
    #allocation8 [shape = 'u8[1024]{0}', space=vmem, size = 0x400, scoped, tag = 'output window, operand 0, single buffered']
    %18 = vsyncpa [#allocation3], 0
    %19 = vsyncpa [#allocation6], 0
    %20 = vsyncpa [#allocation4], 0
    // Predicated region
    $region2: #{st_gat_forward.1} parent=1 // pred_check
      _
    $region3: #{st_gat_forward.1} parent=1 // pred_check_branch
      %22 = sbr.rel (0) target = $region5
    $region4: #{st_gat_forward.1} parent=1 // pred_region
      _
    $region5: #{st_gat_forward.1} parent=1 // pred_fallthru
      _
    // Predicated region
    $region6: #{st_gat_forward.1} parent=1 // pred_check
      _
    $region7: #{st_gat_forward.1} parent=1 // pred_check_branch
      %24 = sbr.rel (0) target = $region9
    $region8: #{st_gat_forward.1} parent=1 // pred_region
      _
    $region9: #{st_gat_forward.1} parent=1 // pred_fallthru
      _
    // Predicated region
    $region10: #{st_gat_forward.1} parent=1 // pred_check
      _
    $region11: #{st_gat_forward.1} parent=1 // pred_check_branch
      %26 = sbr.rel (0) target = $region13
    $region12: #{st_gat_forward.1} parent=1 // pred_region
      _
    $region13: #{st_gat_forward.1} parent=1 // pred_fallthru
      _
    // Predicated region
    $region14: #{st_gat_forward.1} parent=1 // pred_check
      _
    $region15: #{st_gat_forward.1} parent=1 // pred_check_branch
      %28 = sbr.rel (0) target = $region17
    $region16: #{st_gat_forward.1} parent=1 // pred_region
      _
    $region17: #{st_gat_forward.1} parent=1 // pred_fallthru
      _
    // Predicated region
    $region18: #{st_gat_forward.1} parent=1 // pred_check
      _
    $region19: #{st_gat_forward.1} parent=1 // pred_check_branch
      %30 = sbr.rel (0) target = $region21
    $region20: #{st_gat_forward.1} parent=1 // pred_region
      _
    $region21: #{st_gat_forward.1} parent=1 // pred_fallthru
      _
    // Predicated region
    $region22: #{st_gat_forward.1} parent=1 // pred_check
      _
    $region23: #{st_gat_forward.1} parent=1 // pred_check_branch
      %32 = sbr.rel (0) target = $region25
    $region24: #{st_gat_forward.1} parent=1 // pred_region
      _
    $region25: #{st_gat_forward.1} parent=1 // pred_fallthru
      _
    // Predicated region
    $region26: #{st_gat_forward.1} parent=1 // pred_check
      _
    $region27: #{st_gat_forward.1} parent=1 // pred_check_branch
      %34 = sbr.rel (0) target = $region29
    $region28: #{st_gat_forward.1} parent=1 // pred_region
      %s36 = ssub.s32 8192, 8192
      %37 = vsyncadd [#allocation3], %s36
      %s38 = sshll.u32 [#allocation2], 4
      %s39 = int_to_ptr.vmem [resolvable:$true] %s38
      %44 = dma.hbm_to_vmem [thread:$0]  %s6, 8192, %s39, [#allocation3], 512, 512, 32
    $region29: #{st_gat_forward.1} parent=1 // pred_fallthru
      _
    // Predicated region
    $region30: #{st_gat_forward.1} parent=1 // pred_check
      _
    $region31: #{st_gat_forward.1} parent=1 // pred_check_branch
      %46 = sbr.rel (0) target = $region33
    $region32: #{st_gat_forward.1} parent=1 // pred_region
      _
    $region33: #{st_gat_forward.1} parent=1 // pred_fallthru
      _
    // Predicated region
    $region34: #{st_gat_forward.1} parent=1 // pred_check
      _
    $region35: #{st_gat_forward.1} parent=1 // pred_check_branch
      %48 = sbr.rel (0) target = $region37
    $region36: #{st_gat_forward.1} parent=1 // pred_region
      %s50 = ssub.s32 8192, 8192
      %51 = vsyncadd [#allocation6], %s50
      %s52 = sshll.u32 [#allocation5], 4
      %s53 = int_to_ptr.vmem [resolvable:$true] %s52
      %58 = dma.hbm_to_vmem [thread:$0]  %s8, 8192, %s53, [#allocation6], 512, 512, 32
    $region37: #{st_gat_forward.1} parent=1 // pred_fallthru
      _
    // Predicated region
    $region38: #{st_gat_forward.1} parent=1 // pred_check
      _
    $region39: #{st_gat_forward.1} parent=1 // pred_check_branch
      %60 = sbr.rel (0) target = $region41
    $region40: #{st_gat_forward.1} parent=1 // pred_region
      %s62 = ssub.s32 8192, 8192
      %63 = vsyncadd [#allocation6], %s62
      %s64 = sshll.u32 [#allocation7], 4
      %s65 = int_to_ptr.vmem [resolvable:$true] %s64
      %70 = dma.hbm_to_vmem [thread:$0]  %s9, 8192, %s65, [#allocation6], 512, 512, 32
    $region41: #{st_gat_forward.1} parent=1 // pred_fallthru
      _
    // Predicated region
    $region42: #{st_gat_forward.1} parent=1 // pred_check
      _
    $region43: #{st_gat_forward.1} parent=1 // pred_check_branch
      %72 = sbr.rel (0) target = $region45
    $region44: #{st_gat_forward.1} parent=1 // pred_region
      _
    $region45: #{st_gat_forward.1} parent=1 // pred_fallthru
      _
    // Predicated region
    $region46: #{st_gat_forward.1} parent=1 // pred_check
      _
    $region47: #{st_gat_forward.1} parent=1 // pred_check_branch
      %74 = sbr.rel (0) target = $region49
    $region48: #{st_gat_forward.1} parent=1 // pred_region
      _
    $region49: #{st_gat_forward.1} parent=1 // pred_fallthru
      _
    // Predicated region
    $region50: #{st_gat_forward.1} parent=1 // pred_check
      _
    $region51: #{st_gat_forward.1} parent=1 // pred_check_branch
      %76 = sbr.rel (0) target = $region53
    $region52: #{st_gat_forward.1} parent=1 // pred_region
      _
    $region53: #{st_gat_forward.1} parent=1 // pred_fallthru
      _
    // Predicated region
    $region54: #{st_gat_forward.1} parent=1 // pred_check
      _
    $region55: #{st_gat_forward.1} parent=1 // pred_check_branch
      %78 = sbr.rel (0) target = $region57
    $region56: #{st_gat_forward.1} parent=1 // pred_region
      %79 = dma.done [#allocation3], 8192
    $region57: #{st_gat_forward.1} parent=1 // pred_fallthru
      _
    // Predicated region
    $region58: #{st_gat_forward.1} parent=1 // pred_check
      _
    $region59: #{st_gat_forward.1} parent=1 // pred_check_branch
      %81 = sbr.rel (0) target = $region61
    $region60: #{st_gat_forward.1} parent=1 // pred_region
      %82 = dma.done [#allocation6], 8192
    $region61: #{st_gat_forward.1} parent=1 // pred_fallthru
      _
    // Predicated region
    $region62: #{st_gat_forward.1} parent=1 // pred_check
      _
    $region63: #{st_gat_forward.1} parent=1 // pred_check_branch
      %84 = sbr.rel (0) target = $region65
    $region64: #{st_gat_forward.1} parent=1 // pred_region
      %85 = dma.done [#allocation6], 8192
    $region65: #{st_gat_forward.1} parent=1 // pred_fallthru
      _
    %v86 = vld [vmem:[%s0] sm:$0xff]
    %v87 = vld [vmem:[%s0 + $0x8] sm:$0xff]
    %v88 = vld [vmem:[%s2] sm:$0xff]
    %v89 = vld [vmem:[%s2 + $0x8] sm:$0xff]
    %vm90 = vcmask 130048
    %v92 = vsel %vm90, %v86, 0
    %v95 = vsel %vm90, %v87, 0
    %97 = vmatprep.subr.mxu0 0.0
    %98 = vmatpush1.msra.mxu0 %v88
    %99 = vmatprep.subr.mxu0 0.0
    %100 = vmatpush1.msra.mxu0 %v89
    %101 = vmatprep.subr.mxu0 0.0
    %102 = vmatpush1.msra.mxu0 0.0
    %103 = vmatprep.subr.mxu0 0.0
    %104 = vmatpush1.msra.mxu0 0.0
    %105 = vmatprep.subr.mxu0 0.0
    %106 = vmatpush1.msra.mxu0 0.0
    %107 = vmatprep.subr.mxu0 0.0
    %108 = vmatpush1.msra.mxu0 0.0
    %109 = vmatprep.subr.mxu0 0.0
    %110 = vmatpush1.msra.mxu0 0.0
    %111 = vmatprep.subr.mxu0 0.0
    %112 = vmatpush1.msra.mxu0 0.0
    %113 = vmatprep.subr.mxu0 0.0
    %114 = vmatpush1.msra.mxu0 0.0
    %115 = vmatprep.subr.mxu0 0.0
    %116 = vmatpush1.msra.mxu0 0.0
    %117 = vmatprep.subr.mxu0 0.0
    %118 = vmatpush1.msra.mxu0 0.0
    %119 = vmatprep.subr.mxu0 0.0
    %120 = vmatpush1.msra.mxu0 0.0
    %121 = vmatprep.subr.mxu0 0.0
    %122 = vmatpush1.msra.mxu0 0.0
    %123 = vmatprep.subr.mxu0 0.0
    %124 = vmatpush1.msra.mxu0 0.0
    %125 = vmatprep.subr.mxu0 0.0
    %126 = vmatpush1.msra.mxu0 0.0
    %127 = vmatprep.subr.mxu0 0.0
    %128 = vmatpush1.msra.mxu0 0.0
    %129 = vmatprep.subr.mxu0 0.0
    %130 = vmatpush1.msra.mxu0 0.0
    %131 = vmatprep.subr.mxu0 0.0
    %132 = vmatpush1.msra.mxu0 0.0
    %133 = vmatprep.subr.mxu0 0.0
    %134 = vmatpush1.msra.mxu0 0.0
    %135 = vmatprep.subr.mxu0 0.0
    %136 = vmatpush1.msra.mxu0 0.0
    %137 = vmatprep.subr.mxu0 0.0
    %138 = vmatpush1.msra.mxu0 0.0
    %139 = vmatprep.subr.mxu0 0.0
    %140 = vmatpush1.msra.mxu0 0.0
    %141 = vmatprep.subr.mxu0 0.0
    %142 = vmatpush1.msra.mxu0 0.0
    %143 = vmatprep.subr.mxu0 0.0
    %144 = vmatpush1.msra.mxu0 0.0
    %145 = vmatprep.subr.mxu0 0.0
    %146 = vmatpush1.msra.mxu0 0.0
    %147 = vmatprep.subr.mxu0 0.0
    %148 = vmatpush1.msra.mxu0 0.0
    %149 = vmatprep.subr.mxu0 0.0
    %150 = vmatpush1.msra.mxu0 0.0
    %151 = vmatprep.subr.mxu0 0.0
    %152 = vmatpush1.msra.mxu0 0.0
    %153 = vmatprep.subr.mxu0 0.0
    %154 = vmatpush1.msra.mxu0 0.0
    %155 = vmatprep.subr.mxu0 0.0
    %156 = vmatpush1.msra.mxu0 0.0
    %157 = vmatprep.subr.mxu0 0.0
    %158 = vmatpush1.msra.mxu0 0.0
    %159 = vmatprep.subr.mxu0 0.0
    %160 = vmatpush1.msra.mxu0 0.0
    %161 = vmatprep.mubr.f32.mxu0 0.0
    %162 = vmatmul.mubr.f32.gmra.mrb[0].mxu0 %v92
    %v163 = vpop.f32.mrb[0].mxu0
    %v164 = vadd.f32 0.0, %v163
    %v165 = vpop.f32.mrb[0].mxu0
    %166 = vmatprep.mubr.f32.mxu0 0.0
    %167 = vmatmul.mubr.f32.gmra.mrb[0].mxu0 %v95
    %v168 = vpop.f32.mrb[0].mxu0
    %v169 = vadd.f32 0.0, %v168
    %v170 = vpop.f32.mrb[0].mxu0
    %171 = vdwg.mxu0
    %v172 = vld [vmem:[%s3] sm:$0xff]
    %v173 = vld [vmem:[%s3 + $0x8] sm:$0xff]
    %174 = vmatprep.subr.mxu0 0.0
    %175 = vmatpush1.msra.mxu0 %v172
    %176 = vmatprep.subr.mxu0 0.0
    %177 = vmatpush1.msra.mxu0 %v173
    %178 = vmatprep.subr.mxu0 0.0
    %179 = vmatpush1.msra.mxu0 0.0
    %180 = vmatprep.subr.mxu0 0.0
    %181 = vmatpush1.msra.mxu0 0.0
    %182 = vmatprep.subr.mxu0 0.0
    %183 = vmatpush1.msra.mxu0 0.0
    %184 = vmatprep.subr.mxu0 0.0
    %185 = vmatpush1.msra.mxu0 0.0
    %186 = vmatprep.subr.mxu0 0.0
    %187 = vmatpush1.msra.mxu0 0.0
    %188 = vmatprep.subr.mxu0 0.0
    %189 = vmatpush1.msra.mxu0 0.0
    %190 = vmatprep.subr.mxu0 0.0
    %191 = vmatpush1.msra.mxu0 0.0
    %192 = vmatprep.subr.mxu0 0.0
    %193 = vmatpush1.msra.mxu0 0.0
    %194 = vmatprep.subr.mxu0 0.0
    %195 = vmatpush1.msra.mxu0 0.0
    %196 = vmatprep.subr.mxu0 0.0
    %197 = vmatpush1.msra.mxu0 0.0
    %198 = vmatprep.subr.mxu0 0.0
    %199 = vmatpush1.msra.mxu0 0.0
    %200 = vmatprep.subr.mxu0 0.0
    %201 = vmatpush1.msra.mxu0 0.0
    %202 = vmatprep.subr.mxu0 0.0
    %203 = vmatpush1.msra.mxu0 0.0
    %204 = vmatprep.subr.mxu0 0.0
    %205 = vmatpush1.msra.mxu0 0.0
    %206 = vmatprep.subr.mxu0 0.0
    %207 = vmatpush1.msra.mxu0 0.0
    %208 = vmatprep.subr.mxu0 0.0
    %209 = vmatpush1.msra.mxu0 0.0
    %210 = vmatprep.subr.mxu0 0.0
    %211 = vmatpush1.msra.mxu0 0.0
    %212 = vmatprep.subr.mxu0 0.0
    %213 = vmatpush1.msra.mxu0 0.0
    %214 = vmatprep.subr.mxu0 0.0
    %215 = vmatpush1.msra.mxu0 0.0
    %216 = vmatprep.subr.mxu0 0.0
    %217 = vmatpush1.msra.mxu0 0.0
    %218 = vmatprep.subr.mxu0 0.0
    %219 = vmatpush1.msra.mxu0 0.0
    %220 = vmatprep.subr.mxu0 0.0
    %221 = vmatpush1.msra.mxu0 0.0
    %222 = vmatprep.subr.mxu0 0.0
    %223 = vmatpush1.msra.mxu0 0.0
    %224 = vmatprep.subr.mxu0 0.0
    %225 = vmatpush1.msra.mxu0 0.0
    %226 = vmatprep.subr.mxu0 0.0
    %227 = vmatpush1.msra.mxu0 0.0
    %228 = vmatprep.subr.mxu0 0.0
    %229 = vmatpush1.msra.mxu0 0.0
    %230 = vmatprep.subr.mxu0 0.0
    %231 = vmatpush1.msra.mxu0 0.0
    %232 = vmatprep.subr.mxu0 0.0
    %233 = vmatpush1.msra.mxu0 0.0
    %234 = vmatprep.subr.mxu0 0.0
    %235 = vmatpush1.msra.mxu0 0.0
    %236 = vmatprep.subr.mxu0 0.0
    %237 = vmatpush1.msra.mxu0 0.0
    %238 = vmatprep.mubr.f32.mxu0 0.0
    %239 = vmatmul.mubr.f32.gmra.mrb[0].mxu0 %v92
    %v240 = vpop.f32.mrb[0].mxu0
    %v241 = vadd.f32 0.0, %v240
    %v242 = vpop.f32.mrb[0].mxu0
    %243 = vmatprep.mubr.f32.mxu0 0.0
    %244 = vmatmul.mubr.f32.gmra.mrb[0].mxu0 %v95
    %v245 = vpop.f32.mrb[0].mxu0
    %v246 = vadd.f32 0.0, %v245
    %v247 = vpop.f32.mrb[0].mxu0
    %248 = vdwg.mxu0
    %249 = vxpose.xlu0.b32.start [1/16] %v241, 128
    %250 = vxpose.xlu0.b32.cont [2/16] %v246, 128
    %251 = vxpose.xlu0.b32.cont [3/16] 0.0, 128
    %252 = vxpose.xlu0.b32.cont [4/16] 0.0, 128
    %253 = vxpose.xlu0.b32.cont [5/16] 0.0, 128
    %254 = vxpose.xlu0.b32.cont [6/16] 0.0, 128
    %255 = vxpose.xlu0.b32.cont [7/16] 0.0, 128
    %256 = vxpose.xlu0.b32.cont [8/16] 0.0, 128
    %257 = vxpose.xlu0.b32.cont [9/16] 0.0, 128
    %258 = vxpose.xlu0.b32.cont [10/16] 0.0, 128
    %259 = vxpose.xlu0.b32.cont [11/16] 0.0, 128
    %260 = vxpose.xlu0.b32.cont [12/16] 0.0, 128
    %261 = vxpose.xlu0.b32.cont [13/16] 0.0, 128
    %262 = vxpose.xlu0.b32.cont [14/16] 0.0, 128
    %263 = vxpose.xlu0.b32.cont [15/16] 0.0, 128
    %264 = vxpose.xlu0.b32.end [16/16] 0.0, 128
    %v265 = vpop.trf.xlu0
    %v266 = vpop.trf.xlu0
    %v267 = vpop.trf.xlu0
    %v268 = vpop.trf.xlu0
    %v269 = vpop.trf.xlu0
    %v270 = vpop.trf.xlu0
    %v271 = vpop.trf.xlu0
    %v272 = vpop.trf.xlu0
    %v273 = vpop.trf.xlu0
    %v274 = vpop.trf.xlu0
    %v275 = vpop.trf.xlu0
    %v276 = vpop.trf.xlu0
    %v277 = vpop.trf.xlu0
    %v278 = vpop.trf.xlu0
    %v279 = vpop.trf.xlu0
    %v280 = vpop.trf.xlu0
    %v281 = vld [vmem:[%s1] sm:$0xff]
    %v282 = vld [vmem:[%s1 + $0x8] sm:$0xff]
    %vm283 = vcmp.gt.f32.partialorder %v281, 0.0
    %vm284 = vcmp.gt.f32.partialorder %v282, 0.0
    %v285 = vsel %vm283, 0.0, -1e+30
    %v286 = vsel %vm284, 0.0, -1e+30
    %288 = vset.pattern.permute.xlu0 8
    %289 = vperm.xlu0 %288, %v241
    %v290 = vpop.permute.xlu0 %289
    %293 = vset.pattern.permute.xlu0 8
    %294 = vperm.xlu0 %293, %v246
    %v295 = vpop.permute.xlu0 %294
    %v297 = vlaneseq
    %v298 = vshrl.u32 %v297, 7
    %v299 = vsub.s32 0, %v298
    %v300 = vrot.slane %v265, %v299
    %v301 = vadd.f32 %v290, %v300
    %v302 = vadd.f32 %v295, %v300
    %vm303 = vcmp.gt.f32.partialorder %v301, 0.0
    %vm304 = vcmp.gt.f32.partialorder %v302, 0.0
    %v305 = vmul.f32 %v301, 0.2
    %v306 = vmul.f32 %v302, 0.2
    %v307 = vsel %vm303, %v301, %v305
    %v308 = vsel %vm304, %v302, %v306
    %v309 = vadd.f32 %v307, %v285
    %v310 = vadd.f32 %v308, %v286
    %v311 = vsel %vm90, %v309, -inf
    %312 = vmax.xlane.f32.xlu0 %v311
    %v313 = vpop.xlane.xlu0 %312
    %v314 = vsel %vm90, %v310, -inf
    %315 = vmax.xlane.f32.xlu0 %v314
    %v316 = vpop.xlane.xlu0 %315
    %v317 = vsub.f32 %v309, %v313
    %v318 = vsub.f32 %v310, %v316
    %v319 = vmul.f32 %v317, 1.442695
    %v320 = vpow.pop %v319
    %v321 = vmul.f32 %v318, 1.442695
    %v322 = vpow.pop %v321
    %v323 = vsel %vm90, %v320, 0.0
    %324 = vadd.xlane.f32.xlu0 %v323
    %v325 = vpop.xlane.xlu0 %324
    %v326 = vsel %vm90, %v322, 0.0
    %327 = vadd.xlane.f32.xlu0 %v326
    %v328 = vpop.xlane.xlu0 %327
    %v329 = vrcp.pop %v325
    %v330 = vrcp.pop %v328
    %v331 = vmul.f32 %v320, %v329
    %v332 = vmul.f32 %v322, %v330
    %333 = vset.pattern.permute.xlu0 9
    %334 = vperm.xlu0 %333, %v241
    %v335 = vpop.permute.xlu0 %334
    %337 = vset.pattern.permute.xlu0 9
    %338 = vperm.xlu0 %337, %v246
    %v339 = vpop.permute.xlu0 %338
    %v341 = vlaneseq
    %v342 = vshrl.u32 %v341, 7
    %v343 = vsub.s32 1, %v342
    %v344 = vrot.slane %v265, %v343
    %v345 = vadd.f32 %v335, %v344
    %v346 = vadd.f32 %v339, %v344
    %vm347 = vcmp.gt.f32.partialorder %v345, 0.0
    %vm348 = vcmp.gt.f32.partialorder %v346, 0.0
    %v349 = vmul.f32 %v345, 0.2
    %v350 = vmul.f32 %v346, 0.2
    %v351 = vsel %vm347, %v345, %v349
    %v352 = vsel %vm348, %v346, %v350
    %v353 = vadd.f32 %v351, %v285
    %v354 = vadd.f32 %v352, %v286
    %v355 = vsel %vm90, %v353, -inf
    %356 = vmax.xlane.f32.xlu0 %v355
    %v357 = vpop.xlane.xlu0 %356
    %v358 = vsel %vm90, %v354, -inf
    %359 = vmax.xlane.f32.xlu0 %v358
    %v360 = vpop.xlane.xlu0 %359
    %v361 = vsub.f32 %v353, %v357
    %v362 = vsub.f32 %v354, %v360
    %v363 = vmul.f32 %v361, 1.442695
    %v364 = vpow.pop %v363
    %v365 = vmul.f32 %v362, 1.442695
    %v366 = vpow.pop %v365
    %v367 = vsel %vm90, %v364, 0.0
    %368 = vadd.xlane.f32.xlu0 %v367
    %v369 = vpop.xlane.xlu0 %368
    %v370 = vsel %vm90, %v366, 0.0
    %371 = vadd.xlane.f32.xlu0 %v370
    %v372 = vpop.xlane.xlu0 %371
    %v373 = vrcp.pop %v369
    %v374 = vrcp.pop %v372
    %v375 = vmul.f32 %v364, %v373
    %v376 = vmul.f32 %v366, %v374
    %377 = vset.pattern.permute.xlu0 10
    %378 = vperm.xlu0 %377, %v241
    %v379 = vpop.permute.xlu0 %378
    %381 = vset.pattern.permute.xlu0 10
    %382 = vperm.xlu0 %381, %v246
    %v383 = vpop.permute.xlu0 %382
    %v385 = vlaneseq
    %v386 = vshrl.u32 %v385, 7
    %v387 = vsub.s32 2, %v386
    %v388 = vrot.slane %v265, %v387
    %v389 = vadd.f32 %v379, %v388
    %v390 = vadd.f32 %v383, %v388
    %vm391 = vcmp.gt.f32.partialorder %v389, 0.0
    %vm392 = vcmp.gt.f32.partialorder %v390, 0.0
    %v393 = vmul.f32 %v389, 0.2
    %v394 = vmul.f32 %v390, 0.2
    %v395 = vsel %vm391, %v389, %v393
    %v396 = vsel %vm392, %v390, %v394
    %v397 = vadd.f32 %v395, %v285
    %v398 = vadd.f32 %v396, %v286
    %v399 = vsel %vm90, %v397, -inf
    %400 = vmax.xlane.f32.xlu0 %v399
    %v401 = vpop.xlane.xlu0 %400
    %v402 = vsel %vm90, %v398, -inf
    %403 = vmax.xlane.f32.xlu0 %v402
    %v404 = vpop.xlane.xlu0 %403
    %v405 = vsub.f32 %v397, %v401
    %v406 = vsub.f32 %v398, %v404
    %v407 = vmul.f32 %v405, 1.442695
    %v408 = vpow.pop %v407
    %v409 = vmul.f32 %v406, 1.442695
    %v410 = vpow.pop %v409
    %v411 = vsel %vm90, %v408, 0.0
    %412 = vadd.xlane.f32.xlu0 %v411
    %v413 = vpop.xlane.xlu0 %412
    %v414 = vsel %vm90, %v410, 0.0
    %415 = vadd.xlane.f32.xlu0 %v414
    %v416 = vpop.xlane.xlu0 %415
    %v417 = vrcp.pop %v413
    %v418 = vrcp.pop %v416
    %v419 = vmul.f32 %v408, %v417
    %v420 = vmul.f32 %v410, %v418
    %421 = vset.pattern.permute.xlu0 11
    %422 = vperm.xlu0 %421, %v241
    %v423 = vpop.permute.xlu0 %422
    %425 = vset.pattern.permute.xlu0 11
    %426 = vperm.xlu0 %425, %v246
    %v427 = vpop.permute.xlu0 %426
    %v429 = vlaneseq
    %v430 = vshrl.u32 %v429, 7
    %v431 = vsub.s32 3, %v430
    %v432 = vrot.slane %v265, %v431
    %v433 = vadd.f32 %v423, %v432
    %v434 = vadd.f32 %v427, %v432
    %vm435 = vcmp.gt.f32.partialorder %v433, 0.0
    %vm436 = vcmp.gt.f32.partialorder %v434, 0.0
    %v437 = vmul.f32 %v433, 0.2
    %v438 = vmul.f32 %v434, 0.2
    %v439 = vsel %vm435, %v433, %v437
    %v440 = vsel %vm436, %v434, %v438
    %v441 = vadd.f32 %v439, %v285
    %v442 = vadd.f32 %v440, %v286
    %v443 = vsel %vm90, %v441, -inf
    %444 = vmax.xlane.f32.xlu0 %v443
    %v445 = vpop.xlane.xlu0 %444
    %v446 = vsel %vm90, %v442, -inf
    %447 = vmax.xlane.f32.xlu0 %v446
    %v448 = vpop.xlane.xlu0 %447
    %v449 = vsub.f32 %v441, %v445
    %v450 = vsub.f32 %v442, %v448
    %v451 = vmul.f32 %v449, 1.442695
    %v452 = vpow.pop %v451
    %v453 = vmul.f32 %v450, 1.442695
    %v454 = vpow.pop %v453
    %v455 = vsel %vm90, %v452, 0.0
    %456 = vadd.xlane.f32.xlu0 %v455
    %v457 = vpop.xlane.xlu0 %456
    %v458 = vsel %vm90, %v454, 0.0
    %459 = vadd.xlane.f32.xlu0 %v458
    %v460 = vpop.xlane.xlu0 %459
    %v461 = vrcp.pop %v457
    %v462 = vrcp.pop %v460
    %v463 = vmul.f32 %v452, %v461
    %v464 = vmul.f32 %v454, %v462
    %465 = vset.pattern.permute.xlu0 12
    %466 = vperm.xlu0 %465, %v241
    %v467 = vpop.permute.xlu0 %466
    %469 = vset.pattern.permute.xlu0 12
    %470 = vperm.xlu0 %469, %v246
    %v471 = vpop.permute.xlu0 %470
    %v473 = vlaneseq
    %v474 = vshrl.u32 %v473, 7
    %v475 = vsub.s32 4, %v474
    %v476 = vrot.slane %v265, %v475
    %v477 = vadd.f32 %v467, %v476
    %v478 = vadd.f32 %v471, %v476
    %vm479 = vcmp.gt.f32.partialorder %v477, 0.0
    %vm480 = vcmp.gt.f32.partialorder %v478, 0.0
    %v481 = vmul.f32 %v477, 0.2
    %v482 = vmul.f32 %v478, 0.2
    %v483 = vsel %vm479, %v477, %v481
    %v484 = vsel %vm480, %v478, %v482
    %v485 = vadd.f32 %v483, %v285
    %v486 = vadd.f32 %v484, %v286
    %v487 = vsel %vm90, %v485, -inf
    %488 = vmax.xlane.f32.xlu0 %v487
    %v489 = vpop.xlane.xlu0 %488
    %v490 = vsel %vm90, %v486, -inf
    %491 = vmax.xlane.f32.xlu0 %v490
    %v492 = vpop.xlane.xlu0 %491
    %v493 = vsub.f32 %v485, %v489
    %v494 = vsub.f32 %v486, %v492
    %v495 = vmul.f32 %v493, 1.442695
    %v496 = vpow.pop %v495
    %v497 = vmul.f32 %v494, 1.442695
    %v498 = vpow.pop %v497
    %v499 = vsel %vm90, %v496, 0.0
    %500 = vadd.xlane.f32.xlu0 %v499
    %v501 = vpop.xlane.xlu0 %500
    %v502 = vsel %vm90, %v498, 0.0
    %503 = vadd.xlane.f32.xlu0 %v502
    %v504 = vpop.xlane.xlu0 %503
    %v505 = vrcp.pop %v501
    %v506 = vrcp.pop %v504
    %v507 = vmul.f32 %v496, %v505
    %v508 = vmul.f32 %v498, %v506
    %509 = vset.pattern.permute.xlu0 13
    %510 = vperm.xlu0 %509, %v241
    %v511 = vpop.permute.xlu0 %510
    %513 = vset.pattern.permute.xlu0 13
    %514 = vperm.xlu0 %513, %v246
    %v515 = vpop.permute.xlu0 %514
    %v517 = vlaneseq
    %v518 = vshrl.u32 %v517, 7
    %v519 = vsub.s32 5, %v518
    %v520 = vrot.slane %v265, %v519
    %v521 = vadd.f32 %v511, %v520
    %v522 = vadd.f32 %v515, %v520
    %vm523 = vcmp.gt.f32.partialorder %v521, 0.0
    %vm524 = vcmp.gt.f32.partialorder %v522, 0.0
    %v525 = vmul.f32 %v521, 0.2
    %v526 = vmul.f32 %v522, 0.2
    %v527 = vsel %vm523, %v521, %v525
    %v528 = vsel %vm524, %v522, %v526
    %v529 = vadd.f32 %v527, %v285
    %v530 = vadd.f32 %v528, %v286
    %v531 = vsel %vm90, %v529, -inf
    %532 = vmax.xlane.f32.xlu0 %v531
    %v533 = vpop.xlane.xlu0 %532
    %v534 = vsel %vm90, %v530, -inf
    %535 = vmax.xlane.f32.xlu0 %v534
    %v536 = vpop.xlane.xlu0 %535
    %v537 = vsub.f32 %v529, %v533
    %v538 = vsub.f32 %v530, %v536
    %v539 = vmul.f32 %v537, 1.442695
    %v540 = vpow.pop %v539
    %v541 = vmul.f32 %v538, 1.442695
    %v542 = vpow.pop %v541
    %v543 = vsel %vm90, %v540, 0.0
    %544 = vadd.xlane.f32.xlu0 %v543
    %v545 = vpop.xlane.xlu0 %544
    %v546 = vsel %vm90, %v542, 0.0
    %547 = vadd.xlane.f32.xlu0 %v546
    %v548 = vpop.xlane.xlu0 %547
    %v549 = vrcp.pop %v545
    %v550 = vrcp.pop %v548
    %v551 = vmul.f32 %v540, %v549
    %v552 = vmul.f32 %v542, %v550
    %553 = vset.pattern.permute.xlu0 14
    %554 = vperm.xlu0 %553, %v241
    %v555 = vpop.permute.xlu0 %554
    %557 = vset.pattern.permute.xlu0 14
    %558 = vperm.xlu0 %557, %v246
    %v559 = vpop.permute.xlu0 %558
    %v561 = vlaneseq
    %v562 = vshrl.u32 %v561, 7
    %v563 = vsub.s32 6, %v562
    %v564 = vrot.slane %v265, %v563
    %v565 = vadd.f32 %v555, %v564
    %v566 = vadd.f32 %v559, %v564
    %vm567 = vcmp.gt.f32.partialorder %v565, 0.0
    %vm568 = vcmp.gt.f32.partialorder %v566, 0.0
    %v569 = vmul.f32 %v565, 0.2
    %v570 = vmul.f32 %v566, 0.2
    %v571 = vsel %vm567, %v565, %v569
    %v572 = vsel %vm568, %v566, %v570
    %v573 = vadd.f32 %v571, %v285
    %v574 = vadd.f32 %v572, %v286
    %v575 = vsel %vm90, %v573, -inf
    %576 = vmax.xlane.f32.xlu0 %v575
    %v577 = vpop.xlane.xlu0 %576
    %v578 = vsel %vm90, %v574, -inf
    %579 = vmax.xlane.f32.xlu0 %v578
    %v580 = vpop.xlane.xlu0 %579
    %v581 = vsub.f32 %v573, %v577
    %v582 = vsub.f32 %v574, %v580
    %v583 = vmul.f32 %v581, 1.442695
    %v584 = vpow.pop %v583
    %v585 = vmul.f32 %v582, 1.442695
    %v586 = vpow.pop %v585
    %v587 = vsel %vm90, %v584, 0.0
    %588 = vadd.xlane.f32.xlu0 %v587
    %v589 = vpop.xlane.xlu0 %588
    %v590 = vsel %vm90, %v586, 0.0
    %591 = vadd.xlane.f32.xlu0 %v590
    %v592 = vpop.xlane.xlu0 %591
    %v593 = vrcp.pop %v589
    %v594 = vrcp.pop %v592
    %v595 = vmul.f32 %v584, %v593
    %v596 = vmul.f32 %v586, %v594
    %597 = vset.pattern.permute.xlu0 15
    %598 = vperm.xlu0 %597, %v241
    %v599 = vpop.permute.xlu0 %598
    %601 = vset.pattern.permute.xlu0 15
    %602 = vperm.xlu0 %601, %v246
    %v603 = vpop.permute.xlu0 %602
    %v605 = vlaneseq
    %v606 = vshrl.u32 %v605, 7
    %v607 = vsub.s32 7, %v606
    %v608 = vrot.slane %v265, %v607
    %v609 = vadd.f32 %v599, %v608
    %v610 = vadd.f32 %v603, %v608
    %vm611 = vcmp.gt.f32.partialorder %v609, 0.0
    %vm612 = vcmp.gt.f32.partialorder %v610, 0.0
    %v613 = vmul.f32 %v609, 0.2
    %v614 = vmul.f32 %v610, 0.2
    %v615 = vsel %vm611, %v609, %v613
    %v616 = vsel %vm612, %v610, %v614
    %v617 = vadd.f32 %v615, %v285
    %v618 = vadd.f32 %v616, %v286
    %v619 = vsel %vm90, %v617, -inf
    %620 = vmax.xlane.f32.xlu0 %v619
    %v621 = vpop.xlane.xlu0 %620
    %v622 = vsel %vm90, %v618, -inf
    %623 = vmax.xlane.f32.xlu0 %v622
    %v624 = vpop.xlane.xlu0 %623
    %v625 = vsub.f32 %v617, %v621
    %v626 = vsub.f32 %v618, %v624
    %v627 = vmul.f32 %v625, 1.442695
    %v628 = vpow.pop %v627
    %v629 = vmul.f32 %v626, 1.442695
    %v630 = vpow.pop %v629
    %v631 = vsel %vm90, %v628, 0.0
    %632 = vadd.xlane.f32.xlu0 %v631
    %v633 = vpop.xlane.xlu0 %632
    %v634 = vsel %vm90, %v630, 0.0
    %635 = vadd.xlane.f32.xlu0 %v634
    %v636 = vpop.xlane.xlu0 %635
    %v637 = vrcp.pop %v633
    %v638 = vrcp.pop %v636
    %v639 = vmul.f32 %v628, %v637
    %v640 = vmul.f32 %v630, %v638
    %v642 = vsel %vm90, %v331, 0
    %v645 = vsel %vm90, %v332, 0
    %v648 = vsel %vm90, %v375, 0
    %v651 = vsel %vm90, %v376, 0
    %v654 = vsel %vm90, %v419, 0
    %v657 = vsel %vm90, %v420, 0
    %v660 = vsel %vm90, %v463, 0
    %v663 = vsel %vm90, %v464, 0
    %v666 = vsel %vm90, %v507, 0
    %v669 = vsel %vm90, %v508, 0
    %v672 = vsel %vm90, %v551, 0
    %v675 = vsel %vm90, %v552, 0
    %v678 = vsel %vm90, %v595, 0
    %v681 = vsel %vm90, %v596, 0
    %v684 = vsel %vm90, %v639, 0
    %v687 = vsel %vm90, %v640, 0
    %689 = vmatprep.subr.mxu0 0.0
    %690 = vmatpush1.msra.mxu0 %v164
    %691 = vmatprep.subr.mxu0 0.0
    %692 = vmatpush1.msra.mxu0 %v169
    %693 = vmatprep.subr.mxu0 0.0
    %694 = vmatpush1.msra.mxu0 0.0
    %695 = vmatprep.subr.mxu0 0.0
    %696 = vmatpush1.msra.mxu0 0.0
    %697 = vmatprep.subr.mxu0 0.0
    %698 = vmatpush1.msra.mxu0 0.0
    %699 = vmatprep.subr.mxu0 0.0
    %700 = vmatpush1.msra.mxu0 0.0
    %701 = vmatprep.subr.mxu0 0.0
    %702 = vmatpush1.msra.mxu0 0.0
    %703 = vmatprep.subr.mxu0 0.0
    %704 = vmatpush1.msra.mxu0 0.0
    %705 = vmatprep.subr.mxu0 0.0
    %706 = vmatpush1.msra.mxu0 0.0
    %707 = vmatprep.subr.mxu0 0.0
    %708 = vmatpush1.msra.mxu0 0.0
    %709 = vmatprep.subr.mxu0 0.0
    %710 = vmatpush1.msra.mxu0 0.0
    %711 = vmatprep.subr.mxu0 0.0
    %712 = vmatpush1.msra.mxu0 0.0
    %713 = vmatprep.subr.mxu0 0.0
    %714 = vmatpush1.msra.mxu0 0.0
    %715 = vmatprep.subr.mxu0 0.0
    %716 = vmatpush1.msra.mxu0 0.0
    %717 = vmatprep.subr.mxu0 0.0
    %718 = vmatpush1.msra.mxu0 0.0
    %719 = vmatprep.subr.mxu0 0.0
    %720 = vmatpush1.msra.mxu0 0.0
    %721 = vmatprep.subr.mxu0 0.0
    %722 = vmatpush1.msra.mxu0 0.0
    %723 = vmatprep.subr.mxu0 0.0
    %724 = vmatpush1.msra.mxu0 0.0
    %725 = vmatprep.subr.mxu0 0.0
    %726 = vmatpush1.msra.mxu0 0.0
    %727 = vmatprep.subr.mxu0 0.0
    %728 = vmatpush1.msra.mxu0 0.0
    %729 = vmatprep.subr.mxu0 0.0
    %730 = vmatpush1.msra.mxu0 0.0
    %731 = vmatprep.subr.mxu0 0.0
    %732 = vmatpush1.msra.mxu0 0.0
    %733 = vmatprep.subr.mxu0 0.0
    %734 = vmatpush1.msra.mxu0 0.0
    %735 = vmatprep.subr.mxu0 0.0
    %736 = vmatpush1.msra.mxu0 0.0
    %737 = vmatprep.subr.mxu0 0.0
    %738 = vmatpush1.msra.mxu0 0.0
    %739 = vmatprep.subr.mxu0 0.0
    %740 = vmatpush1.msra.mxu0 0.0
    %741 = vmatprep.subr.mxu0 0.0
    %742 = vmatpush1.msra.mxu0 0.0
    %743 = vmatprep.subr.mxu0 0.0
    %744 = vmatpush1.msra.mxu0 0.0
    %745 = vmatprep.subr.mxu0 0.0
    %746 = vmatpush1.msra.mxu0 0.0
    %747 = vmatprep.subr.mxu0 0.0
    %748 = vmatpush1.msra.mxu0 0.0
    %749 = vmatprep.subr.mxu0 0.0
    %750 = vmatpush1.msra.mxu0 0.0
    %751 = vmatprep.subr.mxu0 0.0
    %752 = vmatpush1.msra.mxu0 0.0
    %753 = vmatprep.mubr.f32.mxu0 0.0
    %754 = vmatmul.mubr.f32.gmra.mrb[0].mxu0 %v642
    %v755 = vpop.f32.mrb[0].mxu0
    %v756 = vadd.f32 0.0, %v755
    %v757 = vpop.f32.mrb[0].mxu0
    %758 = vmatprep.mubr.f32.mxu0 0.0
    %759 = vmatmul.mubr.f32.gmra.mrb[0].mxu0 %v645
    %v760 = vpop.f32.mrb[0].mxu0
    %v761 = vadd.f32 0.0, %v760
    %v762 = vpop.f32.mrb[0].mxu0
    %763 = vmatprep.mubr.f32.mxu0 0.0
    %764 = vmatmul.mubr.f32.gmra.mrb[0].mxu0 %v648
    %v765 = vpop.f32.mrb[0].mxu0
    %v766 = vadd.f32 0.0, %v765
    %v767 = vpop.f32.mrb[0].mxu0
    %768 = vmatprep.mubr.f32.mxu0 0.0
    %769 = vmatmul.mubr.f32.gmra.mrb[0].mxu0 %v651
    %v770 = vpop.f32.mrb[0].mxu0
    %v771 = vadd.f32 0.0, %v770
    %v772 = vpop.f32.mrb[0].mxu0
    %773 = vmatprep.mubr.f32.mxu0 0.0
    %774 = vmatmul.mubr.f32.gmra.mrb[0].mxu0 %v654
    %v775 = vpop.f32.mrb[0].mxu0
    %v776 = vadd.f32 0.0, %v775
    %v777 = vpop.f32.mrb[0].mxu0
    %778 = vmatprep.mubr.f32.mxu0 0.0
    %779 = vmatmul.mubr.f32.gmra.mrb[0].mxu0 %v657
    %v780 = vpop.f32.mrb[0].mxu0
    %v781 = vadd.f32 0.0, %v780
    %v782 = vpop.f32.mrb[0].mxu0
    %783 = vmatprep.mubr.f32.mxu0 0.0
    %784 = vmatmul.mubr.f32.gmra.mrb[0].mxu0 %v660
    %v785 = vpop.f32.mrb[0].mxu0
    %v786 = vadd.f32 0.0, %v785
    %v787 = vpop.f32.mrb[0].mxu0
    %788 = vmatprep.mubr.f32.mxu0 0.0
    %789 = vmatmul.mubr.f32.gmra.mrb[0].mxu0 %v663
    %v790 = vpop.f32.mrb[0].mxu0
    %v791 = vadd.f32 0.0, %v790
    %v792 = vpop.f32.mrb[0].mxu0
    %793 = vmatprep.mubr.f32.mxu0 0.0
    %794 = vmatmul.mubr.f32.gmra.mrb[0].mxu0 %v666
    %v795 = vpop.f32.mrb[0].mxu0
    %v796 = vadd.f32 0.0, %v795
    %v797 = vpop.f32.mrb[0].mxu0
    %798 = vmatprep.mubr.f32.mxu0 0.0
    %799 = vmatmul.mubr.f32.gmra.mrb[0].mxu0 %v669
    %v800 = vpop.f32.mrb[0].mxu0
    %v801 = vadd.f32 0.0, %v800
    %v802 = vpop.f32.mrb[0].mxu0
    %803 = vmatprep.mubr.f32.mxu0 0.0
    %804 = vmatmul.mubr.f32.gmra.mrb[0].mxu0 %v672
    %v805 = vpop.f32.mrb[0].mxu0
    %v806 = vadd.f32 0.0, %v805
    %v807 = vpop.f32.mrb[0].mxu0
    %808 = vmatprep.mubr.f32.mxu0 0.0
    %809 = vmatmul.mubr.f32.gmra.mrb[0].mxu0 %v675
    %v810 = vpop.f32.mrb[0].mxu0
    %v811 = vadd.f32 0.0, %v810
    %v812 = vpop.f32.mrb[0].mxu0
    %813 = vmatprep.mubr.f32.mxu0 0.0
    %814 = vmatmul.mubr.f32.gmra.mrb[0].mxu0 %v678
    %v815 = vpop.f32.mrb[0].mxu0
    %v816 = vadd.f32 0.0, %v815
    %v817 = vpop.f32.mrb[0].mxu0
    %818 = vmatprep.mubr.f32.mxu0 0.0
    %819 = vmatmul.mubr.f32.gmra.mrb[0].mxu0 %v681
    %v820 = vpop.f32.mrb[0].mxu0
    %v821 = vadd.f32 0.0, %v820
    %v822 = vpop.f32.mrb[0].mxu0
    %823 = vmatprep.mubr.f32.mxu0 0.0
    %824 = vmatmul.mubr.f32.gmra.mrb[0].mxu0 %v684
    %v825 = vpop.f32.mrb[0].mxu0
    %v826 = vadd.f32 0.0, %v825
    %v827 = vpop.f32.mrb[0].mxu0
    %828 = vmatprep.mubr.f32.mxu0 0.0
    %829 = vmatmul.mubr.f32.gmra.mrb[0].mxu0 %v687
    %v830 = vpop.f32.mrb[0].mxu0
    %v831 = vadd.f32 0.0, %v830
    %v832 = vpop.f32.mrb[0].mxu0
    %833 = vdwg.mxu0
    %836 = vrot.lane.b32.xlu0 %v766, 112
    %v837 = vpop.permute.xlu0 %836
    %838 = vrot.lane.b32.xlu0 %v771, 112
    %v839 = vpop.permute.xlu0 %838
    %v842 = vadd.f32 %v756, %v837
    %v843 = vadd.f32 %v761, %v839
    %846 = vrot.lane.b32.xlu0 %v776, 96
    %v847 = vpop.permute.xlu0 %846
    %848 = vrot.lane.b32.xlu0 %v781, 96
    %v849 = vpop.permute.xlu0 %848
    %v852 = vadd.f32 %v842, %v847
    %v853 = vadd.f32 %v843, %v849
    %856 = vrot.lane.b32.xlu0 %v786, 80
    %v857 = vpop.permute.xlu0 %856
    %858 = vrot.lane.b32.xlu0 %v791, 80
    %v859 = vpop.permute.xlu0 %858
    %v862 = vadd.f32 %v852, %v857
    %v863 = vadd.f32 %v853, %v859
    %866 = vrot.lane.b32.xlu0 %v796, 64
    %v867 = vpop.permute.xlu0 %866
    %868 = vrot.lane.b32.xlu0 %v801, 64
    %v869 = vpop.permute.xlu0 %868
    %v872 = vadd.f32 %v862, %v867
    %v873 = vadd.f32 %v863, %v869
    %876 = vrot.lane.b32.xlu0 %v806, 48
    %v877 = vpop.permute.xlu0 %876
    %878 = vrot.lane.b32.xlu0 %v811, 48
    %v879 = vpop.permute.xlu0 %878
    %v882 = vadd.f32 %v872, %v877
    %v883 = vadd.f32 %v873, %v879
    %886 = vrot.lane.b32.xlu0 %v816, 32
    %v887 = vpop.permute.xlu0 %886
    %888 = vrot.lane.b32.xlu0 %v821, 32
    %v889 = vpop.permute.xlu0 %888
    %v892 = vadd.f32 %v882, %v887
    %v893 = vadd.f32 %v883, %v889
    %896 = vrot.lane.b32.xlu0 %v826, 16
    %v897 = vpop.permute.xlu0 %896
    %898 = vrot.lane.b32.xlu0 %v831, 16
    %v899 = vpop.permute.xlu0 %898
    %v902 = vadd.f32 %v892, %v897
    %v903 = vadd.f32 %v893, %v899
    %v904 = vmul.f32 %v902, 0.125
    %v905 = vmul.f32 %v903, 0.125
    %v906 = vld [vmem:[%s4] sm:$0x1]
    %v908 = vlaneseq
    %v909 = vshrl.u32 %v908, 7
    %v910 = vsub.s32 0, %v909
    %v911 = vrot.slane %v906, %v910
    %v913 = vadd.f32 %v904, %v911
    %v914 = vadd.f32 %v905, %v911
    %v915 = vld [vmem:[%s5] sm:$0xff]
    %v916 = vld [vmem:[%s5 + $0x8] sm:$0xff]
    %v917 = vld [vmem:[%s5 + $0x10] sm:$0xff]
    %v918 = vld [vmem:[%s5 + $0x18] sm:$0xff]
    %v919 = vld [vmem:[%s7] sm:$0xf]
    %v921 = vlaneseq
    %v922 = vshrl.u32 %v921, 7
    %v923 = vsub.s32 0, %v922
    %v924 = vrot.slane %v919, %v923
    %v925 = vlaneseq
    %v926 = vshrl.u32 %v925, 7
    %v927 = vsub.s32 1, %v926
    %v928 = vrot.slane %v919, %v927
    %v929 = vlaneseq
    %v930 = vshrl.u32 %v929, 7
    %v931 = vsub.s32 2, %v930
    %v932 = vrot.slane %v919, %v931
    %v933 = vlaneseq
    %v934 = vshrl.u32 %v933, 7
    %v935 = vsub.s32 3, %v934
    %v936 = vrot.slane %v919, %v935
    %941 = vxpose.xlu0.b32.start [1/16] %v913, 128
    %942 = vxpose.xlu0.b32.cont [2/16] 0.0, 128
    %943 = vxpose.xlu0.b32.cont [3/16] 0.0, 128
    %944 = vxpose.xlu0.b32.cont [4/16] 0.0, 128
    %945 = vxpose.xlu0.b32.cont [5/16] 0.0, 128
    %946 = vxpose.xlu0.b32.cont [6/16] 0.0, 128
    %947 = vxpose.xlu0.b32.cont [7/16] 0.0, 128
    %948 = vxpose.xlu0.b32.cont [8/16] 0.0, 128
    %949 = vxpose.xlu0.b32.cont [9/16] 0.0, 128
    %950 = vxpose.xlu0.b32.cont [10/16] 0.0, 128
    %951 = vxpose.xlu0.b32.cont [11/16] 0.0, 128
    %952 = vxpose.xlu0.b32.cont [12/16] 0.0, 128
    %953 = vxpose.xlu0.b32.cont [13/16] 0.0, 128
    %954 = vxpose.xlu0.b32.cont [14/16] 0.0, 128
    %955 = vxpose.xlu0.b32.cont [15/16] 0.0, 128
    %956 = vxpose.xlu0.b32.end [16/16] 0.0, 128
    %v957 = vpop.trf.xlu0
    %v958 = vpop.trf.xlu0
    %v959 = vpop.trf.xlu0
    %v960 = vpop.trf.xlu0
    %v961 = vpop.trf.xlu0
    %v962 = vpop.trf.xlu0
    %v963 = vpop.trf.xlu0
    %v964 = vpop.trf.xlu0
    %v965 = vpop.trf.xlu0
    %v966 = vpop.trf.xlu0
    %v967 = vpop.trf.xlu0
    %v968 = vpop.trf.xlu0
    %v969 = vpop.trf.xlu0
    %v970 = vpop.trf.xlu0
    %v971 = vpop.trf.xlu0
    %v972 = vpop.trf.xlu0
    %vm973 = vcmask 64512
    %v975 = vsel %vm973, %v957, 0
    %v978 = vsel %vm973, %v958, 0
    %980 = vmatprep.subr.mxu0 %v916
    %981 = vmatpush1.msra.mxu0 %v915
    %982 = vmatprep.subr.mxu0 0.0
    %983 = vmatpush1.msra.mxu0 0.0
    %984 = vmatprep.subr.mxu0 0.0
    %985 = vmatpush1.msra.mxu0 0.0
    %986 = vmatprep.subr.mxu0 0.0
    %987 = vmatpush1.msra.mxu0 0.0
    %988 = vmatprep.subr.mxu0 0.0
    %989 = vmatpush1.msra.mxu0 0.0
    %990 = vmatprep.subr.mxu0 0.0
    %991 = vmatpush1.msra.mxu0 0.0
    %992 = vmatprep.subr.mxu0 0.0
    %993 = vmatpush1.msra.mxu0 0.0
    %994 = vmatprep.subr.mxu0 0.0
    %995 = vmatpush1.msra.mxu0 0.0
    %996 = vmatprep.subr.mxu0 0.0
    %997 = vmatpush1.msra.mxu0 0.0
    %998 = vmatprep.subr.mxu0 0.0
    %999 = vmatpush1.msra.mxu0 0.0
    %1000 = vmatprep.subr.mxu0 0.0
    %1001 = vmatpush1.msra.mxu0 0.0
    %1002 = vmatprep.subr.mxu0 0.0
    %1003 = vmatpush1.msra.mxu0 0.0
    %1004 = vmatprep.subr.mxu0 0.0
    %1005 = vmatpush1.msra.mxu0 0.0
    %1006 = vmatprep.subr.mxu0 0.0
    %1007 = vmatpush1.msra.mxu0 0.0
    %1008 = vmatprep.subr.mxu0 0.0
    %1009 = vmatpush1.msra.mxu0 0.0
    %1010 = vmatprep.subr.mxu0 0.0
    %1011 = vmatpush1.msra.mxu0 0.0
    %1012 = vmatprep.subr.mxu0 0.0
    %1013 = vmatpush1.msra.mxu0 0.0
    %1014 = vmatprep.subr.mxu0 0.0
    %1015 = vmatpush1.msra.mxu0 0.0
    %1016 = vmatprep.subr.mxu0 0.0
    %1017 = vmatpush1.msra.mxu0 0.0
    %1018 = vmatprep.subr.mxu0 0.0
    %1019 = vmatpush1.msra.mxu0 0.0
    %1020 = vmatprep.subr.mxu0 0.0
    %1021 = vmatpush1.msra.mxu0 0.0
    %1022 = vmatprep.subr.mxu0 0.0
    %1023 = vmatpush1.msra.mxu0 0.0
    %1024 = vmatprep.subr.mxu0 0.0
    %1025 = vmatpush1.msra.mxu0 0.0
    %1026 = vmatprep.subr.mxu0 0.0
    %1027 = vmatpush1.msra.mxu0 0.0
    %1028 = vmatprep.subr.mxu0 0.0
    %1029 = vmatpush1.msra.mxu0 0.0
    %1030 = vmatprep.subr.mxu0 0.0
    %1031 = vmatpush1.msra.mxu0 0.0
    %1032 = vmatprep.subr.mxu0 0.0
    %1033 = vmatpush1.msra.mxu0 0.0
    %1034 = vmatprep.subr.mxu0 0.0
    %1035 = vmatpush1.msra.mxu0 0.0
    %1036 = vmatprep.subr.mxu0 0.0
    %1037 = vmatpush1.msra.mxu0 0.0
    %1038 = vmatprep.subr.mxu0 0.0
    %1039 = vmatpush1.msra.mxu0 0.0
    %1040 = vmatprep.subr.mxu0 0.0
    %1041 = vmatpush1.msra.mxu0 0.0
    %1042 = vmatprep.subr.mxu0 0.0
    %1043 = vmatpush1.msra.mxu0 0.0
    %1044 = vmatprep.mubr.f32.mxu0 0.0
    %1045 = vmatmul.mubr.f32.gmra.mrb[0].mxu0 %v975
    %v1046 = vpop.f32.mrb[0].mxu0
    %v1047 = vadd.f32 %v924, %v1046
    %v1048 = vpop.f32.mrb[0].mxu0
    %v1049 = vadd.f32 %v928, %v1048
    %1050 = vmatprep.mubr.f32.mxu0 0.0
    %1051 = vmatmul.mubr.f32.gmra.mrb[0].mxu0 %v978
    %v1052 = vpop.f32.mrb[0].mxu0
    %v1053 = vadd.f32 %v924, %v1052
    %v1054 = vpop.f32.mrb[0].mxu0
    %v1055 = vadd.f32 %v928, %v1054
    %1056 = vdwg.mxu0
    %1057 = vmatprep.subr.mxu0 %v918
    %1058 = vmatpush1.msra.mxu0 %v917
    %1059 = vmatprep.subr.mxu0 0.0
    %1060 = vmatpush1.msra.mxu0 0.0
    %1061 = vmatprep.subr.mxu0 0.0
    %1062 = vmatpush1.msra.mxu0 0.0
    %1063 = vmatprep.subr.mxu0 0.0
    %1064 = vmatpush1.msra.mxu0 0.0
    %1065 = vmatprep.subr.mxu0 0.0
    %1066 = vmatpush1.msra.mxu0 0.0
    %1067 = vmatprep.subr.mxu0 0.0
    %1068 = vmatpush1.msra.mxu0 0.0
    %1069 = vmatprep.subr.mxu0 0.0
    %1070 = vmatpush1.msra.mxu0 0.0
    %1071 = vmatprep.subr.mxu0 0.0
    %1072 = vmatpush1.msra.mxu0 0.0
    %1073 = vmatprep.subr.mxu0 0.0
    %1074 = vmatpush1.msra.mxu0 0.0
    %1075 = vmatprep.subr.mxu0 0.0
    %1076 = vmatpush1.msra.mxu0 0.0
    %1077 = vmatprep.subr.mxu0 0.0
    %1078 = vmatpush1.msra.mxu0 0.0
    %1079 = vmatprep.subr.mxu0 0.0
    %1080 = vmatpush1.msra.mxu0 0.0
    %1081 = vmatprep.subr.mxu0 0.0
    %1082 = vmatpush1.msra.mxu0 0.0
    %1083 = vmatprep.subr.mxu0 0.0
    %1084 = vmatpush1.msra.mxu0 0.0
    %1085 = vmatprep.subr.mxu0 0.0
    %1086 = vmatpush1.msra.mxu0 0.0
    %1087 = vmatprep.subr.mxu0 0.0
    %1088 = vmatpush1.msra.mxu0 0.0
    %1089 = vmatprep.subr.mxu0 0.0
    %1090 = vmatpush1.msra.mxu0 0.0
    %1091 = vmatprep.subr.mxu0 0.0
    %1092 = vmatpush1.msra.mxu0 0.0
    %1093 = vmatprep.subr.mxu0 0.0
    %1094 = vmatpush1.msra.mxu0 0.0
    %1095 = vmatprep.subr.mxu0 0.0
    %1096 = vmatpush1.msra.mxu0 0.0
    %1097 = vmatprep.subr.mxu0 0.0
    %1098 = vmatpush1.msra.mxu0 0.0
    %1099 = vmatprep.subr.mxu0 0.0
    %1100 = vmatpush1.msra.mxu0 0.0
    %1101 = vmatprep.subr.mxu0 0.0
    %1102 = vmatpush1.msra.mxu0 0.0
    %1103 = vmatprep.subr.mxu0 0.0
    %1104 = vmatpush1.msra.mxu0 0.0
    %1105 = vmatprep.subr.mxu0 0.0
    %1106 = vmatpush1.msra.mxu0 0.0
    %1107 = vmatprep.subr.mxu0 0.0
    %1108 = vmatpush1.msra.mxu0 0.0
    %1109 = vmatprep.subr.mxu0 0.0
    %1110 = vmatpush1.msra.mxu0 0.0
    %1111 = vmatprep.subr.mxu0 0.0
    %1112 = vmatpush1.msra.mxu0 0.0
    %1113 = vmatprep.subr.mxu0 0.0
    %1114 = vmatpush1.msra.mxu0 0.0
    %1115 = vmatprep.subr.mxu0 0.0
    %1116 = vmatpush1.msra.mxu0 0.0
    %1117 = vmatprep.subr.mxu0 0.0
    %1118 = vmatpush1.msra.mxu0 0.0
    %1119 = vmatprep.subr.mxu0 0.0
    %1120 = vmatpush1.msra.mxu0 0.0
    %1121 = vmatprep.mubr.f32.mxu0 0.0
    %1122 = vmatmul.mubr.f32.gmra.mrb[0].mxu0 %v975
    %v1123 = vpop.f32.mrb[0].mxu0
    %v1124 = vadd.f32 %v932, %v1123
    %v1125 = vpop.f32.mrb[0].mxu0
    %v1126 = vadd.f32 %v936, %v1125
    %1127 = vmatprep.mubr.f32.mxu0 0.0
    %1128 = vmatmul.mubr.f32.gmra.mrb[0].mxu0 %v978
    %v1129 = vpop.f32.mrb[0].mxu0
    %v1130 = vadd.f32 %v932, %v1129
    %v1131 = vpop.f32.mrb[0].mxu0
    %v1132 = vadd.f32 %v936, %v1131
    %1133 = vdwg.mxu0
    %1134 = vxpose.xlu0.b32.start [1/16] %v914, 128
    %1135 = vxpose.xlu0.b32.cont [2/16] 0.0, 128
    %1136 = vxpose.xlu0.b32.cont [3/16] 0.0, 128
    %1137 = vxpose.xlu0.b32.cont [4/16] 0.0, 128
    %1138 = vxpose.xlu0.b32.cont [5/16] 0.0, 128
    %1139 = vxpose.xlu0.b32.cont [6/16] 0.0, 128
    %1140 = vxpose.xlu0.b32.cont [7/16] 0.0, 128
    %1141 = vxpose.xlu0.b32.cont [8/16] 0.0, 128
    %1142 = vxpose.xlu0.b32.cont [9/16] 0.0, 128
    %1143 = vxpose.xlu0.b32.cont [10/16] 0.0, 128
    %1144 = vxpose.xlu0.b32.cont [11/16] 0.0, 128
    %1145 = vxpose.xlu0.b32.cont [12/16] 0.0, 128
    %1146 = vxpose.xlu0.b32.cont [13/16] 0.0, 128
    %1147 = vxpose.xlu0.b32.cont [14/16] 0.0, 128
    %1148 = vxpose.xlu0.b32.cont [15/16] 0.0, 128
    %1149 = vxpose.xlu0.b32.end [16/16] 0.0, 128
    %v1150 = vpop.trf.xlu0
    %v1151 = vpop.trf.xlu0
    %v1152 = vpop.trf.xlu0
    %v1153 = vpop.trf.xlu0
    %v1154 = vpop.trf.xlu0
    %v1155 = vpop.trf.xlu0
    %v1156 = vpop.trf.xlu0
    %v1157 = vpop.trf.xlu0
    %v1158 = vpop.trf.xlu0
    %v1159 = vpop.trf.xlu0
    %v1160 = vpop.trf.xlu0
    %v1161 = vpop.trf.xlu0
    %v1162 = vpop.trf.xlu0
    %v1163 = vpop.trf.xlu0
    %v1164 = vpop.trf.xlu0
    %v1165 = vpop.trf.xlu0
    %v1167 = vsel %vm973, %v1150, 0
    %v1170 = vsel %vm973, %v1151, 0
    %1172 = vmatprep.subr.mxu0 %v916
    %1173 = vmatpush1.msra.mxu0 %v915
    %1174 = vmatprep.subr.mxu0 0.0
    %1175 = vmatpush1.msra.mxu0 0.0
    %1176 = vmatprep.subr.mxu0 0.0
    %1177 = vmatpush1.msra.mxu0 0.0
    %1178 = vmatprep.subr.mxu0 0.0
    %1179 = vmatpush1.msra.mxu0 0.0
    %1180 = vmatprep.subr.mxu0 0.0
    %1181 = vmatpush1.msra.mxu0 0.0
    %1182 = vmatprep.subr.mxu0 0.0
    %1183 = vmatpush1.msra.mxu0 0.0
    %1184 = vmatprep.subr.mxu0 0.0
    %1185 = vmatpush1.msra.mxu0 0.0
    %1186 = vmatprep.subr.mxu0 0.0
    %1187 = vmatpush1.msra.mxu0 0.0
    %1188 = vmatprep.subr.mxu0 0.0
    %1189 = vmatpush1.msra.mxu0 0.0
    %1190 = vmatprep.subr.mxu0 0.0
    %1191 = vmatpush1.msra.mxu0 0.0
    %1192 = vmatprep.subr.mxu0 0.0
    %1193 = vmatpush1.msra.mxu0 0.0
    %1194 = vmatprep.subr.mxu0 0.0
    %1195 = vmatpush1.msra.mxu0 0.0
    %1196 = vmatprep.subr.mxu0 0.0
    %1197 = vmatpush1.msra.mxu0 0.0
    %1198 = vmatprep.subr.mxu0 0.0
    %1199 = vmatpush1.msra.mxu0 0.0
    %1200 = vmatprep.subr.mxu0 0.0
    %1201 = vmatpush1.msra.mxu0 0.0
    %1202 = vmatprep.subr.mxu0 0.0
    %1203 = vmatpush1.msra.mxu0 0.0
    %1204 = vmatprep.subr.mxu0 0.0
    %1205 = vmatpush1.msra.mxu0 0.0
    %1206 = vmatprep.subr.mxu0 0.0
    %1207 = vmatpush1.msra.mxu0 0.0
    %1208 = vmatprep.subr.mxu0 0.0
    %1209 = vmatpush1.msra.mxu0 0.0
    %1210 = vmatprep.subr.mxu0 0.0
    %1211 = vmatpush1.msra.mxu0 0.0
    %1212 = vmatprep.subr.mxu0 0.0
    %1213 = vmatpush1.msra.mxu0 0.0
    %1214 = vmatprep.subr.mxu0 0.0
    %1215 = vmatpush1.msra.mxu0 0.0
    %1216 = vmatprep.subr.mxu0 0.0
    %1217 = vmatpush1.msra.mxu0 0.0
    %1218 = vmatprep.subr.mxu0 0.0
    %1219 = vmatpush1.msra.mxu0 0.0
    %1220 = vmatprep.subr.mxu0 0.0
    %1221 = vmatpush1.msra.mxu0 0.0
    %1222 = vmatprep.subr.mxu0 0.0
    %1223 = vmatpush1.msra.mxu0 0.0
    %1224 = vmatprep.subr.mxu0 0.0
    %1225 = vmatpush1.msra.mxu0 0.0
    %1226 = vmatprep.subr.mxu0 0.0
    %1227 = vmatpush1.msra.mxu0 0.0
    %1228 = vmatprep.subr.mxu0 0.0
    %1229 = vmatpush1.msra.mxu0 0.0
    %1230 = vmatprep.subr.mxu0 0.0
    %1231 = vmatpush1.msra.mxu0 0.0
    %1232 = vmatprep.subr.mxu0 0.0
    %1233 = vmatpush1.msra.mxu0 0.0
    %1234 = vmatprep.subr.mxu0 0.0
    %1235 = vmatpush1.msra.mxu0 0.0
    %1236 = vmatprep.mubr.f32.mxu0 0.0
    %1237 = vmatmul.mubr.f32.gmra.mrb[0].mxu0 %v1167
    %v1238 = vpop.f32.mrb[0].mxu0
    %v1239 = vadd.f32 %v924, %v1238
    %v1240 = vpop.f32.mrb[0].mxu0
    %v1241 = vadd.f32 %v928, %v1240
    %1242 = vmatprep.mubr.f32.mxu0 0.0
    %1243 = vmatmul.mubr.f32.gmra.mrb[0].mxu0 %v1170
    %v1244 = vpop.f32.mrb[0].mxu0
    %v1245 = vadd.f32 %v924, %v1244
    %v1246 = vpop.f32.mrb[0].mxu0
    %v1247 = vadd.f32 %v928, %v1246
    %1248 = vdwg.mxu0
    %1249 = vmatprep.subr.mxu0 %v918
    %1250 = vmatpush1.msra.mxu0 %v917
    %1251 = vmatprep.subr.mxu0 0.0
    %1252 = vmatpush1.msra.mxu0 0.0
    %1253 = vmatprep.subr.mxu0 0.0
    %1254 = vmatpush1.msra.mxu0 0.0
    %1255 = vmatprep.subr.mxu0 0.0
    %1256 = vmatpush1.msra.mxu0 0.0
    %1257 = vmatprep.subr.mxu0 0.0
    %1258 = vmatpush1.msra.mxu0 0.0
    %1259 = vmatprep.subr.mxu0 0.0
    %1260 = vmatpush1.msra.mxu0 0.0
    %1261 = vmatprep.subr.mxu0 0.0
    %1262 = vmatpush1.msra.mxu0 0.0
    %1263 = vmatprep.subr.mxu0 0.0
    %1264 = vmatpush1.msra.mxu0 0.0
    %1265 = vmatprep.subr.mxu0 0.0
    %1266 = vmatpush1.msra.mxu0 0.0
    %1267 = vmatprep.subr.mxu0 0.0
    %1268 = vmatpush1.msra.mxu0 0.0
    %1269 = vmatprep.subr.mxu0 0.0
    %1270 = vmatpush1.msra.mxu0 0.0
    %1271 = vmatprep.subr.mxu0 0.0
    %1272 = vmatpush1.msra.mxu0 0.0
    %1273 = vmatprep.subr.mxu0 0.0
    %1274 = vmatpush1.msra.mxu0 0.0
    %1275 = vmatprep.subr.mxu0 0.0
    %1276 = vmatpush1.msra.mxu0 0.0
    %1277 = vmatprep.subr.mxu0 0.0
    %1278 = vmatpush1.msra.mxu0 0.0
    %1279 = vmatprep.subr.mxu0 0.0
    %1280 = vmatpush1.msra.mxu0 0.0
    %1281 = vmatprep.subr.mxu0 0.0
    %1282 = vmatpush1.msra.mxu0 0.0
    %1283 = vmatprep.subr.mxu0 0.0
    %1284 = vmatpush1.msra.mxu0 0.0
    %1285 = vmatprep.subr.mxu0 0.0
    %1286 = vmatpush1.msra.mxu0 0.0
    %1287 = vmatprep.subr.mxu0 0.0
    %1288 = vmatpush1.msra.mxu0 0.0
    %1289 = vmatprep.subr.mxu0 0.0
    %1290 = vmatpush1.msra.mxu0 0.0
    %1291 = vmatprep.subr.mxu0 0.0
    %1292 = vmatpush1.msra.mxu0 0.0
    %1293 = vmatprep.subr.mxu0 0.0
    %1294 = vmatpush1.msra.mxu0 0.0
    %1295 = vmatprep.subr.mxu0 0.0
    %1296 = vmatpush1.msra.mxu0 0.0
    %1297 = vmatprep.subr.mxu0 0.0
    %1298 = vmatpush1.msra.mxu0 0.0
    %1299 = vmatprep.subr.mxu0 0.0
    %1300 = vmatpush1.msra.mxu0 0.0
    %1301 = vmatprep.subr.mxu0 0.0
    %1302 = vmatpush1.msra.mxu0 0.0
    %1303 = vmatprep.subr.mxu0 0.0
    %1304 = vmatpush1.msra.mxu0 0.0
    %1305 = vmatprep.subr.mxu0 0.0
    %1306 = vmatpush1.msra.mxu0 0.0
    %1307 = vmatprep.subr.mxu0 0.0
    %1308 = vmatpush1.msra.mxu0 0.0
    %1309 = vmatprep.subr.mxu0 0.0
    %1310 = vmatpush1.msra.mxu0 0.0
    %1311 = vmatprep.subr.mxu0 0.0
    %1312 = vmatpush1.msra.mxu0 0.0
    %1313 = vmatprep.mubr.f32.mxu0 0.0
    %1314 = vmatmul.mubr.f32.gmra.mrb[0].mxu0 %v1167
    %v1315 = vpop.f32.mrb[0].mxu0
    %v1316 = vadd.f32 %v932, %v1315
    %v1317 = vpop.f32.mrb[0].mxu0
    %v1318 = vadd.f32 %v936, %v1317
    %1319 = vmatprep.mubr.f32.mxu0 0.0
    %1320 = vmatmul.mubr.f32.gmra.mrb[0].mxu0 %v1170
    %v1321 = vpop.f32.mrb[0].mxu0
    %v1322 = vadd.f32 %v932, %v1321
    %v1323 = vpop.f32.mrb[0].mxu0
    %v1324 = vadd.f32 %v936, %v1323
    %1325 = vdwg.mxu0
    %v1326 = vld [vmem:[#allocation2] sm:$0xff]
    %v1327 = vld [vmem:[#allocation2 + $0x8] sm:$0xff]
    %v1328 = vld [vmem:[#allocation2 + $0x10] sm:$0xff]
    %v1329 = vld [vmem:[#allocation2 + $0x18] sm:$0xff]
    %v1330 = vld [vmem:[#allocation2 + $0x20] sm:$0xff]
    %v1331 = vld [vmem:[#allocation2 + $0x28] sm:$0xff]
    %v1332 = vld [vmem:[#allocation2 + $0x30] sm:$0xff]
    %v1333 = vld [vmem:[#allocation2 + $0x38] sm:$0xff]
    %v1334 = vld [vmem:[#allocation2 + $0x40] sm:$0xff]
    %v1335 = vld [vmem:[#allocation2 + $0x48] sm:$0xff]
    %v1336 = vld [vmem:[#allocation2 + $0x50] sm:$0xff]
    %v1337 = vld [vmem:[#allocation2 + $0x58] sm:$0xff]
    %v1338 = vld [vmem:[#allocation2 + $0x60] sm:$0xff]
    %v1339 = vld [vmem:[#allocation2 + $0x68] sm:$0xff]
    %v1340 = vld [vmem:[#allocation2 + $0x70] sm:$0xff]
    %v1341 = vld [vmem:[#allocation2 + $0x78] sm:$0xff]
    %v1342 = vld [vmem:[#allocation2 + $0x80] sm:$0xff]
    %v1343 = vld [vmem:[#allocation2 + $0x88] sm:$0xff]
    %v1344 = vld [vmem:[#allocation2 + $0x90] sm:$0xff]
    %v1345 = vld [vmem:[#allocation2 + $0x98] sm:$0xff]
    %v1346 = vld [vmem:[#allocation2 + $0xa0] sm:$0xff]
    %v1347 = vld [vmem:[#allocation2 + $0xa8] sm:$0xff]
    %v1348 = vld [vmem:[#allocation2 + $0xb0] sm:$0xff]
    %v1349 = vld [vmem:[#allocation2 + $0xb8] sm:$0xff]
    %v1350 = vld [vmem:[#allocation2 + $0xc0] sm:$0xff]
    %v1351 = vld [vmem:[#allocation2 + $0xc8] sm:$0xff]
    %v1352 = vld [vmem:[#allocation2 + $0xd0] sm:$0xff]
    %v1353 = vld [vmem:[#allocation2 + $0xd8] sm:$0xff]
    %v1354 = vld [vmem:[#allocation2 + $0xe0] sm:$0xff]
    %v1355 = vld [vmem:[#allocation2 + $0xe8] sm:$0xff]
    %v1356 = vld [vmem:[#allocation2 + $0xf0] sm:$0xff]
    %v1357 = vld [vmem:[#allocation2 + $0xf8] sm:$0xff]
    %v1358 = vld [vmem:[#allocation2 + $0x100] sm:$0xff]
    %v1359 = vld [vmem:[#allocation2 + $0x108] sm:$0xff]
    %v1360 = vld [vmem:[#allocation2 + $0x110] sm:$0xff]
    %v1361 = vld [vmem:[#allocation2 + $0x118] sm:$0xff]
    %v1362 = vld [vmem:[#allocation2 + $0x120] sm:$0xff]
    %v1363 = vld [vmem:[#allocation2 + $0x128] sm:$0xff]
    %v1364 = vld [vmem:[#allocation2 + $0x130] sm:$0xff]
    %v1365 = vld [vmem:[#allocation2 + $0x138] sm:$0xff]
    %v1366 = vld [vmem:[#allocation2 + $0x140] sm:$0xff]
    %v1367 = vld [vmem:[#allocation2 + $0x148] sm:$0xff]
    %v1368 = vld [vmem:[#allocation2 + $0x150] sm:$0xff]
    %v1369 = vld [vmem:[#allocation2 + $0x158] sm:$0xff]
    %v1370 = vld [vmem:[#allocation2 + $0x160] sm:$0xff]
    %v1371 = vld [vmem:[#allocation2 + $0x168] sm:$0xff]
    %v1372 = vld [vmem:[#allocation2 + $0x170] sm:$0xff]
    %v1373 = vld [vmem:[#allocation2 + $0x178] sm:$0xff]
    %v1374 = vld [vmem:[#allocation2 + $0x180] sm:$0xff]
    %v1375 = vld [vmem:[#allocation2 + $0x188] sm:$0xff]
    %v1376 = vld [vmem:[#allocation2 + $0x190] sm:$0xff]
    %v1377 = vld [vmem:[#allocation2 + $0x198] sm:$0xff]
    %v1378 = vld [vmem:[#allocation2 + $0x1a0] sm:$0xff]
    %v1379 = vld [vmem:[#allocation2 + $0x1a8] sm:$0xff]
    %v1380 = vld [vmem:[#allocation2 + $0x1b0] sm:$0xff]
    %v1381 = vld [vmem:[#allocation2 + $0x1b8] sm:$0xff]
    %v1382 = vld [vmem:[#allocation2 + $0x1c0] sm:$0xff]
    %v1383 = vld [vmem:[#allocation2 + $0x1c8] sm:$0xff]
    %v1384 = vld [vmem:[#allocation2 + $0x1d0] sm:$0xff]
    %v1385 = vld [vmem:[#allocation2 + $0x1d8] sm:$0xff]
    %v1386 = vld [vmem:[#allocation2 + $0x1e0] sm:$0xff]
    %v1387 = vld [vmem:[#allocation2 + $0x1e8] sm:$0xff]
    %v1388 = vld [vmem:[#allocation2 + $0x1f0] sm:$0xff]
    %v1389 = vld [vmem:[#allocation2 + $0x1f8] sm:$0xff]
    %v1390 = vld [vmem:[#allocation5] sm:$0xff]
    %v1391 = vld [vmem:[#allocation5 + $0x8] sm:$0xff]
    %v1392 = vld [vmem:[#allocation5 + $0x10] sm:$0xff]
    %v1393 = vld [vmem:[#allocation5 + $0x18] sm:$0xff]
    %v1394 = vld [vmem:[#allocation5 + $0x20] sm:$0xff]
    %v1395 = vld [vmem:[#allocation5 + $0x28] sm:$0xff]
    %v1396 = vld [vmem:[#allocation5 + $0x30] sm:$0xff]
    %v1397 = vld [vmem:[#allocation5 + $0x38] sm:$0xff]
    %v1398 = vld [vmem:[#allocation5 + $0x40] sm:$0xff]
    %v1399 = vld [vmem:[#allocation5 + $0x48] sm:$0xff]
    %v1400 = vld [vmem:[#allocation5 + $0x50] sm:$0xff]
    %v1401 = vld [vmem:[#allocation5 + $0x58] sm:$0xff]
    %v1402 = vld [vmem:[#allocation5 + $0x60] sm:$0xff]
    %v1403 = vld [vmem:[#allocation5 + $0x68] sm:$0xff]
    %v1404 = vld [vmem:[#allocation5 + $0x70] sm:$0xff]
    %v1405 = vld [vmem:[#allocation5 + $0x78] sm:$0xff]
    %v1406 = vld [vmem:[#allocation5 + $0x80] sm:$0xff]
    %v1407 = vld [vmem:[#allocation5 + $0x88] sm:$0xff]
    %v1408 = vld [vmem:[#allocation5 + $0x90] sm:$0xff]
    %v1409 = vld [vmem:[#allocation5 + $0x98] sm:$0xff]
    %v1410 = vld [vmem:[#allocation5 + $0xa0] sm:$0xff]
    %v1411 = vld [vmem:[#allocation5 + $0xa8] sm:$0xff]
    %v1412 = vld [vmem:[#allocation5 + $0xb0] sm:$0xff]
    %v1413 = vld [vmem:[#allocation5 + $0xb8] sm:$0xff]
    %v1414 = vld [vmem:[#allocation5 + $0xc0] sm:$0xff]
    %v1415 = vld [vmem:[#allocation5 + $0xc8] sm:$0xff]
    %v1416 = vld [vmem:[#allocation5 + $0xd0] sm:$0xff]
    %v1417 = vld [vmem:[#allocation5 + $0xd8] sm:$0xff]
    %v1418 = vld [vmem:[#allocation5 + $0xe0] sm:$0xff]
    %v1419 = vld [vmem:[#allocation5 + $0xe8] sm:$0xff]
    %v1420 = vld [vmem:[#allocation5 + $0xf0] sm:$0xff]
    %v1421 = vld [vmem:[#allocation5 + $0xf8] sm:$0xff]
    %v1422 = vld [vmem:[#allocation5 + $0x100] sm:$0xff]
    %v1423 = vld [vmem:[#allocation5 + $0x108] sm:$0xff]
    %v1424 = vld [vmem:[#allocation5 + $0x110] sm:$0xff]
    %v1425 = vld [vmem:[#allocation5 + $0x118] sm:$0xff]
    %v1426 = vld [vmem:[#allocation5 + $0x120] sm:$0xff]
    %v1427 = vld [vmem:[#allocation5 + $0x128] sm:$0xff]
    %v1428 = vld [vmem:[#allocation5 + $0x130] sm:$0xff]
    %v1429 = vld [vmem:[#allocation5 + $0x138] sm:$0xff]
    %v1430 = vld [vmem:[#allocation5 + $0x140] sm:$0xff]
    %v1431 = vld [vmem:[#allocation5 + $0x148] sm:$0xff]
    %v1432 = vld [vmem:[#allocation5 + $0x150] sm:$0xff]
    %v1433 = vld [vmem:[#allocation5 + $0x158] sm:$0xff]
    %v1434 = vld [vmem:[#allocation5 + $0x160] sm:$0xff]
    %v1435 = vld [vmem:[#allocation5 + $0x168] sm:$0xff]
    %v1436 = vld [vmem:[#allocation5 + $0x170] sm:$0xff]
    %v1437 = vld [vmem:[#allocation5 + $0x178] sm:$0xff]
    %v1438 = vld [vmem:[#allocation5 + $0x180] sm:$0xff]
    %v1439 = vld [vmem:[#allocation5 + $0x188] sm:$0xff]
    %v1440 = vld [vmem:[#allocation5 + $0x190] sm:$0xff]
    %v1441 = vld [vmem:[#allocation5 + $0x198] sm:$0xff]
    %v1442 = vld [vmem:[#allocation5 + $0x1a0] sm:$0xff]
    %v1443 = vld [vmem:[#allocation5 + $0x1a8] sm:$0xff]
    %v1444 = vld [vmem:[#allocation5 + $0x1b0] sm:$0xff]
    %v1445 = vld [vmem:[#allocation5 + $0x1b8] sm:$0xff]
    %v1446 = vld [vmem:[#allocation5 + $0x1c0] sm:$0xff]
    %v1447 = vld [vmem:[#allocation5 + $0x1c8] sm:$0xff]
    %v1448 = vld [vmem:[#allocation5 + $0x1d0] sm:$0xff]
    %v1449 = vld [vmem:[#allocation5 + $0x1d8] sm:$0xff]
    %v1450 = vld [vmem:[#allocation5 + $0x1e0] sm:$0xff]
    %v1451 = vld [vmem:[#allocation5 + $0x1e8] sm:$0xff]
    %v1452 = vld [vmem:[#allocation5 + $0x1f0] sm:$0xff]
    %v1453 = vld [vmem:[#allocation5 + $0x1f8] sm:$0xff]
    %v1454 = vld [vmem:[#allocation7] sm:$0xff]
    %v1455 = vld [vmem:[#allocation7 + $0x8] sm:$0xff]
    %v1456 = vld [vmem:[#allocation7 + $0x10] sm:$0xff]
    %v1457 = vld [vmem:[#allocation7 + $0x18] sm:$0xff]
    %v1458 = vld [vmem:[#allocation7 + $0x20] sm:$0xff]
    %v1459 = vld [vmem:[#allocation7 + $0x28] sm:$0xff]
    %v1460 = vld [vmem:[#allocation7 + $0x30] sm:$0xff]
    %v1461 = vld [vmem:[#allocation7 + $0x38] sm:$0xff]
    %v1462 = vld [vmem:[#allocation7 + $0x40] sm:$0xff]
    %v1463 = vld [vmem:[#allocation7 + $0x48] sm:$0xff]
    %v1464 = vld [vmem:[#allocation7 + $0x50] sm:$0xff]
    %v1465 = vld [vmem:[#allocation7 + $0x58] sm:$0xff]
    %v1466 = vld [vmem:[#allocation7 + $0x60] sm:$0xff]
    %v1467 = vld [vmem:[#allocation7 + $0x68] sm:$0xff]
    %v1468 = vld [vmem:[#allocation7 + $0x70] sm:$0xff]
    %v1469 = vld [vmem:[#allocation7 + $0x78] sm:$0xff]
    %v1470 = vld [vmem:[#allocation7 + $0x80] sm:$0xff]
    %v1471 = vld [vmem:[#allocation7 + $0x88] sm:$0xff]
    %v1472 = vld [vmem:[#allocation7 + $0x90] sm:$0xff]
    %v1473 = vld [vmem:[#allocation7 + $0x98] sm:$0xff]
    %v1474 = vld [vmem:[#allocation7 + $0xa0] sm:$0xff]
    %v1475 = vld [vmem:[#allocation7 + $0xa8] sm:$0xff]
    %v1476 = vld [vmem:[#allocation7 + $0xb0] sm:$0xff]
    %v1477 = vld [vmem:[#allocation7 + $0xb8] sm:$0xff]
    %v1478 = vld [vmem:[#allocation7 + $0xc0] sm:$0xff]
    %v1479 = vld [vmem:[#allocation7 + $0xc8] sm:$0xff]
    %v1480 = vld [vmem:[#allocation7 + $0xd0] sm:$0xff]
    %v1481 = vld [vmem:[#allocation7 + $0xd8] sm:$0xff]
    %v1482 = vld [vmem:[#allocation7 + $0xe0] sm:$0xff]
    %v1483 = vld [vmem:[#allocation7 + $0xe8] sm:$0xff]
    %v1484 = vld [vmem:[#allocation7 + $0xf0] sm:$0xff]
    %v1485 = vld [vmem:[#allocation7 + $0xf8] sm:$0xff]
    %v1486 = vld [vmem:[#allocation7 + $0x100] sm:$0xff]
    %v1487 = vld [vmem:[#allocation7 + $0x108] sm:$0xff]
    %v1488 = vld [vmem:[#allocation7 + $0x110] sm:$0xff]
    %v1489 = vld [vmem:[#allocation7 + $0x118] sm:$0xff]
    %v1490 = vld [vmem:[#allocation7 + $0x120] sm:$0xff]
    %v1491 = vld [vmem:[#allocation7 + $0x128] sm:$0xff]
    %v1492 = vld [vmem:[#allocation7 + $0x130] sm:$0xff]
    %v1493 = vld [vmem:[#allocation7 + $0x138] sm:$0xff]
    %v1494 = vld [vmem:[#allocation7 + $0x140] sm:$0xff]
    %v1495 = vld [vmem:[#allocation7 + $0x148] sm:$0xff]
    %v1496 = vld [vmem:[#allocation7 + $0x150] sm:$0xff]
    %v1497 = vld [vmem:[#allocation7 + $0x158] sm:$0xff]
    %v1498 = vld [vmem:[#allocation7 + $0x160] sm:$0xff]
    %v1499 = vld [vmem:[#allocation7 + $0x168] sm:$0xff]
    %v1500 = vld [vmem:[#allocation7 + $0x170] sm:$0xff]
    %v1501 = vld [vmem:[#allocation7 + $0x178] sm:$0xff]
    %v1502 = vld [vmem:[#allocation7 + $0x180] sm:$0xff]
    %v1503 = vld [vmem:[#allocation7 + $0x188] sm:$0xff]
    %v1504 = vld [vmem:[#allocation7 + $0x190] sm:$0xff]
    %v1505 = vld [vmem:[#allocation7 + $0x198] sm:$0xff]
    %v1506 = vld [vmem:[#allocation7 + $0x1a0] sm:$0xff]
    %v1507 = vld [vmem:[#allocation7 + $0x1a8] sm:$0xff]
    %v1508 = vld [vmem:[#allocation7 + $0x1b0] sm:$0xff]
    %v1509 = vld [vmem:[#allocation7 + $0x1b8] sm:$0xff]
    %v1510 = vld [vmem:[#allocation7 + $0x1c0] sm:$0xff]
    %v1511 = vld [vmem:[#allocation7 + $0x1c8] sm:$0xff]
    %v1512 = vld [vmem:[#allocation7 + $0x1d0] sm:$0xff]
    %v1513 = vld [vmem:[#allocation7 + $0x1d8] sm:$0xff]
    %v1514 = vld [vmem:[#allocation7 + $0x1e0] sm:$0xff]
    %v1515 = vld [vmem:[#allocation7 + $0x1e8] sm:$0xff]
    %v1516 = vld [vmem:[#allocation7 + $0x1f0] sm:$0xff]
    %v1517 = vld [vmem:[#allocation7 + $0x1f8] sm:$0xff]
    %v1518 = vld [vmem:[%s10] sm:$0xf]
    %v1523 = vrot.slane %v1239, 7
    %v1524 = vrot.slane %v1241, 7
    %v1525 = vrot.slane %v1316, 7
    %v1526 = vrot.slane %v1318, 7
    %vm1531 = vcmask 1040384
    %v1532 = vsel %vm1531, %v1047, %v1523
    %v1533 = vsel %vm1531, %v1049, %v1524
    %v1534 = vsel %vm1531, %v1124, %v1525
    %v1535 = vsel %vm1531, %v1126, %v1526
    %1536 = vmatprep.subr.mxu0 %v1327
    %1537 = vmatpush1.msra.mxu0 %v1326
    %1538 = vmatprep.subr.mxu0 %v1331
    %1539 = vmatpush1.msra.mxu0 %v1330
    %1540 = vmatprep.subr.mxu0 %v1335
    %1541 = vmatpush1.msra.mxu0 %v1334
    %1542 = vmatprep.subr.mxu0 %v1339
    %1543 = vmatpush1.msra.mxu0 %v1338
    %1544 = vmatprep.subr.mxu0 %v1343
    %1545 = vmatpush1.msra.mxu0 %v1342
    %1546 = vmatprep.subr.mxu0 %v1347
    %1547 = vmatpush1.msra.mxu0 %v1346
    %1548 = vmatprep.subr.mxu0 %v1351
    %1549 = vmatpush1.msra.mxu0 %v1350
    %1550 = vmatprep.subr.mxu0 %v1355
    %1551 = vmatpush1.msra.mxu0 %v1354
    %1552 = vmatprep.subr.mxu0 %v1359
    %1553 = vmatpush1.msra.mxu0 %v1358
    %1554 = vmatprep.subr.mxu0 %v1363
    %1555 = vmatpush1.msra.mxu0 %v1362
    %1556 = vmatprep.subr.mxu0 %v1367
    %1557 = vmatpush1.msra.mxu0 %v1366
    %1558 = vmatprep.subr.mxu0 %v1371
    %1559 = vmatpush1.msra.mxu0 %v1370
    %1560 = vmatprep.subr.mxu0 %v1375
    %1561 = vmatpush1.msra.mxu0 %v1374
    %1562 = vmatprep.subr.mxu0 %v1379
    %1563 = vmatpush1.msra.mxu0 %v1378
    %1564 = vmatprep.subr.mxu0 %v1383
    %1565 = vmatpush1.msra.mxu0 %v1382
    %1566 = vmatprep.subr.mxu0 %v1387
    %1567 = vmatpush1.msra.mxu0 %v1386
    %1568 = vmatprep.subr.mxu0 0.0
    %1569 = vmatpush1.msra.mxu0 0.0
    %1570 = vmatprep.subr.mxu0 0.0
    %1571 = vmatpush1.msra.mxu0 0.0
    %1572 = vmatprep.subr.mxu0 0.0
    %1573 = vmatpush1.msra.mxu0 0.0
    %1574 = vmatprep.subr.mxu0 0.0
    %1575 = vmatpush1.msra.mxu0 0.0
    %1576 = vmatprep.subr.mxu0 0.0
    %1577 = vmatpush1.msra.mxu0 0.0
    %1578 = vmatprep.subr.mxu0 0.0
    %1579 = vmatpush1.msra.mxu0 0.0
    %1580 = vmatprep.subr.mxu0 0.0
    %1581 = vmatpush1.msra.mxu0 0.0
    %1582 = vmatprep.subr.mxu0 0.0
    %1583 = vmatpush1.msra.mxu0 0.0
    %1584 = vmatprep.subr.mxu0 0.0
    %1585 = vmatpush1.msra.mxu0 0.0
    %1586 = vmatprep.subr.mxu0 0.0
    %1587 = vmatpush1.msra.mxu0 0.0
    %1588 = vmatprep.subr.mxu0 0.0
    %1589 = vmatpush1.msra.mxu0 0.0
    %1590 = vmatprep.subr.mxu0 0.0
    %1591 = vmatpush1.msra.mxu0 0.0
    %1592 = vmatprep.subr.mxu0 0.0
    %1593 = vmatpush1.msra.mxu0 0.0
    %1594 = vmatprep.subr.mxu0 0.0
    %1595 = vmatpush1.msra.mxu0 0.0
    %1596 = vmatprep.subr.mxu0 0.0
    %1597 = vmatpush1.msra.mxu0 0.0
    %1598 = vmatprep.subr.mxu0 0.0
    %1599 = vmatpush1.msra.mxu0 0.0
    %1600 = vmatprep.mubr.f32.mxu0 0.0
    %1601 = vmatmul.mubr.f32.gmra.mrb[0].mxu0 0.0
    %v1602 = vpop.f32.mrb[0].mxu0
    %v1603 = vadd.f32 0.0, %v1602
    %v1604 = vpop.f32.mrb[0].mxu0
    %v1605 = vadd.f32 0.0, %v1604
    %1606 = vdwg.mxu0
    %1607 = vmatprep.subr.mxu0 %v1329
    %1608 = vmatpush1.msra.mxu0 %v1328
    %1609 = vmatprep.subr.mxu0 %v1333
    %1610 = vmatpush1.msra.mxu0 %v1332
    %1611 = vmatprep.subr.mxu0 %v1337
    %1612 = vmatpush1.msra.mxu0 %v1336
    %1613 = vmatprep.subr.mxu0 %v1341
    %1614 = vmatpush1.msra.mxu0 %v1340
    %1615 = vmatprep.subr.mxu0 %v1345
    %1616 = vmatpush1.msra.mxu0 %v1344
    %1617 = vmatprep.subr.mxu0 %v1349
    %1618 = vmatpush1.msra.mxu0 %v1348
    %1619 = vmatprep.subr.mxu0 %v1353
    %1620 = vmatpush1.msra.mxu0 %v1352
    %1621 = vmatprep.subr.mxu0 %v1357
    %1622 = vmatpush1.msra.mxu0 %v1356
    %1623 = vmatprep.subr.mxu0 %v1361
    %1624 = vmatpush1.msra.mxu0 %v1360
    %1625 = vmatprep.subr.mxu0 %v1365
    %1626 = vmatpush1.msra.mxu0 %v1364
    %1627 = vmatprep.subr.mxu0 %v1369
    %1628 = vmatpush1.msra.mxu0 %v1368
    %1629 = vmatprep.subr.mxu0 %v1373
    %1630 = vmatpush1.msra.mxu0 %v1372
    %1631 = vmatprep.subr.mxu0 %v1377
    %1632 = vmatpush1.msra.mxu0 %v1376
    %1633 = vmatprep.subr.mxu0 %v1381
    %1634 = vmatpush1.msra.mxu0 %v1380
    %1635 = vmatprep.subr.mxu0 %v1385
    %1636 = vmatpush1.msra.mxu0 %v1384
    %1637 = vmatprep.subr.mxu0 %v1389
    %1638 = vmatpush1.msra.mxu0 %v1388
    %1639 = vmatprep.subr.mxu0 0.0
    %1640 = vmatpush1.msra.mxu0 0.0
    %1641 = vmatprep.subr.mxu0 0.0
    %1642 = vmatpush1.msra.mxu0 0.0
    %1643 = vmatprep.subr.mxu0 0.0
    %1644 = vmatpush1.msra.mxu0 0.0
    %1645 = vmatprep.subr.mxu0 0.0
    %1646 = vmatpush1.msra.mxu0 0.0
    %1647 = vmatprep.subr.mxu0 0.0
    %1648 = vmatpush1.msra.mxu0 0.0
    %1649 = vmatprep.subr.mxu0 0.0
    %1650 = vmatpush1.msra.mxu0 0.0
    %1651 = vmatprep.subr.mxu0 0.0
    %1652 = vmatpush1.msra.mxu0 0.0
    %1653 = vmatprep.subr.mxu0 0.0
    %1654 = vmatpush1.msra.mxu0 0.0
    %1655 = vmatprep.subr.mxu0 0.0
    %1656 = vmatpush1.msra.mxu0 0.0
    %1657 = vmatprep.subr.mxu0 0.0
    %1658 = vmatpush1.msra.mxu0 0.0
    %1659 = vmatprep.subr.mxu0 0.0
    %1660 = vmatpush1.msra.mxu0 0.0
    %1661 = vmatprep.subr.mxu0 0.0
    %1662 = vmatpush1.msra.mxu0 0.0
    %1663 = vmatprep.subr.mxu0 0.0
    %1664 = vmatpush1.msra.mxu0 0.0
    %1665 = vmatprep.subr.mxu0 0.0
    %1666 = vmatpush1.msra.mxu0 0.0
    %1667 = vmatprep.subr.mxu0 0.0
    %1668 = vmatpush1.msra.mxu0 0.0
    %1669 = vmatprep.subr.mxu0 0.0
    %1670 = vmatpush1.msra.mxu0 0.0
    %1671 = vmatprep.mubr.f32.mxu0 0.0
    %1672 = vmatmul.mubr.f32.gmra.mrb[0].mxu0 0.0
    %v1673 = vpop.f32.mrb[0].mxu0
    %v1674 = vadd.f32 0.0, %v1673
    %v1675 = vpop.f32.mrb[0].mxu0
    %v1676 = vadd.f32 0.0, %v1675
    %1677 = vdwg.mxu0
    %v1678 = vadd.f32 %v1532, %v1603
    %v1679 = vadd.f32 %v1533, %v1605
    %v1680 = vadd.f32 %v1534, %v1674
    %v1681 = vadd.f32 %v1535, %v1676
    %v1682 = vxor.u32 %v1678, 2147483648
    %v1683 = vmul.f32 %v1682, 1.442695
    %v1684 = vpow.pop %v1683
    %v1685 = vadd.f32 %v1684, 1.0
    %v1686 = vrcp.pop %v1685
    %v1687 = vmul.f32 1.0, %v1686
    %v1688 = vxor.u32 %v1679, 2147483648
    %v1689 = vmul.f32 %v1688, 1.442695
    %v1690 = vpow.pop %v1689
    %v1691 = vadd.f32 %v1690, 1.0
    %v1692 = vrcp.pop %v1691
    %v1693 = vmul.f32 1.0, %v1692
    %v1694 = vtanh.pop %v1680
    %v1695 = vxor.u32 %v1681, 2147483648
    %v1696 = vmul.f32 %v1695, 1.442695
    %v1697 = vpow.pop %v1696
    %v1698 = vadd.f32 %v1697, 1.0
    %v1699 = vrcp.pop %v1698
    %v1700 = vmul.f32 1.0, %v1699
    %v1701 = vmul.f32 %v1693, 0.0
    %v1702 = vmul.f32 %v1687, %v1694
    %v1703 = vadd.f32 %v1701, %v1702
    %v1704 = vtanh.pop %v1703
    %v1705 = vmul.f32 %v1700, %v1704
    %1706 = vmatprep.subr.mxu0 %v1455
    %1707 = vmatpush1.msra.mxu0 %v1454
    %1708 = vmatprep.subr.mxu0 %v1459
    %1709 = vmatpush1.msra.mxu0 %v1458
    %1710 = vmatprep.subr.mxu0 %v1463
    %1711 = vmatpush1.msra.mxu0 %v1462
    %1712 = vmatprep.subr.mxu0 %v1467
    %1713 = vmatpush1.msra.mxu0 %v1466
    %1714 = vmatprep.subr.mxu0 %v1471
    %1715 = vmatpush1.msra.mxu0 %v1470
    %1716 = vmatprep.subr.mxu0 %v1475
    %1717 = vmatpush1.msra.mxu0 %v1474
    %1718 = vmatprep.subr.mxu0 %v1479
    %1719 = vmatpush1.msra.mxu0 %v1478
    %1720 = vmatprep.subr.mxu0 %v1483
    %1721 = vmatpush1.msra.mxu0 %v1482
    %1722 = vmatprep.subr.mxu0 %v1487
    %1723 = vmatpush1.msra.mxu0 %v1486
    %1724 = vmatprep.subr.mxu0 %v1491
    %1725 = vmatpush1.msra.mxu0 %v1490
    %1726 = vmatprep.subr.mxu0 %v1495
    %1727 = vmatpush1.msra.mxu0 %v1494
    %1728 = vmatprep.subr.mxu0 %v1499
    %1729 = vmatpush1.msra.mxu0 %v1498
    %1730 = vmatprep.subr.mxu0 %v1503
    %1731 = vmatpush1.msra.mxu0 %v1502
    %1732 = vmatprep.subr.mxu0 %v1507
    %1733 = vmatpush1.msra.mxu0 %v1506
    %1734 = vmatprep.subr.mxu0 %v1511
    %1735 = vmatpush1.msra.mxu0 %v1510
    %1736 = vmatprep.subr.mxu0 %v1515
    %1737 = vmatpush1.msra.mxu0 %v1514
    %1738 = vmatprep.subr.mxu0 0.0
    %1739 = vmatpush1.msra.mxu0 0.0
    %1740 = vmatprep.subr.mxu0 0.0
    %1741 = vmatpush1.msra.mxu0 0.0
    %1742 = vmatprep.subr.mxu0 0.0
    %1743 = vmatpush1.msra.mxu0 0.0
    %1744 = vmatprep.subr.mxu0 0.0
    %1745 = vmatpush1.msra.mxu0 0.0
    %1746 = vmatprep.subr.mxu0 0.0
    %1747 = vmatpush1.msra.mxu0 0.0
    %1748 = vmatprep.subr.mxu0 0.0
    %1749 = vmatpush1.msra.mxu0 0.0
    %1750 = vmatprep.subr.mxu0 0.0
    %1751 = vmatpush1.msra.mxu0 0.0
    %1752 = vmatprep.subr.mxu0 0.0
    %1753 = vmatpush1.msra.mxu0 0.0
    %1754 = vmatprep.subr.mxu0 0.0
    %1755 = vmatpush1.msra.mxu0 0.0
    %1756 = vmatprep.subr.mxu0 0.0
    %1757 = vmatpush1.msra.mxu0 0.0
    %1758 = vmatprep.subr.mxu0 0.0
    %1759 = vmatpush1.msra.mxu0 0.0
    %1760 = vmatprep.subr.mxu0 0.0
    %1761 = vmatpush1.msra.mxu0 0.0
    %1762 = vmatprep.subr.mxu0 0.0
    %1763 = vmatpush1.msra.mxu0 0.0
    %1764 = vmatprep.subr.mxu0 0.0
    %1765 = vmatpush1.msra.mxu0 0.0
    %1766 = vmatprep.subr.mxu0 0.0
    %1767 = vmatpush1.msra.mxu0 0.0
    %1768 = vmatprep.subr.mxu0 0.0
    %1769 = vmatpush1.msra.mxu0 0.0
    %1770 = vmatprep.mubr.f32.mxu0 0.0
    %1771 = vmatmul.mubr.f32.gmra.mrb[0].mxu0 0.0
    %v1772 = vpop.f32.mrb[0].mxu0
    %v1773 = vadd.f32 0.0, %v1772
    %v1774 = vpop.f32.mrb[0].mxu0
    %v1775 = vadd.f32 0.0, %v1774
    %1776 = vdwg.mxu0
    %1777 = vmatprep.subr.mxu0 %v1457
    %1778 = vmatpush1.msra.mxu0 %v1456
    %1779 = vmatprep.subr.mxu0 %v1461
    %1780 = vmatpush1.msra.mxu0 %v1460
    %1781 = vmatprep.subr.mxu0 %v1465
    %1782 = vmatpush1.msra.mxu0 %v1464
    %1783 = vmatprep.subr.mxu0 %v1469
    %1784 = vmatpush1.msra.mxu0 %v1468
    %1785 = vmatprep.subr.mxu0 %v1473
    %1786 = vmatpush1.msra.mxu0 %v1472
    %1787 = vmatprep.subr.mxu0 %v1477
    %1788 = vmatpush1.msra.mxu0 %v1476
    %1789 = vmatprep.subr.mxu0 %v1481
    %1790 = vmatpush1.msra.mxu0 %v1480
    %1791 = vmatprep.subr.mxu0 %v1485
    %1792 = vmatpush1.msra.mxu0 %v1484
    %1793 = vmatprep.subr.mxu0 %v1489
    %1794 = vmatpush1.msra.mxu0 %v1488
    %1795 = vmatprep.subr.mxu0 %v1493
    %1796 = vmatpush1.msra.mxu0 %v1492
    %1797 = vmatprep.subr.mxu0 %v1497
    %1798 = vmatpush1.msra.mxu0 %v1496
    %1799 = vmatprep.subr.mxu0 %v1501
    %1800 = vmatpush1.msra.mxu0 %v1500
    %1801 = vmatprep.subr.mxu0 %v1505
    %1802 = vmatpush1.msra.mxu0 %v1504
    %1803 = vmatprep.subr.mxu0 %v1509
    %1804 = vmatpush1.msra.mxu0 %v1508
    %1805 = vmatprep.subr.mxu0 %v1513
    %1806 = vmatpush1.msra.mxu0 %v1512
    %1807 = vmatprep.subr.mxu0 %v1517
    %1808 = vmatpush1.msra.mxu0 %v1516
    %1809 = vmatprep.subr.mxu0 0.0
    %1810 = vmatpush1.msra.mxu0 0.0
    %1811 = vmatprep.subr.mxu0 0.0
    %1812 = vmatpush1.msra.mxu0 0.0
    %1813 = vmatprep.subr.mxu0 0.0
    %1814 = vmatpush1.msra.mxu0 0.0
    %1815 = vmatprep.subr.mxu0 0.0
    %1816 = vmatpush1.msra.mxu0 0.0
    %1817 = vmatprep.subr.mxu0 0.0
    %1818 = vmatpush1.msra.mxu0 0.0
    %1819 = vmatprep.subr.mxu0 0.0
    %1820 = vmatpush1.msra.mxu0 0.0
    %1821 = vmatprep.subr.mxu0 0.0
    %1822 = vmatpush1.msra.mxu0 0.0
    %1823 = vmatprep.subr.mxu0 0.0
    %1824 = vmatpush1.msra.mxu0 0.0
    %1825 = vmatprep.subr.mxu0 0.0
    %1826 = vmatpush1.msra.mxu0 0.0
    %1827 = vmatprep.subr.mxu0 0.0
    %1828 = vmatpush1.msra.mxu0 0.0
    %1829 = vmatprep.subr.mxu0 0.0
    %1830 = vmatpush1.msra.mxu0 0.0
    %1831 = vmatprep.subr.mxu0 0.0
    %1832 = vmatpush1.msra.mxu0 0.0
    %1833 = vmatprep.subr.mxu0 0.0
    %1834 = vmatpush1.msra.mxu0 0.0
    %1835 = vmatprep.subr.mxu0 0.0
    %1836 = vmatpush1.msra.mxu0 0.0
    %1837 = vmatprep.subr.mxu0 0.0
    %1838 = vmatpush1.msra.mxu0 0.0
    %1839 = vmatprep.subr.mxu0 0.0
    %1840 = vmatpush1.msra.mxu0 0.0
    %1841 = vmatprep.mubr.f32.mxu0 0.0
    %1842 = vmatmul.mubr.f32.gmra.mrb[0].mxu0 0.0
    %v1843 = vpop.f32.mrb[0].mxu0
    %v1844 = vadd.f32 0.0, %v1843
    %v1845 = vpop.f32.mrb[0].mxu0
    %v1846 = vadd.f32 0.0, %v1845
    %1847 = vdwg.mxu0
    %1848 = vmatprep.subr.mxu0 %v1391
    %1849 = vmatpush1.msra.mxu0 %v1390
    %1850 = vmatprep.subr.mxu0 %v1395
    %1851 = vmatpush1.msra.mxu0 %v1394
    %1852 = vmatprep.subr.mxu0 %v1399
    %1853 = vmatpush1.msra.mxu0 %v1398
    %1854 = vmatprep.subr.mxu0 %v1403
    %1855 = vmatpush1.msra.mxu0 %v1402
    %1856 = vmatprep.subr.mxu0 %v1407
    %1857 = vmatpush1.msra.mxu0 %v1406
    %1858 = vmatprep.subr.mxu0 %v1411
    %1859 = vmatpush1.msra.mxu0 %v1410
    %1860 = vmatprep.subr.mxu0 %v1415
    %1861 = vmatpush1.msra.mxu0 %v1414
    %1862 = vmatprep.subr.mxu0 %v1419
    %1863 = vmatpush1.msra.mxu0 %v1418
    %1864 = vmatprep.subr.mxu0 %v1423
    %1865 = vmatpush1.msra.mxu0 %v1422
    %1866 = vmatprep.subr.mxu0 %v1427
    %1867 = vmatpush1.msra.mxu0 %v1426
    %1868 = vmatprep.subr.mxu0 %v1431
    %1869 = vmatpush1.msra.mxu0 %v1430
    %1870 = vmatprep.subr.mxu0 %v1435
    %1871 = vmatpush1.msra.mxu0 %v1434
    %1872 = vmatprep.subr.mxu0 %v1439
    %1873 = vmatpush1.msra.mxu0 %v1438
    %1874 = vmatprep.subr.mxu0 %v1443
    %1875 = vmatpush1.msra.mxu0 %v1442
    %1876 = vmatprep.subr.mxu0 %v1447
    %1877 = vmatpush1.msra.mxu0 %v1446
    %1878 = vmatprep.subr.mxu0 %v1451
    %1879 = vmatpush1.msra.mxu0 %v1450
    %1880 = vmatprep.subr.mxu0 0.0
    %1881 = vmatpush1.msra.mxu0 0.0
    %1882 = vmatprep.subr.mxu0 0.0
    %1883 = vmatpush1.msra.mxu0 0.0
    %1884 = vmatprep.subr.mxu0 0.0
    %1885 = vmatpush1.msra.mxu0 0.0
    %1886 = vmatprep.subr.mxu0 0.0
    %1887 = vmatpush1.msra.mxu0 0.0
    %1888 = vmatprep.subr.mxu0 0.0
    %1889 = vmatpush1.msra.mxu0 0.0
    %1890 = vmatprep.subr.mxu0 0.0
    %1891 = vmatpush1.msra.mxu0 0.0
    %1892 = vmatprep.subr.mxu0 0.0
    %1893 = vmatpush1.msra.mxu0 0.0
    %1894 = vmatprep.subr.mxu0 0.0
    %1895 = vmatpush1.msra.mxu0 0.0
    %1896 = vmatprep.subr.mxu0 0.0
    %1897 = vmatpush1.msra.mxu0 0.0
    %1898 = vmatprep.subr.mxu0 0.0
    %1899 = vmatpush1.msra.mxu0 0.0
    %1900 = vmatprep.subr.mxu0 0.0
    %1901 = vmatpush1.msra.mxu0 0.0
    %1902 = vmatprep.subr.mxu0 0.0
    %1903 = vmatpush1.msra.mxu0 0.0
    %1904 = vmatprep.subr.mxu0 0.0
    %1905 = vmatpush1.msra.mxu0 0.0
    %1906 = vmatprep.subr.mxu0 0.0
    %1907 = vmatpush1.msra.mxu0 0.0
    %1908 = vmatprep.subr.mxu0 0.0
    %1909 = vmatpush1.msra.mxu0 0.0
    %1910 = vmatprep.subr.mxu0 0.0
    %1911 = vmatpush1.msra.mxu0 0.0
    %1912 = vmatprep.mubr.f32.mxu0 0.0
    %1913 = vmatmul.mubr.f32.gmra.mrb[0].mxu0 %v1705
    %v1914 = vpop.f32.mrb[0].mxu0
    %v1915 = vadd.f32 %v1773, %v1914
    %v1916 = vpop.f32.mrb[0].mxu0
    %v1917 = vadd.f32 %v1775, %v1916
    %1918 = vdwg.mxu0
    %1919 = vmatprep.subr.mxu0 %v1393
    %1920 = vmatpush1.msra.mxu0 %v1392
    %1921 = vmatprep.subr.mxu0 %v1397
    %1922 = vmatpush1.msra.mxu0 %v1396
    %1923 = vmatprep.subr.mxu0 %v1401
    %1924 = vmatpush1.msra.mxu0 %v1400
    %1925 = vmatprep.subr.mxu0 %v1405
    %1926 = vmatpush1.msra.mxu0 %v1404
    %1927 = vmatprep.subr.mxu0 %v1409
    %1928 = vmatpush1.msra.mxu0 %v1408
    %1929 = vmatprep.subr.mxu0 %v1413
    %1930 = vmatpush1.msra.mxu0 %v1412
    %1931 = vmatprep.subr.mxu0 %v1417
    %1932 = vmatpush1.msra.mxu0 %v1416
    %1933 = vmatprep.subr.mxu0 %v1421
    %1934 = vmatpush1.msra.mxu0 %v1420
    %1935 = vmatprep.subr.mxu0 %v1425
    %1936 = vmatpush1.msra.mxu0 %v1424
    %1937 = vmatprep.subr.mxu0 %v1429
    %1938 = vmatpush1.msra.mxu0 %v1428
    %1939 = vmatprep.subr.mxu0 %v1433
    %1940 = vmatpush1.msra.mxu0 %v1432
    %1941 = vmatprep.subr.mxu0 %v1437
    %1942 = vmatpush1.msra.mxu0 %v1436
    %1943 = vmatprep.subr.mxu0 %v1441
    %1944 = vmatpush1.msra.mxu0 %v1440
    %1945 = vmatprep.subr.mxu0 %v1445
    %1946 = vmatpush1.msra.mxu0 %v1444
    %1947 = vmatprep.subr.mxu0 %v1449
    %1948 = vmatpush1.msra.mxu0 %v1448
    %1949 = vmatprep.subr.mxu0 %v1453
    %1950 = vmatpush1.msra.mxu0 %v1452
    %1951 = vmatprep.subr.mxu0 0.0
    %1952 = vmatpush1.msra.mxu0 0.0
    %1953 = vmatprep.subr.mxu0 0.0
    %1954 = vmatpush1.msra.mxu0 0.0
    %1955 = vmatprep.subr.mxu0 0.0
    %1956 = vmatpush1.msra.mxu0 0.0
    %1957 = vmatprep.subr.mxu0 0.0
    %1958 = vmatpush1.msra.mxu0 0.0
    %1959 = vmatprep.subr.mxu0 0.0
    %1960 = vmatpush1.msra.mxu0 0.0
    %1961 = vmatprep.subr.mxu0 0.0
    %1962 = vmatpush1.msra.mxu0 0.0
    %1963 = vmatprep.subr.mxu0 0.0
    %1964 = vmatpush1.msra.mxu0 0.0
    %1965 = vmatprep.subr.mxu0 0.0
    %1966 = vmatpush1.msra.mxu0 0.0
    %1967 = vmatprep.subr.mxu0 0.0
    %1968 = vmatpush1.msra.mxu0 0.0
    %1969 = vmatprep.subr.mxu0 0.0
    %1970 = vmatpush1.msra.mxu0 0.0
    %1971 = vmatprep.subr.mxu0 0.0
    %1972 = vmatpush1.msra.mxu0 0.0
    %1973 = vmatprep.subr.mxu0 0.0
    %1974 = vmatpush1.msra.mxu0 0.0
    %1975 = vmatprep.subr.mxu0 0.0
    %1976 = vmatpush1.msra.mxu0 0.0
    %1977 = vmatprep.subr.mxu0 0.0
    %1978 = vmatpush1.msra.mxu0 0.0
    %1979 = vmatprep.subr.mxu0 0.0
    %1980 = vmatpush1.msra.mxu0 0.0
    %1981 = vmatprep.subr.mxu0 0.0
    %1982 = vmatpush1.msra.mxu0 0.0
    %1983 = vmatprep.mubr.f32.mxu0 0.0
    %1984 = vmatmul.mubr.f32.gmra.mrb[0].mxu0 %v1705
    %v1985 = vpop.f32.mrb[0].mxu0
    %v1986 = vadd.f32 %v1844, %v1985
    %v1987 = vpop.f32.mrb[0].mxu0
    %v1988 = vadd.f32 %v1846, %v1987
    %1989 = vdwg.mxu0
    %v1991 = vlaneseq
    %v1992 = vshrl.u32 %v1991, 7
    %v1993 = vsub.s32 0, %v1992
    %v1994 = vrot.slane %v1518, %v1993
    %v1995 = vlaneseq
    %v1996 = vshrl.u32 %v1995, 7
    %v1997 = vsub.s32 1, %v1996
    %v1998 = vrot.slane %v1518, %v1997
    %v1999 = vlaneseq
    %v2000 = vshrl.u32 %v1999, 7
    %v2001 = vsub.s32 2, %v2000
    %v2002 = vrot.slane %v1518, %v2001
    %v2003 = vlaneseq
    %v2004 = vshrl.u32 %v2003, 7
    %v2005 = vsub.s32 3, %v2004
    %v2006 = vrot.slane %v1518, %v2005
    %v2011 = vadd.f32 %v1915, %v1994
    %v2012 = vadd.f32 %v1917, %v1998
    %v2013 = vadd.f32 %v1986, %v2002
    %v2014 = vadd.f32 %v1988, %v2006
    %v2015 = vxor.u32 %v2011, 2147483648
    %v2016 = vmul.f32 %v2015, 1.442695
    %v2017 = vpow.pop %v2016
    %v2018 = vadd.f32 %v2017, 1.0
    %v2019 = vrcp.pop %v2018
    %v2020 = vmul.f32 1.0, %v2019
    %v2021 = vxor.u32 %v2012, 2147483648
    %v2022 = vmul.f32 %v2021, 1.442695
    %v2023 = vpow.pop %v2022
    %v2024 = vadd.f32 %v2023, 1.0
    %v2025 = vrcp.pop %v2024
    %v2026 = vmul.f32 1.0, %v2025
    %v2027 = vtanh.pop %v2013
    %v2028 = vxor.u32 %v2014, 2147483648
    %v2029 = vmul.f32 %v2028, 1.442695
    %v2030 = vpow.pop %v2029
    %v2031 = vadd.f32 %v2030, 1.0
    %v2032 = vrcp.pop %v2031
    %v2033 = vmul.f32 1.0, %v2032
    %v2034 = vmul.f32 %v2026, 0.0
    %v2035 = vmul.f32 %v2020, %v2027
    %v2036 = vadd.f32 %v2034, %v2035
    %v2037 = vtanh.pop %v2036
    %v2038 = vmul.f32 %v2033, %v2037
    %v2043 = vrot.slane %v1047, 1
    %v2044 = vrot.slane %v1049, 1
    %v2045 = vrot.slane %v1124, 1
    %v2046 = vrot.slane %v1126, 1
    %v2051 = vsel %vm1531, %v2043, %v1239
    %v2052 = vsel %vm1531, %v2044, %v1241
    %v2053 = vsel %vm1531, %v2045, %v1316
    %v2054 = vsel %vm1531, %v2046, %v1318
    %2055 = vmatprep.subr.mxu0 %v1327
    %2056 = vmatpush1.msra.mxu0 %v1326
    %2057 = vmatprep.subr.mxu0 %v1331
    %2058 = vmatpush1.msra.mxu0 %v1330
    %2059 = vmatprep.subr.mxu0 %v1335
    %2060 = vmatpush1.msra.mxu0 %v1334
    %2061 = vmatprep.subr.mxu0 %v1339
    %2062 = vmatpush1.msra.mxu0 %v1338
    %2063 = vmatprep.subr.mxu0 %v1343
    %2064 = vmatpush1.msra.mxu0 %v1342
    %2065 = vmatprep.subr.mxu0 %v1347
    %2066 = vmatpush1.msra.mxu0 %v1346
    %2067 = vmatprep.subr.mxu0 %v1351
    %2068 = vmatpush1.msra.mxu0 %v1350
    %2069 = vmatprep.subr.mxu0 %v1355
    %2070 = vmatpush1.msra.mxu0 %v1354
    %2071 = vmatprep.subr.mxu0 %v1359
    %2072 = vmatpush1.msra.mxu0 %v1358
    %2073 = vmatprep.subr.mxu0 %v1363
    %2074 = vmatpush1.msra.mxu0 %v1362
    %2075 = vmatprep.subr.mxu0 %v1367
    %2076 = vmatpush1.msra.mxu0 %v1366
    %2077 = vmatprep.subr.mxu0 %v1371
    %2078 = vmatpush1.msra.mxu0 %v1370
    %2079 = vmatprep.subr.mxu0 %v1375
    %2080 = vmatpush1.msra.mxu0 %v1374
    %2081 = vmatprep.subr.mxu0 %v1379
    %2082 = vmatpush1.msra.mxu0 %v1378
    %2083 = vmatprep.subr.mxu0 %v1383
    %2084 = vmatpush1.msra.mxu0 %v1382
    %2085 = vmatprep.subr.mxu0 %v1387
    %2086 = vmatpush1.msra.mxu0 %v1386
    %2087 = vmatprep.subr.mxu0 0.0
    %2088 = vmatpush1.msra.mxu0 0.0
    %2089 = vmatprep.subr.mxu0 0.0
    %2090 = vmatpush1.msra.mxu0 0.0
    %2091 = vmatprep.subr.mxu0 0.0
    %2092 = vmatpush1.msra.mxu0 0.0
    %2093 = vmatprep.subr.mxu0 0.0
    %2094 = vmatpush1.msra.mxu0 0.0
    %2095 = vmatprep.subr.mxu0 0.0
    %2096 = vmatpush1.msra.mxu0 0.0
    %2097 = vmatprep.subr.mxu0 0.0
    %2098 = vmatpush1.msra.mxu0 0.0
    %2099 = vmatprep.subr.mxu0 0.0
    %2100 = vmatpush1.msra.mxu0 0.0
    %2101 = vmatprep.subr.mxu0 0.0
    %2102 = vmatpush1.msra.mxu0 0.0
    %2103 = vmatprep.subr.mxu0 0.0
    %2104 = vmatpush1.msra.mxu0 0.0
    %2105 = vmatprep.subr.mxu0 0.0
    %2106 = vmatpush1.msra.mxu0 0.0
    %2107 = vmatprep.subr.mxu0 0.0
    %2108 = vmatpush1.msra.mxu0 0.0
    %2109 = vmatprep.subr.mxu0 0.0
    %2110 = vmatpush1.msra.mxu0 0.0
    %2111 = vmatprep.subr.mxu0 0.0
    %2112 = vmatpush1.msra.mxu0 0.0
    %2113 = vmatprep.subr.mxu0 0.0
    %2114 = vmatpush1.msra.mxu0 0.0
    %2115 = vmatprep.subr.mxu0 0.0
    %2116 = vmatpush1.msra.mxu0 0.0
    %2117 = vmatprep.subr.mxu0 0.0
    %2118 = vmatpush1.msra.mxu0 0.0
    %2119 = vmatprep.mubr.f32.mxu0 0.0
    %2120 = vmatmul.mubr.f32.gmra.mrb[0].mxu0 %v1705
    %v2121 = vpop.f32.mrb[0].mxu0
    %v2122 = vadd.f32 0.0, %v2121
    %v2123 = vpop.f32.mrb[0].mxu0
    %v2124 = vadd.f32 0.0, %v2123
    %2125 = vdwg.mxu0
    %2126 = vmatprep.subr.mxu0 %v1329
    %2127 = vmatpush1.msra.mxu0 %v1328
    %2128 = vmatprep.subr.mxu0 %v1333
    %2129 = vmatpush1.msra.mxu0 %v1332
    %2130 = vmatprep.subr.mxu0 %v1337
    %2131 = vmatpush1.msra.mxu0 %v1336
    %2132 = vmatprep.subr.mxu0 %v1341
    %2133 = vmatpush1.msra.mxu0 %v1340
    %2134 = vmatprep.subr.mxu0 %v1345
    %2135 = vmatpush1.msra.mxu0 %v1344
    %2136 = vmatprep.subr.mxu0 %v1349
    %2137 = vmatpush1.msra.mxu0 %v1348
    %2138 = vmatprep.subr.mxu0 %v1353
    %2139 = vmatpush1.msra.mxu0 %v1352
    %2140 = vmatprep.subr.mxu0 %v1357
    %2141 = vmatpush1.msra.mxu0 %v1356
    %2142 = vmatprep.subr.mxu0 %v1361
    %2143 = vmatpush1.msra.mxu0 %v1360
    %2144 = vmatprep.subr.mxu0 %v1365
    %2145 = vmatpush1.msra.mxu0 %v1364
    %2146 = vmatprep.subr.mxu0 %v1369
    %2147 = vmatpush1.msra.mxu0 %v1368
    %2148 = vmatprep.subr.mxu0 %v1373
    %2149 = vmatpush1.msra.mxu0 %v1372
    %2150 = vmatprep.subr.mxu0 %v1377
    %2151 = vmatpush1.msra.mxu0 %v1376
    %2152 = vmatprep.subr.mxu0 %v1381
    %2153 = vmatpush1.msra.mxu0 %v1380
    %2154 = vmatprep.subr.mxu0 %v1385
    %2155 = vmatpush1.msra.mxu0 %v1384
    %2156 = vmatprep.subr.mxu0 %v1389
    %2157 = vmatpush1.msra.mxu0 %v1388
    %2158 = vmatprep.subr.mxu0 0.0
    %2159 = vmatpush1.msra.mxu0 0.0
    %2160 = vmatprep.subr.mxu0 0.0
    %2161 = vmatpush1.msra.mxu0 0.0
    %2162 = vmatprep.subr.mxu0 0.0
    %2163 = vmatpush1.msra.mxu0 0.0
    %2164 = vmatprep.subr.mxu0 0.0
    %2165 = vmatpush1.msra.mxu0 0.0
    %2166 = vmatprep.subr.mxu0 0.0
    %2167 = vmatpush1.msra.mxu0 0.0
    %2168 = vmatprep.subr.mxu0 0.0
    %2169 = vmatpush1.msra.mxu0 0.0
    %2170 = vmatprep.subr.mxu0 0.0
    %2171 = vmatpush1.msra.mxu0 0.0
    %2172 = vmatprep.subr.mxu0 0.0
    %2173 = vmatpush1.msra.mxu0 0.0
    %2174 = vmatprep.subr.mxu0 0.0
    %2175 = vmatpush1.msra.mxu0 0.0
    %2176 = vmatprep.subr.mxu0 0.0
    %2177 = vmatpush1.msra.mxu0 0.0
    %2178 = vmatprep.subr.mxu0 0.0
    %2179 = vmatpush1.msra.mxu0 0.0
    %2180 = vmatprep.subr.mxu0 0.0
    %2181 = vmatpush1.msra.mxu0 0.0
    %2182 = vmatprep.subr.mxu0 0.0
    %2183 = vmatpush1.msra.mxu0 0.0
    %2184 = vmatprep.subr.mxu0 0.0
    %2185 = vmatpush1.msra.mxu0 0.0
    %2186 = vmatprep.subr.mxu0 0.0
    %2187 = vmatpush1.msra.mxu0 0.0
    %2188 = vmatprep.subr.mxu0 0.0
    %2189 = vmatpush1.msra.mxu0 0.0
    %2190 = vmatprep.mubr.f32.mxu0 0.0
    %2191 = vmatmul.mubr.f32.gmra.mrb[0].mxu0 %v1705
    %v2192 = vpop.f32.mrb[0].mxu0
    %v2193 = vadd.f32 0.0, %v2192
    %v2194 = vpop.f32.mrb[0].mxu0
    %v2195 = vadd.f32 0.0, %v2194
    %2196 = vdwg.mxu0
    %v2197 = vadd.f32 %v2051, %v2122
    %v2198 = vadd.f32 %v2052, %v2124
    %v2199 = vadd.f32 %v2053, %v2193
    %v2200 = vadd.f32 %v2054, %v2195
    %v2201 = vxor.u32 %v2197, 2147483648
    %v2202 = vmul.f32 %v2201, 1.442695
    %v2203 = vpow.pop %v2202
    %v2204 = vadd.f32 %v2203, 1.0
    %v2205 = vrcp.pop %v2204
    %v2206 = vmul.f32 1.0, %v2205
    %v2207 = vxor.u32 %v2198, 2147483648
    %v2208 = vmul.f32 %v2207, 1.442695
    %v2209 = vpow.pop %v2208
    %v2210 = vadd.f32 %v2209, 1.0
    %v2211 = vrcp.pop %v2210
    %v2212 = vmul.f32 1.0, %v2211
    %v2213 = vtanh.pop %v2199
    %v2214 = vxor.u32 %v2200, 2147483648
    %v2215 = vmul.f32 %v2214, 1.442695
    %v2216 = vpow.pop %v2215
    %v2217 = vadd.f32 %v2216, 1.0
    %v2218 = vrcp.pop %v2217
    %v2219 = vmul.f32 1.0, %v2218
    %v2220 = vmul.f32 %v2212, %v1703
    %v2221 = vmul.f32 %v2206, %v2213
    %v2222 = vadd.f32 %v2220, %v2221
    %v2223 = vtanh.pop %v2222
    %v2224 = vmul.f32 %v2219, %v2223
    %2225 = vmatprep.subr.mxu0 %v1455
    %2226 = vmatpush1.msra.mxu0 %v1454
    %2227 = vmatprep.subr.mxu0 %v1459
    %2228 = vmatpush1.msra.mxu0 %v1458
    %2229 = vmatprep.subr.mxu0 %v1463
    %2230 = vmatpush1.msra.mxu0 %v1462
    %2231 = vmatprep.subr.mxu0 %v1467
    %2232 = vmatpush1.msra.mxu0 %v1466
    %2233 = vmatprep.subr.mxu0 %v1471
    %2234 = vmatpush1.msra.mxu0 %v1470
    %2235 = vmatprep.subr.mxu0 %v1475
    %2236 = vmatpush1.msra.mxu0 %v1474
    %2237 = vmatprep.subr.mxu0 %v1479
    %2238 = vmatpush1.msra.mxu0 %v1478
    %2239 = vmatprep.subr.mxu0 %v1483
    %2240 = vmatpush1.msra.mxu0 %v1482
    %2241 = vmatprep.subr.mxu0 %v1487
    %2242 = vmatpush1.msra.mxu0 %v1486
    %2243 = vmatprep.subr.mxu0 %v1491
    %2244 = vmatpush1.msra.mxu0 %v1490
    %2245 = vmatprep.subr.mxu0 %v1495
    %2246 = vmatpush1.msra.mxu0 %v1494
    %2247 = vmatprep.subr.mxu0 %v1499
    %2248 = vmatpush1.msra.mxu0 %v1498
    %2249 = vmatprep.subr.mxu0 %v1503
    %2250 = vmatpush1.msra.mxu0 %v1502
    %2251 = vmatprep.subr.mxu0 %v1507
    %2252 = vmatpush1.msra.mxu0 %v1506
    %2253 = vmatprep.subr.mxu0 %v1511
    %2254 = vmatpush1.msra.mxu0 %v1510
    %2255 = vmatprep.subr.mxu0 %v1515
    %2256 = vmatpush1.msra.mxu0 %v1514
    %2257 = vmatprep.subr.mxu0 0.0
    %2258 = vmatpush1.msra.mxu0 0.0
    %2259 = vmatprep.subr.mxu0 0.0
    %2260 = vmatpush1.msra.mxu0 0.0
    %2261 = vmatprep.subr.mxu0 0.0
    %2262 = vmatpush1.msra.mxu0 0.0
    %2263 = vmatprep.subr.mxu0 0.0
    %2264 = vmatpush1.msra.mxu0 0.0
    %2265 = vmatprep.subr.mxu0 0.0
    %2266 = vmatpush1.msra.mxu0 0.0
    %2267 = vmatprep.subr.mxu0 0.0
    %2268 = vmatpush1.msra.mxu0 0.0
    %2269 = vmatprep.subr.mxu0 0.0
    %2270 = vmatpush1.msra.mxu0 0.0
    %2271 = vmatprep.subr.mxu0 0.0
    %2272 = vmatpush1.msra.mxu0 0.0
    %2273 = vmatprep.subr.mxu0 0.0
    %2274 = vmatpush1.msra.mxu0 0.0
    %2275 = vmatprep.subr.mxu0 0.0
    %2276 = vmatpush1.msra.mxu0 0.0
    %2277 = vmatprep.subr.mxu0 0.0
    %2278 = vmatpush1.msra.mxu0 0.0
    %2279 = vmatprep.subr.mxu0 0.0
    %2280 = vmatpush1.msra.mxu0 0.0
    %2281 = vmatprep.subr.mxu0 0.0
    %2282 = vmatpush1.msra.mxu0 0.0
    %2283 = vmatprep.subr.mxu0 0.0
    %2284 = vmatpush1.msra.mxu0 0.0
    %2285 = vmatprep.subr.mxu0 0.0
    %2286 = vmatpush1.msra.mxu0 0.0
    %2287 = vmatprep.subr.mxu0 0.0
    %2288 = vmatpush1.msra.mxu0 0.0
    %2289 = vmatprep.mubr.f32.mxu0 0.0
    %2290 = vmatmul.mubr.f32.gmra.mrb[0].mxu0 %v2038
    %v2291 = vpop.f32.mrb[0].mxu0
    %v2292 = vadd.f32 0.0, %v2291
    %v2293 = vpop.f32.mrb[0].mxu0
    %v2294 = vadd.f32 0.0, %v2293
    %2295 = vdwg.mxu0
    %2296 = vmatprep.subr.mxu0 %v1457
    %2297 = vmatpush1.msra.mxu0 %v1456
    %2298 = vmatprep.subr.mxu0 %v1461
    %2299 = vmatpush1.msra.mxu0 %v1460
    %2300 = vmatprep.subr.mxu0 %v1465
    %2301 = vmatpush1.msra.mxu0 %v1464
    %2302 = vmatprep.subr.mxu0 %v1469
    %2303 = vmatpush1.msra.mxu0 %v1468
    %2304 = vmatprep.subr.mxu0 %v1473
    %2305 = vmatpush1.msra.mxu0 %v1472
    %2306 = vmatprep.subr.mxu0 %v1477
    %2307 = vmatpush1.msra.mxu0 %v1476
    %2308 = vmatprep.subr.mxu0 %v1481
    %2309 = vmatpush1.msra.mxu0 %v1480
    %2310 = vmatprep.subr.mxu0 %v1485
    %2311 = vmatpush1.msra.mxu0 %v1484
    %2312 = vmatprep.subr.mxu0 %v1489
    %2313 = vmatpush1.msra.mxu0 %v1488
    %2314 = vmatprep.subr.mxu0 %v1493
    %2315 = vmatpush1.msra.mxu0 %v1492
    %2316 = vmatprep.subr.mxu0 %v1497
    %2317 = vmatpush1.msra.mxu0 %v1496
    %2318 = vmatprep.subr.mxu0 %v1501
    %2319 = vmatpush1.msra.mxu0 %v1500
    %2320 = vmatprep.subr.mxu0 %v1505
    %2321 = vmatpush1.msra.mxu0 %v1504
    %2322 = vmatprep.subr.mxu0 %v1509
    %2323 = vmatpush1.msra.mxu0 %v1508
    %2324 = vmatprep.subr.mxu0 %v1513
    %2325 = vmatpush1.msra.mxu0 %v1512
    %2326 = vmatprep.subr.mxu0 %v1517
    %2327 = vmatpush1.msra.mxu0 %v1516
    %2328 = vmatprep.subr.mxu0 0.0
    %2329 = vmatpush1.msra.mxu0 0.0
    %2330 = vmatprep.subr.mxu0 0.0
    %2331 = vmatpush1.msra.mxu0 0.0
    %2332 = vmatprep.subr.mxu0 0.0
    %2333 = vmatpush1.msra.mxu0 0.0
    %2334 = vmatprep.subr.mxu0 0.0
    %2335 = vmatpush1.msra.mxu0 0.0
    %2336 = vmatprep.subr.mxu0 0.0
    %2337 = vmatpush1.msra.mxu0 0.0
    %2338 = vmatprep.subr.mxu0 0.0
    %2339 = vmatpush1.msra.mxu0 0.0
    %2340 = vmatprep.subr.mxu0 0.0
    %2341 = vmatpush1.msra.mxu0 0.0
    %2342 = vmatprep.subr.mxu0 0.0
    %2343 = vmatpush1.msra.mxu0 0.0
    %2344 = vmatprep.subr.mxu0 0.0
    %2345 = vmatpush1.msra.mxu0 0.0
    %2346 = vmatprep.subr.mxu0 0.0
    %2347 = vmatpush1.msra.mxu0 0.0
    %2348 = vmatprep.subr.mxu0 0.0
    %2349 = vmatpush1.msra.mxu0 0.0
    %2350 = vmatprep.subr.mxu0 0.0
    %2351 = vmatpush1.msra.mxu0 0.0
    %2352 = vmatprep.subr.mxu0 0.0
    %2353 = vmatpush1.msra.mxu0 0.0
    %2354 = vmatprep.subr.mxu0 0.0
    %2355 = vmatpush1.msra.mxu0 0.0
    %2356 = vmatprep.subr.mxu0 0.0
    %2357 = vmatpush1.msra.mxu0 0.0
    %2358 = vmatprep.subr.mxu0 0.0
    %2359 = vmatpush1.msra.mxu0 0.0
    %2360 = vmatprep.mubr.f32.mxu0 0.0
    %2361 = vmatmul.mubr.f32.gmra.mrb[0].mxu0 %v2038
    %v2362 = vpop.f32.mrb[0].mxu0
    %v2363 = vadd.f32 0.0, %v2362
    %v2364 = vpop.f32.mrb[0].mxu0
    %v2365 = vadd.f32 0.0, %v2364
    %2366 = vdwg.mxu0
    %2367 = vmatprep.subr.mxu0 %v1391
    %2368 = vmatpush1.msra.mxu0 %v1390
    %2369 = vmatprep.subr.mxu0 %v1395
    %2370 = vmatpush1.msra.mxu0 %v1394
    %2371 = vmatprep.subr.mxu0 %v1399
    %2372 = vmatpush1.msra.mxu0 %v1398
    %2373 = vmatprep.subr.mxu0 %v1403
    %2374 = vmatpush1.msra.mxu0 %v1402
    %2375 = vmatprep.subr.mxu0 %v1407
    %2376 = vmatpush1.msra.mxu0 %v1406
    %2377 = vmatprep.subr.mxu0 %v1411
    %2378 = vmatpush1.msra.mxu0 %v1410
    %2379 = vmatprep.subr.mxu0 %v1415
    %2380 = vmatpush1.msra.mxu0 %v1414
    %2381 = vmatprep.subr.mxu0 %v1419
    %2382 = vmatpush1.msra.mxu0 %v1418
    %2383 = vmatprep.subr.mxu0 %v1423
    %2384 = vmatpush1.msra.mxu0 %v1422
    %2385 = vmatprep.subr.mxu0 %v1427
    %2386 = vmatpush1.msra.mxu0 %v1426
    %2387 = vmatprep.subr.mxu0 %v1431
    %2388 = vmatpush1.msra.mxu0 %v1430
    %2389 = vmatprep.subr.mxu0 %v1435
    %2390 = vmatpush1.msra.mxu0 %v1434
    %2391 = vmatprep.subr.mxu0 %v1439
    %2392 = vmatpush1.msra.mxu0 %v1438
    %2393 = vmatprep.subr.mxu0 %v1443
    %2394 = vmatpush1.msra.mxu0 %v1442
    %2395 = vmatprep.subr.mxu0 %v1447
    %2396 = vmatpush1.msra.mxu0 %v1446
    %2397 = vmatprep.subr.mxu0 %v1451
    %2398 = vmatpush1.msra.mxu0 %v1450
    %2399 = vmatprep.subr.mxu0 0.0
    %2400 = vmatpush1.msra.mxu0 0.0
    %2401 = vmatprep.subr.mxu0 0.0
    %2402 = vmatpush1.msra.mxu0 0.0
    %2403 = vmatprep.subr.mxu0 0.0
    %2404 = vmatpush1.msra.mxu0 0.0
    %2405 = vmatprep.subr.mxu0 0.0
    %2406 = vmatpush1.msra.mxu0 0.0
    %2407 = vmatprep.subr.mxu0 0.0
    %2408 = vmatpush1.msra.mxu0 0.0
    %2409 = vmatprep.subr.mxu0 0.0
    %2410 = vmatpush1.msra.mxu0 0.0
    %2411 = vmatprep.subr.mxu0 0.0
    %2412 = vmatpush1.msra.mxu0 0.0
    %2413 = vmatprep.subr.mxu0 0.0
    %2414 = vmatpush1.msra.mxu0 0.0
    %2415 = vmatprep.subr.mxu0 0.0
    %2416 = vmatpush1.msra.mxu0 0.0
    %2417 = vmatprep.subr.mxu0 0.0
    %2418 = vmatpush1.msra.mxu0 0.0
    %2419 = vmatprep.subr.mxu0 0.0
    %2420 = vmatpush1.msra.mxu0 0.0
    %2421 = vmatprep.subr.mxu0 0.0
    %2422 = vmatpush1.msra.mxu0 0.0
    %2423 = vmatprep.subr.mxu0 0.0
    %2424 = vmatpush1.msra.mxu0 0.0
    %2425 = vmatprep.subr.mxu0 0.0
    %2426 = vmatpush1.msra.mxu0 0.0
    %2427 = vmatprep.subr.mxu0 0.0
    %2428 = vmatpush1.msra.mxu0 0.0
    %2429 = vmatprep.subr.mxu0 0.0
    %2430 = vmatpush1.msra.mxu0 0.0
    %2431 = vmatprep.mubr.f32.mxu0 0.0
    %2432 = vmatmul.mubr.f32.gmra.mrb[0].mxu0 %v2224
    %v2433 = vpop.f32.mrb[0].mxu0
    %v2434 = vadd.f32 %v2292, %v2433
    %v2435 = vpop.f32.mrb[0].mxu0
    %v2436 = vadd.f32 %v2294, %v2435
    %2437 = vdwg.mxu0
    %2438 = vmatprep.subr.mxu0 %v1393
    %2439 = vmatpush1.msra.mxu0 %v1392
    %2440 = vmatprep.subr.mxu0 %v1397
    %2441 = vmatpush1.msra.mxu0 %v1396
    %2442 = vmatprep.subr.mxu0 %v1401
    %2443 = vmatpush1.msra.mxu0 %v1400
    %2444 = vmatprep.subr.mxu0 %v1405
    %2445 = vmatpush1.msra.mxu0 %v1404
    %2446 = vmatprep.subr.mxu0 %v1409
    %2447 = vmatpush1.msra.mxu0 %v1408
    %2448 = vmatprep.subr.mxu0 %v1413
    %2449 = vmatpush1.msra.mxu0 %v1412
    %2450 = vmatprep.subr.mxu0 %v1417
    %2451 = vmatpush1.msra.mxu0 %v1416
    %2452 = vmatprep.subr.mxu0 %v1421
    %2453 = vmatpush1.msra.mxu0 %v1420
    %2454 = vmatprep.subr.mxu0 %v1425
    %2455 = vmatpush1.msra.mxu0 %v1424
    %2456 = vmatprep.subr.mxu0 %v1429
    %2457 = vmatpush1.msra.mxu0 %v1428
    %2458 = vmatprep.subr.mxu0 %v1433
    %2459 = vmatpush1.msra.mxu0 %v1432
    %2460 = vmatprep.subr.mxu0 %v1437
    %2461 = vmatpush1.msra.mxu0 %v1436
    %2462 = vmatprep.subr.mxu0 %v1441
    %2463 = vmatpush1.msra.mxu0 %v1440
    %2464 = vmatprep.subr.mxu0 %v1445
    %2465 = vmatpush1.msra.mxu0 %v1444
    %2466 = vmatprep.subr.mxu0 %v1449
    %2467 = vmatpush1.msra.mxu0 %v1448
    %2468 = vmatprep.subr.mxu0 %v1453
    %2469 = vmatpush1.msra.mxu0 %v1452
    %2470 = vmatprep.subr.mxu0 0.0
    %2471 = vmatpush1.msra.mxu0 0.0
    %2472 = vmatprep.subr.mxu0 0.0
    %2473 = vmatpush1.msra.mxu0 0.0
    %2474 = vmatprep.subr.mxu0 0.0
    %2475 = vmatpush1.msra.mxu0 0.0
    %2476 = vmatprep.subr.mxu0 0.0
    %2477 = vmatpush1.msra.mxu0 0.0
    %2478 = vmatprep.subr.mxu0 0.0
    %2479 = vmatpush1.msra.mxu0 0.0
    %2480 = vmatprep.subr.mxu0 0.0
    %2481 = vmatpush1.msra.mxu0 0.0
    %2482 = vmatprep.subr.mxu0 0.0
    %2483 = vmatpush1.msra.mxu0 0.0
    %2484 = vmatprep.subr.mxu0 0.0
    %2485 = vmatpush1.msra.mxu0 0.0
    %2486 = vmatprep.subr.mxu0 0.0
    %2487 = vmatpush1.msra.mxu0 0.0
    %2488 = vmatprep.subr.mxu0 0.0
    %2489 = vmatpush1.msra.mxu0 0.0
    %2490 = vmatprep.subr.mxu0 0.0
    %2491 = vmatpush1.msra.mxu0 0.0
    %2492 = vmatprep.subr.mxu0 0.0
    %2493 = vmatpush1.msra.mxu0 0.0
    %2494 = vmatprep.subr.mxu0 0.0
    %2495 = vmatpush1.msra.mxu0 0.0
    %2496 = vmatprep.subr.mxu0 0.0
    %2497 = vmatpush1.msra.mxu0 0.0
    %2498 = vmatprep.subr.mxu0 0.0
    %2499 = vmatpush1.msra.mxu0 0.0
    %2500 = vmatprep.subr.mxu0 0.0
    %2501 = vmatpush1.msra.mxu0 0.0
    %2502 = vmatprep.mubr.f32.mxu0 0.0
    %2503 = vmatmul.mubr.f32.gmra.mrb[0].mxu0 %v2224
    %v2504 = vpop.f32.mrb[0].mxu0
    %v2505 = vadd.f32 %v2363, %v2504
    %v2506 = vpop.f32.mrb[0].mxu0
    %v2507 = vadd.f32 %v2365, %v2506
    %2508 = vdwg.mxu0
    %v2509 = vadd.f32 %v2434, %v1994
    %v2510 = vadd.f32 %v2436, %v1998
    %v2511 = vadd.f32 %v2505, %v2002
    %v2512 = vadd.f32 %v2507, %v2006
    %v2513 = vxor.u32 %v2509, 2147483648
    %v2514 = vmul.f32 %v2513, 1.442695
    %v2515 = vpow.pop %v2514
    %v2516 = vadd.f32 %v2515, 1.0
    %v2517 = vrcp.pop %v2516
    %v2518 = vmul.f32 1.0, %v2517
    %v2519 = vxor.u32 %v2510, 2147483648
    %v2520 = vmul.f32 %v2519, 1.442695
    %v2521 = vpow.pop %v2520
    %v2522 = vadd.f32 %v2521, 1.0
    %v2523 = vrcp.pop %v2522
    %v2524 = vmul.f32 1.0, %v2523
    %v2525 = vtanh.pop %v2511
    %v2526 = vxor.u32 %v2512, 2147483648
    %v2527 = vmul.f32 %v2526, 1.442695
    %v2528 = vpow.pop %v2527
    %v2529 = vadd.f32 %v2528, 1.0
    %v2530 = vrcp.pop %v2529
    %v2531 = vmul.f32 1.0, %v2530
    %v2532 = vmul.f32 %v2524, %v2036
    %v2533 = vmul.f32 %v2518, %v2525
    %v2534 = vadd.f32 %v2532, %v2533
    %v2535 = vtanh.pop %v2534
    %v2536 = vmul.f32 %v2531, %v2535
    %v2537 = vrot.slane %v1047, 2
    %v2538 = vrot.slane %v1049, 2
    %v2539 = vrot.slane %v1124, 2
    %v2540 = vrot.slane %v1126, 2
    %v2545 = vrot.slane %v1239, 1
    %v2546 = vrot.slane %v1241, 1
    %v2547 = vrot.slane %v1316, 1
    %v2548 = vrot.slane %v1318, 1
    %v2553 = vsel %vm1531, %v2537, %v2545
    %v2554 = vsel %vm1531, %v2538, %v2546
    %v2555 = vsel %vm1531, %v2539, %v2547
    %v2556 = vsel %vm1531, %v2540, %v2548
    %2557 = vmatprep.subr.mxu0 %v1327
    %2558 = vmatpush1.msra.mxu0 %v1326
    %2559 = vmatprep.subr.mxu0 %v1331
    %2560 = vmatpush1.msra.mxu0 %v1330
    %2561 = vmatprep.subr.mxu0 %v1335
    %2562 = vmatpush1.msra.mxu0 %v1334
    %2563 = vmatprep.subr.mxu0 %v1339
    %2564 = vmatpush1.msra.mxu0 %v1338
    %2565 = vmatprep.subr.mxu0 %v1343
    %2566 = vmatpush1.msra.mxu0 %v1342
    %2567 = vmatprep.subr.mxu0 %v1347
    %2568 = vmatpush1.msra.mxu0 %v1346
    %2569 = vmatprep.subr.mxu0 %v1351
    %2570 = vmatpush1.msra.mxu0 %v1350
    %2571 = vmatprep.subr.mxu0 %v1355
    %2572 = vmatpush1.msra.mxu0 %v1354
    %2573 = vmatprep.subr.mxu0 %v1359
    %2574 = vmatpush1.msra.mxu0 %v1358
    %2575 = vmatprep.subr.mxu0 %v1363
    %2576 = vmatpush1.msra.mxu0 %v1362
    %2577 = vmatprep.subr.mxu0 %v1367
    %2578 = vmatpush1.msra.mxu0 %v1366
    %2579 = vmatprep.subr.mxu0 %v1371
    %2580 = vmatpush1.msra.mxu0 %v1370
    %2581 = vmatprep.subr.mxu0 %v1375
    %2582 = vmatpush1.msra.mxu0 %v1374
    %2583 = vmatprep.subr.mxu0 %v1379
    %2584 = vmatpush1.msra.mxu0 %v1378
    %2585 = vmatprep.subr.mxu0 %v1383
    %2586 = vmatpush1.msra.mxu0 %v1382
    %2587 = vmatprep.subr.mxu0 %v1387
    %2588 = vmatpush1.msra.mxu0 %v1386
    %2589 = vmatprep.subr.mxu0 0.0
    %2590 = vmatpush1.msra.mxu0 0.0
    %2591 = vmatprep.subr.mxu0 0.0
    %2592 = vmatpush1.msra.mxu0 0.0
    %2593 = vmatprep.subr.mxu0 0.0
    %2594 = vmatpush1.msra.mxu0 0.0
    %2595 = vmatprep.subr.mxu0 0.0
    %2596 = vmatpush1.msra.mxu0 0.0
    %2597 = vmatprep.subr.mxu0 0.0
    %2598 = vmatpush1.msra.mxu0 0.0
    %2599 = vmatprep.subr.mxu0 0.0
    %2600 = vmatpush1.msra.mxu0 0.0
    %2601 = vmatprep.subr.mxu0 0.0
    %2602 = vmatpush1.msra.mxu0 0.0
    %2603 = vmatprep.subr.mxu0 0.0
    %2604 = vmatpush1.msra.mxu0 0.0
    %2605 = vmatprep.subr.mxu0 0.0
    %2606 = vmatpush1.msra.mxu0 0.0
    %2607 = vmatprep.subr.mxu0 0.0
    %2608 = vmatpush1.msra.mxu0 0.0
    %2609 = vmatprep.subr.mxu0 0.0
    %2610 = vmatpush1.msra.mxu0 0.0
    %2611 = vmatprep.subr.mxu0 0.0
    %2612 = vmatpush1.msra.mxu0 0.0
    %2613 = vmatprep.subr.mxu0 0.0
    %2614 = vmatpush1.msra.mxu0 0.0
    %2615 = vmatprep.subr.mxu0 0.0
    %2616 = vmatpush1.msra.mxu0 0.0
    %2617 = vmatprep.subr.mxu0 0.0
    %2618 = vmatpush1.msra.mxu0 0.0
    %2619 = vmatprep.subr.mxu0 0.0
    %2620 = vmatpush1.msra.mxu0 0.0
    %2621 = vmatprep.mubr.f32.mxu0 0.0
    %2622 = vmatmul.mubr.f32.gmra.mrb[0].mxu0 %v2224
    %v2623 = vpop.f32.mrb[0].mxu0
    %v2624 = vadd.f32 0.0, %v2623
    %v2625 = vpop.f32.mrb[0].mxu0
    %v2626 = vadd.f32 0.0, %v2625
    %2627 = vdwg.mxu0
    %2628 = vmatprep.subr.mxu0 %v1329
    %2629 = vmatpush1.msra.mxu0 %v1328
    %2630 = vmatprep.subr.mxu0 %v1333
    %2631 = vmatpush1.msra.mxu0 %v1332
    %2632 = vmatprep.subr.mxu0 %v1337
    %2633 = vmatpush1.msra.mxu0 %v1336
    %2634 = vmatprep.subr.mxu0 %v1341
    %2635 = vmatpush1.msra.mxu0 %v1340
    %2636 = vmatprep.subr.mxu0 %v1345
    %2637 = vmatpush1.msra.mxu0 %v1344
    %2638 = vmatprep.subr.mxu0 %v1349
    %2639 = vmatpush1.msra.mxu0 %v1348
    %2640 = vmatprep.subr.mxu0 %v1353
    %2641 = vmatpush1.msra.mxu0 %v1352
    %2642 = vmatprep.subr.mxu0 %v1357
    %2643 = vmatpush1.msra.mxu0 %v1356
    %2644 = vmatprep.subr.mxu0 %v1361
    %2645 = vmatpush1.msra.mxu0 %v1360
    %2646 = vmatprep.subr.mxu0 %v1365
    %2647 = vmatpush1.msra.mxu0 %v1364
    %2648 = vmatprep.subr.mxu0 %v1369
    %2649 = vmatpush1.msra.mxu0 %v1368
    %2650 = vmatprep.subr.mxu0 %v1373
    %2651 = vmatpush1.msra.mxu0 %v1372
    %2652 = vmatprep.subr.mxu0 %v1377
    %2653 = vmatpush1.msra.mxu0 %v1376
    %2654 = vmatprep.subr.mxu0 %v1381
    %2655 = vmatpush1.msra.mxu0 %v1380
    %2656 = vmatprep.subr.mxu0 %v1385
    %2657 = vmatpush1.msra.mxu0 %v1384
    %2658 = vmatprep.subr.mxu0 %v1389
    %2659 = vmatpush1.msra.mxu0 %v1388
    %2660 = vmatprep.subr.mxu0 0.0
    %2661 = vmatpush1.msra.mxu0 0.0
    %2662 = vmatprep.subr.mxu0 0.0
    %2663 = vmatpush1.msra.mxu0 0.0
    %2664 = vmatprep.subr.mxu0 0.0
    %2665 = vmatpush1.msra.mxu0 0.0
    %2666 = vmatprep.subr.mxu0 0.0
    %2667 = vmatpush1.msra.mxu0 0.0
    %2668 = vmatprep.subr.mxu0 0.0
    %2669 = vmatpush1.msra.mxu0 0.0
    %2670 = vmatprep.subr.mxu0 0.0
    %2671 = vmatpush1.msra.mxu0 0.0
    %2672 = vmatprep.subr.mxu0 0.0
    %2673 = vmatpush1.msra.mxu0 0.0
    %2674 = vmatprep.subr.mxu0 0.0
    %2675 = vmatpush1.msra.mxu0 0.0
    %2676 = vmatprep.subr.mxu0 0.0
    %2677 = vmatpush1.msra.mxu0 0.0
    %2678 = vmatprep.subr.mxu0 0.0
    %2679 = vmatpush1.msra.mxu0 0.0
    %2680 = vmatprep.subr.mxu0 0.0
    %2681 = vmatpush1.msra.mxu0 0.0
    %2682 = vmatprep.subr.mxu0 0.0
    %2683 = vmatpush1.msra.mxu0 0.0
    %2684 = vmatprep.subr.mxu0 0.0
    %2685 = vmatpush1.msra.mxu0 0.0
    %2686 = vmatprep.subr.mxu0 0.0
    %2687 = vmatpush1.msra.mxu0 0.0
    %2688 = vmatprep.subr.mxu0 0.0
    %2689 = vmatpush1.msra.mxu0 0.0
    %2690 = vmatprep.subr.mxu0 0.0
    %2691 = vmatpush1.msra.mxu0 0.0
    %2692 = vmatprep.mubr.f32.mxu0 0.0
    %2693 = vmatmul.mubr.f32.gmra.mrb[0].mxu0 %v2224
    %v2694 = vpop.f32.mrb[0].mxu0
    %v2695 = vadd.f32 0.0, %v2694
    %v2696 = vpop.f32.mrb[0].mxu0
    %v2697 = vadd.f32 0.0, %v2696
    %2698 = vdwg.mxu0
    %v2699 = vadd.f32 %v2553, %v2624
    %v2700 = vadd.f32 %v2554, %v2626
    %v2701 = vadd.f32 %v2555, %v2695
    %v2702 = vadd.f32 %v2556, %v2697
    %v2703 = vxor.u32 %v2699, 2147483648
    %v2704 = vmul.f32 %v2703, 1.442695
    %v2705 = vpow.pop %v2704
    %v2706 = vadd.f32 %v2705, 1.0
    %v2707 = vrcp.pop %v2706
    %v2708 = vmul.f32 1.0, %v2707
    %v2709 = vxor.u32 %v2700, 2147483648
    %v2710 = vmul.f32 %v2709, 1.442695
    %v2711 = vpow.pop %v2710
    %v2712 = vadd.f32 %v2711, 1.0
    %v2713 = vrcp.pop %v2712
    %v2714 = vmul.f32 1.0, %v2713
    %v2715 = vtanh.pop %v2701
    %v2716 = vxor.u32 %v2702, 2147483648
    %v2717 = vmul.f32 %v2716, 1.442695
    %v2718 = vpow.pop %v2717
    %v2719 = vadd.f32 %v2718, 1.0
    %v2720 = vrcp.pop %v2719
    %v2721 = vmul.f32 1.0, %v2720
    %v2722 = vmul.f32 %v2714, %v2222
    %v2723 = vmul.f32 %v2708, %v2715
    %v2724 = vadd.f32 %v2722, %v2723
    %v2725 = vtanh.pop %v2724
    %v2726 = vmul.f32 %v2721, %v2725
    %2727 = vmatprep.subr.mxu0 %v1455
    %2728 = vmatpush1.msra.mxu0 %v1454
    %2729 = vmatprep.subr.mxu0 %v1459
    %2730 = vmatpush1.msra.mxu0 %v1458
    %2731 = vmatprep.subr.mxu0 %v1463
    %2732 = vmatpush1.msra.mxu0 %v1462
    %2733 = vmatprep.subr.mxu0 %v1467
    %2734 = vmatpush1.msra.mxu0 %v1466
    %2735 = vmatprep.subr.mxu0 %v1471
    %2736 = vmatpush1.msra.mxu0 %v1470
    %2737 = vmatprep.subr.mxu0 %v1475
    %2738 = vmatpush1.msra.mxu0 %v1474
    %2739 = vmatprep.subr.mxu0 %v1479
    %2740 = vmatpush1.msra.mxu0 %v1478
    %2741 = vmatprep.subr.mxu0 %v1483
    %2742 = vmatpush1.msra.mxu0 %v1482
    %2743 = vmatprep.subr.mxu0 %v1487
    %2744 = vmatpush1.msra.mxu0 %v1486
    %2745 = vmatprep.subr.mxu0 %v1491
    %2746 = vmatpush1.msra.mxu0 %v1490
    %2747 = vmatprep.subr.mxu0 %v1495
    %2748 = vmatpush1.msra.mxu0 %v1494
    %2749 = vmatprep.subr.mxu0 %v1499
    %2750 = vmatpush1.msra.mxu0 %v1498
    %2751 = vmatprep.subr.mxu0 %v1503
    %2752 = vmatpush1.msra.mxu0 %v1502
    %2753 = vmatprep.subr.mxu0 %v1507
    %2754 = vmatpush1.msra.mxu0 %v1506
    %2755 = vmatprep.subr.mxu0 %v1511
    %2756 = vmatpush1.msra.mxu0 %v1510
    %2757 = vmatprep.subr.mxu0 %v1515
    %2758 = vmatpush1.msra.mxu0 %v1514
    %2759 = vmatprep.subr.mxu0 0.0
    %2760 = vmatpush1.msra.mxu0 0.0
    %2761 = vmatprep.subr.mxu0 0.0
    %2762 = vmatpush1.msra.mxu0 0.0
    %2763 = vmatprep.subr.mxu0 0.0
    %2764 = vmatpush1.msra.mxu0 0.0
    %2765 = vmatprep.subr.mxu0 0.0
    %2766 = vmatpush1.msra.mxu0 0.0
    %2767 = vmatprep.subr.mxu0 0.0
    %2768 = vmatpush1.msra.mxu0 0.0
    %2769 = vmatprep.subr.mxu0 0.0
    %2770 = vmatpush1.msra.mxu0 0.0
    %2771 = vmatprep.subr.mxu0 0.0
    %2772 = vmatpush1.msra.mxu0 0.0
    %2773 = vmatprep.subr.mxu0 0.0
    %2774 = vmatpush1.msra.mxu0 0.0
    %2775 = vmatprep.subr.mxu0 0.0
    %2776 = vmatpush1.msra.mxu0 0.0
    %2777 = vmatprep.subr.mxu0 0.0
    %2778 = vmatpush1.msra.mxu0 0.0
    %2779 = vmatprep.subr.mxu0 0.0
    %2780 = vmatpush1.msra.mxu0 0.0
    %2781 = vmatprep.subr.mxu0 0.0
    %2782 = vmatpush1.msra.mxu0 0.0
    %2783 = vmatprep.subr.mxu0 0.0
    %2784 = vmatpush1.msra.mxu0 0.0
    %2785 = vmatprep.subr.mxu0 0.0
    %2786 = vmatpush1.msra.mxu0 0.0
    %2787 = vmatprep.subr.mxu0 0.0
    %2788 = vmatpush1.msra.mxu0 0.0
    %2789 = vmatprep.subr.mxu0 0.0
    %2790 = vmatpush1.msra.mxu0 0.0
    %2791 = vmatprep.mubr.f32.mxu0 0.0
    %2792 = vmatmul.mubr.f32.gmra.mrb[0].mxu0 %v2536
    %v2793 = vpop.f32.mrb[0].mxu0
    %v2794 = vadd.f32 0.0, %v2793
    %v2795 = vpop.f32.mrb[0].mxu0
    %v2796 = vadd.f32 0.0, %v2795
    %2797 = vdwg.mxu0
    %2798 = vmatprep.subr.mxu0 %v1457
    %2799 = vmatpush1.msra.mxu0 %v1456
    %2800 = vmatprep.subr.mxu0 %v1461
    %2801 = vmatpush1.msra.mxu0 %v1460
    %2802 = vmatprep.subr.mxu0 %v1465
    %2803 = vmatpush1.msra.mxu0 %v1464
    %2804 = vmatprep.subr.mxu0 %v1469
    %2805 = vmatpush1.msra.mxu0 %v1468
    %2806 = vmatprep.subr.mxu0 %v1473
    %2807 = vmatpush1.msra.mxu0 %v1472
    %2808 = vmatprep.subr.mxu0 %v1477
    %2809 = vmatpush1.msra.mxu0 %v1476
    %2810 = vmatprep.subr.mxu0 %v1481
    %2811 = vmatpush1.msra.mxu0 %v1480
    %2812 = vmatprep.subr.mxu0 %v1485
    %2813 = vmatpush1.msra.mxu0 %v1484
    %2814 = vmatprep.subr.mxu0 %v1489
    %2815 = vmatpush1.msra.mxu0 %v1488
    %2816 = vmatprep.subr.mxu0 %v1493
    %2817 = vmatpush1.msra.mxu0 %v1492
    %2818 = vmatprep.subr.mxu0 %v1497
    %2819 = vmatpush1.msra.mxu0 %v1496
    %2820 = vmatprep.subr.mxu0 %v1501
    %2821 = vmatpush1.msra.mxu0 %v1500
    %2822 = vmatprep.subr.mxu0 %v1505
    %2823 = vmatpush1.msra.mxu0 %v1504
    %2824 = vmatprep.subr.mxu0 %v1509
    %2825 = vmatpush1.msra.mxu0 %v1508
    %2826 = vmatprep.subr.mxu0 %v1513
    %2827 = vmatpush1.msra.mxu0 %v1512
    %2828 = vmatprep.subr.mxu0 %v1517
    %2829 = vmatpush1.msra.mxu0 %v1516
    %2830 = vmatprep.subr.mxu0 0.0
    %2831 = vmatpush1.msra.mxu0 0.0
    %2832 = vmatprep.subr.mxu0 0.0
    %2833 = vmatpush1.msra.mxu0 0.0
    %2834 = vmatprep.subr.mxu0 0.0
    %2835 = vmatpush1.msra.mxu0 0.0
    %2836 = vmatprep.subr.mxu0 0.0
    %2837 = vmatpush1.msra.mxu0 0.0
    %2838 = vmatprep.subr.mxu0 0.0
    %2839 = vmatpush1.msra.mxu0 0.0
    %2840 = vmatprep.subr.mxu0 0.0
    %2841 = vmatpush1.msra.mxu0 0.0
    %2842 = vmatprep.subr.mxu0 0.0
    %2843 = vmatpush1.msra.mxu0 0.0
    %2844 = vmatprep.subr.mxu0 0.0
    %2845 = vmatpush1.msra.mxu0 0.0
    %2846 = vmatprep.subr.mxu0 0.0
    %2847 = vmatpush1.msra.mxu0 0.0
    %2848 = vmatprep.subr.mxu0 0.0
    %2849 = vmatpush1.msra.mxu0 0.0
    %2850 = vmatprep.subr.mxu0 0.0
    %2851 = vmatpush1.msra.mxu0 0.0
    %2852 = vmatprep.subr.mxu0 0.0
    %2853 = vmatpush1.msra.mxu0 0.0
    %2854 = vmatprep.subr.mxu0 0.0
    %2855 = vmatpush1.msra.mxu0 0.0
    %2856 = vmatprep.subr.mxu0 0.0
    %2857 = vmatpush1.msra.mxu0 0.0
    %2858 = vmatprep.subr.mxu0 0.0
    %2859 = vmatpush1.msra.mxu0 0.0
    %2860 = vmatprep.subr.mxu0 0.0
    %2861 = vmatpush1.msra.mxu0 0.0
    %2862 = vmatprep.mubr.f32.mxu0 0.0
    %2863 = vmatmul.mubr.f32.gmra.mrb[0].mxu0 %v2536
    %v2864 = vpop.f32.mrb[0].mxu0
    %v2865 = vadd.f32 0.0, %v2864
    %v2866 = vpop.f32.mrb[0].mxu0
    %v2867 = vadd.f32 0.0, %v2866
    %2868 = vdwg.mxu0
    %2869 = vmatprep.subr.mxu0 %v1391
    %2870 = vmatpush1.msra.mxu0 %v1390
    %2871 = vmatprep.subr.mxu0 %v1395
    %2872 = vmatpush1.msra.mxu0 %v1394
    %2873 = vmatprep.subr.mxu0 %v1399
    %2874 = vmatpush1.msra.mxu0 %v1398
    %2875 = vmatprep.subr.mxu0 %v1403
    %2876 = vmatpush1.msra.mxu0 %v1402
    %2877 = vmatprep.subr.mxu0 %v1407
    %2878 = vmatpush1.msra.mxu0 %v1406
    %2879 = vmatprep.subr.mxu0 %v1411
    %2880 = vmatpush1.msra.mxu0 %v1410
    %2881 = vmatprep.subr.mxu0 %v1415
    %2882 = vmatpush1.msra.mxu0 %v1414
    %2883 = vmatprep.subr.mxu0 %v1419
    %2884 = vmatpush1.msra.mxu0 %v1418
    %2885 = vmatprep.subr.mxu0 %v1423
    %2886 = vmatpush1.msra.mxu0 %v1422
    %2887 = vmatprep.subr.mxu0 %v1427
    %2888 = vmatpush1.msra.mxu0 %v1426
    %2889 = vmatprep.subr.mxu0 %v1431
    %2890 = vmatpush1.msra.mxu0 %v1430
    %2891 = vmatprep.subr.mxu0 %v1435
    %2892 = vmatpush1.msra.mxu0 %v1434
    %2893 = vmatprep.subr.mxu0 %v1439
    %2894 = vmatpush1.msra.mxu0 %v1438
    %2895 = vmatprep.subr.mxu0 %v1443
    %2896 = vmatpush1.msra.mxu0 %v1442
    %2897 = vmatprep.subr.mxu0 %v1447
    %2898 = vmatpush1.msra.mxu0 %v1446
    %2899 = vmatprep.subr.mxu0 %v1451
    %2900 = vmatpush1.msra.mxu0 %v1450
    %2901 = vmatprep.subr.mxu0 0.0
    %2902 = vmatpush1.msra.mxu0 0.0
    %2903 = vmatprep.subr.mxu0 0.0
    %2904 = vmatpush1.msra.mxu0 0.0
    %2905 = vmatprep.subr.mxu0 0.0
    %2906 = vmatpush1.msra.mxu0 0.0
    %2907 = vmatprep.subr.mxu0 0.0
    %2908 = vmatpush1.msra.mxu0 0.0
    %2909 = vmatprep.subr.mxu0 0.0
    %2910 = vmatpush1.msra.mxu0 0.0
    %2911 = vmatprep.subr.mxu0 0.0
    %2912 = vmatpush1.msra.mxu0 0.0
    %2913 = vmatprep.subr.mxu0 0.0
    %2914 = vmatpush1.msra.mxu0 0.0
    %2915 = vmatprep.subr.mxu0 0.0
    %2916 = vmatpush1.msra.mxu0 0.0
    %2917 = vmatprep.subr.mxu0 0.0
    %2918 = vmatpush1.msra.mxu0 0.0
    %2919 = vmatprep.subr.mxu0 0.0
    %2920 = vmatpush1.msra.mxu0 0.0
    %2921 = vmatprep.subr.mxu0 0.0
    %2922 = vmatpush1.msra.mxu0 0.0
    %2923 = vmatprep.subr.mxu0 0.0
    %2924 = vmatpush1.msra.mxu0 0.0
    %2925 = vmatprep.subr.mxu0 0.0
    %2926 = vmatpush1.msra.mxu0 0.0
    %2927 = vmatprep.subr.mxu0 0.0
    %2928 = vmatpush1.msra.mxu0 0.0
    %2929 = vmatprep.subr.mxu0 0.0
    %2930 = vmatpush1.msra.mxu0 0.0
    %2931 = vmatprep.subr.mxu0 0.0
    %2932 = vmatpush1.msra.mxu0 0.0
    %2933 = vmatprep.mubr.f32.mxu0 0.0
    %2934 = vmatmul.mubr.f32.gmra.mrb[0].mxu0 %v2726
    %v2935 = vpop.f32.mrb[0].mxu0
    %v2936 = vadd.f32 %v2794, %v2935
    %v2937 = vpop.f32.mrb[0].mxu0
    %v2938 = vadd.f32 %v2796, %v2937
    %2939 = vdwg.mxu0
    %2940 = vmatprep.subr.mxu0 %v1393
    %2941 = vmatpush1.msra.mxu0 %v1392
    %2942 = vmatprep.subr.mxu0 %v1397
    %2943 = vmatpush1.msra.mxu0 %v1396
    %2944 = vmatprep.subr.mxu0 %v1401
    %2945 = vmatpush1.msra.mxu0 %v1400
    %2946 = vmatprep.subr.mxu0 %v1405
    %2947 = vmatpush1.msra.mxu0 %v1404
    %2948 = vmatprep.subr.mxu0 %v1409
    %2949 = vmatpush1.msra.mxu0 %v1408
    %2950 = vmatprep.subr.mxu0 %v1413
    %2951 = vmatpush1.msra.mxu0 %v1412
    %2952 = vmatprep.subr.mxu0 %v1417
    %2953 = vmatpush1.msra.mxu0 %v1416
    %2954 = vmatprep.subr.mxu0 %v1421
    %2955 = vmatpush1.msra.mxu0 %v1420
    %2956 = vmatprep.subr.mxu0 %v1425
    %2957 = vmatpush1.msra.mxu0 %v1424
    %2958 = vmatprep.subr.mxu0 %v1429
    %2959 = vmatpush1.msra.mxu0 %v1428
    %2960 = vmatprep.subr.mxu0 %v1433
    %2961 = vmatpush1.msra.mxu0 %v1432
    %2962 = vmatprep.subr.mxu0 %v1437
    %2963 = vmatpush1.msra.mxu0 %v1436
    %2964 = vmatprep.subr.mxu0 %v1441
    %2965 = vmatpush1.msra.mxu0 %v1440
    %2966 = vmatprep.subr.mxu0 %v1445
    %2967 = vmatpush1.msra.mxu0 %v1444
    %2968 = vmatprep.subr.mxu0 %v1449
    %2969 = vmatpush1.msra.mxu0 %v1448
    %2970 = vmatprep.subr.mxu0 %v1453
    %2971 = vmatpush1.msra.mxu0 %v1452
    %2972 = vmatprep.subr.mxu0 0.0
    %2973 = vmatpush1.msra.mxu0 0.0
    %2974 = vmatprep.subr.mxu0 0.0
    %2975 = vmatpush1.msra.mxu0 0.0
    %2976 = vmatprep.subr.mxu0 0.0
    %2977 = vmatpush1.msra.mxu0 0.0
    %2978 = vmatprep.subr.mxu0 0.0
    %2979 = vmatpush1.msra.mxu0 0.0
    %2980 = vmatprep.subr.mxu0 0.0
    %2981 = vmatpush1.msra.mxu0 0.0
    %2982 = vmatprep.subr.mxu0 0.0
    %2983 = vmatpush1.msra.mxu0 0.0
    %2984 = vmatprep.subr.mxu0 0.0
    %2985 = vmatpush1.msra.mxu0 0.0
    %2986 = vmatprep.subr.mxu0 0.0
    %2987 = vmatpush1.msra.mxu0 0.0
    %2988 = vmatprep.subr.mxu0 0.0
    %2989 = vmatpush1.msra.mxu0 0.0
    %2990 = vmatprep.subr.mxu0 0.0
    %2991 = vmatpush1.msra.mxu0 0.0
    %2992 = vmatprep.subr.mxu0 0.0
    %2993 = vmatpush1.msra.mxu0 0.0
    %2994 = vmatprep.subr.mxu0 0.0
    %2995 = vmatpush1.msra.mxu0 0.0
    %2996 = vmatprep.subr.mxu0 0.0
    %2997 = vmatpush1.msra.mxu0 0.0
    %2998 = vmatprep.subr.mxu0 0.0
    %2999 = vmatpush1.msra.mxu0 0.0
    %3000 = vmatprep.subr.mxu0 0.0
    %3001 = vmatpush1.msra.mxu0 0.0
    %3002 = vmatprep.subr.mxu0 0.0
    %3003 = vmatpush1.msra.mxu0 0.0
    %3004 = vmatprep.mubr.f32.mxu0 0.0
    %3005 = vmatmul.mubr.f32.gmra.mrb[0].mxu0 %v2726
    %v3006 = vpop.f32.mrb[0].mxu0
    %v3007 = vadd.f32 %v2865, %v3006
    %v3008 = vpop.f32.mrb[0].mxu0
    %v3009 = vadd.f32 %v2867, %v3008
    %3010 = vdwg.mxu0
    %v3011 = vadd.f32 %v2936, %v1994
    %v3012 = vadd.f32 %v2938, %v1998
    %v3013 = vadd.f32 %v3007, %v2002
    %v3014 = vadd.f32 %v3009, %v2006
    %v3015 = vxor.u32 %v3011, 2147483648
    %v3016 = vmul.f32 %v3015, 1.442695
    %v3017 = vpow.pop %v3016
    %v3018 = vadd.f32 %v3017, 1.0
    %v3019 = vrcp.pop %v3018
    %v3020 = vmul.f32 1.0, %v3019
    %v3021 = vxor.u32 %v3012, 2147483648
    %v3022 = vmul.f32 %v3021, 1.442695
    %v3023 = vpow.pop %v3022
    %v3024 = vadd.f32 %v3023, 1.0
    %v3025 = vrcp.pop %v3024
    %v3026 = vmul.f32 1.0, %v3025
    %v3027 = vtanh.pop %v3013
    %v3028 = vxor.u32 %v3014, 2147483648
    %v3029 = vmul.f32 %v3028, 1.442695
    %v3030 = vpow.pop %v3029
    %v3031 = vadd.f32 %v3030, 1.0
    %v3032 = vrcp.pop %v3031
    %v3033 = vmul.f32 1.0, %v3032
    %v3034 = vmul.f32 %v3026, %v2534
    %v3035 = vmul.f32 %v3020, %v3027
    %v3036 = vadd.f32 %v3034, %v3035
    %v3037 = vtanh.pop %v3036
    %v3038 = vmul.f32 %v3033, %v3037
    %v3039 = vrot.slane %v1047, 3
    %v3040 = vrot.slane %v1049, 3
    %v3041 = vrot.slane %v1124, 3
    %v3042 = vrot.slane %v1126, 3
    %v3047 = vrot.slane %v1239, 2
    %v3048 = vrot.slane %v1241, 2
    %v3049 = vrot.slane %v1316, 2
    %v3050 = vrot.slane %v1318, 2
    %v3055 = vsel %vm1531, %v3039, %v3047
    %v3056 = vsel %vm1531, %v3040, %v3048
    %v3057 = vsel %vm1531, %v3041, %v3049
    %v3058 = vsel %vm1531, %v3042, %v3050
    %3059 = vmatprep.subr.mxu0 %v1327
    %3060 = vmatpush1.msra.mxu0 %v1326
    %3061 = vmatprep.subr.mxu0 %v1331
    %3062 = vmatpush1.msra.mxu0 %v1330
    %3063 = vmatprep.subr.mxu0 %v1335
    %3064 = vmatpush1.msra.mxu0 %v1334
    %3065 = vmatprep.subr.mxu0 %v1339
    %3066 = vmatpush1.msra.mxu0 %v1338
    %3067 = vmatprep.subr.mxu0 %v1343
    %3068 = vmatpush1.msra.mxu0 %v1342
    %3069 = vmatprep.subr.mxu0 %v1347
    %3070 = vmatpush1.msra.mxu0 %v1346
    %3071 = vmatprep.subr.mxu0 %v1351
    %3072 = vmatpush1.msra.mxu0 %v1350
    %3073 = vmatprep.subr.mxu0 %v1355
    %3074 = vmatpush1.msra.mxu0 %v1354
    %3075 = vmatprep.subr.mxu0 %v1359
    %3076 = vmatpush1.msra.mxu0 %v1358
    %3077 = vmatprep.subr.mxu0 %v1363
    %3078 = vmatpush1.msra.mxu0 %v1362
    %3079 = vmatprep.subr.mxu0 %v1367
    %3080 = vmatpush1.msra.mxu0 %v1366
    %3081 = vmatprep.subr.mxu0 %v1371
    %3082 = vmatpush1.msra.mxu0 %v1370
    %3083 = vmatprep.subr.mxu0 %v1375
    %3084 = vmatpush1.msra.mxu0 %v1374
    %3085 = vmatprep.subr.mxu0 %v1379
    %3086 = vmatpush1.msra.mxu0 %v1378
    %3087 = vmatprep.subr.mxu0 %v1383
    %3088 = vmatpush1.msra.mxu0 %v1382
    %3089 = vmatprep.subr.mxu0 %v1387
    %3090 = vmatpush1.msra.mxu0 %v1386
    %3091 = vmatprep.subr.mxu0 0.0
    %3092 = vmatpush1.msra.mxu0 0.0
    %3093 = vmatprep.subr.mxu0 0.0
    %3094 = vmatpush1.msra.mxu0 0.0
    %3095 = vmatprep.subr.mxu0 0.0
    %3096 = vmatpush1.msra.mxu0 0.0
    %3097 = vmatprep.subr.mxu0 0.0
    %3098 = vmatpush1.msra.mxu0 0.0
    %3099 = vmatprep.subr.mxu0 0.0
    %3100 = vmatpush1.msra.mxu0 0.0
    %3101 = vmatprep.subr.mxu0 0.0
    %3102 = vmatpush1.msra.mxu0 0.0
    %3103 = vmatprep.subr.mxu0 0.0
    %3104 = vmatpush1.msra.mxu0 0.0
    %3105 = vmatprep.subr.mxu0 0.0
    %3106 = vmatpush1.msra.mxu0 0.0
    %3107 = vmatprep.subr.mxu0 0.0
    %3108 = vmatpush1.msra.mxu0 0.0
    %3109 = vmatprep.subr.mxu0 0.0
    %3110 = vmatpush1.msra.mxu0 0.0
    %3111 = vmatprep.subr.mxu0 0.0
    %3112 = vmatpush1.msra.mxu0 0.0
    %3113 = vmatprep.subr.mxu0 0.0
    %3114 = vmatpush1.msra.mxu0 0.0
    %3115 = vmatprep.subr.mxu0 0.0
    %3116 = vmatpush1.msra.mxu0 0.0
    %3117 = vmatprep.subr.mxu0 0.0
    %3118 = vmatpush1.msra.mxu0 0.0
    %3119 = vmatprep.subr.mxu0 0.0
    %3120 = vmatpush1.msra.mxu0 0.0
    %3121 = vmatprep.subr.mxu0 0.0
    %3122 = vmatpush1.msra.mxu0 0.0
    %3123 = vmatprep.mubr.f32.mxu0 0.0
    %3124 = vmatmul.mubr.f32.gmra.mrb[0].mxu0 %v2726
    %v3125 = vpop.f32.mrb[0].mxu0
    %v3126 = vadd.f32 0.0, %v3125
    %v3127 = vpop.f32.mrb[0].mxu0
    %v3128 = vadd.f32 0.0, %v3127
    %3129 = vdwg.mxu0
    %3130 = vmatprep.subr.mxu0 %v1329
    %3131 = vmatpush1.msra.mxu0 %v1328
    %3132 = vmatprep.subr.mxu0 %v1333
    %3133 = vmatpush1.msra.mxu0 %v1332
    %3134 = vmatprep.subr.mxu0 %v1337
    %3135 = vmatpush1.msra.mxu0 %v1336
    %3136 = vmatprep.subr.mxu0 %v1341
    %3137 = vmatpush1.msra.mxu0 %v1340
    %3138 = vmatprep.subr.mxu0 %v1345
    %3139 = vmatpush1.msra.mxu0 %v1344
    %3140 = vmatprep.subr.mxu0 %v1349
    %3141 = vmatpush1.msra.mxu0 %v1348
    %3142 = vmatprep.subr.mxu0 %v1353
    %3143 = vmatpush1.msra.mxu0 %v1352
    %3144 = vmatprep.subr.mxu0 %v1357
    %3145 = vmatpush1.msra.mxu0 %v1356
    %3146 = vmatprep.subr.mxu0 %v1361
    %3147 = vmatpush1.msra.mxu0 %v1360
    %3148 = vmatprep.subr.mxu0 %v1365
    %3149 = vmatpush1.msra.mxu0 %v1364
    %3150 = vmatprep.subr.mxu0 %v1369
    %3151 = vmatpush1.msra.mxu0 %v1368
    %3152 = vmatprep.subr.mxu0 %v1373
    %3153 = vmatpush1.msra.mxu0 %v1372
    %3154 = vmatprep.subr.mxu0 %v1377
    %3155 = vmatpush1.msra.mxu0 %v1376
    %3156 = vmatprep.subr.mxu0 %v1381
    %3157 = vmatpush1.msra.mxu0 %v1380
    %3158 = vmatprep.subr.mxu0 %v1385
    %3159 = vmatpush1.msra.mxu0 %v1384
    %3160 = vmatprep.subr.mxu0 %v1389
    %3161 = vmatpush1.msra.mxu0 %v1388
    %3162 = vmatprep.subr.mxu0 0.0
    %3163 = vmatpush1.msra.mxu0 0.0
    %3164 = vmatprep.subr.mxu0 0.0
    %3165 = vmatpush1.msra.mxu0 0.0
    %3166 = vmatprep.subr.mxu0 0.0
    %3167 = vmatpush1.msra.mxu0 0.0
    %3168 = vmatprep.subr.mxu0 0.0
    %3169 = vmatpush1.msra.mxu0 0.0
    %3170 = vmatprep.subr.mxu0 0.0
    %3171 = vmatpush1.msra.mxu0 0.0
    %3172 = vmatprep.subr.mxu0 0.0
    %3173 = vmatpush1.msra.mxu0 0.0
    %3174 = vmatprep.subr.mxu0 0.0
    %3175 = vmatpush1.msra.mxu0 0.0
    %3176 = vmatprep.subr.mxu0 0.0
    %3177 = vmatpush1.msra.mxu0 0.0
    %3178 = vmatprep.subr.mxu0 0.0
    %3179 = vmatpush1.msra.mxu0 0.0
    %3180 = vmatprep.subr.mxu0 0.0
    %3181 = vmatpush1.msra.mxu0 0.0
    %3182 = vmatprep.subr.mxu0 0.0
    %3183 = vmatpush1.msra.mxu0 0.0
    %3184 = vmatprep.subr.mxu0 0.0
    %3185 = vmatpush1.msra.mxu0 0.0
    %3186 = vmatprep.subr.mxu0 0.0
    %3187 = vmatpush1.msra.mxu0 0.0
    %3188 = vmatprep.subr.mxu0 0.0
    %3189 = vmatpush1.msra.mxu0 0.0
    %3190 = vmatprep.subr.mxu0 0.0
    %3191 = vmatpush1.msra.mxu0 0.0
    %3192 = vmatprep.subr.mxu0 0.0
    %3193 = vmatpush1.msra.mxu0 0.0
    %3194 = vmatprep.mubr.f32.mxu0 0.0
    %3195 = vmatmul.mubr.f32.gmra.mrb[0].mxu0 %v2726
    %v3196 = vpop.f32.mrb[0].mxu0
    %v3197 = vadd.f32 0.0, %v3196
    %v3198 = vpop.f32.mrb[0].mxu0
    %v3199 = vadd.f32 0.0, %v3198
    %3200 = vdwg.mxu0
    %v3201 = vadd.f32 %v3055, %v3126
    %v3202 = vadd.f32 %v3056, %v3128
    %v3203 = vadd.f32 %v3057, %v3197
    %v3204 = vadd.f32 %v3058, %v3199
    %v3205 = vxor.u32 %v3201, 2147483648
    %v3206 = vmul.f32 %v3205, 1.442695
    %v3207 = vpow.pop %v3206
    %v3208 = vadd.f32 %v3207, 1.0
    %v3209 = vrcp.pop %v3208
    %v3210 = vmul.f32 1.0, %v3209
    %v3211 = vxor.u32 %v3202, 2147483648
    %v3212 = vmul.f32 %v3211, 1.442695
    %v3213 = vpow.pop %v3212
    %v3214 = vadd.f32 %v3213, 1.0
    %v3215 = vrcp.pop %v3214
    %v3216 = vmul.f32 1.0, %v3215
    %v3217 = vtanh.pop %v3203
    %v3218 = vxor.u32 %v3204, 2147483648
    %v3219 = vmul.f32 %v3218, 1.442695
    %v3220 = vpow.pop %v3219
    %v3221 = vadd.f32 %v3220, 1.0
    %v3222 = vrcp.pop %v3221
    %v3223 = vmul.f32 1.0, %v3222
    %v3224 = vmul.f32 %v3216, %v2724
    %v3225 = vmul.f32 %v3210, %v3217
    %v3226 = vadd.f32 %v3224, %v3225
    %v3227 = vtanh.pop %v3226
    %v3228 = vmul.f32 %v3223, %v3227
    %3229 = vmatprep.subr.mxu0 %v1455
    %3230 = vmatpush1.msra.mxu0 %v1454
    %3231 = vmatprep.subr.mxu0 %v1459
    %3232 = vmatpush1.msra.mxu0 %v1458
    %3233 = vmatprep.subr.mxu0 %v1463
    %3234 = vmatpush1.msra.mxu0 %v1462
    %3235 = vmatprep.subr.mxu0 %v1467
    %3236 = vmatpush1.msra.mxu0 %v1466
    %3237 = vmatprep.subr.mxu0 %v1471
    %3238 = vmatpush1.msra.mxu0 %v1470
    %3239 = vmatprep.subr.mxu0 %v1475
    %3240 = vmatpush1.msra.mxu0 %v1474
    %3241 = vmatprep.subr.mxu0 %v1479
    %3242 = vmatpush1.msra.mxu0 %v1478
    %3243 = vmatprep.subr.mxu0 %v1483
    %3244 = vmatpush1.msra.mxu0 %v1482
    %3245 = vmatprep.subr.mxu0 %v1487
    %3246 = vmatpush1.msra.mxu0 %v1486
    %3247 = vmatprep.subr.mxu0 %v1491
    %3248 = vmatpush1.msra.mxu0 %v1490
    %3249 = vmatprep.subr.mxu0 %v1495
    %3250 = vmatpush1.msra.mxu0 %v1494
    %3251 = vmatprep.subr.mxu0 %v1499
    %3252 = vmatpush1.msra.mxu0 %v1498
    %3253 = vmatprep.subr.mxu0 %v1503
    %3254 = vmatpush1.msra.mxu0 %v1502
    %3255 = vmatprep.subr.mxu0 %v1507
    %3256 = vmatpush1.msra.mxu0 %v1506
    %3257 = vmatprep.subr.mxu0 %v1511
    %3258 = vmatpush1.msra.mxu0 %v1510
    %3259 = vmatprep.subr.mxu0 %v1515
    %3260 = vmatpush1.msra.mxu0 %v1514
    %3261 = vmatprep.subr.mxu0 0.0
    %3262 = vmatpush1.msra.mxu0 0.0
    %3263 = vmatprep.subr.mxu0 0.0
    %3264 = vmatpush1.msra.mxu0 0.0
    %3265 = vmatprep.subr.mxu0 0.0
    %3266 = vmatpush1.msra.mxu0 0.0
    %3267 = vmatprep.subr.mxu0 0.0
    %3268 = vmatpush1.msra.mxu0 0.0
    %3269 = vmatprep.subr.mxu0 0.0
    %3270 = vmatpush1.msra.mxu0 0.0
    %3271 = vmatprep.subr.mxu0 0.0
    %3272 = vmatpush1.msra.mxu0 0.0
    %3273 = vmatprep.subr.mxu0 0.0
    %3274 = vmatpush1.msra.mxu0 0.0
    %3275 = vmatprep.subr.mxu0 0.0
    %3276 = vmatpush1.msra.mxu0 0.0
    %3277 = vmatprep.subr.mxu0 0.0
    %3278 = vmatpush1.msra.mxu0 0.0
    %3279 = vmatprep.subr.mxu0 0.0
    %3280 = vmatpush1.msra.mxu0 0.0
    %3281 = vmatprep.subr.mxu0 0.0
    %3282 = vmatpush1.msra.mxu0 0.0
    %3283 = vmatprep.subr.mxu0 0.0
    %3284 = vmatpush1.msra.mxu0 0.0
    %3285 = vmatprep.subr.mxu0 0.0
    %3286 = vmatpush1.msra.mxu0 0.0
    %3287 = vmatprep.subr.mxu0 0.0
    %3288 = vmatpush1.msra.mxu0 0.0
    %3289 = vmatprep.subr.mxu0 0.0
    %3290 = vmatpush1.msra.mxu0 0.0
    %3291 = vmatprep.subr.mxu0 0.0
    %3292 = vmatpush1.msra.mxu0 0.0
    %3293 = vmatprep.mubr.f32.mxu0 0.0
    %3294 = vmatmul.mubr.f32.gmra.mrb[0].mxu0 %v3038
    %v3295 = vpop.f32.mrb[0].mxu0
    %v3296 = vadd.f32 0.0, %v3295
    %v3297 = vpop.f32.mrb[0].mxu0
    %v3298 = vadd.f32 0.0, %v3297
    %3299 = vdwg.mxu0
    %3300 = vmatprep.subr.mxu0 %v1457
    %3301 = vmatpush1.msra.mxu0 %v1456
    %3302 = vmatprep.subr.mxu0 %v1461
    %3303 = vmatpush1.msra.mxu0 %v1460
    %3304 = vmatprep.subr.mxu0 %v1465
    %3305 = vmatpush1.msra.mxu0 %v1464
    %3306 = vmatprep.subr.mxu0 %v1469
    %3307 = vmatpush1.msra.mxu0 %v1468
    %3308 = vmatprep.subr.mxu0 %v1473
    %3309 = vmatpush1.msra.mxu0 %v1472
    %3310 = vmatprep.subr.mxu0 %v1477
    %3311 = vmatpush1.msra.mxu0 %v1476
    %3312 = vmatprep.subr.mxu0 %v1481
    %3313 = vmatpush1.msra.mxu0 %v1480
    %3314 = vmatprep.subr.mxu0 %v1485
    %3315 = vmatpush1.msra.mxu0 %v1484
    %3316 = vmatprep.subr.mxu0 %v1489
    %3317 = vmatpush1.msra.mxu0 %v1488
    %3318 = vmatprep.subr.mxu0 %v1493
    %3319 = vmatpush1.msra.mxu0 %v1492
    %3320 = vmatprep.subr.mxu0 %v1497
    %3321 = vmatpush1.msra.mxu0 %v1496
    %3322 = vmatprep.subr.mxu0 %v1501
    %3323 = vmatpush1.msra.mxu0 %v1500
    %3324 = vmatprep.subr.mxu0 %v1505
    %3325 = vmatpush1.msra.mxu0 %v1504
    %3326 = vmatprep.subr.mxu0 %v1509
    %3327 = vmatpush1.msra.mxu0 %v1508
    %3328 = vmatprep.subr.mxu0 %v1513
    %3329 = vmatpush1.msra.mxu0 %v1512
    %3330 = vmatprep.subr.mxu0 %v1517
    %3331 = vmatpush1.msra.mxu0 %v1516
    %3332 = vmatprep.subr.mxu0 0.0
    %3333 = vmatpush1.msra.mxu0 0.0
    %3334 = vmatprep.subr.mxu0 0.0
    %3335 = vmatpush1.msra.mxu0 0.0
    %3336 = vmatprep.subr.mxu0 0.0
    %3337 = vmatpush1.msra.mxu0 0.0
    %3338 = vmatprep.subr.mxu0 0.0
    %3339 = vmatpush1.msra.mxu0 0.0
    %3340 = vmatprep.subr.mxu0 0.0
    %3341 = vmatpush1.msra.mxu0 0.0
    %3342 = vmatprep.subr.mxu0 0.0
    %3343 = vmatpush1.msra.mxu0 0.0
    %3344 = vmatprep.subr.mxu0 0.0
    %3345 = vmatpush1.msra.mxu0 0.0
    %3346 = vmatprep.subr.mxu0 0.0
    %3347 = vmatpush1.msra.mxu0 0.0
    %3348 = vmatprep.subr.mxu0 0.0
    %3349 = vmatpush1.msra.mxu0 0.0
    %3350 = vmatprep.subr.mxu0 0.0
    %3351 = vmatpush1.msra.mxu0 0.0
    %3352 = vmatprep.subr.mxu0 0.0
    %3353 = vmatpush1.msra.mxu0 0.0
    %3354 = vmatprep.subr.mxu0 0.0
    %3355 = vmatpush1.msra.mxu0 0.0
    %3356 = vmatprep.subr.mxu0 0.0
    %3357 = vmatpush1.msra.mxu0 0.0
    %3358 = vmatprep.subr.mxu0 0.0
    %3359 = vmatpush1.msra.mxu0 0.0
    %3360 = vmatprep.subr.mxu0 0.0
    %3361 = vmatpush1.msra.mxu0 0.0
    %3362 = vmatprep.subr.mxu0 0.0
    %3363 = vmatpush1.msra.mxu0 0.0
    %3364 = vmatprep.mubr.f32.mxu0 0.0
    %3365 = vmatmul.mubr.f32.gmra.mrb[0].mxu0 %v3038
    %v3366 = vpop.f32.mrb[0].mxu0
    %v3367 = vadd.f32 0.0, %v3366
    %v3368 = vpop.f32.mrb[0].mxu0
    %v3369 = vadd.f32 0.0, %v3368
    %3370 = vdwg.mxu0
    %3371 = vmatprep.subr.mxu0 %v1391
    %3372 = vmatpush1.msra.mxu0 %v1390
    %3373 = vmatprep.subr.mxu0 %v1395
    %3374 = vmatpush1.msra.mxu0 %v1394
    %3375 = vmatprep.subr.mxu0 %v1399
    %3376 = vmatpush1.msra.mxu0 %v1398
    %3377 = vmatprep.subr.mxu0 %v1403
    %3378 = vmatpush1.msra.mxu0 %v1402
    %3379 = vmatprep.subr.mxu0 %v1407
    %3380 = vmatpush1.msra.mxu0 %v1406
    %3381 = vmatprep.subr.mxu0 %v1411
    %3382 = vmatpush1.msra.mxu0 %v1410
    %3383 = vmatprep.subr.mxu0 %v1415
    %3384 = vmatpush1.msra.mxu0 %v1414
    %3385 = vmatprep.subr.mxu0 %v1419
    %3386 = vmatpush1.msra.mxu0 %v1418
    %3387 = vmatprep.subr.mxu0 %v1423
    %3388 = vmatpush1.msra.mxu0 %v1422
    %3389 = vmatprep.subr.mxu0 %v1427
    %3390 = vmatpush1.msra.mxu0 %v1426
    %3391 = vmatprep.subr.mxu0 %v1431
    %3392 = vmatpush1.msra.mxu0 %v1430
    %3393 = vmatprep.subr.mxu0 %v1435
    %3394 = vmatpush1.msra.mxu0 %v1434
    %3395 = vmatprep.subr.mxu0 %v1439
    %3396 = vmatpush1.msra.mxu0 %v1438
    %3397 = vmatprep.subr.mxu0 %v1443
    %3398 = vmatpush1.msra.mxu0 %v1442
    %3399 = vmatprep.subr.mxu0 %v1447
    %3400 = vmatpush1.msra.mxu0 %v1446
    %3401 = vmatprep.subr.mxu0 %v1451
    %3402 = vmatpush1.msra.mxu0 %v1450
    %3403 = vmatprep.subr.mxu0 0.0
    %3404 = vmatpush1.msra.mxu0 0.0
    %3405 = vmatprep.subr.mxu0 0.0
    %3406 = vmatpush1.msra.mxu0 0.0
    %3407 = vmatprep.subr.mxu0 0.0
    %3408 = vmatpush1.msra.mxu0 0.0
    %3409 = vmatprep.subr.mxu0 0.0
    %3410 = vmatpush1.msra.mxu0 0.0
    %3411 = vmatprep.subr.mxu0 0.0
    %3412 = vmatpush1.msra.mxu0 0.0
    %3413 = vmatprep.subr.mxu0 0.0
    %3414 = vmatpush1.msra.mxu0 0.0
    %3415 = vmatprep.subr.mxu0 0.0
    %3416 = vmatpush1.msra.mxu0 0.0
    %3417 = vmatprep.subr.mxu0 0.0
    %3418 = vmatpush1.msra.mxu0 0.0
    %3419 = vmatprep.subr.mxu0 0.0
    %3420 = vmatpush1.msra.mxu0 0.0
    %3421 = vmatprep.subr.mxu0 0.0
    %3422 = vmatpush1.msra.mxu0 0.0
    %3423 = vmatprep.subr.mxu0 0.0
    %3424 = vmatpush1.msra.mxu0 0.0
    %3425 = vmatprep.subr.mxu0 0.0
    %3426 = vmatpush1.msra.mxu0 0.0
    %3427 = vmatprep.subr.mxu0 0.0
    %3428 = vmatpush1.msra.mxu0 0.0
    %3429 = vmatprep.subr.mxu0 0.0
    %3430 = vmatpush1.msra.mxu0 0.0
    %3431 = vmatprep.subr.mxu0 0.0
    %3432 = vmatpush1.msra.mxu0 0.0
    %3433 = vmatprep.subr.mxu0 0.0
    %3434 = vmatpush1.msra.mxu0 0.0
    %3435 = vmatprep.mubr.f32.mxu0 0.0
    %3436 = vmatmul.mubr.f32.gmra.mrb[0].mxu0 %v3228
    %v3437 = vpop.f32.mrb[0].mxu0
    %v3438 = vadd.f32 %v3296, %v3437
    %v3439 = vpop.f32.mrb[0].mxu0
    %v3440 = vadd.f32 %v3298, %v3439
    %3441 = vdwg.mxu0
    %3442 = vmatprep.subr.mxu0 %v1393
    %3443 = vmatpush1.msra.mxu0 %v1392
    %3444 = vmatprep.subr.mxu0 %v1397
    %3445 = vmatpush1.msra.mxu0 %v1396
    %3446 = vmatprep.subr.mxu0 %v1401
    %3447 = vmatpush1.msra.mxu0 %v1400
    %3448 = vmatprep.subr.mxu0 %v1405
    %3449 = vmatpush1.msra.mxu0 %v1404
    %3450 = vmatprep.subr.mxu0 %v1409
    %3451 = vmatpush1.msra.mxu0 %v1408
    %3452 = vmatprep.subr.mxu0 %v1413
    %3453 = vmatpush1.msra.mxu0 %v1412
    %3454 = vmatprep.subr.mxu0 %v1417
    %3455 = vmatpush1.msra.mxu0 %v1416
    %3456 = vmatprep.subr.mxu0 %v1421
    %3457 = vmatpush1.msra.mxu0 %v1420
    %3458 = vmatprep.subr.mxu0 %v1425
    %3459 = vmatpush1.msra.mxu0 %v1424
    %3460 = vmatprep.subr.mxu0 %v1429
    %3461 = vmatpush1.msra.mxu0 %v1428
    %3462 = vmatprep.subr.mxu0 %v1433
    %3463 = vmatpush1.msra.mxu0 %v1432
    %3464 = vmatprep.subr.mxu0 %v1437
    %3465 = vmatpush1.msra.mxu0 %v1436
    %3466 = vmatprep.subr.mxu0 %v1441
    %3467 = vmatpush1.msra.mxu0 %v1440
    %3468 = vmatprep.subr.mxu0 %v1445
    %3469 = vmatpush1.msra.mxu0 %v1444
    %3470 = vmatprep.subr.mxu0 %v1449
    %3471 = vmatpush1.msra.mxu0 %v1448
    %3472 = vmatprep.subr.mxu0 %v1453
    %3473 = vmatpush1.msra.mxu0 %v1452
    %3474 = vmatprep.subr.mxu0 0.0
    %3475 = vmatpush1.msra.mxu0 0.0
    %3476 = vmatprep.subr.mxu0 0.0
    %3477 = vmatpush1.msra.mxu0 0.0
    %3478 = vmatprep.subr.mxu0 0.0
    %3479 = vmatpush1.msra.mxu0 0.0
    %3480 = vmatprep.subr.mxu0 0.0
    %3481 = vmatpush1.msra.mxu0 0.0
    %3482 = vmatprep.subr.mxu0 0.0
    %3483 = vmatpush1.msra.mxu0 0.0
    %3484 = vmatprep.subr.mxu0 0.0
    %3485 = vmatpush1.msra.mxu0 0.0
    %3486 = vmatprep.subr.mxu0 0.0
    %3487 = vmatpush1.msra.mxu0 0.0
    %3488 = vmatprep.subr.mxu0 0.0
    %3489 = vmatpush1.msra.mxu0 0.0
    %3490 = vmatprep.subr.mxu0 0.0
    %3491 = vmatpush1.msra.mxu0 0.0
    %3492 = vmatprep.subr.mxu0 0.0
    %3493 = vmatpush1.msra.mxu0 0.0
    %3494 = vmatprep.subr.mxu0 0.0
    %3495 = vmatpush1.msra.mxu0 0.0
    %3496 = vmatprep.subr.mxu0 0.0
    %3497 = vmatpush1.msra.mxu0 0.0
    %3498 = vmatprep.subr.mxu0 0.0
    %3499 = vmatpush1.msra.mxu0 0.0
    %3500 = vmatprep.subr.mxu0 0.0
    %3501 = vmatpush1.msra.mxu0 0.0
    %3502 = vmatprep.subr.mxu0 0.0
    %3503 = vmatpush1.msra.mxu0 0.0
    %3504 = vmatprep.subr.mxu0 0.0
    %3505 = vmatpush1.msra.mxu0 0.0
    %3506 = vmatprep.mubr.f32.mxu0 0.0
    %3507 = vmatmul.mubr.f32.gmra.mrb[0].mxu0 %v3228
    %v3508 = vpop.f32.mrb[0].mxu0
    %v3509 = vadd.f32 %v3367, %v3508
    %v3510 = vpop.f32.mrb[0].mxu0
    %v3511 = vadd.f32 %v3369, %v3510
    %3512 = vdwg.mxu0
    %v3513 = vadd.f32 %v3438, %v1994
    %v3514 = vadd.f32 %v3440, %v1998
    %v3515 = vadd.f32 %v3509, %v2002
    %v3516 = vadd.f32 %v3511, %v2006
    %v3517 = vxor.u32 %v3513, 2147483648
    %v3518 = vmul.f32 %v3517, 1.442695
    %v3519 = vpow.pop %v3518
    %v3520 = vadd.f32 %v3519, 1.0
    %v3521 = vrcp.pop %v3520
    %v3522 = vmul.f32 1.0, %v3521
    %v3523 = vxor.u32 %v3514, 2147483648
    %v3524 = vmul.f32 %v3523, 1.442695
    %v3525 = vpow.pop %v3524
    %v3526 = vadd.f32 %v3525, 1.0
    %v3527 = vrcp.pop %v3526
    %v3528 = vmul.f32 1.0, %v3527
    %v3529 = vtanh.pop %v3515
    %v3530 = vxor.u32 %v3516, 2147483648
    %v3531 = vmul.f32 %v3530, 1.442695
    %v3532 = vpow.pop %v3531
    %v3533 = vadd.f32 %v3532, 1.0
    %v3534 = vrcp.pop %v3533
    %v3535 = vmul.f32 1.0, %v3534
    %v3536 = vmul.f32 %v3528, %v3036
    %v3537 = vmul.f32 %v3522, %v3529
    %v3538 = vadd.f32 %v3536, %v3537
    %v3539 = vtanh.pop %v3538
    %v3540 = vmul.f32 %v3535, %v3539
    %v3541 = vrot.slane %v1047, 4
    %v3542 = vrot.slane %v1049, 4
    %v3543 = vrot.slane %v1124, 4
    %v3544 = vrot.slane %v1126, 4
    %v3549 = vrot.slane %v1239, 3
    %v3550 = vrot.slane %v1241, 3
    %v3551 = vrot.slane %v1316, 3
    %v3552 = vrot.slane %v1318, 3
    %v3557 = vsel %vm1531, %v3541, %v3549
    %v3558 = vsel %vm1531, %v3542, %v3550
    %v3559 = vsel %vm1531, %v3543, %v3551
    %v3560 = vsel %vm1531, %v3544, %v3552
    %3561 = vmatprep.subr.mxu0 %v1327
    %3562 = vmatpush1.msra.mxu0 %v1326
    %3563 = vmatprep.subr.mxu0 %v1331
    %3564 = vmatpush1.msra.mxu0 %v1330
    %3565 = vmatprep.subr.mxu0 %v1335
    %3566 = vmatpush1.msra.mxu0 %v1334
    %3567 = vmatprep.subr.mxu0 %v1339
    %3568 = vmatpush1.msra.mxu0 %v1338
    %3569 = vmatprep.subr.mxu0 %v1343
    %3570 = vmatpush1.msra.mxu0 %v1342
    %3571 = vmatprep.subr.mxu0 %v1347
    %3572 = vmatpush1.msra.mxu0 %v1346
    %3573 = vmatprep.subr.mxu0 %v1351
    %3574 = vmatpush1.msra.mxu0 %v1350
    %3575 = vmatprep.subr.mxu0 %v1355
    %3576 = vmatpush1.msra.mxu0 %v1354
    %3577 = vmatprep.subr.mxu0 %v1359
    %3578 = vmatpush1.msra.mxu0 %v1358
    %3579 = vmatprep.subr.mxu0 %v1363
    %3580 = vmatpush1.msra.mxu0 %v1362
    %3581 = vmatprep.subr.mxu0 %v1367
    %3582 = vmatpush1.msra.mxu0 %v1366
    %3583 = vmatprep.subr.mxu0 %v1371
    %3584 = vmatpush1.msra.mxu0 %v1370
    %3585 = vmatprep.subr.mxu0 %v1375
    %3586 = vmatpush1.msra.mxu0 %v1374
    %3587 = vmatprep.subr.mxu0 %v1379
    %3588 = vmatpush1.msra.mxu0 %v1378
    %3589 = vmatprep.subr.mxu0 %v1383
    %3590 = vmatpush1.msra.mxu0 %v1382
    %3591 = vmatprep.subr.mxu0 %v1387
    %3592 = vmatpush1.msra.mxu0 %v1386
    %3593 = vmatprep.subr.mxu0 0.0
    %3594 = vmatpush1.msra.mxu0 0.0
    %3595 = vmatprep.subr.mxu0 0.0
    %3596 = vmatpush1.msra.mxu0 0.0
    %3597 = vmatprep.subr.mxu0 0.0
    %3598 = vmatpush1.msra.mxu0 0.0
    %3599 = vmatprep.subr.mxu0 0.0
    %3600 = vmatpush1.msra.mxu0 0.0
    %3601 = vmatprep.subr.mxu0 0.0
    %3602 = vmatpush1.msra.mxu0 0.0
    %3603 = vmatprep.subr.mxu0 0.0
    %3604 = vmatpush1.msra.mxu0 0.0
    %3605 = vmatprep.subr.mxu0 0.0
    %3606 = vmatpush1.msra.mxu0 0.0
    %3607 = vmatprep.subr.mxu0 0.0
    %3608 = vmatpush1.msra.mxu0 0.0
    %3609 = vmatprep.subr.mxu0 0.0
    %3610 = vmatpush1.msra.mxu0 0.0
    %3611 = vmatprep.subr.mxu0 0.0
    %3612 = vmatpush1.msra.mxu0 0.0
    %3613 = vmatprep.subr.mxu0 0.0
    %3614 = vmatpush1.msra.mxu0 0.0
    %3615 = vmatprep.subr.mxu0 0.0
    %3616 = vmatpush1.msra.mxu0 0.0
    %3617 = vmatprep.subr.mxu0 0.0
    %3618 = vmatpush1.msra.mxu0 0.0
    %3619 = vmatprep.subr.mxu0 0.0
    %3620 = vmatpush1.msra.mxu0 0.0
    %3621 = vmatprep.subr.mxu0 0.0
    %3622 = vmatpush1.msra.mxu0 0.0
    %3623 = vmatprep.subr.mxu0 0.0
    %3624 = vmatpush1.msra.mxu0 0.0
    %3625 = vmatprep.mubr.f32.mxu0 0.0
    %3626 = vmatmul.mubr.f32.gmra.mrb[0].mxu0 %v3228
    %v3627 = vpop.f32.mrb[0].mxu0
    %v3628 = vadd.f32 0.0, %v3627
    %v3629 = vpop.f32.mrb[0].mxu0
    %v3630 = vadd.f32 0.0, %v3629
    %3631 = vdwg.mxu0
    %3632 = vmatprep.subr.mxu0 %v1329
    %3633 = vmatpush1.msra.mxu0 %v1328
    %3634 = vmatprep.subr.mxu0 %v1333
    %3635 = vmatpush1.msra.mxu0 %v1332
    %3636 = vmatprep.subr.mxu0 %v1337
    %3637 = vmatpush1.msra.mxu0 %v1336
    %3638 = vmatprep.subr.mxu0 %v1341
    %3639 = vmatpush1.msra.mxu0 %v1340
    %3640 = vmatprep.subr.mxu0 %v1345
    %3641 = vmatpush1.msra.mxu0 %v1344
    %3642 = vmatprep.subr.mxu0 %v1349
    %3643 = vmatpush1.msra.mxu0 %v1348
    %3644 = vmatprep.subr.mxu0 %v1353
    %3645 = vmatpush1.msra.mxu0 %v1352
    %3646 = vmatprep.subr.mxu0 %v1357
    %3647 = vmatpush1.msra.mxu0 %v1356
    %3648 = vmatprep.subr.mxu0 %v1361
    %3649 = vmatpush1.msra.mxu0 %v1360
    %3650 = vmatprep.subr.mxu0 %v1365
    %3651 = vmatpush1.msra.mxu0 %v1364
    %3652 = vmatprep.subr.mxu0 %v1369
    %3653 = vmatpush1.msra.mxu0 %v1368
    %3654 = vmatprep.subr.mxu0 %v1373
    %3655 = vmatpush1.msra.mxu0 %v1372
    %3656 = vmatprep.subr.mxu0 %v1377
    %3657 = vmatpush1.msra.mxu0 %v1376
    %3658 = vmatprep.subr.mxu0 %v1381
    %3659 = vmatpush1.msra.mxu0 %v1380
    %3660 = vmatprep.subr.mxu0 %v1385
    %3661 = vmatpush1.msra.mxu0 %v1384
    %3662 = vmatprep.subr.mxu0 %v1389
    %3663 = vmatpush1.msra.mxu0 %v1388
    %3664 = vmatprep.subr.mxu0 0.0
    %3665 = vmatpush1.msra.mxu0 0.0
    %3666 = vmatprep.subr.mxu0 0.0
    %3667 = vmatpush1.msra.mxu0 0.0
    %3668 = vmatprep.subr.mxu0 0.0
    %3669 = vmatpush1.msra.mxu0 0.0
    %3670 = vmatprep.subr.mxu0 0.0
    %3671 = vmatpush1.msra.mxu0 0.0
    %3672 = vmatprep.subr.mxu0 0.0
    %3673 = vmatpush1.msra.mxu0 0.0
    %3674 = vmatprep.subr.mxu0 0.0
    %3675 = vmatpush1.msra.mxu0 0.0
    %3676 = vmatprep.subr.mxu0 0.0
    %3677 = vmatpush1.msra.mxu0 0.0
    %3678 = vmatprep.subr.mxu0 0.0
    %3679 = vmatpush1.msra.mxu0 0.0
    %3680 = vmatprep.subr.mxu0 0.0
    %3681 = vmatpush1.msra.mxu0 0.0
    %3682 = vmatprep.subr.mxu0 0.0
    %3683 = vmatpush1.msra.mxu0 0.0
    %3684 = vmatprep.subr.mxu0 0.0
    %3685 = vmatpush1.msra.mxu0 0.0
    %3686 = vmatprep.subr.mxu0 0.0
    %3687 = vmatpush1.msra.mxu0 0.0
    %3688 = vmatprep.subr.mxu0 0.0
    %3689 = vmatpush1.msra.mxu0 0.0
    %3690 = vmatprep.subr.mxu0 0.0
    %3691 = vmatpush1.msra.mxu0 0.0
    %3692 = vmatprep.subr.mxu0 0.0
    %3693 = vmatpush1.msra.mxu0 0.0
    %3694 = vmatprep.subr.mxu0 0.0
    %3695 = vmatpush1.msra.mxu0 0.0
    %3696 = vmatprep.mubr.f32.mxu0 0.0
    %3697 = vmatmul.mubr.f32.gmra.mrb[0].mxu0 %v3228
    %v3698 = vpop.f32.mrb[0].mxu0
    %v3699 = vadd.f32 0.0, %v3698
    %v3700 = vpop.f32.mrb[0].mxu0
    %v3701 = vadd.f32 0.0, %v3700
    %3702 = vdwg.mxu0
    %v3703 = vadd.f32 %v3557, %v3628
    %v3704 = vadd.f32 %v3558, %v3630
    %v3705 = vadd.f32 %v3559, %v3699
    %v3706 = vadd.f32 %v3560, %v3701
    %v3707 = vxor.u32 %v3703, 2147483648
    %v3708 = vmul.f32 %v3707, 1.442695
    %v3709 = vpow.pop %v3708
    %v3710 = vadd.f32 %v3709, 1.0
    %v3711 = vrcp.pop %v3710
    %v3712 = vmul.f32 1.0, %v3711
    %v3713 = vxor.u32 %v3704, 2147483648
    %v3714 = vmul.f32 %v3713, 1.442695
    %v3715 = vpow.pop %v3714
    %v3716 = vadd.f32 %v3715, 1.0
    %v3717 = vrcp.pop %v3716
    %v3718 = vmul.f32 1.0, %v3717
    %v3719 = vtanh.pop %v3705
    %v3720 = vxor.u32 %v3706, 2147483648
    %v3721 = vmul.f32 %v3720, 1.442695
    %v3722 = vpow.pop %v3721
    %v3723 = vadd.f32 %v3722, 1.0
    %v3724 = vrcp.pop %v3723
    %v3725 = vmul.f32 1.0, %v3724
    %v3726 = vmul.f32 %v3718, %v3226
    %v3727 = vmul.f32 %v3712, %v3719
    %v3728 = vadd.f32 %v3726, %v3727
    %v3729 = vtanh.pop %v3728
    %v3730 = vmul.f32 %v3725, %v3729
    %3731 = vmatprep.subr.mxu0 %v1455
    %3732 = vmatpush1.msra.mxu0 %v1454
    %3733 = vmatprep.subr.mxu0 %v1459
    %3734 = vmatpush1.msra.mxu0 %v1458
    %3735 = vmatprep.subr.mxu0 %v1463
    %3736 = vmatpush1.msra.mxu0 %v1462
    %3737 = vmatprep.subr.mxu0 %v1467
    %3738 = vmatpush1.msra.mxu0 %v1466
    %3739 = vmatprep.subr.mxu0 %v1471
    %3740 = vmatpush1.msra.mxu0 %v1470
    %3741 = vmatprep.subr.mxu0 %v1475
    %3742 = vmatpush1.msra.mxu0 %v1474
    %3743 = vmatprep.subr.mxu0 %v1479
    %3744 = vmatpush1.msra.mxu0 %v1478
    %3745 = vmatprep.subr.mxu0 %v1483
    %3746 = vmatpush1.msra.mxu0 %v1482
    %3747 = vmatprep.subr.mxu0 %v1487
    %3748 = vmatpush1.msra.mxu0 %v1486
    %3749 = vmatprep.subr.mxu0 %v1491
    %3750 = vmatpush1.msra.mxu0 %v1490
    %3751 = vmatprep.subr.mxu0 %v1495
    %3752 = vmatpush1.msra.mxu0 %v1494
    %3753 = vmatprep.subr.mxu0 %v1499
    %3754 = vmatpush1.msra.mxu0 %v1498
    %3755 = vmatprep.subr.mxu0 %v1503
    %3756 = vmatpush1.msra.mxu0 %v1502
    %3757 = vmatprep.subr.mxu0 %v1507
    %3758 = vmatpush1.msra.mxu0 %v1506
    %3759 = vmatprep.subr.mxu0 %v1511
    %3760 = vmatpush1.msra.mxu0 %v1510
    %3761 = vmatprep.subr.mxu0 %v1515
    %3762 = vmatpush1.msra.mxu0 %v1514
    %3763 = vmatprep.subr.mxu0 0.0
    %3764 = vmatpush1.msra.mxu0 0.0
    %3765 = vmatprep.subr.mxu0 0.0
    %3766 = vmatpush1.msra.mxu0 0.0
    %3767 = vmatprep.subr.mxu0 0.0
    %3768 = vmatpush1.msra.mxu0 0.0
    %3769 = vmatprep.subr.mxu0 0.0
    %3770 = vmatpush1.msra.mxu0 0.0
    %3771 = vmatprep.subr.mxu0 0.0
    %3772 = vmatpush1.msra.mxu0 0.0
    %3773 = vmatprep.subr.mxu0 0.0
    %3774 = vmatpush1.msra.mxu0 0.0
    %3775 = vmatprep.subr.mxu0 0.0
    %3776 = vmatpush1.msra.mxu0 0.0
    %3777 = vmatprep.subr.mxu0 0.0
    %3778 = vmatpush1.msra.mxu0 0.0
    %3779 = vmatprep.subr.mxu0 0.0
    %3780 = vmatpush1.msra.mxu0 0.0
    %3781 = vmatprep.subr.mxu0 0.0
    %3782 = vmatpush1.msra.mxu0 0.0
    %3783 = vmatprep.subr.mxu0 0.0
    %3784 = vmatpush1.msra.mxu0 0.0
    %3785 = vmatprep.subr.mxu0 0.0
    %3786 = vmatpush1.msra.mxu0 0.0
    %3787 = vmatprep.subr.mxu0 0.0
    %3788 = vmatpush1.msra.mxu0 0.0
    %3789 = vmatprep.subr.mxu0 0.0
    %3790 = vmatpush1.msra.mxu0 0.0
    %3791 = vmatprep.subr.mxu0 0.0
    %3792 = vmatpush1.msra.mxu0 0.0
    %3793 = vmatprep.subr.mxu0 0.0
    %3794 = vmatpush1.msra.mxu0 0.0
    %3795 = vmatprep.mubr.f32.mxu0 0.0
    %3796 = vmatmul.mubr.f32.gmra.mrb[0].mxu0 %v3540
    %v3797 = vpop.f32.mrb[0].mxu0
    %v3798 = vadd.f32 0.0, %v3797
    %v3799 = vpop.f32.mrb[0].mxu0
    %v3800 = vadd.f32 0.0, %v3799
    %3801 = vdwg.mxu0
    %3802 = vmatprep.subr.mxu0 %v1457
    %3803 = vmatpush1.msra.mxu0 %v1456
    %3804 = vmatprep.subr.mxu0 %v1461
    %3805 = vmatpush1.msra.mxu0 %v1460
    %3806 = vmatprep.subr.mxu0 %v1465
    %3807 = vmatpush1.msra.mxu0 %v1464
    %3808 = vmatprep.subr.mxu0 %v1469
    %3809 = vmatpush1.msra.mxu0 %v1468
    %3810 = vmatprep.subr.mxu0 %v1473
    %3811 = vmatpush1.msra.mxu0 %v1472
    %3812 = vmatprep.subr.mxu0 %v1477
    %3813 = vmatpush1.msra.mxu0 %v1476
    %3814 = vmatprep.subr.mxu0 %v1481
    %3815 = vmatpush1.msra.mxu0 %v1480
    %3816 = vmatprep.subr.mxu0 %v1485
    %3817 = vmatpush1.msra.mxu0 %v1484
    %3818 = vmatprep.subr.mxu0 %v1489
    %3819 = vmatpush1.msra.mxu0 %v1488
    %3820 = vmatprep.subr.mxu0 %v1493
    %3821 = vmatpush1.msra.mxu0 %v1492
    %3822 = vmatprep.subr.mxu0 %v1497
    %3823 = vmatpush1.msra.mxu0 %v1496
    %3824 = vmatprep.subr.mxu0 %v1501
    %3825 = vmatpush1.msra.mxu0 %v1500
    %3826 = vmatprep.subr.mxu0 %v1505
    %3827 = vmatpush1.msra.mxu0 %v1504
    %3828 = vmatprep.subr.mxu0 %v1509
    %3829 = vmatpush1.msra.mxu0 %v1508
    %3830 = vmatprep.subr.mxu0 %v1513
    %3831 = vmatpush1.msra.mxu0 %v1512
    %3832 = vmatprep.subr.mxu0 %v1517
    %3833 = vmatpush1.msra.mxu0 %v1516
    %3834 = vmatprep.subr.mxu0 0.0
    %3835 = vmatpush1.msra.mxu0 0.0
    %3836 = vmatprep.subr.mxu0 0.0
    %3837 = vmatpush1.msra.mxu0 0.0
    %3838 = vmatprep.subr.mxu0 0.0
    %3839 = vmatpush1.msra.mxu0 0.0
    %3840 = vmatprep.subr.mxu0 0.0
    %3841 = vmatpush1.msra.mxu0 0.0
    %3842 = vmatprep.subr.mxu0 0.0
    %3843 = vmatpush1.msra.mxu0 0.0
    %3844 = vmatprep.subr.mxu0 0.0
    %3845 = vmatpush1.msra.mxu0 0.0
    %3846 = vmatprep.subr.mxu0 0.0
    %3847 = vmatpush1.msra.mxu0 0.0
    %3848 = vmatprep.subr.mxu0 0.0
    %3849 = vmatpush1.msra.mxu0 0.0
    %3850 = vmatprep.subr.mxu0 0.0
    %3851 = vmatpush1.msra.mxu0 0.0
    %3852 = vmatprep.subr.mxu0 0.0
    %3853 = vmatpush1.msra.mxu0 0.0
    %3854 = vmatprep.subr.mxu0 0.0
    %3855 = vmatpush1.msra.mxu0 0.0
    %3856 = vmatprep.subr.mxu0 0.0
    %3857 = vmatpush1.msra.mxu0 0.0
    %3858 = vmatprep.subr.mxu0 0.0
    %3859 = vmatpush1.msra.mxu0 0.0
    %3860 = vmatprep.subr.mxu0 0.0
    %3861 = vmatpush1.msra.mxu0 0.0
    %3862 = vmatprep.subr.mxu0 0.0
    %3863 = vmatpush1.msra.mxu0 0.0
    %3864 = vmatprep.subr.mxu0 0.0
    %3865 = vmatpush1.msra.mxu0 0.0
    %3866 = vmatprep.mubr.f32.mxu0 0.0
    %3867 = vmatmul.mubr.f32.gmra.mrb[0].mxu0 %v3540
    %v3868 = vpop.f32.mrb[0].mxu0
    %v3869 = vadd.f32 0.0, %v3868
    %v3870 = vpop.f32.mrb[0].mxu0
    %v3871 = vadd.f32 0.0, %v3870
    %3872 = vdwg.mxu0
    %3873 = vmatprep.subr.mxu0 %v1391
    %3874 = vmatpush1.msra.mxu0 %v1390
    %3875 = vmatprep.subr.mxu0 %v1395
    %3876 = vmatpush1.msra.mxu0 %v1394
    %3877 = vmatprep.subr.mxu0 %v1399
    %3878 = vmatpush1.msra.mxu0 %v1398
    %3879 = vmatprep.subr.mxu0 %v1403
    %3880 = vmatpush1.msra.mxu0 %v1402
    %3881 = vmatprep.subr.mxu0 %v1407
    %3882 = vmatpush1.msra.mxu0 %v1406
    %3883 = vmatprep.subr.mxu0 %v1411
    %3884 = vmatpush1.msra.mxu0 %v1410
    %3885 = vmatprep.subr.mxu0 %v1415
    %3886 = vmatpush1.msra.mxu0 %v1414
    %3887 = vmatprep.subr.mxu0 %v1419
    %3888 = vmatpush1.msra.mxu0 %v1418
    %3889 = vmatprep.subr.mxu0 %v1423
    %3890 = vmatpush1.msra.mxu0 %v1422
    %3891 = vmatprep.subr.mxu0 %v1427
    %3892 = vmatpush1.msra.mxu0 %v1426
    %3893 = vmatprep.subr.mxu0 %v1431
    %3894 = vmatpush1.msra.mxu0 %v1430
    %3895 = vmatprep.subr.mxu0 %v1435
    %3896 = vmatpush1.msra.mxu0 %v1434
    %3897 = vmatprep.subr.mxu0 %v1439
    %3898 = vmatpush1.msra.mxu0 %v1438
    %3899 = vmatprep.subr.mxu0 %v1443
    %3900 = vmatpush1.msra.mxu0 %v1442
    %3901 = vmatprep.subr.mxu0 %v1447
    %3902 = vmatpush1.msra.mxu0 %v1446
    %3903 = vmatprep.subr.mxu0 %v1451
    %3904 = vmatpush1.msra.mxu0 %v1450
    %3905 = vmatprep.subr.mxu0 0.0
    %3906 = vmatpush1.msra.mxu0 0.0
    %3907 = vmatprep.subr.mxu0 0.0
    %3908 = vmatpush1.msra.mxu0 0.0
    %3909 = vmatprep.subr.mxu0 0.0
    %3910 = vmatpush1.msra.mxu0 0.0
    %3911 = vmatprep.subr.mxu0 0.0
    %3912 = vmatpush1.msra.mxu0 0.0
    %3913 = vmatprep.subr.mxu0 0.0
    %3914 = vmatpush1.msra.mxu0 0.0
    %3915 = vmatprep.subr.mxu0 0.0
    %3916 = vmatpush1.msra.mxu0 0.0
    %3917 = vmatprep.subr.mxu0 0.0
    %3918 = vmatpush1.msra.mxu0 0.0
    %3919 = vmatprep.subr.mxu0 0.0
    %3920 = vmatpush1.msra.mxu0 0.0
    %3921 = vmatprep.subr.mxu0 0.0
    %3922 = vmatpush1.msra.mxu0 0.0
    %3923 = vmatprep.subr.mxu0 0.0
    %3924 = vmatpush1.msra.mxu0 0.0
    %3925 = vmatprep.subr.mxu0 0.0
    %3926 = vmatpush1.msra.mxu0 0.0
    %3927 = vmatprep.subr.mxu0 0.0
    %3928 = vmatpush1.msra.mxu0 0.0
    %3929 = vmatprep.subr.mxu0 0.0
    %3930 = vmatpush1.msra.mxu0 0.0
    %3931 = vmatprep.subr.mxu0 0.0
    %3932 = vmatpush1.msra.mxu0 0.0
    %3933 = vmatprep.subr.mxu0 0.0
    %3934 = vmatpush1.msra.mxu0 0.0
    %3935 = vmatprep.subr.mxu0 0.0
    %3936 = vmatpush1.msra.mxu0 0.0
    %3937 = vmatprep.mubr.f32.mxu0 0.0
    %3938 = vmatmul.mubr.f32.gmra.mrb[0].mxu0 %v3730
    %v3939 = vpop.f32.mrb[0].mxu0
    %v3940 = vadd.f32 %v3798, %v3939
    %v3941 = vpop.f32.mrb[0].mxu0
    %v3942 = vadd.f32 %v3800, %v3941
    %3943 = vdwg.mxu0
    %3944 = vmatprep.subr.mxu0 %v1393
    %3945 = vmatpush1.msra.mxu0 %v1392
    %3946 = vmatprep.subr.mxu0 %v1397
    %3947 = vmatpush1.msra.mxu0 %v1396
    %3948 = vmatprep.subr.mxu0 %v1401
    %3949 = vmatpush1.msra.mxu0 %v1400
    %3950 = vmatprep.subr.mxu0 %v1405
    %3951 = vmatpush1.msra.mxu0 %v1404
    %3952 = vmatprep.subr.mxu0 %v1409
    %3953 = vmatpush1.msra.mxu0 %v1408
    %3954 = vmatprep.subr.mxu0 %v1413
    %3955 = vmatpush1.msra.mxu0 %v1412
    %3956 = vmatprep.subr.mxu0 %v1417
    %3957 = vmatpush1.msra.mxu0 %v1416
    %3958 = vmatprep.subr.mxu0 %v1421
    %3959 = vmatpush1.msra.mxu0 %v1420
    %3960 = vmatprep.subr.mxu0 %v1425
    %3961 = vmatpush1.msra.mxu0 %v1424
    %3962 = vmatprep.subr.mxu0 %v1429
    %3963 = vmatpush1.msra.mxu0 %v1428
    %3964 = vmatprep.subr.mxu0 %v1433
    %3965 = vmatpush1.msra.mxu0 %v1432
    %3966 = vmatprep.subr.mxu0 %v1437
    %3967 = vmatpush1.msra.mxu0 %v1436
    %3968 = vmatprep.subr.mxu0 %v1441
    %3969 = vmatpush1.msra.mxu0 %v1440
    %3970 = vmatprep.subr.mxu0 %v1445
    %3971 = vmatpush1.msra.mxu0 %v1444
    %3972 = vmatprep.subr.mxu0 %v1449
    %3973 = vmatpush1.msra.mxu0 %v1448
    %3974 = vmatprep.subr.mxu0 %v1453
    %3975 = vmatpush1.msra.mxu0 %v1452
    %3976 = vmatprep.subr.mxu0 0.0
    %3977 = vmatpush1.msra.mxu0 0.0
    %3978 = vmatprep.subr.mxu0 0.0
    %3979 = vmatpush1.msra.mxu0 0.0
    %3980 = vmatprep.subr.mxu0 0.0
    %3981 = vmatpush1.msra.mxu0 0.0
    %3982 = vmatprep.subr.mxu0 0.0
    %3983 = vmatpush1.msra.mxu0 0.0
    %3984 = vmatprep.subr.mxu0 0.0
    %3985 = vmatpush1.msra.mxu0 0.0
    %3986 = vmatprep.subr.mxu0 0.0
    %3987 = vmatpush1.msra.mxu0 0.0
    %3988 = vmatprep.subr.mxu0 0.0
    %3989 = vmatpush1.msra.mxu0 0.0
    %3990 = vmatprep.subr.mxu0 0.0
    %3991 = vmatpush1.msra.mxu0 0.0
    %3992 = vmatprep.subr.mxu0 0.0
    %3993 = vmatpush1.msra.mxu0 0.0
    %3994 = vmatprep.subr.mxu0 0.0
    %3995 = vmatpush1.msra.mxu0 0.0
    %3996 = vmatprep.subr.mxu0 0.0
    %3997 = vmatpush1.msra.mxu0 0.0
    %3998 = vmatprep.subr.mxu0 0.0
    %3999 = vmatpush1.msra.mxu0 0.0
    %4000 = vmatprep.subr.mxu0 0.0
    %4001 = vmatpush1.msra.mxu0 0.0
    %4002 = vmatprep.subr.mxu0 0.0
    %4003 = vmatpush1.msra.mxu0 0.0
    %4004 = vmatprep.subr.mxu0 0.0
    %4005 = vmatpush1.msra.mxu0 0.0
    %4006 = vmatprep.subr.mxu0 0.0
    %4007 = vmatpush1.msra.mxu0 0.0
    %4008 = vmatprep.mubr.f32.mxu0 0.0
    %4009 = vmatmul.mubr.f32.gmra.mrb[0].mxu0 %v3730
    %v4010 = vpop.f32.mrb[0].mxu0
    %v4011 = vadd.f32 %v3869, %v4010
    %v4012 = vpop.f32.mrb[0].mxu0
    %v4013 = vadd.f32 %v3871, %v4012
    %4014 = vdwg.mxu0
    %v4015 = vadd.f32 %v3940, %v1994
    %v4016 = vadd.f32 %v3942, %v1998
    %v4017 = vadd.f32 %v4011, %v2002
    %v4018 = vadd.f32 %v4013, %v2006
    %v4019 = vxor.u32 %v4015, 2147483648
    %v4020 = vmul.f32 %v4019, 1.442695
    %v4021 = vpow.pop %v4020
    %v4022 = vadd.f32 %v4021, 1.0
    %v4023 = vrcp.pop %v4022
    %v4024 = vmul.f32 1.0, %v4023
    %v4025 = vxor.u32 %v4016, 2147483648
    %v4026 = vmul.f32 %v4025, 1.442695
    %v4027 = vpow.pop %v4026
    %v4028 = vadd.f32 %v4027, 1.0
    %v4029 = vrcp.pop %v4028
    %v4030 = vmul.f32 1.0, %v4029
    %v4031 = vtanh.pop %v4017
    %v4032 = vxor.u32 %v4018, 2147483648
    %v4033 = vmul.f32 %v4032, 1.442695
    %v4034 = vpow.pop %v4033
    %v4035 = vadd.f32 %v4034, 1.0
    %v4036 = vrcp.pop %v4035
    %v4037 = vmul.f32 1.0, %v4036
    %v4038 = vmul.f32 %v4030, %v3538
    %v4039 = vmul.f32 %v4024, %v4031
    %v4040 = vadd.f32 %v4038, %v4039
    %v4041 = vtanh.pop %v4040
    %v4042 = vmul.f32 %v4037, %v4041
    %v4043 = vrot.slane %v1047, 5
    %v4044 = vrot.slane %v1049, 5
    %v4045 = vrot.slane %v1124, 5
    %v4046 = vrot.slane %v1126, 5
    %v4051 = vrot.slane %v1239, 4
    %v4052 = vrot.slane %v1241, 4
    %v4053 = vrot.slane %v1316, 4
    %v4054 = vrot.slane %v1318, 4
    %v4059 = vsel %vm1531, %v4043, %v4051
    %v4060 = vsel %vm1531, %v4044, %v4052
    %v4061 = vsel %vm1531, %v4045, %v4053
    %v4062 = vsel %vm1531, %v4046, %v4054
    %4063 = vmatprep.subr.mxu0 %v1327
    %4064 = vmatpush1.msra.mxu0 %v1326
    %4065 = vmatprep.subr.mxu0 %v1331
    %4066 = vmatpush1.msra.mxu0 %v1330
    %4067 = vmatprep.subr.mxu0 %v1335
    %4068 = vmatpush1.msra.mxu0 %v1334
    %4069 = vmatprep.subr.mxu0 %v1339
    %4070 = vmatpush1.msra.mxu0 %v1338
    %4071 = vmatprep.subr.mxu0 %v1343
    %4072 = vmatpush1.msra.mxu0 %v1342
    %4073 = vmatprep.subr.mxu0 %v1347
    %4074 = vmatpush1.msra.mxu0 %v1346
    %4075 = vmatprep.subr.mxu0 %v1351
    %4076 = vmatpush1.msra.mxu0 %v1350
    %4077 = vmatprep.subr.mxu0 %v1355
    %4078 = vmatpush1.msra.mxu0 %v1354
    %4079 = vmatprep.subr.mxu0 %v1359
    %4080 = vmatpush1.msra.mxu0 %v1358
    %4081 = vmatprep.subr.mxu0 %v1363
    %4082 = vmatpush1.msra.mxu0 %v1362
    %4083 = vmatprep.subr.mxu0 %v1367
    %4084 = vmatpush1.msra.mxu0 %v1366
    %4085 = vmatprep.subr.mxu0 %v1371
    %4086 = vmatpush1.msra.mxu0 %v1370
    %4087 = vmatprep.subr.mxu0 %v1375
    %4088 = vmatpush1.msra.mxu0 %v1374
    %4089 = vmatprep.subr.mxu0 %v1379
    %4090 = vmatpush1.msra.mxu0 %v1378
    %4091 = vmatprep.subr.mxu0 %v1383
    %4092 = vmatpush1.msra.mxu0 %v1382
    %4093 = vmatprep.subr.mxu0 %v1387
    %4094 = vmatpush1.msra.mxu0 %v1386
    %4095 = vmatprep.subr.mxu0 0.0
    %4096 = vmatpush1.msra.mxu0 0.0
    %4097 = vmatprep.subr.mxu0 0.0
    %4098 = vmatpush1.msra.mxu0 0.0
    %4099 = vmatprep.subr.mxu0 0.0
    %4100 = vmatpush1.msra.mxu0 0.0
    %4101 = vmatprep.subr.mxu0 0.0
    %4102 = vmatpush1.msra.mxu0 0.0
    %4103 = vmatprep.subr.mxu0 0.0
    %4104 = vmatpush1.msra.mxu0 0.0
    %4105 = vmatprep.subr.mxu0 0.0
    %4106 = vmatpush1.msra.mxu0 0.0
    %4107 = vmatprep.subr.mxu0 0.0
    %4108 = vmatpush1.msra.mxu0 0.0
    %4109 = vmatprep.subr.mxu0 0.0
    %4110 = vmatpush1.msra.mxu0 0.0
    %4111 = vmatprep.subr.mxu0 0.0
    %4112 = vmatpush1.msra.mxu0 0.0
    %4113 = vmatprep.subr.mxu0 0.0
    %4114 = vmatpush1.msra.mxu0 0.0
    %4115 = vmatprep.subr.mxu0 0.0
    %4116 = vmatpush1.msra.mxu0 0.0
    %4117 = vmatprep.subr.mxu0 0.0
    %4118 = vmatpush1.msra.mxu0 0.0
    %4119 = vmatprep.subr.mxu0 0.0
    %4120 = vmatpush1.msra.mxu0 0.0
    %4121 = vmatprep.subr.mxu0 0.0
    %4122 = vmatpush1.msra.mxu0 0.0
    %4123 = vmatprep.subr.mxu0 0.0
    %4124 = vmatpush1.msra.mxu0 0.0
    %4125 = vmatprep.subr.mxu0 0.0
    %4126 = vmatpush1.msra.mxu0 0.0
    %4127 = vmatprep.mubr.f32.mxu0 0.0
    %4128 = vmatmul.mubr.f32.gmra.mrb[0].mxu0 %v3730
    %v4129 = vpop.f32.mrb[0].mxu0
    %v4130 = vadd.f32 0.0, %v4129
    %v4131 = vpop.f32.mrb[0].mxu0
    %v4132 = vadd.f32 0.0, %v4131
    %4133 = vdwg.mxu0
    %4134 = vmatprep.subr.mxu0 %v1329
    %4135 = vmatpush1.msra.mxu0 %v1328
    %4136 = vmatprep.subr.mxu0 %v1333
    %4137 = vmatpush1.msra.mxu0 %v1332
    %4138 = vmatprep.subr.mxu0 %v1337
    %4139 = vmatpush1.msra.mxu0 %v1336
    %4140 = vmatprep.subr.mxu0 %v1341
    %4141 = vmatpush1.msra.mxu0 %v1340
    %4142 = vmatprep.subr.mxu0 %v1345
    %4143 = vmatpush1.msra.mxu0 %v1344
    %4144 = vmatprep.subr.mxu0 %v1349
    %4145 = vmatpush1.msra.mxu0 %v1348
    %4146 = vmatprep.subr.mxu0 %v1353
    %4147 = vmatpush1.msra.mxu0 %v1352
    %4148 = vmatprep.subr.mxu0 %v1357
    %4149 = vmatpush1.msra.mxu0 %v1356
    %4150 = vmatprep.subr.mxu0 %v1361
    %4151 = vmatpush1.msra.mxu0 %v1360
    %4152 = vmatprep.subr.mxu0 %v1365
    %4153 = vmatpush1.msra.mxu0 %v1364
    %4154 = vmatprep.subr.mxu0 %v1369
    %4155 = vmatpush1.msra.mxu0 %v1368
    %4156 = vmatprep.subr.mxu0 %v1373
    %4157 = vmatpush1.msra.mxu0 %v1372
    %4158 = vmatprep.subr.mxu0 %v1377
    %4159 = vmatpush1.msra.mxu0 %v1376
    %4160 = vmatprep.subr.mxu0 %v1381
    %4161 = vmatpush1.msra.mxu0 %v1380
    %4162 = vmatprep.subr.mxu0 %v1385
    %4163 = vmatpush1.msra.mxu0 %v1384
    %4164 = vmatprep.subr.mxu0 %v1389
    %4165 = vmatpush1.msra.mxu0 %v1388
    %4166 = vmatprep.subr.mxu0 0.0
    %4167 = vmatpush1.msra.mxu0 0.0
    %4168 = vmatprep.subr.mxu0 0.0
    %4169 = vmatpush1.msra.mxu0 0.0
    %4170 = vmatprep.subr.mxu0 0.0
    %4171 = vmatpush1.msra.mxu0 0.0
    %4172 = vmatprep.subr.mxu0 0.0
    %4173 = vmatpush1.msra.mxu0 0.0
    %4174 = vmatprep.subr.mxu0 0.0
    %4175 = vmatpush1.msra.mxu0 0.0
    %4176 = vmatprep.subr.mxu0 0.0
    %4177 = vmatpush1.msra.mxu0 0.0
    %4178 = vmatprep.subr.mxu0 0.0
    %4179 = vmatpush1.msra.mxu0 0.0
    %4180 = vmatprep.subr.mxu0 0.0
    %4181 = vmatpush1.msra.mxu0 0.0
    %4182 = vmatprep.subr.mxu0 0.0
    %4183 = vmatpush1.msra.mxu0 0.0
    %4184 = vmatprep.subr.mxu0 0.0
    %4185 = vmatpush1.msra.mxu0 0.0
    %4186 = vmatprep.subr.mxu0 0.0
    %4187 = vmatpush1.msra.mxu0 0.0
    %4188 = vmatprep.subr.mxu0 0.0
    %4189 = vmatpush1.msra.mxu0 0.0
    %4190 = vmatprep.subr.mxu0 0.0
    %4191 = vmatpush1.msra.mxu0 0.0
    %4192 = vmatprep.subr.mxu0 0.0
    %4193 = vmatpush1.msra.mxu0 0.0
    %4194 = vmatprep.subr.mxu0 0.0
    %4195 = vmatpush1.msra.mxu0 0.0
    %4196 = vmatprep.subr.mxu0 0.0
    %4197 = vmatpush1.msra.mxu0 0.0
    %4198 = vmatprep.mubr.f32.mxu0 0.0
    %4199 = vmatmul.mubr.f32.gmra.mrb[0].mxu0 %v3730
    %v4200 = vpop.f32.mrb[0].mxu0
    %v4201 = vadd.f32 0.0, %v4200
    %v4202 = vpop.f32.mrb[0].mxu0
    %v4203 = vadd.f32 0.0, %v4202
    %4204 = vdwg.mxu0
    %v4205 = vadd.f32 %v4059, %v4130
    %v4206 = vadd.f32 %v4060, %v4132
    %v4207 = vadd.f32 %v4061, %v4201
    %v4208 = vadd.f32 %v4062, %v4203
    %v4209 = vxor.u32 %v4205, 2147483648
    %v4210 = vmul.f32 %v4209, 1.442695
    %v4211 = vpow.pop %v4210
    %v4212 = vadd.f32 %v4211, 1.0
    %v4213 = vrcp.pop %v4212
    %v4214 = vmul.f32 1.0, %v4213
    %v4215 = vxor.u32 %v4206, 2147483648
    %v4216 = vmul.f32 %v4215, 1.442695
    %v4217 = vpow.pop %v4216
    %v4218 = vadd.f32 %v4217, 1.0
    %v4219 = vrcp.pop %v4218
    %v4220 = vmul.f32 1.0, %v4219
    %v4221 = vtanh.pop %v4207
    %v4222 = vxor.u32 %v4208, 2147483648
    %v4223 = vmul.f32 %v4222, 1.442695
    %v4224 = vpow.pop %v4223
    %v4225 = vadd.f32 %v4224, 1.0
    %v4226 = vrcp.pop %v4225
    %v4227 = vmul.f32 1.0, %v4226
    %v4228 = vmul.f32 %v4220, %v3728
    %v4229 = vmul.f32 %v4214, %v4221
    %v4230 = vadd.f32 %v4228, %v4229
    %v4231 = vtanh.pop %v4230
    %v4232 = vmul.f32 %v4227, %v4231
    %4233 = vmatprep.subr.mxu0 %v1455
    %4234 = vmatpush1.msra.mxu0 %v1454
    %4235 = vmatprep.subr.mxu0 %v1459
    %4236 = vmatpush1.msra.mxu0 %v1458
    %4237 = vmatprep.subr.mxu0 %v1463
    %4238 = vmatpush1.msra.mxu0 %v1462
    %4239 = vmatprep.subr.mxu0 %v1467
    %4240 = vmatpush1.msra.mxu0 %v1466
    %4241 = vmatprep.subr.mxu0 %v1471
    %4242 = vmatpush1.msra.mxu0 %v1470
    %4243 = vmatprep.subr.mxu0 %v1475
    %4244 = vmatpush1.msra.mxu0 %v1474
    %4245 = vmatprep.subr.mxu0 %v1479
    %4246 = vmatpush1.msra.mxu0 %v1478
    %4247 = vmatprep.subr.mxu0 %v1483
    %4248 = vmatpush1.msra.mxu0 %v1482
    %4249 = vmatprep.subr.mxu0 %v1487
    %4250 = vmatpush1.msra.mxu0 %v1486
    %4251 = vmatprep.subr.mxu0 %v1491
    %4252 = vmatpush1.msra.mxu0 %v1490
    %4253 = vmatprep.subr.mxu0 %v1495
    %4254 = vmatpush1.msra.mxu0 %v1494
    %4255 = vmatprep.subr.mxu0 %v1499
    %4256 = vmatpush1.msra.mxu0 %v1498
    %4257 = vmatprep.subr.mxu0 %v1503
    %4258 = vmatpush1.msra.mxu0 %v1502
    %4259 = vmatprep.subr.mxu0 %v1507
    %4260 = vmatpush1.msra.mxu0 %v1506
    %4261 = vmatprep.subr.mxu0 %v1511
    %4262 = vmatpush1.msra.mxu0 %v1510
    %4263 = vmatprep.subr.mxu0 %v1515
    %4264 = vmatpush1.msra.mxu0 %v1514
    %4265 = vmatprep.subr.mxu0 0.0
    %4266 = vmatpush1.msra.mxu0 0.0
    %4267 = vmatprep.subr.mxu0 0.0
    %4268 = vmatpush1.msra.mxu0 0.0
    %4269 = vmatprep.subr.mxu0 0.0
    %4270 = vmatpush1.msra.mxu0 0.0
    %4271 = vmatprep.subr.mxu0 0.0
    %4272 = vmatpush1.msra.mxu0 0.0
    %4273 = vmatprep.subr.mxu0 0.0
    %4274 = vmatpush1.msra.mxu0 0.0
    %4275 = vmatprep.subr.mxu0 0.0
    %4276 = vmatpush1.msra.mxu0 0.0
    %4277 = vmatprep.subr.mxu0 0.0
    %4278 = vmatpush1.msra.mxu0 0.0
    %4279 = vmatprep.subr.mxu0 0.0
    %4280 = vmatpush1.msra.mxu0 0.0
    %4281 = vmatprep.subr.mxu0 0.0
    %4282 = vmatpush1.msra.mxu0 0.0
    %4283 = vmatprep.subr.mxu0 0.0
    %4284 = vmatpush1.msra.mxu0 0.0
    %4285 = vmatprep.subr.mxu0 0.0
    %4286 = vmatpush1.msra.mxu0 0.0
    %4287 = vmatprep.subr.mxu0 0.0
    %4288 = vmatpush1.msra.mxu0 0.0
    %4289 = vmatprep.subr.mxu0 0.0
    %4290 = vmatpush1.msra.mxu0 0.0
    %4291 = vmatprep.subr.mxu0 0.0
    %4292 = vmatpush1.msra.mxu0 0.0
    %4293 = vmatprep.subr.mxu0 0.0
    %4294 = vmatpush1.msra.mxu0 0.0
    %4295 = vmatprep.subr.mxu0 0.0
    %4296 = vmatpush1.msra.mxu0 0.0
    %4297 = vmatprep.mubr.f32.mxu0 0.0
    %4298 = vmatmul.mubr.f32.gmra.mrb[0].mxu0 %v4042
    %v4299 = vpop.f32.mrb[0].mxu0
    %v4300 = vadd.f32 0.0, %v4299
    %v4301 = vpop.f32.mrb[0].mxu0
    %v4302 = vadd.f32 0.0, %v4301
    %4303 = vdwg.mxu0
    %4304 = vmatprep.subr.mxu0 %v1457
    %4305 = vmatpush1.msra.mxu0 %v1456
    %4306 = vmatprep.subr.mxu0 %v1461
    %4307 = vmatpush1.msra.mxu0 %v1460
    %4308 = vmatprep.subr.mxu0 %v1465
    %4309 = vmatpush1.msra.mxu0 %v1464
    %4310 = vmatprep.subr.mxu0 %v1469
    %4311 = vmatpush1.msra.mxu0 %v1468
    %4312 = vmatprep.subr.mxu0 %v1473
    %4313 = vmatpush1.msra.mxu0 %v1472
    %4314 = vmatprep.subr.mxu0 %v1477
    %4315 = vmatpush1.msra.mxu0 %v1476
    %4316 = vmatprep.subr.mxu0 %v1481
    %4317 = vmatpush1.msra.mxu0 %v1480
    %4318 = vmatprep.subr.mxu0 %v1485
    %4319 = vmatpush1.msra.mxu0 %v1484
    %4320 = vmatprep.subr.mxu0 %v1489
    %4321 = vmatpush1.msra.mxu0 %v1488
    %4322 = vmatprep.subr.mxu0 %v1493
    %4323 = vmatpush1.msra.mxu0 %v1492
    %4324 = vmatprep.subr.mxu0 %v1497
    %4325 = vmatpush1.msra.mxu0 %v1496
    %4326 = vmatprep.subr.mxu0 %v1501
    %4327 = vmatpush1.msra.mxu0 %v1500
    %4328 = vmatprep.subr.mxu0 %v1505
    %4329 = vmatpush1.msra.mxu0 %v1504
    %4330 = vmatprep.subr.mxu0 %v1509
    %4331 = vmatpush1.msra.mxu0 %v1508
    %4332 = vmatprep.subr.mxu0 %v1513
    %4333 = vmatpush1.msra.mxu0 %v1512
    %4334 = vmatprep.subr.mxu0 %v1517
    %4335 = vmatpush1.msra.mxu0 %v1516
    %4336 = vmatprep.subr.mxu0 0.0
    %4337 = vmatpush1.msra.mxu0 0.0
    %4338 = vmatprep.subr.mxu0 0.0
    %4339 = vmatpush1.msra.mxu0 0.0
    %4340 = vmatprep.subr.mxu0 0.0
    %4341 = vmatpush1.msra.mxu0 0.0
    %4342 = vmatprep.subr.mxu0 0.0
    %4343 = vmatpush1.msra.mxu0 0.0
    %4344 = vmatprep.subr.mxu0 0.0
    %4345 = vmatpush1.msra.mxu0 0.0
    %4346 = vmatprep.subr.mxu0 0.0
    %4347 = vmatpush1.msra.mxu0 0.0
    %4348 = vmatprep.subr.mxu0 0.0
    %4349 = vmatpush1.msra.mxu0 0.0
    %4350 = vmatprep.subr.mxu0 0.0
    %4351 = vmatpush1.msra.mxu0 0.0
    %4352 = vmatprep.subr.mxu0 0.0
    %4353 = vmatpush1.msra.mxu0 0.0
    %4354 = vmatprep.subr.mxu0 0.0
    %4355 = vmatpush1.msra.mxu0 0.0
    %4356 = vmatprep.subr.mxu0 0.0
    %4357 = vmatpush1.msra.mxu0 0.0
    %4358 = vmatprep.subr.mxu0 0.0
    %4359 = vmatpush1.msra.mxu0 0.0
    %4360 = vmatprep.subr.mxu0 0.0
    %4361 = vmatpush1.msra.mxu0 0.0
    %4362 = vmatprep.subr.mxu0 0.0
    %4363 = vmatpush1.msra.mxu0 0.0
    %4364 = vmatprep.subr.mxu0 0.0
    %4365 = vmatpush1.msra.mxu0 0.0
    %4366 = vmatprep.subr.mxu0 0.0
    %4367 = vmatpush1.msra.mxu0 0.0
    %4368 = vmatprep.mubr.f32.mxu0 0.0
    %4369 = vmatmul.mubr.f32.gmra.mrb[0].mxu0 %v4042
    %v4370 = vpop.f32.mrb[0].mxu0
    %v4371 = vadd.f32 0.0, %v4370
    %v4372 = vpop.f32.mrb[0].mxu0
    %v4373 = vadd.f32 0.0, %v4372
    %4374 = vdwg.mxu0
    %4375 = vmatprep.subr.mxu0 %v1391
    %4376 = vmatpush1.msra.mxu0 %v1390
    %4377 = vmatprep.subr.mxu0 %v1395
    %4378 = vmatpush1.msra.mxu0 %v1394
    %4379 = vmatprep.subr.mxu0 %v1399
    %4380 = vmatpush1.msra.mxu0 %v1398
    %4381 = vmatprep.subr.mxu0 %v1403
    %4382 = vmatpush1.msra.mxu0 %v1402
    %4383 = vmatprep.subr.mxu0 %v1407
    %4384 = vmatpush1.msra.mxu0 %v1406
    %4385 = vmatprep.subr.mxu0 %v1411
    %4386 = vmatpush1.msra.mxu0 %v1410
    %4387 = vmatprep.subr.mxu0 %v1415
    %4388 = vmatpush1.msra.mxu0 %v1414
    %4389 = vmatprep.subr.mxu0 %v1419
    %4390 = vmatpush1.msra.mxu0 %v1418
    %4391 = vmatprep.subr.mxu0 %v1423
    %4392 = vmatpush1.msra.mxu0 %v1422
    %4393 = vmatprep.subr.mxu0 %v1427
    %4394 = vmatpush1.msra.mxu0 %v1426
    %4395 = vmatprep.subr.mxu0 %v1431
    %4396 = vmatpush1.msra.mxu0 %v1430
    %4397 = vmatprep.subr.mxu0 %v1435
    %4398 = vmatpush1.msra.mxu0 %v1434
    %4399 = vmatprep.subr.mxu0 %v1439
    %4400 = vmatpush1.msra.mxu0 %v1438
    %4401 = vmatprep.subr.mxu0 %v1443
    %4402 = vmatpush1.msra.mxu0 %v1442
    %4403 = vmatprep.subr.mxu0 %v1447
    %4404 = vmatpush1.msra.mxu0 %v1446
    %4405 = vmatprep.subr.mxu0 %v1451
    %4406 = vmatpush1.msra.mxu0 %v1450
    %4407 = vmatprep.subr.mxu0 0.0
    %4408 = vmatpush1.msra.mxu0 0.0
    %4409 = vmatprep.subr.mxu0 0.0
    %4410 = vmatpush1.msra.mxu0 0.0
    %4411 = vmatprep.subr.mxu0 0.0
    %4412 = vmatpush1.msra.mxu0 0.0
    %4413 = vmatprep.subr.mxu0 0.0
    %4414 = vmatpush1.msra.mxu0 0.0
    %4415 = vmatprep.subr.mxu0 0.0
    %4416 = vmatpush1.msra.mxu0 0.0
    %4417 = vmatprep.subr.mxu0 0.0
    %4418 = vmatpush1.msra.mxu0 0.0
    %4419 = vmatprep.subr.mxu0 0.0
    %4420 = vmatpush1.msra.mxu0 0.0
    %4421 = vmatprep.subr.mxu0 0.0
    %4422 = vmatpush1.msra.mxu0 0.0
    %4423 = vmatprep.subr.mxu0 0.0
    %4424 = vmatpush1.msra.mxu0 0.0
    %4425 = vmatprep.subr.mxu0 0.0
    %4426 = vmatpush1.msra.mxu0 0.0
    %4427 = vmatprep.subr.mxu0 0.0
    %4428 = vmatpush1.msra.mxu0 0.0
    %4429 = vmatprep.subr.mxu0 0.0
    %4430 = vmatpush1.msra.mxu0 0.0
    %4431 = vmatprep.subr.mxu0 0.0
    %4432 = vmatpush1.msra.mxu0 0.0
    %4433 = vmatprep.subr.mxu0 0.0
    %4434 = vmatpush1.msra.mxu0 0.0
    %4435 = vmatprep.subr.mxu0 0.0
    %4436 = vmatpush1.msra.mxu0 0.0
    %4437 = vmatprep.subr.mxu0 0.0
    %4438 = vmatpush1.msra.mxu0 0.0
    %4439 = vmatprep.mubr.f32.mxu0 0.0
    %4440 = vmatmul.mubr.f32.gmra.mrb[0].mxu0 %v4232
    %v4441 = vpop.f32.mrb[0].mxu0
    %v4442 = vadd.f32 %v4300, %v4441
    %v4443 = vpop.f32.mrb[0].mxu0
    %v4444 = vadd.f32 %v4302, %v4443
    %4445 = vdwg.mxu0
    %4446 = vmatprep.subr.mxu0 %v1393
    %4447 = vmatpush1.msra.mxu0 %v1392
    %4448 = vmatprep.subr.mxu0 %v1397
    %4449 = vmatpush1.msra.mxu0 %v1396
    %4450 = vmatprep.subr.mxu0 %v1401
    %4451 = vmatpush1.msra.mxu0 %v1400
    %4452 = vmatprep.subr.mxu0 %v1405
    %4453 = vmatpush1.msra.mxu0 %v1404
    %4454 = vmatprep.subr.mxu0 %v1409
    %4455 = vmatpush1.msra.mxu0 %v1408
    %4456 = vmatprep.subr.mxu0 %v1413
    %4457 = vmatpush1.msra.mxu0 %v1412
    %4458 = vmatprep.subr.mxu0 %v1417
    %4459 = vmatpush1.msra.mxu0 %v1416
    %4460 = vmatprep.subr.mxu0 %v1421
    %4461 = vmatpush1.msra.mxu0 %v1420
    %4462 = vmatprep.subr.mxu0 %v1425
    %4463 = vmatpush1.msra.mxu0 %v1424
    %4464 = vmatprep.subr.mxu0 %v1429
    %4465 = vmatpush1.msra.mxu0 %v1428
    %4466 = vmatprep.subr.mxu0 %v1433
    %4467 = vmatpush1.msra.mxu0 %v1432
    %4468 = vmatprep.subr.mxu0 %v1437
    %4469 = vmatpush1.msra.mxu0 %v1436
    %4470 = vmatprep.subr.mxu0 %v1441
    %4471 = vmatpush1.msra.mxu0 %v1440
    %4472 = vmatprep.subr.mxu0 %v1445
    %4473 = vmatpush1.msra.mxu0 %v1444
    %4474 = vmatprep.subr.mxu0 %v1449
    %4475 = vmatpush1.msra.mxu0 %v1448
    %4476 = vmatprep.subr.mxu0 %v1453
    %4477 = vmatpush1.msra.mxu0 %v1452
    %4478 = vmatprep.subr.mxu0 0.0
    %4479 = vmatpush1.msra.mxu0 0.0
    %4480 = vmatprep.subr.mxu0 0.0
    %4481 = vmatpush1.msra.mxu0 0.0
    %4482 = vmatprep.subr.mxu0 0.0
    %4483 = vmatpush1.msra.mxu0 0.0
    %4484 = vmatprep.subr.mxu0 0.0
    %4485 = vmatpush1.msra.mxu0 0.0
    %4486 = vmatprep.subr.mxu0 0.0
    %4487 = vmatpush1.msra.mxu0 0.0
    %4488 = vmatprep.subr.mxu0 0.0
    %4489 = vmatpush1.msra.mxu0 0.0
    %4490 = vmatprep.subr.mxu0 0.0
    %4491 = vmatpush1.msra.mxu0 0.0
    %4492 = vmatprep.subr.mxu0 0.0
    %4493 = vmatpush1.msra.mxu0 0.0
    %4494 = vmatprep.subr.mxu0 0.0
    %4495 = vmatpush1.msra.mxu0 0.0
    %4496 = vmatprep.subr.mxu0 0.0
    %4497 = vmatpush1.msra.mxu0 0.0
    %4498 = vmatprep.subr.mxu0 0.0
    %4499 = vmatpush1.msra.mxu0 0.0
    %4500 = vmatprep.subr.mxu0 0.0
    %4501 = vmatpush1.msra.mxu0 0.0
    %4502 = vmatprep.subr.mxu0 0.0
    %4503 = vmatpush1.msra.mxu0 0.0
    %4504 = vmatprep.subr.mxu0 0.0
    %4505 = vmatpush1.msra.mxu0 0.0
    %4506 = vmatprep.subr.mxu0 0.0
    %4507 = vmatpush1.msra.mxu0 0.0
    %4508 = vmatprep.subr.mxu0 0.0
    %4509 = vmatpush1.msra.mxu0 0.0
    %4510 = vmatprep.mubr.f32.mxu0 0.0
    %4511 = vmatmul.mubr.f32.gmra.mrb[0].mxu0 %v4232
    %v4512 = vpop.f32.mrb[0].mxu0
    %v4513 = vadd.f32 %v4371, %v4512
    %v4514 = vpop.f32.mrb[0].mxu0
    %v4515 = vadd.f32 %v4373, %v4514
    %4516 = vdwg.mxu0
    %v4517 = vadd.f32 %v4442, %v1994
    %v4518 = vadd.f32 %v4444, %v1998
    %v4519 = vadd.f32 %v4513, %v2002
    %v4520 = vadd.f32 %v4515, %v2006
    %v4521 = vxor.u32 %v4517, 2147483648
    %v4522 = vmul.f32 %v4521, 1.442695
    %v4523 = vpow.pop %v4522
    %v4524 = vadd.f32 %v4523, 1.0
    %v4525 = vrcp.pop %v4524
    %v4526 = vmul.f32 1.0, %v4525
    %v4527 = vxor.u32 %v4518, 2147483648
    %v4528 = vmul.f32 %v4527, 1.442695
    %v4529 = vpow.pop %v4528
    %v4530 = vadd.f32 %v4529, 1.0
    %v4531 = vrcp.pop %v4530
    %v4532 = vmul.f32 1.0, %v4531
    %v4533 = vtanh.pop %v4519
    %v4534 = vxor.u32 %v4520, 2147483648
    %v4535 = vmul.f32 %v4534, 1.442695
    %v4536 = vpow.pop %v4535
    %v4537 = vadd.f32 %v4536, 1.0
    %v4538 = vrcp.pop %v4537
    %v4539 = vmul.f32 1.0, %v4538
    %v4540 = vmul.f32 %v4532, %v4040
    %v4541 = vmul.f32 %v4526, %v4533
    %v4542 = vadd.f32 %v4540, %v4541
    %v4543 = vtanh.pop %v4542
    %v4544 = vmul.f32 %v4539, %v4543
    %v4545 = vrot.slane %v1047, 6
    %v4546 = vrot.slane %v1049, 6
    %v4547 = vrot.slane %v1124, 6
    %v4548 = vrot.slane %v1126, 6
    %v4553 = vrot.slane %v1239, 5
    %v4554 = vrot.slane %v1241, 5
    %v4555 = vrot.slane %v1316, 5
    %v4556 = vrot.slane %v1318, 5
    %v4561 = vsel %vm1531, %v4545, %v4553
    %v4562 = vsel %vm1531, %v4546, %v4554
    %v4563 = vsel %vm1531, %v4547, %v4555
    %v4564 = vsel %vm1531, %v4548, %v4556
    %4565 = vmatprep.subr.mxu0 %v1327
    %4566 = vmatpush1.msra.mxu0 %v1326
    %4567 = vmatprep.subr.mxu0 %v1331
    %4568 = vmatpush1.msra.mxu0 %v1330
    %4569 = vmatprep.subr.mxu0 %v1335
    %4570 = vmatpush1.msra.mxu0 %v1334
    %4571 = vmatprep.subr.mxu0 %v1339
    %4572 = vmatpush1.msra.mxu0 %v1338
    %4573 = vmatprep.subr.mxu0 %v1343
    %4574 = vmatpush1.msra.mxu0 %v1342
    %4575 = vmatprep.subr.mxu0 %v1347
    %4576 = vmatpush1.msra.mxu0 %v1346
    %4577 = vmatprep.subr.mxu0 %v1351
    %4578 = vmatpush1.msra.mxu0 %v1350
    %4579 = vmatprep.subr.mxu0 %v1355
    %4580 = vmatpush1.msra.mxu0 %v1354
    %4581 = vmatprep.subr.mxu0 %v1359
    %4582 = vmatpush1.msra.mxu0 %v1358
    %4583 = vmatprep.subr.mxu0 %v1363
    %4584 = vmatpush1.msra.mxu0 %v1362
    %4585 = vmatprep.subr.mxu0 %v1367
    %4586 = vmatpush1.msra.mxu0 %v1366
    %4587 = vmatprep.subr.mxu0 %v1371
    %4588 = vmatpush1.msra.mxu0 %v1370
    %4589 = vmatprep.subr.mxu0 %v1375
    %4590 = vmatpush1.msra.mxu0 %v1374
    %4591 = vmatprep.subr.mxu0 %v1379
    %4592 = vmatpush1.msra.mxu0 %v1378
    %4593 = vmatprep.subr.mxu0 %v1383
    %4594 = vmatpush1.msra.mxu0 %v1382
    %4595 = vmatprep.subr.mxu0 %v1387
    %4596 = vmatpush1.msra.mxu0 %v1386
    %4597 = vmatprep.subr.mxu0 0.0
    %4598 = vmatpush1.msra.mxu0 0.0
    %4599 = vmatprep.subr.mxu0 0.0
    %4600 = vmatpush1.msra.mxu0 0.0
    %4601 = vmatprep.subr.mxu0 0.0
    %4602 = vmatpush1.msra.mxu0 0.0
    %4603 = vmatprep.subr.mxu0 0.0
    %4604 = vmatpush1.msra.mxu0 0.0
    %4605 = vmatprep.subr.mxu0 0.0
    %4606 = vmatpush1.msra.mxu0 0.0
    %4607 = vmatprep.subr.mxu0 0.0
    %4608 = vmatpush1.msra.mxu0 0.0
    %4609 = vmatprep.subr.mxu0 0.0
    %4610 = vmatpush1.msra.mxu0 0.0
    %4611 = vmatprep.subr.mxu0 0.0
    %4612 = vmatpush1.msra.mxu0 0.0
    %4613 = vmatprep.subr.mxu0 0.0
    %4614 = vmatpush1.msra.mxu0 0.0
    %4615 = vmatprep.subr.mxu0 0.0
    %4616 = vmatpush1.msra.mxu0 0.0
    %4617 = vmatprep.subr.mxu0 0.0
    %4618 = vmatpush1.msra.mxu0 0.0
    %4619 = vmatprep.subr.mxu0 0.0
    %4620 = vmatpush1.msra.mxu0 0.0
    %4621 = vmatprep.subr.mxu0 0.0
    %4622 = vmatpush1.msra.mxu0 0.0
    %4623 = vmatprep.subr.mxu0 0.0
    %4624 = vmatpush1.msra.mxu0 0.0
    %4625 = vmatprep.subr.mxu0 0.0
    %4626 = vmatpush1.msra.mxu0 0.0
    %4627 = vmatprep.subr.mxu0 0.0
    %4628 = vmatpush1.msra.mxu0 0.0
    %4629 = vmatprep.mubr.f32.mxu0 0.0
    %4630 = vmatmul.mubr.f32.gmra.mrb[0].mxu0 %v4232
    %v4631 = vpop.f32.mrb[0].mxu0
    %v4632 = vadd.f32 0.0, %v4631
    %v4633 = vpop.f32.mrb[0].mxu0
    %v4634 = vadd.f32 0.0, %v4633
    %4635 = vdwg.mxu0
    %4636 = vmatprep.subr.mxu0 %v1329
    %4637 = vmatpush1.msra.mxu0 %v1328
    %4638 = vmatprep.subr.mxu0 %v1333
    %4639 = vmatpush1.msra.mxu0 %v1332
    %4640 = vmatprep.subr.mxu0 %v1337
    %4641 = vmatpush1.msra.mxu0 %v1336
    %4642 = vmatprep.subr.mxu0 %v1341
    %4643 = vmatpush1.msra.mxu0 %v1340
    %4644 = vmatprep.subr.mxu0 %v1345
    %4645 = vmatpush1.msra.mxu0 %v1344
    %4646 = vmatprep.subr.mxu0 %v1349
    %4647 = vmatpush1.msra.mxu0 %v1348
    %4648 = vmatprep.subr.mxu0 %v1353
    %4649 = vmatpush1.msra.mxu0 %v1352
    %4650 = vmatprep.subr.mxu0 %v1357
    %4651 = vmatpush1.msra.mxu0 %v1356
    %4652 = vmatprep.subr.mxu0 %v1361
    %4653 = vmatpush1.msra.mxu0 %v1360
    %4654 = vmatprep.subr.mxu0 %v1365
    %4655 = vmatpush1.msra.mxu0 %v1364
    %4656 = vmatprep.subr.mxu0 %v1369
    %4657 = vmatpush1.msra.mxu0 %v1368
    %4658 = vmatprep.subr.mxu0 %v1373
    %4659 = vmatpush1.msra.mxu0 %v1372
    %4660 = vmatprep.subr.mxu0 %v1377
    %4661 = vmatpush1.msra.mxu0 %v1376
    %4662 = vmatprep.subr.mxu0 %v1381
    %4663 = vmatpush1.msra.mxu0 %v1380
    %4664 = vmatprep.subr.mxu0 %v1385
    %4665 = vmatpush1.msra.mxu0 %v1384
    %4666 = vmatprep.subr.mxu0 %v1389
    %4667 = vmatpush1.msra.mxu0 %v1388
    %4668 = vmatprep.subr.mxu0 0.0
    %4669 = vmatpush1.msra.mxu0 0.0
    %4670 = vmatprep.subr.mxu0 0.0
    %4671 = vmatpush1.msra.mxu0 0.0
    %4672 = vmatprep.subr.mxu0 0.0
    %4673 = vmatpush1.msra.mxu0 0.0
    %4674 = vmatprep.subr.mxu0 0.0
    %4675 = vmatpush1.msra.mxu0 0.0
    %4676 = vmatprep.subr.mxu0 0.0
    %4677 = vmatpush1.msra.mxu0 0.0
    %4678 = vmatprep.subr.mxu0 0.0
    %4679 = vmatpush1.msra.mxu0 0.0
    %4680 = vmatprep.subr.mxu0 0.0
    %4681 = vmatpush1.msra.mxu0 0.0
    %4682 = vmatprep.subr.mxu0 0.0
    %4683 = vmatpush1.msra.mxu0 0.0
    %4684 = vmatprep.subr.mxu0 0.0
    %4685 = vmatpush1.msra.mxu0 0.0
    %4686 = vmatprep.subr.mxu0 0.0
    %4687 = vmatpush1.msra.mxu0 0.0
    %4688 = vmatprep.subr.mxu0 0.0
    %4689 = vmatpush1.msra.mxu0 0.0
    %4690 = vmatprep.subr.mxu0 0.0
    %4691 = vmatpush1.msra.mxu0 0.0
    %4692 = vmatprep.subr.mxu0 0.0
    %4693 = vmatpush1.msra.mxu0 0.0
    %4694 = vmatprep.subr.mxu0 0.0
    %4695 = vmatpush1.msra.mxu0 0.0
    %4696 = vmatprep.subr.mxu0 0.0
    %4697 = vmatpush1.msra.mxu0 0.0
    %4698 = vmatprep.subr.mxu0 0.0
    %4699 = vmatpush1.msra.mxu0 0.0
    %4700 = vmatprep.mubr.f32.mxu0 0.0
    %4701 = vmatmul.mubr.f32.gmra.mrb[0].mxu0 %v4232
    %v4702 = vpop.f32.mrb[0].mxu0
    %v4703 = vadd.f32 0.0, %v4702
    %v4704 = vpop.f32.mrb[0].mxu0
    %v4705 = vadd.f32 0.0, %v4704
    %4706 = vdwg.mxu0
    %v4707 = vadd.f32 %v4561, %v4632
    %v4708 = vadd.f32 %v4562, %v4634
    %v4709 = vadd.f32 %v4563, %v4703
    %v4710 = vadd.f32 %v4564, %v4705
    %v4711 = vxor.u32 %v4707, 2147483648
    %v4712 = vmul.f32 %v4711, 1.442695
    %v4713 = vpow.pop %v4712
    %v4714 = vadd.f32 %v4713, 1.0
    %v4715 = vrcp.pop %v4714
    %v4716 = vmul.f32 1.0, %v4715
    %v4717 = vxor.u32 %v4708, 2147483648
    %v4718 = vmul.f32 %v4717, 1.442695
    %v4719 = vpow.pop %v4718
    %v4720 = vadd.f32 %v4719, 1.0
    %v4721 = vrcp.pop %v4720
    %v4722 = vmul.f32 1.0, %v4721
    %v4723 = vtanh.pop %v4709
    %v4724 = vxor.u32 %v4710, 2147483648
    %v4725 = vmul.f32 %v4724, 1.442695
    %v4726 = vpow.pop %v4725
    %v4727 = vadd.f32 %v4726, 1.0
    %v4728 = vrcp.pop %v4727
    %v4729 = vmul.f32 1.0, %v4728
    %v4730 = vmul.f32 %v4722, %v4230
    %v4731 = vmul.f32 %v4716, %v4723
    %v4732 = vadd.f32 %v4730, %v4731
    %v4733 = vtanh.pop %v4732
    %v4734 = vmul.f32 %v4729, %v4733
    %4735 = vmatprep.subr.mxu0 %v1455
    %4736 = vmatpush1.msra.mxu0 %v1454
    %4737 = vmatprep.subr.mxu0 %v1459
    %4738 = vmatpush1.msra.mxu0 %v1458
    %4739 = vmatprep.subr.mxu0 %v1463
    %4740 = vmatpush1.msra.mxu0 %v1462
    %4741 = vmatprep.subr.mxu0 %v1467
    %4742 = vmatpush1.msra.mxu0 %v1466
    %4743 = vmatprep.subr.mxu0 %v1471
    %4744 = vmatpush1.msra.mxu0 %v1470
    %4745 = vmatprep.subr.mxu0 %v1475
    %4746 = vmatpush1.msra.mxu0 %v1474
    %4747 = vmatprep.subr.mxu0 %v1479
    %4748 = vmatpush1.msra.mxu0 %v1478
    %4749 = vmatprep.subr.mxu0 %v1483
    %4750 = vmatpush1.msra.mxu0 %v1482
    %4751 = vmatprep.subr.mxu0 %v1487
    %4752 = vmatpush1.msra.mxu0 %v1486
    %4753 = vmatprep.subr.mxu0 %v1491
    %4754 = vmatpush1.msra.mxu0 %v1490
    %4755 = vmatprep.subr.mxu0 %v1495
    %4756 = vmatpush1.msra.mxu0 %v1494
    %4757 = vmatprep.subr.mxu0 %v1499
    %4758 = vmatpush1.msra.mxu0 %v1498
    %4759 = vmatprep.subr.mxu0 %v1503
    %4760 = vmatpush1.msra.mxu0 %v1502
    %4761 = vmatprep.subr.mxu0 %v1507
    %4762 = vmatpush1.msra.mxu0 %v1506
    %4763 = vmatprep.subr.mxu0 %v1511
    %4764 = vmatpush1.msra.mxu0 %v1510
    %4765 = vmatprep.subr.mxu0 %v1515
    %4766 = vmatpush1.msra.mxu0 %v1514
    %4767 = vmatprep.subr.mxu0 0.0
    %4768 = vmatpush1.msra.mxu0 0.0
    %4769 = vmatprep.subr.mxu0 0.0
    %4770 = vmatpush1.msra.mxu0 0.0
    %4771 = vmatprep.subr.mxu0 0.0
    %4772 = vmatpush1.msra.mxu0 0.0
    %4773 = vmatprep.subr.mxu0 0.0
    %4774 = vmatpush1.msra.mxu0 0.0
    %4775 = vmatprep.subr.mxu0 0.0
    %4776 = vmatpush1.msra.mxu0 0.0
    %4777 = vmatprep.subr.mxu0 0.0
    %4778 = vmatpush1.msra.mxu0 0.0
    %4779 = vmatprep.subr.mxu0 0.0
    %4780 = vmatpush1.msra.mxu0 0.0
    %4781 = vmatprep.subr.mxu0 0.0
    %4782 = vmatpush1.msra.mxu0 0.0
    %4783 = vmatprep.subr.mxu0 0.0
    %4784 = vmatpush1.msra.mxu0 0.0
    %4785 = vmatprep.subr.mxu0 0.0
    %4786 = vmatpush1.msra.mxu0 0.0
    %4787 = vmatprep.subr.mxu0 0.0
    %4788 = vmatpush1.msra.mxu0 0.0
    %4789 = vmatprep.subr.mxu0 0.0
    %4790 = vmatpush1.msra.mxu0 0.0
    %4791 = vmatprep.subr.mxu0 0.0
    %4792 = vmatpush1.msra.mxu0 0.0
    %4793 = vmatprep.subr.mxu0 0.0
    %4794 = vmatpush1.msra.mxu0 0.0
    %4795 = vmatprep.subr.mxu0 0.0
    %4796 = vmatpush1.msra.mxu0 0.0
    %4797 = vmatprep.subr.mxu0 0.0
    %4798 = vmatpush1.msra.mxu0 0.0
    %4799 = vmatprep.mubr.f32.mxu0 0.0
    %4800 = vmatmul.mubr.f32.gmra.mrb[0].mxu0 %v4544
    %v4801 = vpop.f32.mrb[0].mxu0
    %v4802 = vadd.f32 0.0, %v4801
    %v4803 = vpop.f32.mrb[0].mxu0
    %v4804 = vadd.f32 0.0, %v4803
    %4805 = vdwg.mxu0
    %4806 = vmatprep.subr.mxu0 %v1457
    %4807 = vmatpush1.msra.mxu0 %v1456
    %4808 = vmatprep.subr.mxu0 %v1461
    %4809 = vmatpush1.msra.mxu0 %v1460
    %4810 = vmatprep.subr.mxu0 %v1465
    %4811 = vmatpush1.msra.mxu0 %v1464
    %4812 = vmatprep.subr.mxu0 %v1469
    %4813 = vmatpush1.msra.mxu0 %v1468
    %4814 = vmatprep.subr.mxu0 %v1473
    %4815 = vmatpush1.msra.mxu0 %v1472
    %4816 = vmatprep.subr.mxu0 %v1477
    %4817 = vmatpush1.msra.mxu0 %v1476
    %4818 = vmatprep.subr.mxu0 %v1481
    %4819 = vmatpush1.msra.mxu0 %v1480
    %4820 = vmatprep.subr.mxu0 %v1485
    %4821 = vmatpush1.msra.mxu0 %v1484
    %4822 = vmatprep.subr.mxu0 %v1489
    %4823 = vmatpush1.msra.mxu0 %v1488
    %4824 = vmatprep.subr.mxu0 %v1493
    %4825 = vmatpush1.msra.mxu0 %v1492
    %4826 = vmatprep.subr.mxu0 %v1497
    %4827 = vmatpush1.msra.mxu0 %v1496
    %4828 = vmatprep.subr.mxu0 %v1501
    %4829 = vmatpush1.msra.mxu0 %v1500
    %4830 = vmatprep.subr.mxu0 %v1505
    %4831 = vmatpush1.msra.mxu0 %v1504
    %4832 = vmatprep.subr.mxu0 %v1509
    %4833 = vmatpush1.msra.mxu0 %v1508
    %4834 = vmatprep.subr.mxu0 %v1513
    %4835 = vmatpush1.msra.mxu0 %v1512
    %4836 = vmatprep.subr.mxu0 %v1517
    %4837 = vmatpush1.msra.mxu0 %v1516
    %4838 = vmatprep.subr.mxu0 0.0
    %4839 = vmatpush1.msra.mxu0 0.0
    %4840 = vmatprep.subr.mxu0 0.0
    %4841 = vmatpush1.msra.mxu0 0.0
    %4842 = vmatprep.subr.mxu0 0.0
    %4843 = vmatpush1.msra.mxu0 0.0
    %4844 = vmatprep.subr.mxu0 0.0
    %4845 = vmatpush1.msra.mxu0 0.0
    %4846 = vmatprep.subr.mxu0 0.0
    %4847 = vmatpush1.msra.mxu0 0.0
    %4848 = vmatprep.subr.mxu0 0.0
    %4849 = vmatpush1.msra.mxu0 0.0
    %4850 = vmatprep.subr.mxu0 0.0
    %4851 = vmatpush1.msra.mxu0 0.0
    %4852 = vmatprep.subr.mxu0 0.0
    %4853 = vmatpush1.msra.mxu0 0.0
    %4854 = vmatprep.subr.mxu0 0.0
    %4855 = vmatpush1.msra.mxu0 0.0
    %4856 = vmatprep.subr.mxu0 0.0
    %4857 = vmatpush1.msra.mxu0 0.0
    %4858 = vmatprep.subr.mxu0 0.0
    %4859 = vmatpush1.msra.mxu0 0.0
    %4860 = vmatprep.subr.mxu0 0.0
    %4861 = vmatpush1.msra.mxu0 0.0
    %4862 = vmatprep.subr.mxu0 0.0
    %4863 = vmatpush1.msra.mxu0 0.0
    %4864 = vmatprep.subr.mxu0 0.0
    %4865 = vmatpush1.msra.mxu0 0.0
    %4866 = vmatprep.subr.mxu0 0.0
    %4867 = vmatpush1.msra.mxu0 0.0
    %4868 = vmatprep.subr.mxu0 0.0
    %4869 = vmatpush1.msra.mxu0 0.0
    %4870 = vmatprep.mubr.f32.mxu0 0.0
    %4871 = vmatmul.mubr.f32.gmra.mrb[0].mxu0 %v4544
    %v4872 = vpop.f32.mrb[0].mxu0
    %v4873 = vadd.f32 0.0, %v4872
    %v4874 = vpop.f32.mrb[0].mxu0
    %v4875 = vadd.f32 0.0, %v4874
    %4876 = vdwg.mxu0
    %4877 = vmatprep.subr.mxu0 %v1391
    %4878 = vmatpush1.msra.mxu0 %v1390
    %4879 = vmatprep.subr.mxu0 %v1395
    %4880 = vmatpush1.msra.mxu0 %v1394
    %4881 = vmatprep.subr.mxu0 %v1399
    %4882 = vmatpush1.msra.mxu0 %v1398
    %4883 = vmatprep.subr.mxu0 %v1403
    %4884 = vmatpush1.msra.mxu0 %v1402
    %4885 = vmatprep.subr.mxu0 %v1407
    %4886 = vmatpush1.msra.mxu0 %v1406
    %4887 = vmatprep.subr.mxu0 %v1411
    %4888 = vmatpush1.msra.mxu0 %v1410
    %4889 = vmatprep.subr.mxu0 %v1415
    %4890 = vmatpush1.msra.mxu0 %v1414
    %4891 = vmatprep.subr.mxu0 %v1419
    %4892 = vmatpush1.msra.mxu0 %v1418
    %4893 = vmatprep.subr.mxu0 %v1423
    %4894 = vmatpush1.msra.mxu0 %v1422
    %4895 = vmatprep.subr.mxu0 %v1427
    %4896 = vmatpush1.msra.mxu0 %v1426
    %4897 = vmatprep.subr.mxu0 %v1431
    %4898 = vmatpush1.msra.mxu0 %v1430
    %4899 = vmatprep.subr.mxu0 %v1435
    %4900 = vmatpush1.msra.mxu0 %v1434
    %4901 = vmatprep.subr.mxu0 %v1439
    %4902 = vmatpush1.msra.mxu0 %v1438
    %4903 = vmatprep.subr.mxu0 %v1443
    %4904 = vmatpush1.msra.mxu0 %v1442
    %4905 = vmatprep.subr.mxu0 %v1447
    %4906 = vmatpush1.msra.mxu0 %v1446
    %4907 = vmatprep.subr.mxu0 %v1451
    %4908 = vmatpush1.msra.mxu0 %v1450
    %4909 = vmatprep.subr.mxu0 0.0
    %4910 = vmatpush1.msra.mxu0 0.0
    %4911 = vmatprep.subr.mxu0 0.0
    %4912 = vmatpush1.msra.mxu0 0.0
    %4913 = vmatprep.subr.mxu0 0.0
    %4914 = vmatpush1.msra.mxu0 0.0
    %4915 = vmatprep.subr.mxu0 0.0
    %4916 = vmatpush1.msra.mxu0 0.0
    %4917 = vmatprep.subr.mxu0 0.0
    %4918 = vmatpush1.msra.mxu0 0.0
    %4919 = vmatprep.subr.mxu0 0.0
    %4920 = vmatpush1.msra.mxu0 0.0
    %4921 = vmatprep.subr.mxu0 0.0
    %4922 = vmatpush1.msra.mxu0 0.0
    %4923 = vmatprep.subr.mxu0 0.0
    %4924 = vmatpush1.msra.mxu0 0.0
    %4925 = vmatprep.subr.mxu0 0.0
    %4926 = vmatpush1.msra.mxu0 0.0
    %4927 = vmatprep.subr.mxu0 0.0
    %4928 = vmatpush1.msra.mxu0 0.0
    %4929 = vmatprep.subr.mxu0 0.0
    %4930 = vmatpush1.msra.mxu0 0.0
    %4931 = vmatprep.subr.mxu0 0.0
    %4932 = vmatpush1.msra.mxu0 0.0
    %4933 = vmatprep.subr.mxu0 0.0
    %4934 = vmatpush1.msra.mxu0 0.0
    %4935 = vmatprep.subr.mxu0 0.0
    %4936 = vmatpush1.msra.mxu0 0.0
    %4937 = vmatprep.subr.mxu0 0.0
    %4938 = vmatpush1.msra.mxu0 0.0
    %4939 = vmatprep.subr.mxu0 0.0
    %4940 = vmatpush1.msra.mxu0 0.0
    %4941 = vmatprep.mubr.f32.mxu0 0.0
    %4942 = vmatmul.mubr.f32.gmra.mrb[0].mxu0 %v4734
    %v4943 = vpop.f32.mrb[0].mxu0
    %v4944 = vadd.f32 %v4802, %v4943
    %v4945 = vpop.f32.mrb[0].mxu0
    %v4946 = vadd.f32 %v4804, %v4945
    %4947 = vdwg.mxu0
    %4948 = vmatprep.subr.mxu0 %v1393
    %4949 = vmatpush1.msra.mxu0 %v1392
    %4950 = vmatprep.subr.mxu0 %v1397
    %4951 = vmatpush1.msra.mxu0 %v1396
    %4952 = vmatprep.subr.mxu0 %v1401
    %4953 = vmatpush1.msra.mxu0 %v1400
    %4954 = vmatprep.subr.mxu0 %v1405
    %4955 = vmatpush1.msra.mxu0 %v1404
    %4956 = vmatprep.subr.mxu0 %v1409
    %4957 = vmatpush1.msra.mxu0 %v1408
    %4958 = vmatprep.subr.mxu0 %v1413
    %4959 = vmatpush1.msra.mxu0 %v1412
    %4960 = vmatprep.subr.mxu0 %v1417
    %4961 = vmatpush1.msra.mxu0 %v1416
    %4962 = vmatprep.subr.mxu0 %v1421
    %4963 = vmatpush1.msra.mxu0 %v1420
    %4964 = vmatprep.subr.mxu0 %v1425
    %4965 = vmatpush1.msra.mxu0 %v1424
    %4966 = vmatprep.subr.mxu0 %v1429
    %4967 = vmatpush1.msra.mxu0 %v1428
    %4968 = vmatprep.subr.mxu0 %v1433
    %4969 = vmatpush1.msra.mxu0 %v1432
    %4970 = vmatprep.subr.mxu0 %v1437
    %4971 = vmatpush1.msra.mxu0 %v1436
    %4972 = vmatprep.subr.mxu0 %v1441
    %4973 = vmatpush1.msra.mxu0 %v1440
    %4974 = vmatprep.subr.mxu0 %v1445
    %4975 = vmatpush1.msra.mxu0 %v1444
    %4976 = vmatprep.subr.mxu0 %v1449
    %4977 = vmatpush1.msra.mxu0 %v1448
    %4978 = vmatprep.subr.mxu0 %v1453
    %4979 = vmatpush1.msra.mxu0 %v1452
    %4980 = vmatprep.subr.mxu0 0.0
    %4981 = vmatpush1.msra.mxu0 0.0
    %4982 = vmatprep.subr.mxu0 0.0
    %4983 = vmatpush1.msra.mxu0 0.0
    %4984 = vmatprep.subr.mxu0 0.0
    %4985 = vmatpush1.msra.mxu0 0.0
    %4986 = vmatprep.subr.mxu0 0.0
    %4987 = vmatpush1.msra.mxu0 0.0
    %4988 = vmatprep.subr.mxu0 0.0
    %4989 = vmatpush1.msra.mxu0 0.0
    %4990 = vmatprep.subr.mxu0 0.0
    %4991 = vmatpush1.msra.mxu0 0.0
    %4992 = vmatprep.subr.mxu0 0.0
    %4993 = vmatpush1.msra.mxu0 0.0
    %4994 = vmatprep.subr.mxu0 0.0
    %4995 = vmatpush1.msra.mxu0 0.0
    %4996 = vmatprep.subr.mxu0 0.0
    %4997 = vmatpush1.msra.mxu0 0.0
    %4998 = vmatprep.subr.mxu0 0.0
    %4999 = vmatpush1.msra.mxu0 0.0
    %5000 = vmatprep.subr.mxu0 0.0
    %5001 = vmatpush1.msra.mxu0 0.0
    %5002 = vmatprep.subr.mxu0 0.0
    %5003 = vmatpush1.msra.mxu0 0.0
    %5004 = vmatprep.subr.mxu0 0.0
    %5005 = vmatpush1.msra.mxu0 0.0
    %5006 = vmatprep.subr.mxu0 0.0
    %5007 = vmatpush1.msra.mxu0 0.0
    %5008 = vmatprep.subr.mxu0 0.0
    %5009 = vmatpush1.msra.mxu0 0.0
    %5010 = vmatprep.subr.mxu0 0.0
    %5011 = vmatpush1.msra.mxu0 0.0
    %5012 = vmatprep.mubr.f32.mxu0 0.0
    %5013 = vmatmul.mubr.f32.gmra.mrb[0].mxu0 %v4734
    %v5014 = vpop.f32.mrb[0].mxu0
    %v5015 = vadd.f32 %v4873, %v5014
    %v5016 = vpop.f32.mrb[0].mxu0
    %v5017 = vadd.f32 %v4875, %v5016
    %5018 = vdwg.mxu0
    %v5019 = vadd.f32 %v4944, %v1994
    %v5020 = vadd.f32 %v4946, %v1998
    %v5021 = vadd.f32 %v5015, %v2002
    %v5022 = vadd.f32 %v5017, %v2006
    %v5023 = vxor.u32 %v5019, 2147483648
    %v5024 = vmul.f32 %v5023, 1.442695
    %v5025 = vpow.pop %v5024
    %v5026 = vadd.f32 %v5025, 1.0
    %v5027 = vrcp.pop %v5026
    %v5028 = vmul.f32 1.0, %v5027
    %v5029 = vxor.u32 %v5020, 2147483648
    %v5030 = vmul.f32 %v5029, 1.442695
    %v5031 = vpow.pop %v5030
    %v5032 = vadd.f32 %v5031, 1.0
    %v5033 = vrcp.pop %v5032
    %v5034 = vmul.f32 1.0, %v5033
    %v5035 = vtanh.pop %v5021
    %v5036 = vxor.u32 %v5022, 2147483648
    %v5037 = vmul.f32 %v5036, 1.442695
    %v5038 = vpow.pop %v5037
    %v5039 = vadd.f32 %v5038, 1.0
    %v5040 = vrcp.pop %v5039
    %v5041 = vmul.f32 1.0, %v5040
    %v5042 = vmul.f32 %v5034, %v4542
    %v5043 = vmul.f32 %v5028, %v5035
    %v5044 = vadd.f32 %v5042, %v5043
    %v5045 = vtanh.pop %v5044
    %v5046 = vmul.f32 %v5041, %v5045
    %v5047 = vrot.slane %v1047, 7
    %v5048 = vrot.slane %v1049, 7
    %v5049 = vrot.slane %v1124, 7
    %v5050 = vrot.slane %v1126, 7
    %v5055 = vrot.slane %v1239, 6
    %v5056 = vrot.slane %v1241, 6
    %v5057 = vrot.slane %v1316, 6
    %v5058 = vrot.slane %v1318, 6
    %v5063 = vsel %vm1531, %v5047, %v5055
    %v5064 = vsel %vm1531, %v5048, %v5056
    %v5065 = vsel %vm1531, %v5049, %v5057
    %v5066 = vsel %vm1531, %v5050, %v5058
    %5067 = vmatprep.subr.mxu0 %v1327
    %5068 = vmatpush1.msra.mxu0 %v1326
    %5069 = vmatprep.subr.mxu0 %v1331
    %5070 = vmatpush1.msra.mxu0 %v1330
    %5071 = vmatprep.subr.mxu0 %v1335
    %5072 = vmatpush1.msra.mxu0 %v1334
    %5073 = vmatprep.subr.mxu0 %v1339
    %5074 = vmatpush1.msra.mxu0 %v1338
    %5075 = vmatprep.subr.mxu0 %v1343
    %5076 = vmatpush1.msra.mxu0 %v1342
    %5077 = vmatprep.subr.mxu0 %v1347
    %5078 = vmatpush1.msra.mxu0 %v1346
    %5079 = vmatprep.subr.mxu0 %v1351
    %5080 = vmatpush1.msra.mxu0 %v1350
    %5081 = vmatprep.subr.mxu0 %v1355
    %5082 = vmatpush1.msra.mxu0 %v1354
    %5083 = vmatprep.subr.mxu0 %v1359
    %5084 = vmatpush1.msra.mxu0 %v1358
    %5085 = vmatprep.subr.mxu0 %v1363
    %5086 = vmatpush1.msra.mxu0 %v1362
    %5087 = vmatprep.subr.mxu0 %v1367
    %5088 = vmatpush1.msra.mxu0 %v1366
    %5089 = vmatprep.subr.mxu0 %v1371
    %5090 = vmatpush1.msra.mxu0 %v1370
    %5091 = vmatprep.subr.mxu0 %v1375
    %5092 = vmatpush1.msra.mxu0 %v1374
    %5093 = vmatprep.subr.mxu0 %v1379
    %5094 = vmatpush1.msra.mxu0 %v1378
    %5095 = vmatprep.subr.mxu0 %v1383
    %5096 = vmatpush1.msra.mxu0 %v1382
    %5097 = vmatprep.subr.mxu0 %v1387
    %5098 = vmatpush1.msra.mxu0 %v1386
    %5099 = vmatprep.subr.mxu0 0.0
    %5100 = vmatpush1.msra.mxu0 0.0
    %5101 = vmatprep.subr.mxu0 0.0
    %5102 = vmatpush1.msra.mxu0 0.0
    %5103 = vmatprep.subr.mxu0 0.0
    %5104 = vmatpush1.msra.mxu0 0.0
    %5105 = vmatprep.subr.mxu0 0.0
    %5106 = vmatpush1.msra.mxu0 0.0
    %5107 = vmatprep.subr.mxu0 0.0
    %5108 = vmatpush1.msra.mxu0 0.0
    %5109 = vmatprep.subr.mxu0 0.0
    %5110 = vmatpush1.msra.mxu0 0.0
    %5111 = vmatprep.subr.mxu0 0.0
    %5112 = vmatpush1.msra.mxu0 0.0
    %5113 = vmatprep.subr.mxu0 0.0
    %5114 = vmatpush1.msra.mxu0 0.0
    %5115 = vmatprep.subr.mxu0 0.0
    %5116 = vmatpush1.msra.mxu0 0.0
    %5117 = vmatprep.subr.mxu0 0.0
    %5118 = vmatpush1.msra.mxu0 0.0
    %5119 = vmatprep.subr.mxu0 0.0
    %5120 = vmatpush1.msra.mxu0 0.0
    %5121 = vmatprep.subr.mxu0 0.0
    %5122 = vmatpush1.msra.mxu0 0.0
    %5123 = vmatprep.subr.mxu0 0.0
    %5124 = vmatpush1.msra.mxu0 0.0
    %5125 = vmatprep.subr.mxu0 0.0
    %5126 = vmatpush1.msra.mxu0 0.0
    %5127 = vmatprep.subr.mxu0 0.0
    %5128 = vmatpush1.msra.mxu0 0.0
    %5129 = vmatprep.subr.mxu0 0.0
    %5130 = vmatpush1.msra.mxu0 0.0
    %5131 = vmatprep.mubr.f32.mxu0 0.0
    %5132 = vmatmul.mubr.f32.gmra.mrb[0].mxu0 %v4734
    %v5133 = vpop.f32.mrb[0].mxu0
    %v5134 = vadd.f32 0.0, %v5133
    %v5135 = vpop.f32.mrb[0].mxu0
    %v5136 = vadd.f32 0.0, %v5135
    %5137 = vdwg.mxu0
    %5138 = vmatprep.subr.mxu0 %v1329
    %5139 = vmatpush1.msra.mxu0 %v1328
    %5140 = vmatprep.subr.mxu0 %v1333
    %5141 = vmatpush1.msra.mxu0 %v1332
    %5142 = vmatprep.subr.mxu0 %v1337
    %5143 = vmatpush1.msra.mxu0 %v1336
    %5144 = vmatprep.subr.mxu0 %v1341
    %5145 = vmatpush1.msra.mxu0 %v1340
    %5146 = vmatprep.subr.mxu0 %v1345
    %5147 = vmatpush1.msra.mxu0 %v1344
    %5148 = vmatprep.subr.mxu0 %v1349
    %5149 = vmatpush1.msra.mxu0 %v1348
    %5150 = vmatprep.subr.mxu0 %v1353
    %5151 = vmatpush1.msra.mxu0 %v1352
    %5152 = vmatprep.subr.mxu0 %v1357
    %5153 = vmatpush1.msra.mxu0 %v1356
    %5154 = vmatprep.subr.mxu0 %v1361
    %5155 = vmatpush1.msra.mxu0 %v1360
    %5156 = vmatprep.subr.mxu0 %v1365
    %5157 = vmatpush1.msra.mxu0 %v1364
    %5158 = vmatprep.subr.mxu0 %v1369
    %5159 = vmatpush1.msra.mxu0 %v1368
    %5160 = vmatprep.subr.mxu0 %v1373
    %5161 = vmatpush1.msra.mxu0 %v1372
    %5162 = vmatprep.subr.mxu0 %v1377
    %5163 = vmatpush1.msra.mxu0 %v1376
    %5164 = vmatprep.subr.mxu0 %v1381
    %5165 = vmatpush1.msra.mxu0 %v1380
    %5166 = vmatprep.subr.mxu0 %v1385
    %5167 = vmatpush1.msra.mxu0 %v1384
    %5168 = vmatprep.subr.mxu0 %v1389
    %5169 = vmatpush1.msra.mxu0 %v1388
    %5170 = vmatprep.subr.mxu0 0.0
    %5171 = vmatpush1.msra.mxu0 0.0
    %5172 = vmatprep.subr.mxu0 0.0
    %5173 = vmatpush1.msra.mxu0 0.0
    %5174 = vmatprep.subr.mxu0 0.0
    %5175 = vmatpush1.msra.mxu0 0.0
    %5176 = vmatprep.subr.mxu0 0.0
    %5177 = vmatpush1.msra.mxu0 0.0
    %5178 = vmatprep.subr.mxu0 0.0
    %5179 = vmatpush1.msra.mxu0 0.0
    %5180 = vmatprep.subr.mxu0 0.0
    %5181 = vmatpush1.msra.mxu0 0.0
    %5182 = vmatprep.subr.mxu0 0.0
    %5183 = vmatpush1.msra.mxu0 0.0
    %5184 = vmatprep.subr.mxu0 0.0
    %5185 = vmatpush1.msra.mxu0 0.0
    %5186 = vmatprep.subr.mxu0 0.0
    %5187 = vmatpush1.msra.mxu0 0.0
    %5188 = vmatprep.subr.mxu0 0.0
    %5189 = vmatpush1.msra.mxu0 0.0
    %5190 = vmatprep.subr.mxu0 0.0
    %5191 = vmatpush1.msra.mxu0 0.0
    %5192 = vmatprep.subr.mxu0 0.0
    %5193 = vmatpush1.msra.mxu0 0.0
    %5194 = vmatprep.subr.mxu0 0.0
    %5195 = vmatpush1.msra.mxu0 0.0
    %5196 = vmatprep.subr.mxu0 0.0
    %5197 = vmatpush1.msra.mxu0 0.0
    %5198 = vmatprep.subr.mxu0 0.0
    %5199 = vmatpush1.msra.mxu0 0.0
    %5200 = vmatprep.subr.mxu0 0.0
    %5201 = vmatpush1.msra.mxu0 0.0
    %5202 = vmatprep.mubr.f32.mxu0 0.0
    %5203 = vmatmul.mubr.f32.gmra.mrb[0].mxu0 %v4734
    %v5204 = vpop.f32.mrb[0].mxu0
    %v5205 = vadd.f32 0.0, %v5204
    %v5206 = vpop.f32.mrb[0].mxu0
    %v5207 = vadd.f32 0.0, %v5206
    %5208 = vdwg.mxu0
    %v5209 = vadd.f32 %v5063, %v5134
    %v5210 = vadd.f32 %v5064, %v5136
    %v5211 = vadd.f32 %v5065, %v5205
    %v5212 = vadd.f32 %v5066, %v5207
    %v5213 = vxor.u32 %v5209, 2147483648
    %v5214 = vmul.f32 %v5213, 1.442695
    %v5215 = vpow.pop %v5214
    %v5216 = vadd.f32 %v5215, 1.0
    %v5217 = vrcp.pop %v5216
    %v5218 = vmul.f32 1.0, %v5217
    %v5219 = vxor.u32 %v5210, 2147483648
    %v5220 = vmul.f32 %v5219, 1.442695
    %v5221 = vpow.pop %v5220
    %v5222 = vadd.f32 %v5221, 1.0
    %v5223 = vrcp.pop %v5222
    %v5224 = vmul.f32 1.0, %v5223
    %v5225 = vtanh.pop %v5211
    %v5226 = vxor.u32 %v5212, 2147483648
    %v5227 = vmul.f32 %v5226, 1.442695
    %v5228 = vpow.pop %v5227
    %v5229 = vadd.f32 %v5228, 1.0
    %v5230 = vrcp.pop %v5229
    %v5231 = vmul.f32 1.0, %v5230
    %v5232 = vmul.f32 %v5224, %v4732
    %v5233 = vmul.f32 %v5218, %v5225
    %v5234 = vadd.f32 %v5232, %v5233
    %v5235 = vtanh.pop %v5234
    %v5236 = vmul.f32 %v5231, %v5235
    %5237 = vmatprep.subr.mxu0 %v1455
    %5238 = vmatpush1.msra.mxu0 %v1454
    %5239 = vmatprep.subr.mxu0 %v1459
    %5240 = vmatpush1.msra.mxu0 %v1458
    %5241 = vmatprep.subr.mxu0 %v1463
    %5242 = vmatpush1.msra.mxu0 %v1462
    %5243 = vmatprep.subr.mxu0 %v1467
    %5244 = vmatpush1.msra.mxu0 %v1466
    %5245 = vmatprep.subr.mxu0 %v1471
    %5246 = vmatpush1.msra.mxu0 %v1470
    %5247 = vmatprep.subr.mxu0 %v1475
    %5248 = vmatpush1.msra.mxu0 %v1474
    %5249 = vmatprep.subr.mxu0 %v1479
    %5250 = vmatpush1.msra.mxu0 %v1478
    %5251 = vmatprep.subr.mxu0 %v1483
    %5252 = vmatpush1.msra.mxu0 %v1482
    %5253 = vmatprep.subr.mxu0 %v1487
    %5254 = vmatpush1.msra.mxu0 %v1486
    %5255 = vmatprep.subr.mxu0 %v1491
    %5256 = vmatpush1.msra.mxu0 %v1490
    %5257 = vmatprep.subr.mxu0 %v1495
    %5258 = vmatpush1.msra.mxu0 %v1494
    %5259 = vmatprep.subr.mxu0 %v1499
    %5260 = vmatpush1.msra.mxu0 %v1498
    %5261 = vmatprep.subr.mxu0 %v1503
    %5262 = vmatpush1.msra.mxu0 %v1502
    %5263 = vmatprep.subr.mxu0 %v1507
    %5264 = vmatpush1.msra.mxu0 %v1506
    %5265 = vmatprep.subr.mxu0 %v1511
    %5266 = vmatpush1.msra.mxu0 %v1510
    %5267 = vmatprep.subr.mxu0 %v1515
    %5268 = vmatpush1.msra.mxu0 %v1514
    %5269 = vmatprep.subr.mxu0 0.0
    %5270 = vmatpush1.msra.mxu0 0.0
    %5271 = vmatprep.subr.mxu0 0.0
    %5272 = vmatpush1.msra.mxu0 0.0
    %5273 = vmatprep.subr.mxu0 0.0
    %5274 = vmatpush1.msra.mxu0 0.0
    %5275 = vmatprep.subr.mxu0 0.0
    %5276 = vmatpush1.msra.mxu0 0.0
    %5277 = vmatprep.subr.mxu0 0.0
    %5278 = vmatpush1.msra.mxu0 0.0
    %5279 = vmatprep.subr.mxu0 0.0
    %5280 = vmatpush1.msra.mxu0 0.0
    %5281 = vmatprep.subr.mxu0 0.0
    %5282 = vmatpush1.msra.mxu0 0.0
    %5283 = vmatprep.subr.mxu0 0.0
    %5284 = vmatpush1.msra.mxu0 0.0
    %5285 = vmatprep.subr.mxu0 0.0
    %5286 = vmatpush1.msra.mxu0 0.0
    %5287 = vmatprep.subr.mxu0 0.0
    %5288 = vmatpush1.msra.mxu0 0.0
    %5289 = vmatprep.subr.mxu0 0.0
    %5290 = vmatpush1.msra.mxu0 0.0
    %5291 = vmatprep.subr.mxu0 0.0
    %5292 = vmatpush1.msra.mxu0 0.0
    %5293 = vmatprep.subr.mxu0 0.0
    %5294 = vmatpush1.msra.mxu0 0.0
    %5295 = vmatprep.subr.mxu0 0.0
    %5296 = vmatpush1.msra.mxu0 0.0
    %5297 = vmatprep.subr.mxu0 0.0
    %5298 = vmatpush1.msra.mxu0 0.0
    %5299 = vmatprep.subr.mxu0 0.0
    %5300 = vmatpush1.msra.mxu0 0.0
    %5301 = vmatprep.mubr.f32.mxu0 0.0
    %5302 = vmatmul.mubr.f32.gmra.mrb[0].mxu0 %v5046
    %v5303 = vpop.f32.mrb[0].mxu0
    %v5304 = vadd.f32 0.0, %v5303
    %v5305 = vpop.f32.mrb[0].mxu0
    %v5306 = vadd.f32 0.0, %v5305
    %5307 = vdwg.mxu0
    %5308 = vmatprep.subr.mxu0 %v1457
    %5309 = vmatpush1.msra.mxu0 %v1456
    %5310 = vmatprep.subr.mxu0 %v1461
    %5311 = vmatpush1.msra.mxu0 %v1460
    %5312 = vmatprep.subr.mxu0 %v1465
    %5313 = vmatpush1.msra.mxu0 %v1464
    %5314 = vmatprep.subr.mxu0 %v1469
    %5315 = vmatpush1.msra.mxu0 %v1468
    %5316 = vmatprep.subr.mxu0 %v1473
    %5317 = vmatpush1.msra.mxu0 %v1472
    %5318 = vmatprep.subr.mxu0 %v1477
    %5319 = vmatpush1.msra.mxu0 %v1476
    %5320 = vmatprep.subr.mxu0 %v1481
    %5321 = vmatpush1.msra.mxu0 %v1480
    %5322 = vmatprep.subr.mxu0 %v1485
    %5323 = vmatpush1.msra.mxu0 %v1484
    %5324 = vmatprep.subr.mxu0 %v1489
    %5325 = vmatpush1.msra.mxu0 %v1488
    %5326 = vmatprep.subr.mxu0 %v1493
    %5327 = vmatpush1.msra.mxu0 %v1492
    %5328 = vmatprep.subr.mxu0 %v1497
    %5329 = vmatpush1.msra.mxu0 %v1496
    %5330 = vmatprep.subr.mxu0 %v1501
    %5331 = vmatpush1.msra.mxu0 %v1500
    %5332 = vmatprep.subr.mxu0 %v1505
    %5333 = vmatpush1.msra.mxu0 %v1504
    %5334 = vmatprep.subr.mxu0 %v1509
    %5335 = vmatpush1.msra.mxu0 %v1508
    %5336 = vmatprep.subr.mxu0 %v1513
    %5337 = vmatpush1.msra.mxu0 %v1512
    %5338 = vmatprep.subr.mxu0 %v1517
    %5339 = vmatpush1.msra.mxu0 %v1516
    %5340 = vmatprep.subr.mxu0 0.0
    %5341 = vmatpush1.msra.mxu0 0.0
    %5342 = vmatprep.subr.mxu0 0.0
    %5343 = vmatpush1.msra.mxu0 0.0
    %5344 = vmatprep.subr.mxu0 0.0
    %5345 = vmatpush1.msra.mxu0 0.0
    %5346 = vmatprep.subr.mxu0 0.0
    %5347 = vmatpush1.msra.mxu0 0.0
    %5348 = vmatprep.subr.mxu0 0.0
    %5349 = vmatpush1.msra.mxu0 0.0
    %5350 = vmatprep.subr.mxu0 0.0
    %5351 = vmatpush1.msra.mxu0 0.0
    %5352 = vmatprep.subr.mxu0 0.0
    %5353 = vmatpush1.msra.mxu0 0.0
    %5354 = vmatprep.subr.mxu0 0.0
    %5355 = vmatpush1.msra.mxu0 0.0
    %5356 = vmatprep.subr.mxu0 0.0
    %5357 = vmatpush1.msra.mxu0 0.0
    %5358 = vmatprep.subr.mxu0 0.0
    %5359 = vmatpush1.msra.mxu0 0.0
    %5360 = vmatprep.subr.mxu0 0.0
    %5361 = vmatpush1.msra.mxu0 0.0
    %5362 = vmatprep.subr.mxu0 0.0
    %5363 = vmatpush1.msra.mxu0 0.0
    %5364 = vmatprep.subr.mxu0 0.0
    %5365 = vmatpush1.msra.mxu0 0.0
    %5366 = vmatprep.subr.mxu0 0.0
    %5367 = vmatpush1.msra.mxu0 0.0
    %5368 = vmatprep.subr.mxu0 0.0
    %5369 = vmatpush1.msra.mxu0 0.0
    %5370 = vmatprep.subr.mxu0 0.0
    %5371 = vmatpush1.msra.mxu0 0.0
    %5372 = vmatprep.mubr.f32.mxu0 0.0
    %5373 = vmatmul.mubr.f32.gmra.mrb[0].mxu0 %v5046
    %v5374 = vpop.f32.mrb[0].mxu0
    %v5375 = vadd.f32 0.0, %v5374
    %v5376 = vpop.f32.mrb[0].mxu0
    %v5377 = vadd.f32 0.0, %v5376
    %5378 = vdwg.mxu0
    %5379 = vmatprep.subr.mxu0 %v1391
    %5380 = vmatpush1.msra.mxu0 %v1390
    %5381 = vmatprep.subr.mxu0 %v1395
    %5382 = vmatpush1.msra.mxu0 %v1394
    %5383 = vmatprep.subr.mxu0 %v1399
    %5384 = vmatpush1.msra.mxu0 %v1398
    %5385 = vmatprep.subr.mxu0 %v1403
    %5386 = vmatpush1.msra.mxu0 %v1402
    %5387 = vmatprep.subr.mxu0 %v1407
    %5388 = vmatpush1.msra.mxu0 %v1406
    %5389 = vmatprep.subr.mxu0 %v1411
    %5390 = vmatpush1.msra.mxu0 %v1410
    %5391 = vmatprep.subr.mxu0 %v1415
    %5392 = vmatpush1.msra.mxu0 %v1414
    %5393 = vmatprep.subr.mxu0 %v1419
    %5394 = vmatpush1.msra.mxu0 %v1418
    %5395 = vmatprep.subr.mxu0 %v1423
    %5396 = vmatpush1.msra.mxu0 %v1422
    %5397 = vmatprep.subr.mxu0 %v1427
    %5398 = vmatpush1.msra.mxu0 %v1426
    %5399 = vmatprep.subr.mxu0 %v1431
    %5400 = vmatpush1.msra.mxu0 %v1430
    %5401 = vmatprep.subr.mxu0 %v1435
    %5402 = vmatpush1.msra.mxu0 %v1434
    %5403 = vmatprep.subr.mxu0 %v1439
    %5404 = vmatpush1.msra.mxu0 %v1438
    %5405 = vmatprep.subr.mxu0 %v1443
    %5406 = vmatpush1.msra.mxu0 %v1442
    %5407 = vmatprep.subr.mxu0 %v1447
    %5408 = vmatpush1.msra.mxu0 %v1446
    %5409 = vmatprep.subr.mxu0 %v1451
    %5410 = vmatpush1.msra.mxu0 %v1450
    %5411 = vmatprep.subr.mxu0 0.0
    %5412 = vmatpush1.msra.mxu0 0.0
    %5413 = vmatprep.subr.mxu0 0.0
    %5414 = vmatpush1.msra.mxu0 0.0
    %5415 = vmatprep.subr.mxu0 0.0
    %5416 = vmatpush1.msra.mxu0 0.0
    %5417 = vmatprep.subr.mxu0 0.0
    %5418 = vmatpush1.msra.mxu0 0.0
    %5419 = vmatprep.subr.mxu0 0.0
    %5420 = vmatpush1.msra.mxu0 0.0
    %5421 = vmatprep.subr.mxu0 0.0
    %5422 = vmatpush1.msra.mxu0 0.0
    %5423 = vmatprep.subr.mxu0 0.0
    %5424 = vmatpush1.msra.mxu0 0.0
    %5425 = vmatprep.subr.mxu0 0.0
    %5426 = vmatpush1.msra.mxu0 0.0
    %5427 = vmatprep.subr.mxu0 0.0
    %5428 = vmatpush1.msra.mxu0 0.0
    %5429 = vmatprep.subr.mxu0 0.0
    %5430 = vmatpush1.msra.mxu0 0.0
    %5431 = vmatprep.subr.mxu0 0.0
    %5432 = vmatpush1.msra.mxu0 0.0
    %5433 = vmatprep.subr.mxu0 0.0
    %5434 = vmatpush1.msra.mxu0 0.0
    %5435 = vmatprep.subr.mxu0 0.0
    %5436 = vmatpush1.msra.mxu0 0.0
    %5437 = vmatprep.subr.mxu0 0.0
    %5438 = vmatpush1.msra.mxu0 0.0
    %5439 = vmatprep.subr.mxu0 0.0
    %5440 = vmatpush1.msra.mxu0 0.0
    %5441 = vmatprep.subr.mxu0 0.0
    %5442 = vmatpush1.msra.mxu0 0.0
    %5443 = vmatprep.mubr.f32.mxu0 0.0
    %5444 = vmatmul.mubr.f32.gmra.mrb[0].mxu0 %v5236
    %v5445 = vpop.f32.mrb[0].mxu0
    %v5446 = vadd.f32 %v5304, %v5445
    %v5447 = vpop.f32.mrb[0].mxu0
    %v5448 = vadd.f32 %v5306, %v5447
    %5449 = vdwg.mxu0
    %5450 = vmatprep.subr.mxu0 %v1393
    %5451 = vmatpush1.msra.mxu0 %v1392
    %5452 = vmatprep.subr.mxu0 %v1397
    %5453 = vmatpush1.msra.mxu0 %v1396
    %5454 = vmatprep.subr.mxu0 %v1401
    %5455 = vmatpush1.msra.mxu0 %v1400
    %5456 = vmatprep.subr.mxu0 %v1405
    %5457 = vmatpush1.msra.mxu0 %v1404
    %5458 = vmatprep.subr.mxu0 %v1409
    %5459 = vmatpush1.msra.mxu0 %v1408
    %5460 = vmatprep.subr.mxu0 %v1413
    %5461 = vmatpush1.msra.mxu0 %v1412
    %5462 = vmatprep.subr.mxu0 %v1417
    %5463 = vmatpush1.msra.mxu0 %v1416
    %5464 = vmatprep.subr.mxu0 %v1421
    %5465 = vmatpush1.msra.mxu0 %v1420
    %5466 = vmatprep.subr.mxu0 %v1425
    %5467 = vmatpush1.msra.mxu0 %v1424
    %5468 = vmatprep.subr.mxu0 %v1429
    %5469 = vmatpush1.msra.mxu0 %v1428
    %5470 = vmatprep.subr.mxu0 %v1433
    %5471 = vmatpush1.msra.mxu0 %v1432
    %5472 = vmatprep.subr.mxu0 %v1437
    %5473 = vmatpush1.msra.mxu0 %v1436
    %5474 = vmatprep.subr.mxu0 %v1441
    %5475 = vmatpush1.msra.mxu0 %v1440
    %5476 = vmatprep.subr.mxu0 %v1445
    %5477 = vmatpush1.msra.mxu0 %v1444
    %5478 = vmatprep.subr.mxu0 %v1449
    %5479 = vmatpush1.msra.mxu0 %v1448
    %5480 = vmatprep.subr.mxu0 %v1453
    %5481 = vmatpush1.msra.mxu0 %v1452
    %5482 = vmatprep.subr.mxu0 0.0
    %5483 = vmatpush1.msra.mxu0 0.0
    %5484 = vmatprep.subr.mxu0 0.0
    %5485 = vmatpush1.msra.mxu0 0.0
    %5486 = vmatprep.subr.mxu0 0.0
    %5487 = vmatpush1.msra.mxu0 0.0
    %5488 = vmatprep.subr.mxu0 0.0
    %5489 = vmatpush1.msra.mxu0 0.0
    %5490 = vmatprep.subr.mxu0 0.0
    %5491 = vmatpush1.msra.mxu0 0.0
    %5492 = vmatprep.subr.mxu0 0.0
    %5493 = vmatpush1.msra.mxu0 0.0
    %5494 = vmatprep.subr.mxu0 0.0
    %5495 = vmatpush1.msra.mxu0 0.0
    %5496 = vmatprep.subr.mxu0 0.0
    %5497 = vmatpush1.msra.mxu0 0.0
    %5498 = vmatprep.subr.mxu0 0.0
    %5499 = vmatpush1.msra.mxu0 0.0
    %5500 = vmatprep.subr.mxu0 0.0
    %5501 = vmatpush1.msra.mxu0 0.0
    %5502 = vmatprep.subr.mxu0 0.0
    %5503 = vmatpush1.msra.mxu0 0.0
    %5504 = vmatprep.subr.mxu0 0.0
    %5505 = vmatpush1.msra.mxu0 0.0
    %5506 = vmatprep.subr.mxu0 0.0
    %5507 = vmatpush1.msra.mxu0 0.0
    %5508 = vmatprep.subr.mxu0 0.0
    %5509 = vmatpush1.msra.mxu0 0.0
    %5510 = vmatprep.subr.mxu0 0.0
    %5511 = vmatpush1.msra.mxu0 0.0
    %5512 = vmatprep.subr.mxu0 0.0
    %5513 = vmatpush1.msra.mxu0 0.0
    %5514 = vmatprep.mubr.f32.mxu0 0.0
    %5515 = vmatmul.mubr.f32.gmra.mrb[0].mxu0 %v5236
    %v5516 = vpop.f32.mrb[0].mxu0
    %v5517 = vadd.f32 %v5375, %v5516
    %v5518 = vpop.f32.mrb[0].mxu0
    %v5519 = vadd.f32 %v5377, %v5518
    %5520 = vdwg.mxu0
    %v5521 = vadd.f32 %v5446, %v1994
    %v5522 = vadd.f32 %v5448, %v1998
    %v5523 = vadd.f32 %v5517, %v2002
    %v5524 = vadd.f32 %v5519, %v2006
    %v5525 = vxor.u32 %v5521, 2147483648
    %v5526 = vmul.f32 %v5525, 1.442695
    %v5527 = vpow.pop %v5526
    %v5528 = vadd.f32 %v5527, 1.0
    %v5529 = vrcp.pop %v5528
    %v5530 = vmul.f32 1.0, %v5529
    %v5531 = vxor.u32 %v5522, 2147483648
    %v5532 = vmul.f32 %v5531, 1.442695
    %v5533 = vpow.pop %v5532
    %v5534 = vadd.f32 %v5533, 1.0
    %v5535 = vrcp.pop %v5534
    %v5536 = vmul.f32 1.0, %v5535
    %v5537 = vtanh.pop %v5523
    %v5538 = vxor.u32 %v5524, 2147483648
    %v5539 = vmul.f32 %v5538, 1.442695
    %v5540 = vpow.pop %v5539
    %v5541 = vadd.f32 %v5540, 1.0
    %v5542 = vrcp.pop %v5541
    %v5543 = vmul.f32 1.0, %v5542
    %v5544 = vmul.f32 %v5536, %v5044
    %v5545 = vmul.f32 %v5530, %v5537
    %v5546 = vadd.f32 %v5544, %v5545
    %v5547 = vtanh.pop %v5546
    %v5548 = vmul.f32 %v5543, %v5547
    %v5553 = vrot.slane %v1245, 7
    %v5554 = vrot.slane %v1247, 7
    %v5555 = vrot.slane %v1322, 7
    %v5556 = vrot.slane %v1324, 7
    %v5561 = vsel %vm1531, %v1053, %v5553
    %v5562 = vsel %vm1531, %v1055, %v5554
    %v5563 = vsel %vm1531, %v1130, %v5555
    %v5564 = vsel %vm1531, %v1132, %v5556
    %5565 = vmatprep.subr.mxu0 %v1327
    %5566 = vmatpush1.msra.mxu0 %v1326
    %5567 = vmatprep.subr.mxu0 %v1331
    %5568 = vmatpush1.msra.mxu0 %v1330
    %5569 = vmatprep.subr.mxu0 %v1335
    %5570 = vmatpush1.msra.mxu0 %v1334
    %5571 = vmatprep.subr.mxu0 %v1339
    %5572 = vmatpush1.msra.mxu0 %v1338
    %5573 = vmatprep.subr.mxu0 %v1343
    %5574 = vmatpush1.msra.mxu0 %v1342
    %5575 = vmatprep.subr.mxu0 %v1347
    %5576 = vmatpush1.msra.mxu0 %v1346
    %5577 = vmatprep.subr.mxu0 %v1351
    %5578 = vmatpush1.msra.mxu0 %v1350
    %5579 = vmatprep.subr.mxu0 %v1355
    %5580 = vmatpush1.msra.mxu0 %v1354
    %5581 = vmatprep.subr.mxu0 %v1359
    %5582 = vmatpush1.msra.mxu0 %v1358
    %5583 = vmatprep.subr.mxu0 %v1363
    %5584 = vmatpush1.msra.mxu0 %v1362
    %5585 = vmatprep.subr.mxu0 %v1367
    %5586 = vmatpush1.msra.mxu0 %v1366
    %5587 = vmatprep.subr.mxu0 %v1371
    %5588 = vmatpush1.msra.mxu0 %v1370
    %5589 = vmatprep.subr.mxu0 %v1375
    %5590 = vmatpush1.msra.mxu0 %v1374
    %5591 = vmatprep.subr.mxu0 %v1379
    %5592 = vmatpush1.msra.mxu0 %v1378
    %5593 = vmatprep.subr.mxu0 %v1383
    %5594 = vmatpush1.msra.mxu0 %v1382
    %5595 = vmatprep.subr.mxu0 %v1387
    %5596 = vmatpush1.msra.mxu0 %v1386
    %5597 = vmatprep.subr.mxu0 0.0
    %5598 = vmatpush1.msra.mxu0 0.0
    %5599 = vmatprep.subr.mxu0 0.0
    %5600 = vmatpush1.msra.mxu0 0.0
    %5601 = vmatprep.subr.mxu0 0.0
    %5602 = vmatpush1.msra.mxu0 0.0
    %5603 = vmatprep.subr.mxu0 0.0
    %5604 = vmatpush1.msra.mxu0 0.0
    %5605 = vmatprep.subr.mxu0 0.0
    %5606 = vmatpush1.msra.mxu0 0.0
    %5607 = vmatprep.subr.mxu0 0.0
    %5608 = vmatpush1.msra.mxu0 0.0
    %5609 = vmatprep.subr.mxu0 0.0
    %5610 = vmatpush1.msra.mxu0 0.0
    %5611 = vmatprep.subr.mxu0 0.0
    %5612 = vmatpush1.msra.mxu0 0.0
    %5613 = vmatprep.subr.mxu0 0.0
    %5614 = vmatpush1.msra.mxu0 0.0
    %5615 = vmatprep.subr.mxu0 0.0
    %5616 = vmatpush1.msra.mxu0 0.0
    %5617 = vmatprep.subr.mxu0 0.0
    %5618 = vmatpush1.msra.mxu0 0.0
    %5619 = vmatprep.subr.mxu0 0.0
    %5620 = vmatpush1.msra.mxu0 0.0
    %5621 = vmatprep.subr.mxu0 0.0
    %5622 = vmatpush1.msra.mxu0 0.0
    %5623 = vmatprep.subr.mxu0 0.0
    %5624 = vmatpush1.msra.mxu0 0.0
    %5625 = vmatprep.subr.mxu0 0.0
    %5626 = vmatpush1.msra.mxu0 0.0
    %5627 = vmatprep.subr.mxu0 0.0
    %5628 = vmatpush1.msra.mxu0 0.0
    %5629 = vmatprep.mubr.f32.mxu0 0.0
    %5630 = vmatmul.mubr.f32.gmra.mrb[0].mxu0 %v5236
    %v5631 = vpop.f32.mrb[0].mxu0
    %v5632 = vadd.f32 0.0, %v5631
    %v5633 = vpop.f32.mrb[0].mxu0
    %v5634 = vadd.f32 0.0, %v5633
    %5635 = vdwg.mxu0
    %5636 = vmatprep.subr.mxu0 %v1329
    %5637 = vmatpush1.msra.mxu0 %v1328
    %5638 = vmatprep.subr.mxu0 %v1333
    %5639 = vmatpush1.msra.mxu0 %v1332
    %5640 = vmatprep.subr.mxu0 %v1337
    %5641 = vmatpush1.msra.mxu0 %v1336
    %5642 = vmatprep.subr.mxu0 %v1341
    %5643 = vmatpush1.msra.mxu0 %v1340
    %5644 = vmatprep.subr.mxu0 %v1345
    %5645 = vmatpush1.msra.mxu0 %v1344
    %5646 = vmatprep.subr.mxu0 %v1349
    %5647 = vmatpush1.msra.mxu0 %v1348
    %5648 = vmatprep.subr.mxu0 %v1353
    %5649 = vmatpush1.msra.mxu0 %v1352
    %5650 = vmatprep.subr.mxu0 %v1357
    %5651 = vmatpush1.msra.mxu0 %v1356
    %5652 = vmatprep.subr.mxu0 %v1361
    %5653 = vmatpush1.msra.mxu0 %v1360
    %5654 = vmatprep.subr.mxu0 %v1365
    %5655 = vmatpush1.msra.mxu0 %v1364
    %5656 = vmatprep.subr.mxu0 %v1369
    %5657 = vmatpush1.msra.mxu0 %v1368
    %5658 = vmatprep.subr.mxu0 %v1373
    %5659 = vmatpush1.msra.mxu0 %v1372
    %5660 = vmatprep.subr.mxu0 %v1377
    %5661 = vmatpush1.msra.mxu0 %v1376
    %5662 = vmatprep.subr.mxu0 %v1381
    %5663 = vmatpush1.msra.mxu0 %v1380
    %5664 = vmatprep.subr.mxu0 %v1385
    %5665 = vmatpush1.msra.mxu0 %v1384
    %5666 = vmatprep.subr.mxu0 %v1389
    %5667 = vmatpush1.msra.mxu0 %v1388
    %5668 = vmatprep.subr.mxu0 0.0
    %5669 = vmatpush1.msra.mxu0 0.0
    %5670 = vmatprep.subr.mxu0 0.0
    %5671 = vmatpush1.msra.mxu0 0.0
    %5672 = vmatprep.subr.mxu0 0.0
    %5673 = vmatpush1.msra.mxu0 0.0
    %5674 = vmatprep.subr.mxu0 0.0
    %5675 = vmatpush1.msra.mxu0 0.0
    %5676 = vmatprep.subr.mxu0 0.0
    %5677 = vmatpush1.msra.mxu0 0.0
    %5678 = vmatprep.subr.mxu0 0.0
    %5679 = vmatpush1.msra.mxu0 0.0
    %5680 = vmatprep.subr.mxu0 0.0
    %5681 = vmatpush1.msra.mxu0 0.0
    %5682 = vmatprep.subr.mxu0 0.0
    %5683 = vmatpush1.msra.mxu0 0.0
    %5684 = vmatprep.subr.mxu0 0.0
    %5685 = vmatpush1.msra.mxu0 0.0
    %5686 = vmatprep.subr.mxu0 0.0
    %5687 = vmatpush1.msra.mxu0 0.0
    %5688 = vmatprep.subr.mxu0 0.0
    %5689 = vmatpush1.msra.mxu0 0.0
    %5690 = vmatprep.subr.mxu0 0.0
    %5691 = vmatpush1.msra.mxu0 0.0
    %5692 = vmatprep.subr.mxu0 0.0
    %5693 = vmatpush1.msra.mxu0 0.0
    %5694 = vmatprep.subr.mxu0 0.0
    %5695 = vmatpush1.msra.mxu0 0.0
    %5696 = vmatprep.subr.mxu0 0.0
    %5697 = vmatpush1.msra.mxu0 0.0
    %5698 = vmatprep.subr.mxu0 0.0
    %5699 = vmatpush1.msra.mxu0 0.0
    %5700 = vmatprep.mubr.f32.mxu0 0.0
    %5701 = vmatmul.mubr.f32.gmra.mrb[0].mxu0 %v5236
    %v5702 = vpop.f32.mrb[0].mxu0
    %v5703 = vadd.f32 0.0, %v5702
    %v5704 = vpop.f32.mrb[0].mxu0
    %v5705 = vadd.f32 0.0, %v5704
    %5706 = vdwg.mxu0
    %v5707 = vadd.f32 %v5561, %v5632
    %v5708 = vadd.f32 %v5562, %v5634
    %v5709 = vadd.f32 %v5563, %v5703
    %v5710 = vadd.f32 %v5564, %v5705
    %v5711 = vxor.u32 %v5707, 2147483648
    %v5712 = vmul.f32 %v5711, 1.442695
    %v5713 = vpow.pop %v5712
    %v5714 = vadd.f32 %v5713, 1.0
    %v5715 = vrcp.pop %v5714
    %v5716 = vmul.f32 1.0, %v5715
    %v5717 = vxor.u32 %v5708, 2147483648
    %v5718 = vmul.f32 %v5717, 1.442695
    %v5719 = vpow.pop %v5718
    %v5720 = vadd.f32 %v5719, 1.0
    %v5721 = vrcp.pop %v5720
    %v5722 = vmul.f32 1.0, %v5721
    %v5723 = vtanh.pop %v5709
    %v5724 = vxor.u32 %v5710, 2147483648
    %v5725 = vmul.f32 %v5724, 1.442695
    %v5726 = vpow.pop %v5725
    %v5727 = vadd.f32 %v5726, 1.0
    %v5728 = vrcp.pop %v5727
    %v5729 = vmul.f32 1.0, %v5728
    %v5730 = vmul.f32 %v5722, %v5234
    %v5731 = vmul.f32 %v5716, %v5723
    %v5732 = vadd.f32 %v5730, %v5731
    %v5733 = vtanh.pop %v5732
    %v5734 = vmul.f32 %v5729, %v5733
    %5735 = vmatprep.subr.mxu0 %v1455
    %5736 = vmatpush1.msra.mxu0 %v1454
    %5737 = vmatprep.subr.mxu0 %v1459
    %5738 = vmatpush1.msra.mxu0 %v1458
    %5739 = vmatprep.subr.mxu0 %v1463
    %5740 = vmatpush1.msra.mxu0 %v1462
    %5741 = vmatprep.subr.mxu0 %v1467
    %5742 = vmatpush1.msra.mxu0 %v1466
    %5743 = vmatprep.subr.mxu0 %v1471
    %5744 = vmatpush1.msra.mxu0 %v1470
    %5745 = vmatprep.subr.mxu0 %v1475
    %5746 = vmatpush1.msra.mxu0 %v1474
    %5747 = vmatprep.subr.mxu0 %v1479
    %5748 = vmatpush1.msra.mxu0 %v1478
    %5749 = vmatprep.subr.mxu0 %v1483
    %5750 = vmatpush1.msra.mxu0 %v1482
    %5751 = vmatprep.subr.mxu0 %v1487
    %5752 = vmatpush1.msra.mxu0 %v1486
    %5753 = vmatprep.subr.mxu0 %v1491
    %5754 = vmatpush1.msra.mxu0 %v1490
    %5755 = vmatprep.subr.mxu0 %v1495
    %5756 = vmatpush1.msra.mxu0 %v1494
    %5757 = vmatprep.subr.mxu0 %v1499
    %5758 = vmatpush1.msra.mxu0 %v1498
    %5759 = vmatprep.subr.mxu0 %v1503
    %5760 = vmatpush1.msra.mxu0 %v1502
    %5761 = vmatprep.subr.mxu0 %v1507
    %5762 = vmatpush1.msra.mxu0 %v1506
    %5763 = vmatprep.subr.mxu0 %v1511
    %5764 = vmatpush1.msra.mxu0 %v1510
    %5765 = vmatprep.subr.mxu0 %v1515
    %5766 = vmatpush1.msra.mxu0 %v1514
    %5767 = vmatprep.subr.mxu0 0.0
    %5768 = vmatpush1.msra.mxu0 0.0
    %5769 = vmatprep.subr.mxu0 0.0
    %5770 = vmatpush1.msra.mxu0 0.0
    %5771 = vmatprep.subr.mxu0 0.0
    %5772 = vmatpush1.msra.mxu0 0.0
    %5773 = vmatprep.subr.mxu0 0.0
    %5774 = vmatpush1.msra.mxu0 0.0
    %5775 = vmatprep.subr.mxu0 0.0
    %5776 = vmatpush1.msra.mxu0 0.0
    %5777 = vmatprep.subr.mxu0 0.0
    %5778 = vmatpush1.msra.mxu0 0.0
    %5779 = vmatprep.subr.mxu0 0.0
    %5780 = vmatpush1.msra.mxu0 0.0
    %5781 = vmatprep.subr.mxu0 0.0
    %5782 = vmatpush1.msra.mxu0 0.0
    %5783 = vmatprep.subr.mxu0 0.0
    %5784 = vmatpush1.msra.mxu0 0.0
    %5785 = vmatprep.subr.mxu0 0.0
    %5786 = vmatpush1.msra.mxu0 0.0
    %5787 = vmatprep.subr.mxu0 0.0
    %5788 = vmatpush1.msra.mxu0 0.0
    %5789 = vmatprep.subr.mxu0 0.0
    %5790 = vmatpush1.msra.mxu0 0.0
    %5791 = vmatprep.subr.mxu0 0.0
    %5792 = vmatpush1.msra.mxu0 0.0
    %5793 = vmatprep.subr.mxu0 0.0
    %5794 = vmatpush1.msra.mxu0 0.0
    %5795 = vmatprep.subr.mxu0 0.0
    %5796 = vmatpush1.msra.mxu0 0.0
    %5797 = vmatprep.subr.mxu0 0.0
    %5798 = vmatpush1.msra.mxu0 0.0
    %5799 = vmatprep.mubr.f32.mxu0 0.0
    %5800 = vmatmul.mubr.f32.gmra.mrb[0].mxu0 %v5548
    %v5801 = vpop.f32.mrb[0].mxu0
    %v5802 = vadd.f32 0.0, %v5801
    %v5803 = vpop.f32.mrb[0].mxu0
    %v5804 = vadd.f32 0.0, %v5803
    %5805 = vdwg.mxu0
    %5806 = vmatprep.subr.mxu0 %v1457
    %5807 = vmatpush1.msra.mxu0 %v1456
    %5808 = vmatprep.subr.mxu0 %v1461
    %5809 = vmatpush1.msra.mxu0 %v1460
    %5810 = vmatprep.subr.mxu0 %v1465
    %5811 = vmatpush1.msra.mxu0 %v1464
    %5812 = vmatprep.subr.mxu0 %v1469
    %5813 = vmatpush1.msra.mxu0 %v1468
    %5814 = vmatprep.subr.mxu0 %v1473
    %5815 = vmatpush1.msra.mxu0 %v1472
    %5816 = vmatprep.subr.mxu0 %v1477
    %5817 = vmatpush1.msra.mxu0 %v1476
    %5818 = vmatprep.subr.mxu0 %v1481
    %5819 = vmatpush1.msra.mxu0 %v1480
    %5820 = vmatprep.subr.mxu0 %v1485
    %5821 = vmatpush1.msra.mxu0 %v1484
    %5822 = vmatprep.subr.mxu0 %v1489
    %5823 = vmatpush1.msra.mxu0 %v1488
    %5824 = vmatprep.subr.mxu0 %v1493
    %5825 = vmatpush1.msra.mxu0 %v1492
    %5826 = vmatprep.subr.mxu0 %v1497
    %5827 = vmatpush1.msra.mxu0 %v1496
    %5828 = vmatprep.subr.mxu0 %v1501
    %5829 = vmatpush1.msra.mxu0 %v1500
    %5830 = vmatprep.subr.mxu0 %v1505
    %5831 = vmatpush1.msra.mxu0 %v1504
    %5832 = vmatprep.subr.mxu0 %v1509
    %5833 = vmatpush1.msra.mxu0 %v1508
    %5834 = vmatprep.subr.mxu0 %v1513
    %5835 = vmatpush1.msra.mxu0 %v1512
    %5836 = vmatprep.subr.mxu0 %v1517
    %5837 = vmatpush1.msra.mxu0 %v1516
    %5838 = vmatprep.subr.mxu0 0.0
    %5839 = vmatpush1.msra.mxu0 0.0
    %5840 = vmatprep.subr.mxu0 0.0
    %5841 = vmatpush1.msra.mxu0 0.0
    %5842 = vmatprep.subr.mxu0 0.0
    %5843 = vmatpush1.msra.mxu0 0.0
    %5844 = vmatprep.subr.mxu0 0.0
    %5845 = vmatpush1.msra.mxu0 0.0
    %5846 = vmatprep.subr.mxu0 0.0
    %5847 = vmatpush1.msra.mxu0 0.0
    %5848 = vmatprep.subr.mxu0 0.0
    %5849 = vmatpush1.msra.mxu0 0.0
    %5850 = vmatprep.subr.mxu0 0.0
    %5851 = vmatpush1.msra.mxu0 0.0
    %5852 = vmatprep.subr.mxu0 0.0
    %5853 = vmatpush1.msra.mxu0 0.0
    %5854 = vmatprep.subr.mxu0 0.0
    %5855 = vmatpush1.msra.mxu0 0.0
    %5856 = vmatprep.subr.mxu0 0.0
    %5857 = vmatpush1.msra.mxu0 0.0
    %5858 = vmatprep.subr.mxu0 0.0
    %5859 = vmatpush1.msra.mxu0 0.0
    %5860 = vmatprep.subr.mxu0 0.0
    %5861 = vmatpush1.msra.mxu0 0.0
    %5862 = vmatprep.subr.mxu0 0.0
    %5863 = vmatpush1.msra.mxu0 0.0
    %5864 = vmatprep.subr.mxu0 0.0
    %5865 = vmatpush1.msra.mxu0 0.0
    %5866 = vmatprep.subr.mxu0 0.0
    %5867 = vmatpush1.msra.mxu0 0.0
    %5868 = vmatprep.subr.mxu0 0.0
    %5869 = vmatpush1.msra.mxu0 0.0
    %5870 = vmatprep.mubr.f32.mxu0 0.0
    %5871 = vmatmul.mubr.f32.gmra.mrb[0].mxu0 %v5548
    %v5872 = vpop.f32.mrb[0].mxu0
    %v5873 = vadd.f32 0.0, %v5872
    %v5874 = vpop.f32.mrb[0].mxu0
    %v5875 = vadd.f32 0.0, %v5874
    %5876 = vdwg.mxu0
    %5877 = vmatprep.subr.mxu0 %v1391
    %5878 = vmatpush1.msra.mxu0 %v1390
    %5879 = vmatprep.subr.mxu0 %v1395
    %5880 = vmatpush1.msra.mxu0 %v1394
    %5881 = vmatprep.subr.mxu0 %v1399
    %5882 = vmatpush1.msra.mxu0 %v1398
    %5883 = vmatprep.subr.mxu0 %v1403
    %5884 = vmatpush1.msra.mxu0 %v1402
    %5885 = vmatprep.subr.mxu0 %v1407
    %5886 = vmatpush1.msra.mxu0 %v1406
    %5887 = vmatprep.subr.mxu0 %v1411
    %5888 = vmatpush1.msra.mxu0 %v1410
    %5889 = vmatprep.subr.mxu0 %v1415
    %5890 = vmatpush1.msra.mxu0 %v1414
    %5891 = vmatprep.subr.mxu0 %v1419
    %5892 = vmatpush1.msra.mxu0 %v1418
    %5893 = vmatprep.subr.mxu0 %v1423
    %5894 = vmatpush1.msra.mxu0 %v1422
    %5895 = vmatprep.subr.mxu0 %v1427
    %5896 = vmatpush1.msra.mxu0 %v1426
    %5897 = vmatprep.subr.mxu0 %v1431
    %5898 = vmatpush1.msra.mxu0 %v1430
    %5899 = vmatprep.subr.mxu0 %v1435
    %5900 = vmatpush1.msra.mxu0 %v1434
    %5901 = vmatprep.subr.mxu0 %v1439
    %5902 = vmatpush1.msra.mxu0 %v1438
    %5903 = vmatprep.subr.mxu0 %v1443
    %5904 = vmatpush1.msra.mxu0 %v1442
    %5905 = vmatprep.subr.mxu0 %v1447
    %5906 = vmatpush1.msra.mxu0 %v1446
    %5907 = vmatprep.subr.mxu0 %v1451
    %5908 = vmatpush1.msra.mxu0 %v1450
    %5909 = vmatprep.subr.mxu0 0.0
    %5910 = vmatpush1.msra.mxu0 0.0
    %5911 = vmatprep.subr.mxu0 0.0
    %5912 = vmatpush1.msra.mxu0 0.0
    %5913 = vmatprep.subr.mxu0 0.0
    %5914 = vmatpush1.msra.mxu0 0.0
    %5915 = vmatprep.subr.mxu0 0.0
    %5916 = vmatpush1.msra.mxu0 0.0
    %5917 = vmatprep.subr.mxu0 0.0
    %5918 = vmatpush1.msra.mxu0 0.0
    %5919 = vmatprep.subr.mxu0 0.0
    %5920 = vmatpush1.msra.mxu0 0.0
    %5921 = vmatprep.subr.mxu0 0.0
    %5922 = vmatpush1.msra.mxu0 0.0
    %5923 = vmatprep.subr.mxu0 0.0
    %5924 = vmatpush1.msra.mxu0 0.0
    %5925 = vmatprep.subr.mxu0 0.0
    %5926 = vmatpush1.msra.mxu0 0.0
    %5927 = vmatprep.subr.mxu0 0.0
    %5928 = vmatpush1.msra.mxu0 0.0
    %5929 = vmatprep.subr.mxu0 0.0
    %5930 = vmatpush1.msra.mxu0 0.0
    %5931 = vmatprep.subr.mxu0 0.0
    %5932 = vmatpush1.msra.mxu0 0.0
    %5933 = vmatprep.subr.mxu0 0.0
    %5934 = vmatpush1.msra.mxu0 0.0
    %5935 = vmatprep.subr.mxu0 0.0
    %5936 = vmatpush1.msra.mxu0 0.0
    %5937 = vmatprep.subr.mxu0 0.0
    %5938 = vmatpush1.msra.mxu0 0.0
    %5939 = vmatprep.subr.mxu0 0.0
    %5940 = vmatpush1.msra.mxu0 0.0
    %5941 = vmatprep.mubr.f32.mxu0 0.0
    %5942 = vmatmul.mubr.f32.gmra.mrb[0].mxu0 %v5734
    %v5943 = vpop.f32.mrb[0].mxu0
    %v5944 = vadd.f32 %v5802, %v5943
    %v5945 = vpop.f32.mrb[0].mxu0
    %v5946 = vadd.f32 %v5804, %v5945
    %5947 = vdwg.mxu0
    %5948 = vmatprep.subr.mxu0 %v1393
    %5949 = vmatpush1.msra.mxu0 %v1392
    %5950 = vmatprep.subr.mxu0 %v1397
    %5951 = vmatpush1.msra.mxu0 %v1396
    %5952 = vmatprep.subr.mxu0 %v1401
    %5953 = vmatpush1.msra.mxu0 %v1400
    %5954 = vmatprep.subr.mxu0 %v1405
    %5955 = vmatpush1.msra.mxu0 %v1404
    %5956 = vmatprep.subr.mxu0 %v1409
    %5957 = vmatpush1.msra.mxu0 %v1408
    %5958 = vmatprep.subr.mxu0 %v1413
    %5959 = vmatpush1.msra.mxu0 %v1412
    %5960 = vmatprep.subr.mxu0 %v1417
    %5961 = vmatpush1.msra.mxu0 %v1416
    %5962 = vmatprep.subr.mxu0 %v1421
    %5963 = vmatpush1.msra.mxu0 %v1420
    %5964 = vmatprep.subr.mxu0 %v1425
    %5965 = vmatpush1.msra.mxu0 %v1424
    %5966 = vmatprep.subr.mxu0 %v1429
    %5967 = vmatpush1.msra.mxu0 %v1428
    %5968 = vmatprep.subr.mxu0 %v1433
    %5969 = vmatpush1.msra.mxu0 %v1432
    %5970 = vmatprep.subr.mxu0 %v1437
    %5971 = vmatpush1.msra.mxu0 %v1436
    %5972 = vmatprep.subr.mxu0 %v1441
    %5973 = vmatpush1.msra.mxu0 %v1440
    %5974 = vmatprep.subr.mxu0 %v1445
    %5975 = vmatpush1.msra.mxu0 %v1444
    %5976 = vmatprep.subr.mxu0 %v1449
    %5977 = vmatpush1.msra.mxu0 %v1448
    %5978 = vmatprep.subr.mxu0 %v1453
    %5979 = vmatpush1.msra.mxu0 %v1452
    %5980 = vmatprep.subr.mxu0 0.0
    %5981 = vmatpush1.msra.mxu0 0.0
    %5982 = vmatprep.subr.mxu0 0.0
    %5983 = vmatpush1.msra.mxu0 0.0
    %5984 = vmatprep.subr.mxu0 0.0
    %5985 = vmatpush1.msra.mxu0 0.0
    %5986 = vmatprep.subr.mxu0 0.0
    %5987 = vmatpush1.msra.mxu0 0.0
    %5988 = vmatprep.subr.mxu0 0.0
    %5989 = vmatpush1.msra.mxu0 0.0
    %5990 = vmatprep.subr.mxu0 0.0
    %5991 = vmatpush1.msra.mxu0 0.0
    %5992 = vmatprep.subr.mxu0 0.0
    %5993 = vmatpush1.msra.mxu0 0.0
    %5994 = vmatprep.subr.mxu0 0.0
    %5995 = vmatpush1.msra.mxu0 0.0
    %5996 = vmatprep.subr.mxu0 0.0
    %5997 = vmatpush1.msra.mxu0 0.0
    %5998 = vmatprep.subr.mxu0 0.0
    %5999 = vmatpush1.msra.mxu0 0.0
    %6000 = vmatprep.subr.mxu0 0.0
    %6001 = vmatpush1.msra.mxu0 0.0
    %6002 = vmatprep.subr.mxu0 0.0
    %6003 = vmatpush1.msra.mxu0 0.0
    %6004 = vmatprep.subr.mxu0 0.0
    %6005 = vmatpush1.msra.mxu0 0.0
    %6006 = vmatprep.subr.mxu0 0.0
    %6007 = vmatpush1.msra.mxu0 0.0
    %6008 = vmatprep.subr.mxu0 0.0
    %6009 = vmatpush1.msra.mxu0 0.0
    %6010 = vmatprep.subr.mxu0 0.0
    %6011 = vmatpush1.msra.mxu0 0.0
    %6012 = vmatprep.mubr.f32.mxu0 0.0
    %6013 = vmatmul.mubr.f32.gmra.mrb[0].mxu0 %v5734
    %v6014 = vpop.f32.mrb[0].mxu0
    %v6015 = vadd.f32 %v5873, %v6014
    %v6016 = vpop.f32.mrb[0].mxu0
    %v6017 = vadd.f32 %v5875, %v6016
    %6018 = vdwg.mxu0
    %v6019 = vadd.f32 %v5944, %v1994
    %v6020 = vadd.f32 %v5946, %v1998
    %v6021 = vadd.f32 %v6015, %v2002
    %v6022 = vadd.f32 %v6017, %v2006
    %v6023 = vxor.u32 %v6019, 2147483648
    %v6024 = vmul.f32 %v6023, 1.442695
    %v6025 = vpow.pop %v6024
    %v6026 = vadd.f32 %v6025, 1.0
    %v6027 = vrcp.pop %v6026
    %v6028 = vmul.f32 1.0, %v6027
    %v6029 = vxor.u32 %v6020, 2147483648
    %v6030 = vmul.f32 %v6029, 1.442695
    %v6031 = vpow.pop %v6030
    %v6032 = vadd.f32 %v6031, 1.0
    %v6033 = vrcp.pop %v6032
    %v6034 = vmul.f32 1.0, %v6033
    %v6035 = vtanh.pop %v6021
    %v6036 = vxor.u32 %v6022, 2147483648
    %v6037 = vmul.f32 %v6036, 1.442695
    %v6038 = vpow.pop %v6037
    %v6039 = vadd.f32 %v6038, 1.0
    %v6040 = vrcp.pop %v6039
    %v6041 = vmul.f32 1.0, %v6040
    %v6042 = vmul.f32 %v6034, %v5546
    %v6043 = vmul.f32 %v6028, %v6035
    %v6044 = vadd.f32 %v6042, %v6043
    %v6045 = vtanh.pop %v6044
    %v6046 = vmul.f32 %v6041, %v6045
    %v6051 = vrot.slane %v1053, 1
    %v6052 = vrot.slane %v1055, 1
    %v6053 = vrot.slane %v1130, 1
    %v6054 = vrot.slane %v1132, 1
    %v6059 = vsel %vm1531, %v6051, %v1245
    %v6060 = vsel %vm1531, %v6052, %v1247
    %v6061 = vsel %vm1531, %v6053, %v1322
    %v6062 = vsel %vm1531, %v6054, %v1324
    %6063 = vmatprep.subr.mxu0 %v1327
    %6064 = vmatpush1.msra.mxu0 %v1326
    %6065 = vmatprep.subr.mxu0 %v1331
    %6066 = vmatpush1.msra.mxu0 %v1330
    %6067 = vmatprep.subr.mxu0 %v1335
    %6068 = vmatpush1.msra.mxu0 %v1334
    %6069 = vmatprep.subr.mxu0 %v1339
    %6070 = vmatpush1.msra.mxu0 %v1338
    %6071 = vmatprep.subr.mxu0 %v1343
    %6072 = vmatpush1.msra.mxu0 %v1342
    %6073 = vmatprep.subr.mxu0 %v1347
    %6074 = vmatpush1.msra.mxu0 %v1346
    %6075 = vmatprep.subr.mxu0 %v1351
    %6076 = vmatpush1.msra.mxu0 %v1350
    %6077 = vmatprep.subr.mxu0 %v1355
    %6078 = vmatpush1.msra.mxu0 %v1354
    %6079 = vmatprep.subr.mxu0 %v1359
    %6080 = vmatpush1.msra.mxu0 %v1358
    %6081 = vmatprep.subr.mxu0 %v1363
    %6082 = vmatpush1.msra.mxu0 %v1362
    %6083 = vmatprep.subr.mxu0 %v1367
    %6084 = vmatpush1.msra.mxu0 %v1366
    %6085 = vmatprep.subr.mxu0 %v1371
    %6086 = vmatpush1.msra.mxu0 %v1370
    %6087 = vmatprep.subr.mxu0 %v1375
    %6088 = vmatpush1.msra.mxu0 %v1374
    %6089 = vmatprep.subr.mxu0 %v1379
    %6090 = vmatpush1.msra.mxu0 %v1378
    %6091 = vmatprep.subr.mxu0 %v1383
    %6092 = vmatpush1.msra.mxu0 %v1382
    %6093 = vmatprep.subr.mxu0 %v1387
    %6094 = vmatpush1.msra.mxu0 %v1386
    %6095 = vmatprep.subr.mxu0 0.0
    %6096 = vmatpush1.msra.mxu0 0.0
    %6097 = vmatprep.subr.mxu0 0.0
    %6098 = vmatpush1.msra.mxu0 0.0
    %6099 = vmatprep.subr.mxu0 0.0
    %6100 = vmatpush1.msra.mxu0 0.0
    %6101 = vmatprep.subr.mxu0 0.0
    %6102 = vmatpush1.msra.mxu0 0.0
    %6103 = vmatprep.subr.mxu0 0.0
    %6104 = vmatpush1.msra.mxu0 0.0
    %6105 = vmatprep.subr.mxu0 0.0
    %6106 = vmatpush1.msra.mxu0 0.0
    %6107 = vmatprep.subr.mxu0 0.0
    %6108 = vmatpush1.msra.mxu0 0.0
    %6109 = vmatprep.subr.mxu0 0.0
    %6110 = vmatpush1.msra.mxu0 0.0
    %6111 = vmatprep.subr.mxu0 0.0
    %6112 = vmatpush1.msra.mxu0 0.0
    %6113 = vmatprep.subr.mxu0 0.0
    %6114 = vmatpush1.msra.mxu0 0.0
    %6115 = vmatprep.subr.mxu0 0.0
    %6116 = vmatpush1.msra.mxu0 0.0
    %6117 = vmatprep.subr.mxu0 0.0
    %6118 = vmatpush1.msra.mxu0 0.0
    %6119 = vmatprep.subr.mxu0 0.0
    %6120 = vmatpush1.msra.mxu0 0.0
    %6121 = vmatprep.subr.mxu0 0.0
    %6122 = vmatpush1.msra.mxu0 0.0
    %6123 = vmatprep.subr.mxu0 0.0
    %6124 = vmatpush1.msra.mxu0 0.0
    %6125 = vmatprep.subr.mxu0 0.0
    %6126 = vmatpush1.msra.mxu0 0.0
    %6127 = vmatprep.mubr.f32.mxu0 0.0
    %6128 = vmatmul.mubr.f32.gmra.mrb[0].mxu0 %v5734
    %v6129 = vpop.f32.mrb[0].mxu0
    %v6130 = vadd.f32 0.0, %v6129
    %v6131 = vpop.f32.mrb[0].mxu0
    %v6132 = vadd.f32 0.0, %v6131
    %6133 = vdwg.mxu0
    %6134 = vmatprep.subr.mxu0 %v1329
    %6135 = vmatpush1.msra.mxu0 %v1328
    %6136 = vmatprep.subr.mxu0 %v1333
    %6137 = vmatpush1.msra.mxu0 %v1332
    %6138 = vmatprep.subr.mxu0 %v1337
    %6139 = vmatpush1.msra.mxu0 %v1336
    %6140 = vmatprep.subr.mxu0 %v1341
    %6141 = vmatpush1.msra.mxu0 %v1340
    %6142 = vmatprep.subr.mxu0 %v1345
    %6143 = vmatpush1.msra.mxu0 %v1344
    %6144 = vmatprep.subr.mxu0 %v1349
    %6145 = vmatpush1.msra.mxu0 %v1348
    %6146 = vmatprep.subr.mxu0 %v1353
    %6147 = vmatpush1.msra.mxu0 %v1352
    %6148 = vmatprep.subr.mxu0 %v1357
    %6149 = vmatpush1.msra.mxu0 %v1356
    %6150 = vmatprep.subr.mxu0 %v1361
    %6151 = vmatpush1.msra.mxu0 %v1360
    %6152 = vmatprep.subr.mxu0 %v1365
    %6153 = vmatpush1.msra.mxu0 %v1364
    %6154 = vmatprep.subr.mxu0 %v1369
    %6155 = vmatpush1.msra.mxu0 %v1368
    %6156 = vmatprep.subr.mxu0 %v1373
    %6157 = vmatpush1.msra.mxu0 %v1372
    %6158 = vmatprep.subr.mxu0 %v1377
    %6159 = vmatpush1.msra.mxu0 %v1376
    %6160 = vmatprep.subr.mxu0 %v1381
    %6161 = vmatpush1.msra.mxu0 %v1380
    %6162 = vmatprep.subr.mxu0 %v1385
    %6163 = vmatpush1.msra.mxu0 %v1384
    %6164 = vmatprep.subr.mxu0 %v1389
    %6165 = vmatpush1.msra.mxu0 %v1388
    %6166 = vmatprep.subr.mxu0 0.0
    %6167 = vmatpush1.msra.mxu0 0.0
    %6168 = vmatprep.subr.mxu0 0.0
    %6169 = vmatpush1.msra.mxu0 0.0
    %6170 = vmatprep.subr.mxu0 0.0
    %6171 = vmatpush1.msra.mxu0 0.0
    %6172 = vmatprep.subr.mxu0 0.0
    %6173 = vmatpush1.msra.mxu0 0.0
    %6174 = vmatprep.subr.mxu0 0.0
    %6175 = vmatpush1.msra.mxu0 0.0
    %6176 = vmatprep.subr.mxu0 0.0
    %6177 = vmatpush1.msra.mxu0 0.0
    %6178 = vmatprep.subr.mxu0 0.0
    %6179 = vmatpush1.msra.mxu0 0.0
    %6180 = vmatprep.subr.mxu0 0.0
    %6181 = vmatpush1.msra.mxu0 0.0
    %6182 = vmatprep.subr.mxu0 0.0
    %6183 = vmatpush1.msra.mxu0 0.0
    %6184 = vmatprep.subr.mxu0 0.0
    %6185 = vmatpush1.msra.mxu0 0.0
    %6186 = vmatprep.subr.mxu0 0.0
    %6187 = vmatpush1.msra.mxu0 0.0
    %6188 = vmatprep.subr.mxu0 0.0
    %6189 = vmatpush1.msra.mxu0 0.0
    %6190 = vmatprep.subr.mxu0 0.0
    %6191 = vmatpush1.msra.mxu0 0.0
    %6192 = vmatprep.subr.mxu0 0.0
    %6193 = vmatpush1.msra.mxu0 0.0
    %6194 = vmatprep.subr.mxu0 0.0
    %6195 = vmatpush1.msra.mxu0 0.0
    %6196 = vmatprep.subr.mxu0 0.0
    %6197 = vmatpush1.msra.mxu0 0.0
    %6198 = vmatprep.mubr.f32.mxu0 0.0
    %6199 = vmatmul.mubr.f32.gmra.mrb[0].mxu0 %v5734
    %v6200 = vpop.f32.mrb[0].mxu0
    %v6201 = vadd.f32 0.0, %v6200
    %v6202 = vpop.f32.mrb[0].mxu0
    %v6203 = vadd.f32 0.0, %v6202
    %6204 = vdwg.mxu0
    %v6205 = vadd.f32 %v6059, %v6130
    %v6206 = vadd.f32 %v6060, %v6132
    %v6207 = vadd.f32 %v6061, %v6201
    %v6208 = vadd.f32 %v6062, %v6203
    %v6209 = vxor.u32 %v6205, 2147483648
    %v6210 = vmul.f32 %v6209, 1.442695
    %v6211 = vpow.pop %v6210
    %v6212 = vadd.f32 %v6211, 1.0
    %v6213 = vrcp.pop %v6212
    %v6214 = vmul.f32 1.0, %v6213
    %v6215 = vxor.u32 %v6206, 2147483648
    %v6216 = vmul.f32 %v6215, 1.442695
    %v6217 = vpow.pop %v6216
    %v6218 = vadd.f32 %v6217, 1.0
    %v6219 = vrcp.pop %v6218
    %v6220 = vmul.f32 1.0, %v6219
    %v6221 = vtanh.pop %v6207
    %v6222 = vxor.u32 %v6208, 2147483648
    %v6223 = vmul.f32 %v6222, 1.442695
    %v6224 = vpow.pop %v6223
    %v6225 = vadd.f32 %v6224, 1.0
    %v6226 = vrcp.pop %v6225
    %v6227 = vmul.f32 1.0, %v6226
    %v6228 = vmul.f32 %v6220, %v5732
    %v6229 = vmul.f32 %v6214, %v6221
    %v6230 = vadd.f32 %v6228, %v6229
    %v6231 = vtanh.pop %v6230
    %v6232 = vmul.f32 %v6227, %v6231
    %6233 = vmatprep.subr.mxu0 %v1455
    %6234 = vmatpush1.msra.mxu0 %v1454
    %6235 = vmatprep.subr.mxu0 %v1459
    %6236 = vmatpush1.msra.mxu0 %v1458
    %6237 = vmatprep.subr.mxu0 %v1463
    %6238 = vmatpush1.msra.mxu0 %v1462
    %6239 = vmatprep.subr.mxu0 %v1467
    %6240 = vmatpush1.msra.mxu0 %v1466
    %6241 = vmatprep.subr.mxu0 %v1471
    %6242 = vmatpush1.msra.mxu0 %v1470
    %6243 = vmatprep.subr.mxu0 %v1475
    %6244 = vmatpush1.msra.mxu0 %v1474
    %6245 = vmatprep.subr.mxu0 %v1479
    %6246 = vmatpush1.msra.mxu0 %v1478
    %6247 = vmatprep.subr.mxu0 %v1483
    %6248 = vmatpush1.msra.mxu0 %v1482
    %6249 = vmatprep.subr.mxu0 %v1487
    %6250 = vmatpush1.msra.mxu0 %v1486
    %6251 = vmatprep.subr.mxu0 %v1491
    %6252 = vmatpush1.msra.mxu0 %v1490
    %6253 = vmatprep.subr.mxu0 %v1495
    %6254 = vmatpush1.msra.mxu0 %v1494
    %6255 = vmatprep.subr.mxu0 %v1499
    %6256 = vmatpush1.msra.mxu0 %v1498
    %6257 = vmatprep.subr.mxu0 %v1503
    %6258 = vmatpush1.msra.mxu0 %v1502
    %6259 = vmatprep.subr.mxu0 %v1507
    %6260 = vmatpush1.msra.mxu0 %v1506
    %6261 = vmatprep.subr.mxu0 %v1511
    %6262 = vmatpush1.msra.mxu0 %v1510
    %6263 = vmatprep.subr.mxu0 %v1515
    %6264 = vmatpush1.msra.mxu0 %v1514
    %6265 = vmatprep.subr.mxu0 0.0
    %6266 = vmatpush1.msra.mxu0 0.0
    %6267 = vmatprep.subr.mxu0 0.0
    %6268 = vmatpush1.msra.mxu0 0.0
    %6269 = vmatprep.subr.mxu0 0.0
    %6270 = vmatpush1.msra.mxu0 0.0
    %6271 = vmatprep.subr.mxu0 0.0
    %6272 = vmatpush1.msra.mxu0 0.0
    %6273 = vmatprep.subr.mxu0 0.0
    %6274 = vmatpush1.msra.mxu0 0.0
    %6275 = vmatprep.subr.mxu0 0.0
    %6276 = vmatpush1.msra.mxu0 0.0
    %6277 = vmatprep.subr.mxu0 0.0
    %6278 = vmatpush1.msra.mxu0 0.0
    %6279 = vmatprep.subr.mxu0 0.0
    %6280 = vmatpush1.msra.mxu0 0.0
    %6281 = vmatprep.subr.mxu0 0.0
    %6282 = vmatpush1.msra.mxu0 0.0
    %6283 = vmatprep.subr.mxu0 0.0
    %6284 = vmatpush1.msra.mxu0 0.0
    %6285 = vmatprep.subr.mxu0 0.0
    %6286 = vmatpush1.msra.mxu0 0.0
    %6287 = vmatprep.subr.mxu0 0.0
    %6288 = vmatpush1.msra.mxu0 0.0
    %6289 = vmatprep.subr.mxu0 0.0
    %6290 = vmatpush1.msra.mxu0 0.0
    %6291 = vmatprep.subr.mxu0 0.0
    %6292 = vmatpush1.msra.mxu0 0.0
    %6293 = vmatprep.subr.mxu0 0.0
    %6294 = vmatpush1.msra.mxu0 0.0
    %6295 = vmatprep.subr.mxu0 0.0
    %6296 = vmatpush1.msra.mxu0 0.0
    %6297 = vmatprep.mubr.f32.mxu0 0.0
    %6298 = vmatmul.mubr.f32.gmra.mrb[0].mxu0 %v6046
    %v6299 = vpop.f32.mrb[0].mxu0
    %v6300 = vadd.f32 0.0, %v6299
    %v6301 = vpop.f32.mrb[0].mxu0
    %v6302 = vadd.f32 0.0, %v6301
    %6303 = vdwg.mxu0
    %6304 = vmatprep.subr.mxu0 %v1457
    %6305 = vmatpush1.msra.mxu0 %v1456
    %6306 = vmatprep.subr.mxu0 %v1461
    %6307 = vmatpush1.msra.mxu0 %v1460
    %6308 = vmatprep.subr.mxu0 %v1465
    %6309 = vmatpush1.msra.mxu0 %v1464
    %6310 = vmatprep.subr.mxu0 %v1469
    %6311 = vmatpush1.msra.mxu0 %v1468
    %6312 = vmatprep.subr.mxu0 %v1473
    %6313 = vmatpush1.msra.mxu0 %v1472
    %6314 = vmatprep.subr.mxu0 %v1477
    %6315 = vmatpush1.msra.mxu0 %v1476
    %6316 = vmatprep.subr.mxu0 %v1481
    %6317 = vmatpush1.msra.mxu0 %v1480
    %6318 = vmatprep.subr.mxu0 %v1485
    %6319 = vmatpush1.msra.mxu0 %v1484
    %6320 = vmatprep.subr.mxu0 %v1489
    %6321 = vmatpush1.msra.mxu0 %v1488
    %6322 = vmatprep.subr.mxu0 %v1493
    %6323 = vmatpush1.msra.mxu0 %v1492
    %6324 = vmatprep.subr.mxu0 %v1497
    %6325 = vmatpush1.msra.mxu0 %v1496
    %6326 = vmatprep.subr.mxu0 %v1501
    %6327 = vmatpush1.msra.mxu0 %v1500
    %6328 = vmatprep.subr.mxu0 %v1505
    %6329 = vmatpush1.msra.mxu0 %v1504
    %6330 = vmatprep.subr.mxu0 %v1509
    %6331 = vmatpush1.msra.mxu0 %v1508
    %6332 = vmatprep.subr.mxu0 %v1513
    %6333 = vmatpush1.msra.mxu0 %v1512
    %6334 = vmatprep.subr.mxu0 %v1517
    %6335 = vmatpush1.msra.mxu0 %v1516
    %6336 = vmatprep.subr.mxu0 0.0
    %6337 = vmatpush1.msra.mxu0 0.0
    %6338 = vmatprep.subr.mxu0 0.0
    %6339 = vmatpush1.msra.mxu0 0.0
    %6340 = vmatprep.subr.mxu0 0.0
    %6341 = vmatpush1.msra.mxu0 0.0
    %6342 = vmatprep.subr.mxu0 0.0
    %6343 = vmatpush1.msra.mxu0 0.0
    %6344 = vmatprep.subr.mxu0 0.0
    %6345 = vmatpush1.msra.mxu0 0.0
    %6346 = vmatprep.subr.mxu0 0.0
    %6347 = vmatpush1.msra.mxu0 0.0
    %6348 = vmatprep.subr.mxu0 0.0
    %6349 = vmatpush1.msra.mxu0 0.0
    %6350 = vmatprep.subr.mxu0 0.0
    %6351 = vmatpush1.msra.mxu0 0.0
    %6352 = vmatprep.subr.mxu0 0.0
    %6353 = vmatpush1.msra.mxu0 0.0
    %6354 = vmatprep.subr.mxu0 0.0
    %6355 = vmatpush1.msra.mxu0 0.0
    %6356 = vmatprep.subr.mxu0 0.0
    %6357 = vmatpush1.msra.mxu0 0.0
    %6358 = vmatprep.subr.mxu0 0.0
    %6359 = vmatpush1.msra.mxu0 0.0
    %6360 = vmatprep.subr.mxu0 0.0
    %6361 = vmatpush1.msra.mxu0 0.0
    %6362 = vmatprep.subr.mxu0 0.0
    %6363 = vmatpush1.msra.mxu0 0.0
    %6364 = vmatprep.subr.mxu0 0.0
    %6365 = vmatpush1.msra.mxu0 0.0
    %6366 = vmatprep.subr.mxu0 0.0
    %6367 = vmatpush1.msra.mxu0 0.0
    %6368 = vmatprep.mubr.f32.mxu0 0.0
    %6369 = vmatmul.mubr.f32.gmra.mrb[0].mxu0 %v6046
    %v6370 = vpop.f32.mrb[0].mxu0
    %v6371 = vadd.f32 0.0, %v6370
    %v6372 = vpop.f32.mrb[0].mxu0
    %v6373 = vadd.f32 0.0, %v6372
    %6374 = vdwg.mxu0
    %6375 = vmatprep.subr.mxu0 %v1391
    %6376 = vmatpush1.msra.mxu0 %v1390
    %6377 = vmatprep.subr.mxu0 %v1395
    %6378 = vmatpush1.msra.mxu0 %v1394
    %6379 = vmatprep.subr.mxu0 %v1399
    %6380 = vmatpush1.msra.mxu0 %v1398
    %6381 = vmatprep.subr.mxu0 %v1403
    %6382 = vmatpush1.msra.mxu0 %v1402
    %6383 = vmatprep.subr.mxu0 %v1407
    %6384 = vmatpush1.msra.mxu0 %v1406
    %6385 = vmatprep.subr.mxu0 %v1411
    %6386 = vmatpush1.msra.mxu0 %v1410
    %6387 = vmatprep.subr.mxu0 %v1415
    %6388 = vmatpush1.msra.mxu0 %v1414
    %6389 = vmatprep.subr.mxu0 %v1419
    %6390 = vmatpush1.msra.mxu0 %v1418
    %6391 = vmatprep.subr.mxu0 %v1423
    %6392 = vmatpush1.msra.mxu0 %v1422
    %6393 = vmatprep.subr.mxu0 %v1427
    %6394 = vmatpush1.msra.mxu0 %v1426
    %6395 = vmatprep.subr.mxu0 %v1431
    %6396 = vmatpush1.msra.mxu0 %v1430
    %6397 = vmatprep.subr.mxu0 %v1435
    %6398 = vmatpush1.msra.mxu0 %v1434
    %6399 = vmatprep.subr.mxu0 %v1439
    %6400 = vmatpush1.msra.mxu0 %v1438
    %6401 = vmatprep.subr.mxu0 %v1443
    %6402 = vmatpush1.msra.mxu0 %v1442
    %6403 = vmatprep.subr.mxu0 %v1447
    %6404 = vmatpush1.msra.mxu0 %v1446
    %6405 = vmatprep.subr.mxu0 %v1451
    %6406 = vmatpush1.msra.mxu0 %v1450
    %6407 = vmatprep.subr.mxu0 0.0
    %6408 = vmatpush1.msra.mxu0 0.0
    %6409 = vmatprep.subr.mxu0 0.0
    %6410 = vmatpush1.msra.mxu0 0.0
    %6411 = vmatprep.subr.mxu0 0.0
    %6412 = vmatpush1.msra.mxu0 0.0
    %6413 = vmatprep.subr.mxu0 0.0
    %6414 = vmatpush1.msra.mxu0 0.0
    %6415 = vmatprep.subr.mxu0 0.0
    %6416 = vmatpush1.msra.mxu0 0.0
    %6417 = vmatprep.subr.mxu0 0.0
    %6418 = vmatpush1.msra.mxu0 0.0
    %6419 = vmatprep.subr.mxu0 0.0
    %6420 = vmatpush1.msra.mxu0 0.0
    %6421 = vmatprep.subr.mxu0 0.0
    %6422 = vmatpush1.msra.mxu0 0.0
    %6423 = vmatprep.subr.mxu0 0.0
    %6424 = vmatpush1.msra.mxu0 0.0
    %6425 = vmatprep.subr.mxu0 0.0
    %6426 = vmatpush1.msra.mxu0 0.0
    %6427 = vmatprep.subr.mxu0 0.0
    %6428 = vmatpush1.msra.mxu0 0.0
    %6429 = vmatprep.subr.mxu0 0.0
    %6430 = vmatpush1.msra.mxu0 0.0
    %6431 = vmatprep.subr.mxu0 0.0
    %6432 = vmatpush1.msra.mxu0 0.0
    %6433 = vmatprep.subr.mxu0 0.0
    %6434 = vmatpush1.msra.mxu0 0.0
    %6435 = vmatprep.subr.mxu0 0.0
    %6436 = vmatpush1.msra.mxu0 0.0
    %6437 = vmatprep.subr.mxu0 0.0
    %6438 = vmatpush1.msra.mxu0 0.0
    %6439 = vmatprep.mubr.f32.mxu0 0.0
    %6440 = vmatmul.mubr.f32.gmra.mrb[0].mxu0 %v6232
    %v6441 = vpop.f32.mrb[0].mxu0
    %v6442 = vadd.f32 %v6300, %v6441
    %v6443 = vpop.f32.mrb[0].mxu0
    %v6444 = vadd.f32 %v6302, %v6443
    %6445 = vdwg.mxu0
    %6446 = vmatprep.subr.mxu0 %v1393
    %6447 = vmatpush1.msra.mxu0 %v1392
    %6448 = vmatprep.subr.mxu0 %v1397
    %6449 = vmatpush1.msra.mxu0 %v1396
    %6450 = vmatprep.subr.mxu0 %v1401
    %6451 = vmatpush1.msra.mxu0 %v1400
    %6452 = vmatprep.subr.mxu0 %v1405
    %6453 = vmatpush1.msra.mxu0 %v1404
    %6454 = vmatprep.subr.mxu0 %v1409
    %6455 = vmatpush1.msra.mxu0 %v1408
    %6456 = vmatprep.subr.mxu0 %v1413
    %6457 = vmatpush1.msra.mxu0 %v1412
    %6458 = vmatprep.subr.mxu0 %v1417
    %6459 = vmatpush1.msra.mxu0 %v1416
    %6460 = vmatprep.subr.mxu0 %v1421
    %6461 = vmatpush1.msra.mxu0 %v1420
    %6462 = vmatprep.subr.mxu0 %v1425
    %6463 = vmatpush1.msra.mxu0 %v1424
    %6464 = vmatprep.subr.mxu0 %v1429
    %6465 = vmatpush1.msra.mxu0 %v1428
    %6466 = vmatprep.subr.mxu0 %v1433
    %6467 = vmatpush1.msra.mxu0 %v1432
    %6468 = vmatprep.subr.mxu0 %v1437
    %6469 = vmatpush1.msra.mxu0 %v1436
    %6470 = vmatprep.subr.mxu0 %v1441
    %6471 = vmatpush1.msra.mxu0 %v1440
    %6472 = vmatprep.subr.mxu0 %v1445
    %6473 = vmatpush1.msra.mxu0 %v1444
    %6474 = vmatprep.subr.mxu0 %v1449
    %6475 = vmatpush1.msra.mxu0 %v1448
    %6476 = vmatprep.subr.mxu0 %v1453
    %6477 = vmatpush1.msra.mxu0 %v1452
    %6478 = vmatprep.subr.mxu0 0.0
    %6479 = vmatpush1.msra.mxu0 0.0
    %6480 = vmatprep.subr.mxu0 0.0
    %6481 = vmatpush1.msra.mxu0 0.0
    %6482 = vmatprep.subr.mxu0 0.0
    %6483 = vmatpush1.msra.mxu0 0.0
    %6484 = vmatprep.subr.mxu0 0.0
    %6485 = vmatpush1.msra.mxu0 0.0
    %6486 = vmatprep.subr.mxu0 0.0
    %6487 = vmatpush1.msra.mxu0 0.0
    %6488 = vmatprep.subr.mxu0 0.0
    %6489 = vmatpush1.msra.mxu0 0.0
    %6490 = vmatprep.subr.mxu0 0.0
    %6491 = vmatpush1.msra.mxu0 0.0
    %6492 = vmatprep.subr.mxu0 0.0
    %6493 = vmatpush1.msra.mxu0 0.0
    %6494 = vmatprep.subr.mxu0 0.0
    %6495 = vmatpush1.msra.mxu0 0.0
    %6496 = vmatprep.subr.mxu0 0.0
    %6497 = vmatpush1.msra.mxu0 0.0
    %6498 = vmatprep.subr.mxu0 0.0
    %6499 = vmatpush1.msra.mxu0 0.0
    %6500 = vmatprep.subr.mxu0 0.0
    %6501 = vmatpush1.msra.mxu0 0.0
    %6502 = vmatprep.subr.mxu0 0.0
    %6503 = vmatpush1.msra.mxu0 0.0
    %6504 = vmatprep.subr.mxu0 0.0
    %6505 = vmatpush1.msra.mxu0 0.0
    %6506 = vmatprep.subr.mxu0 0.0
    %6507 = vmatpush1.msra.mxu0 0.0
    %6508 = vmatprep.subr.mxu0 0.0
    %6509 = vmatpush1.msra.mxu0 0.0
    %6510 = vmatprep.mubr.f32.mxu0 0.0
    %6511 = vmatmul.mubr.f32.gmra.mrb[0].mxu0 %v6232
    %v6512 = vpop.f32.mrb[0].mxu0
    %v6513 = vadd.f32 %v6371, %v6512
    %v6514 = vpop.f32.mrb[0].mxu0
    %v6515 = vadd.f32 %v6373, %v6514
    %6516 = vdwg.mxu0
    %v6517 = vadd.f32 %v6442, %v1994
    %v6518 = vadd.f32 %v6444, %v1998
    %v6519 = vadd.f32 %v6513, %v2002
    %v6520 = vadd.f32 %v6515, %v2006
    %v6521 = vxor.u32 %v6517, 2147483648
    %v6522 = vmul.f32 %v6521, 1.442695
    %v6523 = vpow.pop %v6522
    %v6524 = vadd.f32 %v6523, 1.0
    %v6525 = vrcp.pop %v6524
    %v6526 = vmul.f32 1.0, %v6525
    %v6527 = vxor.u32 %v6518, 2147483648
    %v6528 = vmul.f32 %v6527, 1.442695
    %v6529 = vpow.pop %v6528
    %v6530 = vadd.f32 %v6529, 1.0
    %v6531 = vrcp.pop %v6530
    %v6532 = vmul.f32 1.0, %v6531
    %v6533 = vtanh.pop %v6519
    %v6534 = vxor.u32 %v6520, 2147483648
    %v6535 = vmul.f32 %v6534, 1.442695
    %v6536 = vpow.pop %v6535
    %v6537 = vadd.f32 %v6536, 1.0
    %v6538 = vrcp.pop %v6537
    %v6539 = vmul.f32 1.0, %v6538
    %v6540 = vmul.f32 %v6532, %v6044
    %v6541 = vmul.f32 %v6526, %v6533
    %v6542 = vadd.f32 %v6540, %v6541
    %v6543 = vtanh.pop %v6542
    %v6544 = vmul.f32 %v6539, %v6543
    %v6545 = vrot.slane %v1053, 2
    %v6546 = vrot.slane %v1055, 2
    %v6547 = vrot.slane %v1130, 2
    %v6548 = vrot.slane %v1132, 2
    %v6553 = vrot.slane %v1245, 1
    %v6554 = vrot.slane %v1247, 1
    %v6555 = vrot.slane %v1322, 1
    %v6556 = vrot.slane %v1324, 1
    %v6561 = vsel %vm1531, %v6545, %v6553
    %v6562 = vsel %vm1531, %v6546, %v6554
    %v6563 = vsel %vm1531, %v6547, %v6555
    %v6564 = vsel %vm1531, %v6548, %v6556
    %6565 = vmatprep.subr.mxu0 %v1327
    %6566 = vmatpush1.msra.mxu0 %v1326
    %6567 = vmatprep.subr.mxu0 %v1331
    %6568 = vmatpush1.msra.mxu0 %v1330
    %6569 = vmatprep.subr.mxu0 %v1335
    %6570 = vmatpush1.msra.mxu0 %v1334
    %6571 = vmatprep.subr.mxu0 %v1339
    %6572 = vmatpush1.msra.mxu0 %v1338
    %6573 = vmatprep.subr.mxu0 %v1343
    %6574 = vmatpush1.msra.mxu0 %v1342
    %6575 = vmatprep.subr.mxu0 %v1347
    %6576 = vmatpush1.msra.mxu0 %v1346
    %6577 = vmatprep.subr.mxu0 %v1351
    %6578 = vmatpush1.msra.mxu0 %v1350
    %6579 = vmatprep.subr.mxu0 %v1355
    %6580 = vmatpush1.msra.mxu0 %v1354
    %6581 = vmatprep.subr.mxu0 %v1359
    %6582 = vmatpush1.msra.mxu0 %v1358
    %6583 = vmatprep.subr.mxu0 %v1363
    %6584 = vmatpush1.msra.mxu0 %v1362
    %6585 = vmatprep.subr.mxu0 %v1367
    %6586 = vmatpush1.msra.mxu0 %v1366
    %6587 = vmatprep.subr.mxu0 %v1371
    %6588 = vmatpush1.msra.mxu0 %v1370
    %6589 = vmatprep.subr.mxu0 %v1375
    %6590 = vmatpush1.msra.mxu0 %v1374
    %6591 = vmatprep.subr.mxu0 %v1379
    %6592 = vmatpush1.msra.mxu0 %v1378
    %6593 = vmatprep.subr.mxu0 %v1383
    %6594 = vmatpush1.msra.mxu0 %v1382
    %6595 = vmatprep.subr.mxu0 %v1387
    %6596 = vmatpush1.msra.mxu0 %v1386
    %6597 = vmatprep.subr.mxu0 0.0
    %6598 = vmatpush1.msra.mxu0 0.0
    %6599 = vmatprep.subr.mxu0 0.0
    %6600 = vmatpush1.msra.mxu0 0.0
    %6601 = vmatprep.subr.mxu0 0.0
    %6602 = vmatpush1.msra.mxu0 0.0
    %6603 = vmatprep.subr.mxu0 0.0
    %6604 = vmatpush1.msra.mxu0 0.0
    %6605 = vmatprep.subr.mxu0 0.0
    %6606 = vmatpush1.msra.mxu0 0.0
    %6607 = vmatprep.subr.mxu0 0.0
    %6608 = vmatpush1.msra.mxu0 0.0
    %6609 = vmatprep.subr.mxu0 0.0
    %6610 = vmatpush1.msra.mxu0 0.0
    %6611 = vmatprep.subr.mxu0 0.0
    %6612 = vmatpush1.msra.mxu0 0.0
    %6613 = vmatprep.subr.mxu0 0.0
    %6614 = vmatpush1.msra.mxu0 0.0
    %6615 = vmatprep.subr.mxu0 0.0
    %6616 = vmatpush1.msra.mxu0 0.0
    %6617 = vmatprep.subr.mxu0 0.0
    %6618 = vmatpush1.msra.mxu0 0.0
    %6619 = vmatprep.subr.mxu0 0.0
    %6620 = vmatpush1.msra.mxu0 0.0
    %6621 = vmatprep.subr.mxu0 0.0
    %6622 = vmatpush1.msra.mxu0 0.0
    %6623 = vmatprep.subr.mxu0 0.0
    %6624 = vmatpush1.msra.mxu0 0.0
    %6625 = vmatprep.subr.mxu0 0.0
    %6626 = vmatpush1.msra.mxu0 0.0
    %6627 = vmatprep.subr.mxu0 0.0
    %6628 = vmatpush1.msra.mxu0 0.0
    %6629 = vmatprep.mubr.f32.mxu0 0.0
    %6630 = vmatmul.mubr.f32.gmra.mrb[0].mxu0 %v6232
    %v6631 = vpop.f32.mrb[0].mxu0
    %v6632 = vadd.f32 0.0, %v6631
    %v6633 = vpop.f32.mrb[0].mxu0
    %v6634 = vadd.f32 0.0, %v6633
    %6635 = vdwg.mxu0
    %6636 = vmatprep.subr.mxu0 %v1329
    %6637 = vmatpush1.msra.mxu0 %v1328
    %6638 = vmatprep.subr.mxu0 %v1333
    %6639 = vmatpush1.msra.mxu0 %v1332
    %6640 = vmatprep.subr.mxu0 %v1337
    %6641 = vmatpush1.msra.mxu0 %v1336
    %6642 = vmatprep.subr.mxu0 %v1341
    %6643 = vmatpush1.msra.mxu0 %v1340
    %6644 = vmatprep.subr.mxu0 %v1345
    %6645 = vmatpush1.msra.mxu0 %v1344
    %6646 = vmatprep.subr.mxu0 %v1349
    %6647 = vmatpush1.msra.mxu0 %v1348
    %6648 = vmatprep.subr.mxu0 %v1353
    %6649 = vmatpush1.msra.mxu0 %v1352
    %6650 = vmatprep.subr.mxu0 %v1357
    %6651 = vmatpush1.msra.mxu0 %v1356
    %6652 = vmatprep.subr.mxu0 %v1361
    %6653 = vmatpush1.msra.mxu0 %v1360
    %6654 = vmatprep.subr.mxu0 %v1365
    %6655 = vmatpush1.msra.mxu0 %v1364
    %6656 = vmatprep.subr.mxu0 %v1369
    %6657 = vmatpush1.msra.mxu0 %v1368
    %6658 = vmatprep.subr.mxu0 %v1373
    %6659 = vmatpush1.msra.mxu0 %v1372
    %6660 = vmatprep.subr.mxu0 %v1377
    %6661 = vmatpush1.msra.mxu0 %v1376
    %6662 = vmatprep.subr.mxu0 %v1381
    %6663 = vmatpush1.msra.mxu0 %v1380
    %6664 = vmatprep.subr.mxu0 %v1385
    %6665 = vmatpush1.msra.mxu0 %v1384
    %6666 = vmatprep.subr.mxu0 %v1389
    %6667 = vmatpush1.msra.mxu0 %v1388
    %6668 = vmatprep.subr.mxu0 0.0
    %6669 = vmatpush1.msra.mxu0 0.0
    %6670 = vmatprep.subr.mxu0 0.0
    %6671 = vmatpush1.msra.mxu0 0.0
    %6672 = vmatprep.subr.mxu0 0.0
    %6673 = vmatpush1.msra.mxu0 0.0
    %6674 = vmatprep.subr.mxu0 0.0
    %6675 = vmatpush1.msra.mxu0 0.0
    %6676 = vmatprep.subr.mxu0 0.0
    %6677 = vmatpush1.msra.mxu0 0.0
    %6678 = vmatprep.subr.mxu0 0.0
    %6679 = vmatpush1.msra.mxu0 0.0
    %6680 = vmatprep.subr.mxu0 0.0
    %6681 = vmatpush1.msra.mxu0 0.0
    %6682 = vmatprep.subr.mxu0 0.0
    %6683 = vmatpush1.msra.mxu0 0.0
    %6684 = vmatprep.subr.mxu0 0.0
    %6685 = vmatpush1.msra.mxu0 0.0
    %6686 = vmatprep.subr.mxu0 0.0
    %6687 = vmatpush1.msra.mxu0 0.0
    %6688 = vmatprep.subr.mxu0 0.0
    %6689 = vmatpush1.msra.mxu0 0.0
    %6690 = vmatprep.subr.mxu0 0.0
    %6691 = vmatpush1.msra.mxu0 0.0
    %6692 = vmatprep.subr.mxu0 0.0
    %6693 = vmatpush1.msra.mxu0 0.0
    %6694 = vmatprep.subr.mxu0 0.0
    %6695 = vmatpush1.msra.mxu0 0.0
    %6696 = vmatprep.subr.mxu0 0.0
    %6697 = vmatpush1.msra.mxu0 0.0
    %6698 = vmatprep.subr.mxu0 0.0
    %6699 = vmatpush1.msra.mxu0 0.0
    %6700 = vmatprep.mubr.f32.mxu0 0.0
    %6701 = vmatmul.mubr.f32.gmra.mrb[0].mxu0 %v6232
    %v6702 = vpop.f32.mrb[0].mxu0
    %v6703 = vadd.f32 0.0, %v6702
    %v6704 = vpop.f32.mrb[0].mxu0
    %v6705 = vadd.f32 0.0, %v6704
    %6706 = vdwg.mxu0
    %v6707 = vadd.f32 %v6561, %v6632
    %v6708 = vadd.f32 %v6562, %v6634
    %v6709 = vadd.f32 %v6563, %v6703
    %v6710 = vadd.f32 %v6564, %v6705
    %v6711 = vxor.u32 %v6707, 2147483648
    %v6712 = vmul.f32 %v6711, 1.442695
    %v6713 = vpow.pop %v6712
    %v6714 = vadd.f32 %v6713, 1.0
    %v6715 = vrcp.pop %v6714
    %v6716 = vmul.f32 1.0, %v6715
    %v6717 = vxor.u32 %v6708, 2147483648
    %v6718 = vmul.f32 %v6717, 1.442695
    %v6719 = vpow.pop %v6718
    %v6720 = vadd.f32 %v6719, 1.0
    %v6721 = vrcp.pop %v6720
    %v6722 = vmul.f32 1.0, %v6721
    %v6723 = vtanh.pop %v6709
    %v6724 = vxor.u32 %v6710, 2147483648
    %v6725 = vmul.f32 %v6724, 1.442695
    %v6726 = vpow.pop %v6725
    %v6727 = vadd.f32 %v6726, 1.0
    %v6728 = vrcp.pop %v6727
    %v6729 = vmul.f32 1.0, %v6728
    %v6730 = vmul.f32 %v6722, %v6230
    %v6731 = vmul.f32 %v6716, %v6723
    %v6732 = vadd.f32 %v6730, %v6731
    %v6733 = vtanh.pop %v6732
    %v6734 = vmul.f32 %v6729, %v6733
    %6735 = vmatprep.subr.mxu0 %v1455
    %6736 = vmatpush1.msra.mxu0 %v1454
    %6737 = vmatprep.subr.mxu0 %v1459
    %6738 = vmatpush1.msra.mxu0 %v1458
    %6739 = vmatprep.subr.mxu0 %v1463
    %6740 = vmatpush1.msra.mxu0 %v1462
    %6741 = vmatprep.subr.mxu0 %v1467
    %6742 = vmatpush1.msra.mxu0 %v1466
    %6743 = vmatprep.subr.mxu0 %v1471
    %6744 = vmatpush1.msra.mxu0 %v1470
    %6745 = vmatprep.subr.mxu0 %v1475
    %6746 = vmatpush1.msra.mxu0 %v1474
    %6747 = vmatprep.subr.mxu0 %v1479
    %6748 = vmatpush1.msra.mxu0 %v1478
    %6749 = vmatprep.subr.mxu0 %v1483
    %6750 = vmatpush1.msra.mxu0 %v1482
    %6751 = vmatprep.subr.mxu0 %v1487
    %6752 = vmatpush1.msra.mxu0 %v1486
    %6753 = vmatprep.subr.mxu0 %v1491
    %6754 = vmatpush1.msra.mxu0 %v1490
    %6755 = vmatprep.subr.mxu0 %v1495
    %6756 = vmatpush1.msra.mxu0 %v1494
    %6757 = vmatprep.subr.mxu0 %v1499
    %6758 = vmatpush1.msra.mxu0 %v1498
    %6759 = vmatprep.subr.mxu0 %v1503
    %6760 = vmatpush1.msra.mxu0 %v1502
    %6761 = vmatprep.subr.mxu0 %v1507
    %6762 = vmatpush1.msra.mxu0 %v1506
    %6763 = vmatprep.subr.mxu0 %v1511
    %6764 = vmatpush1.msra.mxu0 %v1510
    %6765 = vmatprep.subr.mxu0 %v1515
    %6766 = vmatpush1.msra.mxu0 %v1514
    %6767 = vmatprep.subr.mxu0 0.0
    %6768 = vmatpush1.msra.mxu0 0.0
    %6769 = vmatprep.subr.mxu0 0.0
    %6770 = vmatpush1.msra.mxu0 0.0
    %6771 = vmatprep.subr.mxu0 0.0
    %6772 = vmatpush1.msra.mxu0 0.0
    %6773 = vmatprep.subr.mxu0 0.0
    %6774 = vmatpush1.msra.mxu0 0.0
    %6775 = vmatprep.subr.mxu0 0.0
    %6776 = vmatpush1.msra.mxu0 0.0
    %6777 = vmatprep.subr.mxu0 0.0
    %6778 = vmatpush1.msra.mxu0 0.0
    %6779 = vmatprep.subr.mxu0 0.0
    %6780 = vmatpush1.msra.mxu0 0.0
    %6781 = vmatprep.subr.mxu0 0.0
    %6782 = vmatpush1.msra.mxu0 0.0
    %6783 = vmatprep.subr.mxu0 0.0
    %6784 = vmatpush1.msra.mxu0 0.0
    %6785 = vmatprep.subr.mxu0 0.0
    %6786 = vmatpush1.msra.mxu0 0.0
    %6787 = vmatprep.subr.mxu0 0.0
    %6788 = vmatpush1.msra.mxu0 0.0
    %6789 = vmatprep.subr.mxu0 0.0
    %6790 = vmatpush1.msra.mxu0 0.0
    %6791 = vmatprep.subr.mxu0 0.0
    %6792 = vmatpush1.msra.mxu0 0.0
    %6793 = vmatprep.subr.mxu0 0.0
    %6794 = vmatpush1.msra.mxu0 0.0
    %6795 = vmatprep.subr.mxu0 0.0
    %6796 = vmatpush1.msra.mxu0 0.0
    %6797 = vmatprep.subr.mxu0 0.0
    %6798 = vmatpush1.msra.mxu0 0.0
    %6799 = vmatprep.mubr.f32.mxu0 0.0
    %6800 = vmatmul.mubr.f32.gmra.mrb[0].mxu0 %v6544
    %v6801 = vpop.f32.mrb[0].mxu0
    %v6802 = vadd.f32 0.0, %v6801
    %v6803 = vpop.f32.mrb[0].mxu0
    %v6804 = vadd.f32 0.0, %v6803
    %6805 = vdwg.mxu0
    %6806 = vmatprep.subr.mxu0 %v1457
    %6807 = vmatpush1.msra.mxu0 %v1456
    %6808 = vmatprep.subr.mxu0 %v1461
    %6809 = vmatpush1.msra.mxu0 %v1460
    %6810 = vmatprep.subr.mxu0 %v1465
    %6811 = vmatpush1.msra.mxu0 %v1464
    %6812 = vmatprep.subr.mxu0 %v1469
    %6813 = vmatpush1.msra.mxu0 %v1468
    %6814 = vmatprep.subr.mxu0 %v1473
    %6815 = vmatpush1.msra.mxu0 %v1472
    %6816 = vmatprep.subr.mxu0 %v1477
    %6817 = vmatpush1.msra.mxu0 %v1476
    %6818 = vmatprep.subr.mxu0 %v1481
    %6819 = vmatpush1.msra.mxu0 %v1480
    %6820 = vmatprep.subr.mxu0 %v1485
    %6821 = vmatpush1.msra.mxu0 %v1484
    %6822 = vmatprep.subr.mxu0 %v1489
    %6823 = vmatpush1.msra.mxu0 %v1488
    %6824 = vmatprep.subr.mxu0 %v1493
    %6825 = vmatpush1.msra.mxu0 %v1492
    %6826 = vmatprep.subr.mxu0 %v1497
    %6827 = vmatpush1.msra.mxu0 %v1496
    %6828 = vmatprep.subr.mxu0 %v1501
    %6829 = vmatpush1.msra.mxu0 %v1500
    %6830 = vmatprep.subr.mxu0 %v1505
    %6831 = vmatpush1.msra.mxu0 %v1504
    %6832 = vmatprep.subr.mxu0 %v1509
    %6833 = vmatpush1.msra.mxu0 %v1508
    %6834 = vmatprep.subr.mxu0 %v1513
    %6835 = vmatpush1.msra.mxu0 %v1512
    %6836 = vmatprep.subr.mxu0 %v1517
    %6837 = vmatpush1.msra.mxu0 %v1516
    %6838 = vmatprep.subr.mxu0 0.0
    %6839 = vmatpush1.msra.mxu0 0.0
    %6840 = vmatprep.subr.mxu0 0.0
    %6841 = vmatpush1.msra.mxu0 0.0
    %6842 = vmatprep.subr.mxu0 0.0
    %6843 = vmatpush1.msra.mxu0 0.0
    %6844 = vmatprep.subr.mxu0 0.0
    %6845 = vmatpush1.msra.mxu0 0.0
    %6846 = vmatprep.subr.mxu0 0.0
    %6847 = vmatpush1.msra.mxu0 0.0
    %6848 = vmatprep.subr.mxu0 0.0
    %6849 = vmatpush1.msra.mxu0 0.0
    %6850 = vmatprep.subr.mxu0 0.0
    %6851 = vmatpush1.msra.mxu0 0.0
    %6852 = vmatprep.subr.mxu0 0.0
    %6853 = vmatpush1.msra.mxu0 0.0
    %6854 = vmatprep.subr.mxu0 0.0
    %6855 = vmatpush1.msra.mxu0 0.0
    %6856 = vmatprep.subr.mxu0 0.0
    %6857 = vmatpush1.msra.mxu0 0.0
    %6858 = vmatprep.subr.mxu0 0.0
    %6859 = vmatpush1.msra.mxu0 0.0
    %6860 = vmatprep.subr.mxu0 0.0
    %6861 = vmatpush1.msra.mxu0 0.0
    %6862 = vmatprep.subr.mxu0 0.0
    %6863 = vmatpush1.msra.mxu0 0.0
    %6864 = vmatprep.subr.mxu0 0.0
    %6865 = vmatpush1.msra.mxu0 0.0
    %6866 = vmatprep.subr.mxu0 0.0
    %6867 = vmatpush1.msra.mxu0 0.0
    %6868 = vmatprep.subr.mxu0 0.0
    %6869 = vmatpush1.msra.mxu0 0.0
    %6870 = vmatprep.mubr.f32.mxu0 0.0
    %6871 = vmatmul.mubr.f32.gmra.mrb[0].mxu0 %v6544
    %v6872 = vpop.f32.mrb[0].mxu0
    %v6873 = vadd.f32 0.0, %v6872
    %v6874 = vpop.f32.mrb[0].mxu0
    %v6875 = vadd.f32 0.0, %v6874
    %6876 = vdwg.mxu0
    %6877 = vmatprep.subr.mxu0 %v1391
    %6878 = vmatpush1.msra.mxu0 %v1390
    %6879 = vmatprep.subr.mxu0 %v1395
    %6880 = vmatpush1.msra.mxu0 %v1394
    %6881 = vmatprep.subr.mxu0 %v1399
    %6882 = vmatpush1.msra.mxu0 %v1398
    %6883 = vmatprep.subr.mxu0 %v1403
    %6884 = vmatpush1.msra.mxu0 %v1402
    %6885 = vmatprep.subr.mxu0 %v1407
    %6886 = vmatpush1.msra.mxu0 %v1406
    %6887 = vmatprep.subr.mxu0 %v1411
    %6888 = vmatpush1.msra.mxu0 %v1410
    %6889 = vmatprep.subr.mxu0 %v1415
    %6890 = vmatpush1.msra.mxu0 %v1414
    %6891 = vmatprep.subr.mxu0 %v1419
    %6892 = vmatpush1.msra.mxu0 %v1418
    %6893 = vmatprep.subr.mxu0 %v1423
    %6894 = vmatpush1.msra.mxu0 %v1422
    %6895 = vmatprep.subr.mxu0 %v1427
    %6896 = vmatpush1.msra.mxu0 %v1426
    %6897 = vmatprep.subr.mxu0 %v1431
    %6898 = vmatpush1.msra.mxu0 %v1430
    %6899 = vmatprep.subr.mxu0 %v1435
    %6900 = vmatpush1.msra.mxu0 %v1434
    %6901 = vmatprep.subr.mxu0 %v1439
    %6902 = vmatpush1.msra.mxu0 %v1438
    %6903 = vmatprep.subr.mxu0 %v1443
    %6904 = vmatpush1.msra.mxu0 %v1442
    %6905 = vmatprep.subr.mxu0 %v1447
    %6906 = vmatpush1.msra.mxu0 %v1446
    %6907 = vmatprep.subr.mxu0 %v1451
    %6908 = vmatpush1.msra.mxu0 %v1450
    %6909 = vmatprep.subr.mxu0 0.0
    %6910 = vmatpush1.msra.mxu0 0.0
    %6911 = vmatprep.subr.mxu0 0.0
    %6912 = vmatpush1.msra.mxu0 0.0
    %6913 = vmatprep.subr.mxu0 0.0
    %6914 = vmatpush1.msra.mxu0 0.0
    %6915 = vmatprep.subr.mxu0 0.0
    %6916 = vmatpush1.msra.mxu0 0.0
    %6917 = vmatprep.subr.mxu0 0.0
    %6918 = vmatpush1.msra.mxu0 0.0
    %6919 = vmatprep.subr.mxu0 0.0
    %6920 = vmatpush1.msra.mxu0 0.0
    %6921 = vmatprep.subr.mxu0 0.0
    %6922 = vmatpush1.msra.mxu0 0.0
    %6923 = vmatprep.subr.mxu0 0.0
    %6924 = vmatpush1.msra.mxu0 0.0
    %6925 = vmatprep.subr.mxu0 0.0
    %6926 = vmatpush1.msra.mxu0 0.0
    %6927 = vmatprep.subr.mxu0 0.0
    %6928 = vmatpush1.msra.mxu0 0.0
    %6929 = vmatprep.subr.mxu0 0.0
    %6930 = vmatpush1.msra.mxu0 0.0
    %6931 = vmatprep.subr.mxu0 0.0
    %6932 = vmatpush1.msra.mxu0 0.0
    %6933 = vmatprep.subr.mxu0 0.0
    %6934 = vmatpush1.msra.mxu0 0.0
    %6935 = vmatprep.subr.mxu0 0.0
    %6936 = vmatpush1.msra.mxu0 0.0
    %6937 = vmatprep.subr.mxu0 0.0
    %6938 = vmatpush1.msra.mxu0 0.0
    %6939 = vmatprep.subr.mxu0 0.0
    %6940 = vmatpush1.msra.mxu0 0.0
    %6941 = vmatprep.mubr.f32.mxu0 0.0
    %6942 = vmatmul.mubr.f32.gmra.mrb[0].mxu0 %v6734
    %v6943 = vpop.f32.mrb[0].mxu0
    %v6944 = vadd.f32 %v6802, %v6943
    %v6945 = vpop.f32.mrb[0].mxu0
    %v6946 = vadd.f32 %v6804, %v6945
    %6947 = vdwg.mxu0
    %6948 = vmatprep.subr.mxu0 %v1393
    %6949 = vmatpush1.msra.mxu0 %v1392
    %6950 = vmatprep.subr.mxu0 %v1397
    %6951 = vmatpush1.msra.mxu0 %v1396
    %6952 = vmatprep.subr.mxu0 %v1401
    %6953 = vmatpush1.msra.mxu0 %v1400
    %6954 = vmatprep.subr.mxu0 %v1405
    %6955 = vmatpush1.msra.mxu0 %v1404
    %6956 = vmatprep.subr.mxu0 %v1409
    %6957 = vmatpush1.msra.mxu0 %v1408
    %6958 = vmatprep.subr.mxu0 %v1413
    %6959 = vmatpush1.msra.mxu0 %v1412
    %6960 = vmatprep.subr.mxu0 %v1417
    %6961 = vmatpush1.msra.mxu0 %v1416
    %6962 = vmatprep.subr.mxu0 %v1421
    %6963 = vmatpush1.msra.mxu0 %v1420
    %6964 = vmatprep.subr.mxu0 %v1425
    %6965 = vmatpush1.msra.mxu0 %v1424
    %6966 = vmatprep.subr.mxu0 %v1429
    %6967 = vmatpush1.msra.mxu0 %v1428
    %6968 = vmatprep.subr.mxu0 %v1433
    %6969 = vmatpush1.msra.mxu0 %v1432
    %6970 = vmatprep.subr.mxu0 %v1437
    %6971 = vmatpush1.msra.mxu0 %v1436
    %6972 = vmatprep.subr.mxu0 %v1441
    %6973 = vmatpush1.msra.mxu0 %v1440
    %6974 = vmatprep.subr.mxu0 %v1445
    %6975 = vmatpush1.msra.mxu0 %v1444
    %6976 = vmatprep.subr.mxu0 %v1449
    %6977 = vmatpush1.msra.mxu0 %v1448
    %6978 = vmatprep.subr.mxu0 %v1453
    %6979 = vmatpush1.msra.mxu0 %v1452
    %6980 = vmatprep.subr.mxu0 0.0
    %6981 = vmatpush1.msra.mxu0 0.0
    %6982 = vmatprep.subr.mxu0 0.0
    %6983 = vmatpush1.msra.mxu0 0.0
    %6984 = vmatprep.subr.mxu0 0.0
    %6985 = vmatpush1.msra.mxu0 0.0
    %6986 = vmatprep.subr.mxu0 0.0
    %6987 = vmatpush1.msra.mxu0 0.0
    %6988 = vmatprep.subr.mxu0 0.0
    %6989 = vmatpush1.msra.mxu0 0.0
    %6990 = vmatprep.subr.mxu0 0.0
    %6991 = vmatpush1.msra.mxu0 0.0
    %6992 = vmatprep.subr.mxu0 0.0
    %6993 = vmatpush1.msra.mxu0 0.0
    %6994 = vmatprep.subr.mxu0 0.0
    %6995 = vmatpush1.msra.mxu0 0.0
    %6996 = vmatprep.subr.mxu0 0.0
    %6997 = vmatpush1.msra.mxu0 0.0
    %6998 = vmatprep.subr.mxu0 0.0
    %6999 = vmatpush1.msra.mxu0 0.0
    %7000 = vmatprep.subr.mxu0 0.0
    %7001 = vmatpush1.msra.mxu0 0.0
    %7002 = vmatprep.subr.mxu0 0.0
    %7003 = vmatpush1.msra.mxu0 0.0
    %7004 = vmatprep.subr.mxu0 0.0
    %7005 = vmatpush1.msra.mxu0 0.0
    %7006 = vmatprep.subr.mxu0 0.0
    %7007 = vmatpush1.msra.mxu0 0.0
    %7008 = vmatprep.subr.mxu0 0.0
    %7009 = vmatpush1.msra.mxu0 0.0
    %7010 = vmatprep.subr.mxu0 0.0
    %7011 = vmatpush1.msra.mxu0 0.0
    %7012 = vmatprep.mubr.f32.mxu0 0.0
    %7013 = vmatmul.mubr.f32.gmra.mrb[0].mxu0 %v6734
    %v7014 = vpop.f32.mrb[0].mxu0
    %v7015 = vadd.f32 %v6873, %v7014
    %v7016 = vpop.f32.mrb[0].mxu0
    %v7017 = vadd.f32 %v6875, %v7016
    %7018 = vdwg.mxu0
    %v7019 = vadd.f32 %v6944, %v1994
    %v7020 = vadd.f32 %v6946, %v1998
    %v7021 = vadd.f32 %v7015, %v2002
    %v7022 = vadd.f32 %v7017, %v2006
    %v7023 = vxor.u32 %v7019, 2147483648
    %v7024 = vmul.f32 %v7023, 1.442695
    %v7025 = vpow.pop %v7024
    %v7026 = vadd.f32 %v7025, 1.0
    %v7027 = vrcp.pop %v7026
    %v7028 = vmul.f32 1.0, %v7027
    %v7029 = vxor.u32 %v7020, 2147483648
    %v7030 = vmul.f32 %v7029, 1.442695
    %v7031 = vpow.pop %v7030
    %v7032 = vadd.f32 %v7031, 1.0
    %v7033 = vrcp.pop %v7032
    %v7034 = vmul.f32 1.0, %v7033
    %v7035 = vtanh.pop %v7021
    %v7036 = vxor.u32 %v7022, 2147483648
    %v7037 = vmul.f32 %v7036, 1.442695
    %v7038 = vpow.pop %v7037
    %v7039 = vadd.f32 %v7038, 1.0
    %v7040 = vrcp.pop %v7039
    %v7041 = vmul.f32 1.0, %v7040
    %v7042 = vmul.f32 %v7034, %v6542
    %v7043 = vmul.f32 %v7028, %v7035
    %v7044 = vadd.f32 %v7042, %v7043
    %v7045 = vtanh.pop %v7044
    %v7046 = vmul.f32 %v7041, %v7045
    %v7047 = vrot.slane %v1053, 3
    %v7048 = vrot.slane %v1055, 3
    %v7049 = vrot.slane %v1130, 3
    %v7050 = vrot.slane %v1132, 3
    %v7055 = vrot.slane %v1245, 2
    %v7056 = vrot.slane %v1247, 2
    %v7057 = vrot.slane %v1322, 2
    %v7058 = vrot.slane %v1324, 2
    %v7063 = vsel %vm1531, %v7047, %v7055
    %v7064 = vsel %vm1531, %v7048, %v7056
    %v7065 = vsel %vm1531, %v7049, %v7057
    %v7066 = vsel %vm1531, %v7050, %v7058
    %7067 = vmatprep.subr.mxu0 %v1327
    %7068 = vmatpush1.msra.mxu0 %v1326
    %7069 = vmatprep.subr.mxu0 %v1331
    %7070 = vmatpush1.msra.mxu0 %v1330
    %7071 = vmatprep.subr.mxu0 %v1335
    %7072 = vmatpush1.msra.mxu0 %v1334
    %7073 = vmatprep.subr.mxu0 %v1339
    %7074 = vmatpush1.msra.mxu0 %v1338
    %7075 = vmatprep.subr.mxu0 %v1343
    %7076 = vmatpush1.msra.mxu0 %v1342
    %7077 = vmatprep.subr.mxu0 %v1347
    %7078 = vmatpush1.msra.mxu0 %v1346
    %7079 = vmatprep.subr.mxu0 %v1351
    %7080 = vmatpush1.msra.mxu0 %v1350
    %7081 = vmatprep.subr.mxu0 %v1355
    %7082 = vmatpush1.msra.mxu0 %v1354
    %7083 = vmatprep.subr.mxu0 %v1359
    %7084 = vmatpush1.msra.mxu0 %v1358
    %7085 = vmatprep.subr.mxu0 %v1363
    %7086 = vmatpush1.msra.mxu0 %v1362
    %7087 = vmatprep.subr.mxu0 %v1367
    %7088 = vmatpush1.msra.mxu0 %v1366
    %7089 = vmatprep.subr.mxu0 %v1371
    %7090 = vmatpush1.msra.mxu0 %v1370
    %7091 = vmatprep.subr.mxu0 %v1375
    %7092 = vmatpush1.msra.mxu0 %v1374
    %7093 = vmatprep.subr.mxu0 %v1379
    %7094 = vmatpush1.msra.mxu0 %v1378
    %7095 = vmatprep.subr.mxu0 %v1383
    %7096 = vmatpush1.msra.mxu0 %v1382
    %7097 = vmatprep.subr.mxu0 %v1387
    %7098 = vmatpush1.msra.mxu0 %v1386
    %7099 = vmatprep.subr.mxu0 0.0
    %7100 = vmatpush1.msra.mxu0 0.0
    %7101 = vmatprep.subr.mxu0 0.0
    %7102 = vmatpush1.msra.mxu0 0.0
    %7103 = vmatprep.subr.mxu0 0.0
    %7104 = vmatpush1.msra.mxu0 0.0
    %7105 = vmatprep.subr.mxu0 0.0
    %7106 = vmatpush1.msra.mxu0 0.0
    %7107 = vmatprep.subr.mxu0 0.0
    %7108 = vmatpush1.msra.mxu0 0.0
    %7109 = vmatprep.subr.mxu0 0.0
    %7110 = vmatpush1.msra.mxu0 0.0
    %7111 = vmatprep.subr.mxu0 0.0
    %7112 = vmatpush1.msra.mxu0 0.0
    %7113 = vmatprep.subr.mxu0 0.0
    %7114 = vmatpush1.msra.mxu0 0.0
    %7115 = vmatprep.subr.mxu0 0.0
    %7116 = vmatpush1.msra.mxu0 0.0
    %7117 = vmatprep.subr.mxu0 0.0
    %7118 = vmatpush1.msra.mxu0 0.0
    %7119 = vmatprep.subr.mxu0 0.0
    %7120 = vmatpush1.msra.mxu0 0.0
    %7121 = vmatprep.subr.mxu0 0.0
    %7122 = vmatpush1.msra.mxu0 0.0
    %7123 = vmatprep.subr.mxu0 0.0
    %7124 = vmatpush1.msra.mxu0 0.0
    %7125 = vmatprep.subr.mxu0 0.0
    %7126 = vmatpush1.msra.mxu0 0.0
    %7127 = vmatprep.subr.mxu0 0.0
    %7128 = vmatpush1.msra.mxu0 0.0
    %7129 = vmatprep.subr.mxu0 0.0
    %7130 = vmatpush1.msra.mxu0 0.0
    %7131 = vmatprep.mubr.f32.mxu0 0.0
    %7132 = vmatmul.mubr.f32.gmra.mrb[0].mxu0 %v6734
    %v7133 = vpop.f32.mrb[0].mxu0
    %v7134 = vadd.f32 0.0, %v7133
    %v7135 = vpop.f32.mrb[0].mxu0
    %v7136 = vadd.f32 0.0, %v7135
    %7137 = vdwg.mxu0
    %7138 = vmatprep.subr.mxu0 %v1329
    %7139 = vmatpush1.msra.mxu0 %v1328
    %7140 = vmatprep.subr.mxu0 %v1333
    %7141 = vmatpush1.msra.mxu0 %v1332
    %7142 = vmatprep.subr.mxu0 %v1337
    %7143 = vmatpush1.msra.mxu0 %v1336
    %7144 = vmatprep.subr.mxu0 %v1341
    %7145 = vmatpush1.msra.mxu0 %v1340
    %7146 = vmatprep.subr.mxu0 %v1345
    %7147 = vmatpush1.msra.mxu0 %v1344
    %7148 = vmatprep.subr.mxu0 %v1349
    %7149 = vmatpush1.msra.mxu0 %v1348
    %7150 = vmatprep.subr.mxu0 %v1353
    %7151 = vmatpush1.msra.mxu0 %v1352
    %7152 = vmatprep.subr.mxu0 %v1357
    %7153 = vmatpush1.msra.mxu0 %v1356
    %7154 = vmatprep.subr.mxu0 %v1361
    %7155 = vmatpush1.msra.mxu0 %v1360
    %7156 = vmatprep.subr.mxu0 %v1365
    %7157 = vmatpush1.msra.mxu0 %v1364
    %7158 = vmatprep.subr.mxu0 %v1369
    %7159 = vmatpush1.msra.mxu0 %v1368
    %7160 = vmatprep.subr.mxu0 %v1373
    %7161 = vmatpush1.msra.mxu0 %v1372
    %7162 = vmatprep.subr.mxu0 %v1377
    %7163 = vmatpush1.msra.mxu0 %v1376
    %7164 = vmatprep.subr.mxu0 %v1381
    %7165 = vmatpush1.msra.mxu0 %v1380
    %7166 = vmatprep.subr.mxu0 %v1385
    %7167 = vmatpush1.msra.mxu0 %v1384
    %7168 = vmatprep.subr.mxu0 %v1389
    %7169 = vmatpush1.msra.mxu0 %v1388
    %7170 = vmatprep.subr.mxu0 0.0
    %7171 = vmatpush1.msra.mxu0 0.0
    %7172 = vmatprep.subr.mxu0 0.0
    %7173 = vmatpush1.msra.mxu0 0.0
    %7174 = vmatprep.subr.mxu0 0.0
    %7175 = vmatpush1.msra.mxu0 0.0
    %7176 = vmatprep.subr.mxu0 0.0
    %7177 = vmatpush1.msra.mxu0 0.0
    %7178 = vmatprep.subr.mxu0 0.0
    %7179 = vmatpush1.msra.mxu0 0.0
    %7180 = vmatprep.subr.mxu0 0.0
    %7181 = vmatpush1.msra.mxu0 0.0
    %7182 = vmatprep.subr.mxu0 0.0
    %7183 = vmatpush1.msra.mxu0 0.0
    %7184 = vmatprep.subr.mxu0 0.0
    %7185 = vmatpush1.msra.mxu0 0.0
    %7186 = vmatprep.subr.mxu0 0.0
    %7187 = vmatpush1.msra.mxu0 0.0
    %7188 = vmatprep.subr.mxu0 0.0
    %7189 = vmatpush1.msra.mxu0 0.0
    %7190 = vmatprep.subr.mxu0 0.0
    %7191 = vmatpush1.msra.mxu0 0.0
    %7192 = vmatprep.subr.mxu0 0.0
    %7193 = vmatpush1.msra.mxu0 0.0
    %7194 = vmatprep.subr.mxu0 0.0
    %7195 = vmatpush1.msra.mxu0 0.0
    %7196 = vmatprep.subr.mxu0 0.0
    %7197 = vmatpush1.msra.mxu0 0.0
    %7198 = vmatprep.subr.mxu0 0.0
    %7199 = vmatpush1.msra.mxu0 0.0
    %7200 = vmatprep.subr.mxu0 0.0
    %7201 = vmatpush1.msra.mxu0 0.0
    %7202 = vmatprep.mubr.f32.mxu0 0.0
    %7203 = vmatmul.mubr.f32.gmra.mrb[0].mxu0 %v6734
    %v7204 = vpop.f32.mrb[0].mxu0
    %v7205 = vadd.f32 0.0, %v7204
    %v7206 = vpop.f32.mrb[0].mxu0
    %v7207 = vadd.f32 0.0, %v7206
    %7208 = vdwg.mxu0
    %v7209 = vadd.f32 %v7063, %v7134
    %v7210 = vadd.f32 %v7064, %v7136
    %v7211 = vadd.f32 %v7065, %v7205
    %v7212 = vadd.f32 %v7066, %v7207
    %v7213 = vxor.u32 %v7209, 2147483648
    %v7214 = vmul.f32 %v7213, 1.442695
    %v7215 = vpow.pop %v7214
    %v7216 = vadd.f32 %v7215, 1.0
    %v7217 = vrcp.pop %v7216
    %v7218 = vmul.f32 1.0, %v7217
    %v7219 = vxor.u32 %v7210, 2147483648
    %v7220 = vmul.f32 %v7219, 1.442695
    %v7221 = vpow.pop %v7220
    %v7222 = vadd.f32 %v7221, 1.0
    %v7223 = vrcp.pop %v7222
    %v7224 = vmul.f32 1.0, %v7223
    %v7225 = vtanh.pop %v7211
    %v7226 = vxor.u32 %v7212, 2147483648
    %v7227 = vmul.f32 %v7226, 1.442695
    %v7228 = vpow.pop %v7227
    %v7229 = vadd.f32 %v7228, 1.0
    %v7230 = vrcp.pop %v7229
    %v7231 = vmul.f32 1.0, %v7230
    %v7232 = vmul.f32 %v7224, %v6732
    %v7233 = vmul.f32 %v7218, %v7225
    %v7234 = vadd.f32 %v7232, %v7233
    %v7235 = vtanh.pop %v7234
    %v7236 = vmul.f32 %v7231, %v7235
    %7237 = vmatprep.subr.mxu0 %v1455
    %7238 = vmatpush1.msra.mxu0 %v1454
    %7239 = vmatprep.subr.mxu0 %v1459
    %7240 = vmatpush1.msra.mxu0 %v1458
    %7241 = vmatprep.subr.mxu0 %v1463
    %7242 = vmatpush1.msra.mxu0 %v1462
    %7243 = vmatprep.subr.mxu0 %v1467
    %7244 = vmatpush1.msra.mxu0 %v1466
    %7245 = vmatprep.subr.mxu0 %v1471
    %7246 = vmatpush1.msra.mxu0 %v1470
    %7247 = vmatprep.subr.mxu0 %v1475
    %7248 = vmatpush1.msra.mxu0 %v1474
    %7249 = vmatprep.subr.mxu0 %v1479
    %7250 = vmatpush1.msra.mxu0 %v1478
    %7251 = vmatprep.subr.mxu0 %v1483
    %7252 = vmatpush1.msra.mxu0 %v1482
    %7253 = vmatprep.subr.mxu0 %v1487
    %7254 = vmatpush1.msra.mxu0 %v1486
    %7255 = vmatprep.subr.mxu0 %v1491
    %7256 = vmatpush1.msra.mxu0 %v1490
    %7257 = vmatprep.subr.mxu0 %v1495
    %7258 = vmatpush1.msra.mxu0 %v1494
    %7259 = vmatprep.subr.mxu0 %v1499
    %7260 = vmatpush1.msra.mxu0 %v1498
    %7261 = vmatprep.subr.mxu0 %v1503
    %7262 = vmatpush1.msra.mxu0 %v1502
    %7263 = vmatprep.subr.mxu0 %v1507
    %7264 = vmatpush1.msra.mxu0 %v1506
    %7265 = vmatprep.subr.mxu0 %v1511
    %7266 = vmatpush1.msra.mxu0 %v1510
    %7267 = vmatprep.subr.mxu0 %v1515
    %7268 = vmatpush1.msra.mxu0 %v1514
    %7269 = vmatprep.subr.mxu0 0.0
    %7270 = vmatpush1.msra.mxu0 0.0
    %7271 = vmatprep.subr.mxu0 0.0
    %7272 = vmatpush1.msra.mxu0 0.0
    %7273 = vmatprep.subr.mxu0 0.0
    %7274 = vmatpush1.msra.mxu0 0.0
    %7275 = vmatprep.subr.mxu0 0.0
    %7276 = vmatpush1.msra.mxu0 0.0
    %7277 = vmatprep.subr.mxu0 0.0
    %7278 = vmatpush1.msra.mxu0 0.0
    %7279 = vmatprep.subr.mxu0 0.0
    %7280 = vmatpush1.msra.mxu0 0.0
    %7281 = vmatprep.subr.mxu0 0.0
    %7282 = vmatpush1.msra.mxu0 0.0
    %7283 = vmatprep.subr.mxu0 0.0
    %7284 = vmatpush1.msra.mxu0 0.0
    %7285 = vmatprep.subr.mxu0 0.0
    %7286 = vmatpush1.msra.mxu0 0.0
    %7287 = vmatprep.subr.mxu0 0.0
    %7288 = vmatpush1.msra.mxu0 0.0
    %7289 = vmatprep.subr.mxu0 0.0
    %7290 = vmatpush1.msra.mxu0 0.0
    %7291 = vmatprep.subr.mxu0 0.0
    %7292 = vmatpush1.msra.mxu0 0.0
    %7293 = vmatprep.subr.mxu0 0.0
    %7294 = vmatpush1.msra.mxu0 0.0
    %7295 = vmatprep.subr.mxu0 0.0
    %7296 = vmatpush1.msra.mxu0 0.0
    %7297 = vmatprep.subr.mxu0 0.0
    %7298 = vmatpush1.msra.mxu0 0.0
    %7299 = vmatprep.subr.mxu0 0.0
    %7300 = vmatpush1.msra.mxu0 0.0
    %7301 = vmatprep.mubr.f32.mxu0 0.0
    %7302 = vmatmul.mubr.f32.gmra.mrb[0].mxu0 %v7046
    %v7303 = vpop.f32.mrb[0].mxu0
    %v7304 = vadd.f32 0.0, %v7303
    %v7305 = vpop.f32.mrb[0].mxu0
    %v7306 = vadd.f32 0.0, %v7305
    %7307 = vdwg.mxu0
    %7308 = vmatprep.subr.mxu0 %v1457
    %7309 = vmatpush1.msra.mxu0 %v1456
    %7310 = vmatprep.subr.mxu0 %v1461
    %7311 = vmatpush1.msra.mxu0 %v1460
    %7312 = vmatprep.subr.mxu0 %v1465
    %7313 = vmatpush1.msra.mxu0 %v1464
    %7314 = vmatprep.subr.mxu0 %v1469
    %7315 = vmatpush1.msra.mxu0 %v1468
    %7316 = vmatprep.subr.mxu0 %v1473
    %7317 = vmatpush1.msra.mxu0 %v1472
    %7318 = vmatprep.subr.mxu0 %v1477
    %7319 = vmatpush1.msra.mxu0 %v1476
    %7320 = vmatprep.subr.mxu0 %v1481
    %7321 = vmatpush1.msra.mxu0 %v1480
    %7322 = vmatprep.subr.mxu0 %v1485
    %7323 = vmatpush1.msra.mxu0 %v1484
    %7324 = vmatprep.subr.mxu0 %v1489
    %7325 = vmatpush1.msra.mxu0 %v1488
    %7326 = vmatprep.subr.mxu0 %v1493
    %7327 = vmatpush1.msra.mxu0 %v1492
    %7328 = vmatprep.subr.mxu0 %v1497
    %7329 = vmatpush1.msra.mxu0 %v1496
    %7330 = vmatprep.subr.mxu0 %v1501
    %7331 = vmatpush1.msra.mxu0 %v1500
    %7332 = vmatprep.subr.mxu0 %v1505
    %7333 = vmatpush1.msra.mxu0 %v1504
    %7334 = vmatprep.subr.mxu0 %v1509
    %7335 = vmatpush1.msra.mxu0 %v1508
    %7336 = vmatprep.subr.mxu0 %v1513
    %7337 = vmatpush1.msra.mxu0 %v1512
    %7338 = vmatprep.subr.mxu0 %v1517
    %7339 = vmatpush1.msra.mxu0 %v1516
    %7340 = vmatprep.subr.mxu0 0.0
    %7341 = vmatpush1.msra.mxu0 0.0
    %7342 = vmatprep.subr.mxu0 0.0
    %7343 = vmatpush1.msra.mxu0 0.0
    %7344 = vmatprep.subr.mxu0 0.0
    %7345 = vmatpush1.msra.mxu0 0.0
    %7346 = vmatprep.subr.mxu0 0.0
    %7347 = vmatpush1.msra.mxu0 0.0
    %7348 = vmatprep.subr.mxu0 0.0
    %7349 = vmatpush1.msra.mxu0 0.0
    %7350 = vmatprep.subr.mxu0 0.0
    %7351 = vmatpush1.msra.mxu0 0.0
    %7352 = vmatprep.subr.mxu0 0.0
    %7353 = vmatpush1.msra.mxu0 0.0
    %7354 = vmatprep.subr.mxu0 0.0
    %7355 = vmatpush1.msra.mxu0 0.0
    %7356 = vmatprep.subr.mxu0 0.0
    %7357 = vmatpush1.msra.mxu0 0.0
    %7358 = vmatprep.subr.mxu0 0.0
    %7359 = vmatpush1.msra.mxu0 0.0
    %7360 = vmatprep.subr.mxu0 0.0
    %7361 = vmatpush1.msra.mxu0 0.0
    %7362 = vmatprep.subr.mxu0 0.0
    %7363 = vmatpush1.msra.mxu0 0.0
    %7364 = vmatprep.subr.mxu0 0.0
    %7365 = vmatpush1.msra.mxu0 0.0
    %7366 = vmatprep.subr.mxu0 0.0
    %7367 = vmatpush1.msra.mxu0 0.0
    %7368 = vmatprep.subr.mxu0 0.0
    %7369 = vmatpush1.msra.mxu0 0.0
    %7370 = vmatprep.subr.mxu0 0.0
    %7371 = vmatpush1.msra.mxu0 0.0
    %7372 = vmatprep.mubr.f32.mxu0 0.0
    %7373 = vmatmul.mubr.f32.gmra.mrb[0].mxu0 %v7046
    %v7374 = vpop.f32.mrb[0].mxu0
    %v7375 = vadd.f32 0.0, %v7374
    %v7376 = vpop.f32.mrb[0].mxu0
    %v7377 = vadd.f32 0.0, %v7376
    %7378 = vdwg.mxu0
    %7379 = vmatprep.subr.mxu0 %v1391
    %7380 = vmatpush1.msra.mxu0 %v1390
    %7381 = vmatprep.subr.mxu0 %v1395
    %7382 = vmatpush1.msra.mxu0 %v1394
    %7383 = vmatprep.subr.mxu0 %v1399
    %7384 = vmatpush1.msra.mxu0 %v1398
    %7385 = vmatprep.subr.mxu0 %v1403
    %7386 = vmatpush1.msra.mxu0 %v1402
    %7387 = vmatprep.subr.mxu0 %v1407
    %7388 = vmatpush1.msra.mxu0 %v1406
    %7389 = vmatprep.subr.mxu0 %v1411
    %7390 = vmatpush1.msra.mxu0 %v1410
    %7391 = vmatprep.subr.mxu0 %v1415
    %7392 = vmatpush1.msra.mxu0 %v1414
    %7393 = vmatprep.subr.mxu0 %v1419
    %7394 = vmatpush1.msra.mxu0 %v1418
    %7395 = vmatprep.subr.mxu0 %v1423
    %7396 = vmatpush1.msra.mxu0 %v1422
    %7397 = vmatprep.subr.mxu0 %v1427
    %7398 = vmatpush1.msra.mxu0 %v1426
    %7399 = vmatprep.subr.mxu0 %v1431
    %7400 = vmatpush1.msra.mxu0 %v1430
    %7401 = vmatprep.subr.mxu0 %v1435
    %7402 = vmatpush1.msra.mxu0 %v1434
    %7403 = vmatprep.subr.mxu0 %v1439
    %7404 = vmatpush1.msra.mxu0 %v1438
    %7405 = vmatprep.subr.mxu0 %v1443
    %7406 = vmatpush1.msra.mxu0 %v1442
    %7407 = vmatprep.subr.mxu0 %v1447
    %7408 = vmatpush1.msra.mxu0 %v1446
    %7409 = vmatprep.subr.mxu0 %v1451
    %7410 = vmatpush1.msra.mxu0 %v1450
    %7411 = vmatprep.subr.mxu0 0.0
    %7412 = vmatpush1.msra.mxu0 0.0
    %7413 = vmatprep.subr.mxu0 0.0
    %7414 = vmatpush1.msra.mxu0 0.0
    %7415 = vmatprep.subr.mxu0 0.0
    %7416 = vmatpush1.msra.mxu0 0.0
    %7417 = vmatprep.subr.mxu0 0.0
    %7418 = vmatpush1.msra.mxu0 0.0
    %7419 = vmatprep.subr.mxu0 0.0
    %7420 = vmatpush1.msra.mxu0 0.0
    %7421 = vmatprep.subr.mxu0 0.0
    %7422 = vmatpush1.msra.mxu0 0.0
    %7423 = vmatprep.subr.mxu0 0.0
    %7424 = vmatpush1.msra.mxu0 0.0
    %7425 = vmatprep.subr.mxu0 0.0
    %7426 = vmatpush1.msra.mxu0 0.0
    %7427 = vmatprep.subr.mxu0 0.0
    %7428 = vmatpush1.msra.mxu0 0.0
    %7429 = vmatprep.subr.mxu0 0.0
    %7430 = vmatpush1.msra.mxu0 0.0
    %7431 = vmatprep.subr.mxu0 0.0
    %7432 = vmatpush1.msra.mxu0 0.0
    %7433 = vmatprep.subr.mxu0 0.0
    %7434 = vmatpush1.msra.mxu0 0.0
    %7435 = vmatprep.subr.mxu0 0.0
    %7436 = vmatpush1.msra.mxu0 0.0
    %7437 = vmatprep.subr.mxu0 0.0
    %7438 = vmatpush1.msra.mxu0 0.0
    %7439 = vmatprep.subr.mxu0 0.0
    %7440 = vmatpush1.msra.mxu0 0.0
    %7441 = vmatprep.subr.mxu0 0.0
    %7442 = vmatpush1.msra.mxu0 0.0
    %7443 = vmatprep.mubr.f32.mxu0 0.0
    %7444 = vmatmul.mubr.f32.gmra.mrb[0].mxu0 %v7236
    %v7445 = vpop.f32.mrb[0].mxu0
    %v7446 = vadd.f32 %v7304, %v7445
    %v7447 = vpop.f32.mrb[0].mxu0
    %v7448 = vadd.f32 %v7306, %v7447
    %7449 = vdwg.mxu0
    %7450 = vmatprep.subr.mxu0 %v1393
    %7451 = vmatpush1.msra.mxu0 %v1392
    %7452 = vmatprep.subr.mxu0 %v1397
    %7453 = vmatpush1.msra.mxu0 %v1396
    %7454 = vmatprep.subr.mxu0 %v1401
    %7455 = vmatpush1.msra.mxu0 %v1400
    %7456 = vmatprep.subr.mxu0 %v1405
    %7457 = vmatpush1.msra.mxu0 %v1404
    %7458 = vmatprep.subr.mxu0 %v1409
    %7459 = vmatpush1.msra.mxu0 %v1408
    %7460 = vmatprep.subr.mxu0 %v1413
    %7461 = vmatpush1.msra.mxu0 %v1412
    %7462 = vmatprep.subr.mxu0 %v1417
    %7463 = vmatpush1.msra.mxu0 %v1416
    %7464 = vmatprep.subr.mxu0 %v1421
    %7465 = vmatpush1.msra.mxu0 %v1420
    %7466 = vmatprep.subr.mxu0 %v1425
    %7467 = vmatpush1.msra.mxu0 %v1424
    %7468 = vmatprep.subr.mxu0 %v1429
    %7469 = vmatpush1.msra.mxu0 %v1428
    %7470 = vmatprep.subr.mxu0 %v1433
    %7471 = vmatpush1.msra.mxu0 %v1432
    %7472 = vmatprep.subr.mxu0 %v1437
    %7473 = vmatpush1.msra.mxu0 %v1436
    %7474 = vmatprep.subr.mxu0 %v1441
    %7475 = vmatpush1.msra.mxu0 %v1440
    %7476 = vmatprep.subr.mxu0 %v1445
    %7477 = vmatpush1.msra.mxu0 %v1444
    %7478 = vmatprep.subr.mxu0 %v1449
    %7479 = vmatpush1.msra.mxu0 %v1448
    %7480 = vmatprep.subr.mxu0 %v1453
    %7481 = vmatpush1.msra.mxu0 %v1452
    %7482 = vmatprep.subr.mxu0 0.0
    %7483 = vmatpush1.msra.mxu0 0.0
    %7484 = vmatprep.subr.mxu0 0.0
    %7485 = vmatpush1.msra.mxu0 0.0
    %7486 = vmatprep.subr.mxu0 0.0
    %7487 = vmatpush1.msra.mxu0 0.0
    %7488 = vmatprep.subr.mxu0 0.0
    %7489 = vmatpush1.msra.mxu0 0.0
    %7490 = vmatprep.subr.mxu0 0.0
    %7491 = vmatpush1.msra.mxu0 0.0
    %7492 = vmatprep.subr.mxu0 0.0
    %7493 = vmatpush1.msra.mxu0 0.0
    %7494 = vmatprep.subr.mxu0 0.0
    %7495 = vmatpush1.msra.mxu0 0.0
    %7496 = vmatprep.subr.mxu0 0.0
    %7497 = vmatpush1.msra.mxu0 0.0
    %7498 = vmatprep.subr.mxu0 0.0
    %7499 = vmatpush1.msra.mxu0 0.0
    %7500 = vmatprep.subr.mxu0 0.0
    %7501 = vmatpush1.msra.mxu0 0.0
    %7502 = vmatprep.subr.mxu0 0.0
    %7503 = vmatpush1.msra.mxu0 0.0
    %7504 = vmatprep.subr.mxu0 0.0
    %7505 = vmatpush1.msra.mxu0 0.0
    %7506 = vmatprep.subr.mxu0 0.0
    %7507 = vmatpush1.msra.mxu0 0.0
    %7508 = vmatprep.subr.mxu0 0.0
    %7509 = vmatpush1.msra.mxu0 0.0
    %7510 = vmatprep.subr.mxu0 0.0
    %7511 = vmatpush1.msra.mxu0 0.0
    %7512 = vmatprep.subr.mxu0 0.0
    %7513 = vmatpush1.msra.mxu0 0.0
    %7514 = vmatprep.mubr.f32.mxu0 0.0
    %7515 = vmatmul.mubr.f32.gmra.mrb[0].mxu0 %v7236
    %v7516 = vpop.f32.mrb[0].mxu0
    %v7517 = vadd.f32 %v7375, %v7516
    %v7518 = vpop.f32.mrb[0].mxu0
    %v7519 = vadd.f32 %v7377, %v7518
    %7520 = vdwg.mxu0
    %v7521 = vadd.f32 %v7446, %v1994
    %v7522 = vadd.f32 %v7448, %v1998
    %v7523 = vadd.f32 %v7517, %v2002
    %v7524 = vadd.f32 %v7519, %v2006
    %v7525 = vxor.u32 %v7521, 2147483648
    %v7526 = vmul.f32 %v7525, 1.442695
    %v7527 = vpow.pop %v7526
    %v7528 = vadd.f32 %v7527, 1.0
    %v7529 = vrcp.pop %v7528
    %v7530 = vmul.f32 1.0, %v7529
    %v7531 = vxor.u32 %v7522, 2147483648
    %v7532 = vmul.f32 %v7531, 1.442695
    %v7533 = vpow.pop %v7532
    %v7534 = vadd.f32 %v7533, 1.0
    %v7535 = vrcp.pop %v7534
    %v7536 = vmul.f32 1.0, %v7535
    %v7537 = vtanh.pop %v7523
    %v7538 = vxor.u32 %v7524, 2147483648
    %v7539 = vmul.f32 %v7538, 1.442695
    %v7540 = vpow.pop %v7539
    %v7541 = vadd.f32 %v7540, 1.0
    %v7542 = vrcp.pop %v7541
    %v7543 = vmul.f32 1.0, %v7542
    %v7544 = vmul.f32 %v7536, %v7044
    %v7545 = vmul.f32 %v7530, %v7537
    %v7546 = vadd.f32 %v7544, %v7545
    %v7547 = vtanh.pop %v7546
    %v7548 = vmul.f32 %v7543, %v7547
    %v7549 = vrot.slane %v1053, 4
    %v7550 = vrot.slane %v1055, 4
    %v7551 = vrot.slane %v1130, 4
    %v7552 = vrot.slane %v1132, 4
    %v7557 = vrot.slane %v1245, 3
    %v7558 = vrot.slane %v1247, 3
    %v7559 = vrot.slane %v1322, 3
    %v7560 = vrot.slane %v1324, 3
    %v7565 = vsel %vm1531, %v7549, %v7557
    %v7566 = vsel %vm1531, %v7550, %v7558
    %v7567 = vsel %vm1531, %v7551, %v7559
    %v7568 = vsel %vm1531, %v7552, %v7560
    %7569 = vmatprep.subr.mxu0 %v1327
    %7570 = vmatpush1.msra.mxu0 %v1326
    %7571 = vmatprep.subr.mxu0 %v1331
    %7572 = vmatpush1.msra.mxu0 %v1330
    %7573 = vmatprep.subr.mxu0 %v1335
    %7574 = vmatpush1.msra.mxu0 %v1334
    %7575 = vmatprep.subr.mxu0 %v1339
    %7576 = vmatpush1.msra.mxu0 %v1338
    %7577 = vmatprep.subr.mxu0 %v1343
    %7578 = vmatpush1.msra.mxu0 %v1342
    %7579 = vmatprep.subr.mxu0 %v1347
    %7580 = vmatpush1.msra.mxu0 %v1346
    %7581 = vmatprep.subr.mxu0 %v1351
    %7582 = vmatpush1.msra.mxu0 %v1350
    %7583 = vmatprep.subr.mxu0 %v1355
    %7584 = vmatpush1.msra.mxu0 %v1354
    %7585 = vmatprep.subr.mxu0 %v1359
    %7586 = vmatpush1.msra.mxu0 %v1358
    %7587 = vmatprep.subr.mxu0 %v1363
    %7588 = vmatpush1.msra.mxu0 %v1362
    %7589 = vmatprep.subr.mxu0 %v1367
    %7590 = vmatpush1.msra.mxu0 %v1366
    %7591 = vmatprep.subr.mxu0 %v1371
    %7592 = vmatpush1.msra.mxu0 %v1370
    %7593 = vmatprep.subr.mxu0 %v1375
    %7594 = vmatpush1.msra.mxu0 %v1374
    %7595 = vmatprep.subr.mxu0 %v1379
    %7596 = vmatpush1.msra.mxu0 %v1378
    %7597 = vmatprep.subr.mxu0 %v1383
    %7598 = vmatpush1.msra.mxu0 %v1382
    %7599 = vmatprep.subr.mxu0 %v1387
    %7600 = vmatpush1.msra.mxu0 %v1386
    %7601 = vmatprep.subr.mxu0 0.0
    %7602 = vmatpush1.msra.mxu0 0.0
    %7603 = vmatprep.subr.mxu0 0.0
    %7604 = vmatpush1.msra.mxu0 0.0
    %7605 = vmatprep.subr.mxu0 0.0
    %7606 = vmatpush1.msra.mxu0 0.0
    %7607 = vmatprep.subr.mxu0 0.0
    %7608 = vmatpush1.msra.mxu0 0.0
    %7609 = vmatprep.subr.mxu0 0.0
    %7610 = vmatpush1.msra.mxu0 0.0
    %7611 = vmatprep.subr.mxu0 0.0
    %7612 = vmatpush1.msra.mxu0 0.0
    %7613 = vmatprep.subr.mxu0 0.0
    %7614 = vmatpush1.msra.mxu0 0.0
    %7615 = vmatprep.subr.mxu0 0.0
    %7616 = vmatpush1.msra.mxu0 0.0
    %7617 = vmatprep.subr.mxu0 0.0
    %7618 = vmatpush1.msra.mxu0 0.0
    %7619 = vmatprep.subr.mxu0 0.0
    %7620 = vmatpush1.msra.mxu0 0.0
    %7621 = vmatprep.subr.mxu0 0.0
    %7622 = vmatpush1.msra.mxu0 0.0
    %7623 = vmatprep.subr.mxu0 0.0
    %7624 = vmatpush1.msra.mxu0 0.0
    %7625 = vmatprep.subr.mxu0 0.0
    %7626 = vmatpush1.msra.mxu0 0.0
    %7627 = vmatprep.subr.mxu0 0.0
    %7628 = vmatpush1.msra.mxu0 0.0
    %7629 = vmatprep.subr.mxu0 0.0
    %7630 = vmatpush1.msra.mxu0 0.0
    %7631 = vmatprep.subr.mxu0 0.0
    %7632 = vmatpush1.msra.mxu0 0.0
    %7633 = vmatprep.mubr.f32.mxu0 0.0
    %7634 = vmatmul.mubr.f32.gmra.mrb[0].mxu0 %v7236
    %v7635 = vpop.f32.mrb[0].mxu0
    %v7636 = vadd.f32 0.0, %v7635
    %v7637 = vpop.f32.mrb[0].mxu0
    %v7638 = vadd.f32 0.0, %v7637
    %7639 = vdwg.mxu0
    %7640 = vmatprep.subr.mxu0 %v1329
    %7641 = vmatpush1.msra.mxu0 %v1328
    %7642 = vmatprep.subr.mxu0 %v1333
    %7643 = vmatpush1.msra.mxu0 %v1332
    %7644 = vmatprep.subr.mxu0 %v1337
    %7645 = vmatpush1.msra.mxu0 %v1336
    %7646 = vmatprep.subr.mxu0 %v1341
    %7647 = vmatpush1.msra.mxu0 %v1340
    %7648 = vmatprep.subr.mxu0 %v1345
    %7649 = vmatpush1.msra.mxu0 %v1344
    %7650 = vmatprep.subr.mxu0 %v1349
    %7651 = vmatpush1.msra.mxu0 %v1348
    %7652 = vmatprep.subr.mxu0 %v1353
    %7653 = vmatpush1.msra.mxu0 %v1352
    %7654 = vmatprep.subr.mxu0 %v1357
    %7655 = vmatpush1.msra.mxu0 %v1356
    %7656 = vmatprep.subr.mxu0 %v1361
    %7657 = vmatpush1.msra.mxu0 %v1360
    %7658 = vmatprep.subr.mxu0 %v1365
    %7659 = vmatpush1.msra.mxu0 %v1364
    %7660 = vmatprep.subr.mxu0 %v1369
    %7661 = vmatpush1.msra.mxu0 %v1368
    %7662 = vmatprep.subr.mxu0 %v1373
    %7663 = vmatpush1.msra.mxu0 %v1372
    %7664 = vmatprep.subr.mxu0 %v1377
    %7665 = vmatpush1.msra.mxu0 %v1376
    %7666 = vmatprep.subr.mxu0 %v1381
    %7667 = vmatpush1.msra.mxu0 %v1380
    %7668 = vmatprep.subr.mxu0 %v1385
    %7669 = vmatpush1.msra.mxu0 %v1384
    %7670 = vmatprep.subr.mxu0 %v1389
    %7671 = vmatpush1.msra.mxu0 %v1388
    %7672 = vmatprep.subr.mxu0 0.0
    %7673 = vmatpush1.msra.mxu0 0.0
    %7674 = vmatprep.subr.mxu0 0.0
    %7675 = vmatpush1.msra.mxu0 0.0
    %7676 = vmatprep.subr.mxu0 0.0
    %7677 = vmatpush1.msra.mxu0 0.0
    %7678 = vmatprep.subr.mxu0 0.0
    %7679 = vmatpush1.msra.mxu0 0.0
    %7680 = vmatprep.subr.mxu0 0.0
    %7681 = vmatpush1.msra.mxu0 0.0
    %7682 = vmatprep.subr.mxu0 0.0
    %7683 = vmatpush1.msra.mxu0 0.0
    %7684 = vmatprep.subr.mxu0 0.0
    %7685 = vmatpush1.msra.mxu0 0.0
    %7686 = vmatprep.subr.mxu0 0.0
    %7687 = vmatpush1.msra.mxu0 0.0
    %7688 = vmatprep.subr.mxu0 0.0
    %7689 = vmatpush1.msra.mxu0 0.0
    %7690 = vmatprep.subr.mxu0 0.0
    %7691 = vmatpush1.msra.mxu0 0.0
    %7692 = vmatprep.subr.mxu0 0.0
    %7693 = vmatpush1.msra.mxu0 0.0
    %7694 = vmatprep.subr.mxu0 0.0
    %7695 = vmatpush1.msra.mxu0 0.0
    %7696 = vmatprep.subr.mxu0 0.0
    %7697 = vmatpush1.msra.mxu0 0.0
    %7698 = vmatprep.subr.mxu0 0.0
    %7699 = vmatpush1.msra.mxu0 0.0
    %7700 = vmatprep.subr.mxu0 0.0
    %7701 = vmatpush1.msra.mxu0 0.0
    %7702 = vmatprep.subr.mxu0 0.0
    %7703 = vmatpush1.msra.mxu0 0.0
    %7704 = vmatprep.mubr.f32.mxu0 0.0
    %7705 = vmatmul.mubr.f32.gmra.mrb[0].mxu0 %v7236
    %v7706 = vpop.f32.mrb[0].mxu0
    %v7707 = vadd.f32 0.0, %v7706
    %v7708 = vpop.f32.mrb[0].mxu0
    %v7709 = vadd.f32 0.0, %v7708
    %7710 = vdwg.mxu0
    %v7711 = vadd.f32 %v7565, %v7636
    %v7712 = vadd.f32 %v7566, %v7638
    %v7713 = vadd.f32 %v7567, %v7707
    %v7714 = vadd.f32 %v7568, %v7709
    %v7715 = vxor.u32 %v7711, 2147483648
    %v7716 = vmul.f32 %v7715, 1.442695
    %v7717 = vpow.pop %v7716
    %v7718 = vadd.f32 %v7717, 1.0
    %v7719 = vrcp.pop %v7718
    %v7720 = vmul.f32 1.0, %v7719
    %v7721 = vxor.u32 %v7712, 2147483648
    %v7722 = vmul.f32 %v7721, 1.442695
    %v7723 = vpow.pop %v7722
    %v7724 = vadd.f32 %v7723, 1.0
    %v7725 = vrcp.pop %v7724
    %v7726 = vmul.f32 1.0, %v7725
    %v7727 = vtanh.pop %v7713
    %v7728 = vxor.u32 %v7714, 2147483648
    %v7729 = vmul.f32 %v7728, 1.442695
    %v7730 = vpow.pop %v7729
    %v7731 = vadd.f32 %v7730, 1.0
    %v7732 = vrcp.pop %v7731
    %v7733 = vmul.f32 1.0, %v7732
    %v7734 = vmul.f32 %v7726, %v7234
    %v7735 = vmul.f32 %v7720, %v7727
    %v7736 = vadd.f32 %v7734, %v7735
    %v7737 = vtanh.pop %v7736
    %v7738 = vmul.f32 %v7733, %v7737
    %7739 = vmatprep.subr.mxu0 %v1455
    %7740 = vmatpush1.msra.mxu0 %v1454
    %7741 = vmatprep.subr.mxu0 %v1459
    %7742 = vmatpush1.msra.mxu0 %v1458
    %7743 = vmatprep.subr.mxu0 %v1463
    %7744 = vmatpush1.msra.mxu0 %v1462
    %7745 = vmatprep.subr.mxu0 %v1467
    %7746 = vmatpush1.msra.mxu0 %v1466
    %7747 = vmatprep.subr.mxu0 %v1471
    %7748 = vmatpush1.msra.mxu0 %v1470
    %7749 = vmatprep.subr.mxu0 %v1475
    %7750 = vmatpush1.msra.mxu0 %v1474
    %7751 = vmatprep.subr.mxu0 %v1479
    %7752 = vmatpush1.msra.mxu0 %v1478
    %7753 = vmatprep.subr.mxu0 %v1483
    %7754 = vmatpush1.msra.mxu0 %v1482
    %7755 = vmatprep.subr.mxu0 %v1487
    %7756 = vmatpush1.msra.mxu0 %v1486
    %7757 = vmatprep.subr.mxu0 %v1491
    %7758 = vmatpush1.msra.mxu0 %v1490
    %7759 = vmatprep.subr.mxu0 %v1495
    %7760 = vmatpush1.msra.mxu0 %v1494
    %7761 = vmatprep.subr.mxu0 %v1499
    %7762 = vmatpush1.msra.mxu0 %v1498
    %7763 = vmatprep.subr.mxu0 %v1503
    %7764 = vmatpush1.msra.mxu0 %v1502
    %7765 = vmatprep.subr.mxu0 %v1507
    %7766 = vmatpush1.msra.mxu0 %v1506
    %7767 = vmatprep.subr.mxu0 %v1511
    %7768 = vmatpush1.msra.mxu0 %v1510
    %7769 = vmatprep.subr.mxu0 %v1515
    %7770 = vmatpush1.msra.mxu0 %v1514
    %7771 = vmatprep.subr.mxu0 0.0
    %7772 = vmatpush1.msra.mxu0 0.0
    %7773 = vmatprep.subr.mxu0 0.0
    %7774 = vmatpush1.msra.mxu0 0.0
    %7775 = vmatprep.subr.mxu0 0.0
    %7776 = vmatpush1.msra.mxu0 0.0
    %7777 = vmatprep.subr.mxu0 0.0
    %7778 = vmatpush1.msra.mxu0 0.0
    %7779 = vmatprep.subr.mxu0 0.0
    %7780 = vmatpush1.msra.mxu0 0.0
    %7781 = vmatprep.subr.mxu0 0.0
    %7782 = vmatpush1.msra.mxu0 0.0
    %7783 = vmatprep.subr.mxu0 0.0
    %7784 = vmatpush1.msra.mxu0 0.0
    %7785 = vmatprep.subr.mxu0 0.0
    %7786 = vmatpush1.msra.mxu0 0.0
    %7787 = vmatprep.subr.mxu0 0.0
    %7788 = vmatpush1.msra.mxu0 0.0
    %7789 = vmatprep.subr.mxu0 0.0
    %7790 = vmatpush1.msra.mxu0 0.0
    %7791 = vmatprep.subr.mxu0 0.0
    %7792 = vmatpush1.msra.mxu0 0.0
    %7793 = vmatprep.subr.mxu0 0.0
    %7794 = vmatpush1.msra.mxu0 0.0
    %7795 = vmatprep.subr.mxu0 0.0
    %7796 = vmatpush1.msra.mxu0 0.0
    %7797 = vmatprep.subr.mxu0 0.0
    %7798 = vmatpush1.msra.mxu0 0.0
    %7799 = vmatprep.subr.mxu0 0.0
    %7800 = vmatpush1.msra.mxu0 0.0
    %7801 = vmatprep.subr.mxu0 0.0
    %7802 = vmatpush1.msra.mxu0 0.0
    %7803 = vmatprep.mubr.f32.mxu0 0.0
    %7804 = vmatmul.mubr.f32.gmra.mrb[0].mxu0 %v7548
    %v7805 = vpop.f32.mrb[0].mxu0
    %v7806 = vadd.f32 0.0, %v7805
    %v7807 = vpop.f32.mrb[0].mxu0
    %v7808 = vadd.f32 0.0, %v7807
    %7809 = vdwg.mxu0
    %7810 = vmatprep.subr.mxu0 %v1457
    %7811 = vmatpush1.msra.mxu0 %v1456
    %7812 = vmatprep.subr.mxu0 %v1461
    %7813 = vmatpush1.msra.mxu0 %v1460
    %7814 = vmatprep.subr.mxu0 %v1465
    %7815 = vmatpush1.msra.mxu0 %v1464
    %7816 = vmatprep.subr.mxu0 %v1469
    %7817 = vmatpush1.msra.mxu0 %v1468
    %7818 = vmatprep.subr.mxu0 %v1473
    %7819 = vmatpush1.msra.mxu0 %v1472
    %7820 = vmatprep.subr.mxu0 %v1477
    %7821 = vmatpush1.msra.mxu0 %v1476
    %7822 = vmatprep.subr.mxu0 %v1481
    %7823 = vmatpush1.msra.mxu0 %v1480
    %7824 = vmatprep.subr.mxu0 %v1485
    %7825 = vmatpush1.msra.mxu0 %v1484
    %7826 = vmatprep.subr.mxu0 %v1489
    %7827 = vmatpush1.msra.mxu0 %v1488
    %7828 = vmatprep.subr.mxu0 %v1493
    %7829 = vmatpush1.msra.mxu0 %v1492
    %7830 = vmatprep.subr.mxu0 %v1497
    %7831 = vmatpush1.msra.mxu0 %v1496
    %7832 = vmatprep.subr.mxu0 %v1501
    %7833 = vmatpush1.msra.mxu0 %v1500
    %7834 = vmatprep.subr.mxu0 %v1505
    %7835 = vmatpush1.msra.mxu0 %v1504
    %7836 = vmatprep.subr.mxu0 %v1509
    %7837 = vmatpush1.msra.mxu0 %v1508
    %7838 = vmatprep.subr.mxu0 %v1513
    %7839 = vmatpush1.msra.mxu0 %v1512
    %7840 = vmatprep.subr.mxu0 %v1517
    %7841 = vmatpush1.msra.mxu0 %v1516
    %7842 = vmatprep.subr.mxu0 0.0
    %7843 = vmatpush1.msra.mxu0 0.0
    %7844 = vmatprep.subr.mxu0 0.0
    %7845 = vmatpush1.msra.mxu0 0.0
    %7846 = vmatprep.subr.mxu0 0.0
    %7847 = vmatpush1.msra.mxu0 0.0
    %7848 = vmatprep.subr.mxu0 0.0
    %7849 = vmatpush1.msra.mxu0 0.0
    %7850 = vmatprep.subr.mxu0 0.0
    %7851 = vmatpush1.msra.mxu0 0.0
    %7852 = vmatprep.subr.mxu0 0.0
    %7853 = vmatpush1.msra.mxu0 0.0
    %7854 = vmatprep.subr.mxu0 0.0
    %7855 = vmatpush1.msra.mxu0 0.0
    %7856 = vmatprep.subr.mxu0 0.0
    %7857 = vmatpush1.msra.mxu0 0.0
    %7858 = vmatprep.subr.mxu0 0.0
    %7859 = vmatpush1.msra.mxu0 0.0
    %7860 = vmatprep.subr.mxu0 0.0
    %7861 = vmatpush1.msra.mxu0 0.0
    %7862 = vmatprep.subr.mxu0 0.0
    %7863 = vmatpush1.msra.mxu0 0.0
    %7864 = vmatprep.subr.mxu0 0.0
    %7865 = vmatpush1.msra.mxu0 0.0
    %7866 = vmatprep.subr.mxu0 0.0
    %7867 = vmatpush1.msra.mxu0 0.0
    %7868 = vmatprep.subr.mxu0 0.0
    %7869 = vmatpush1.msra.mxu0 0.0
    %7870 = vmatprep.subr.mxu0 0.0
    %7871 = vmatpush1.msra.mxu0 0.0
    %7872 = vmatprep.subr.mxu0 0.0
    %7873 = vmatpush1.msra.mxu0 0.0
    %7874 = vmatprep.mubr.f32.mxu0 0.0
    %7875 = vmatmul.mubr.f32.gmra.mrb[0].mxu0 %v7548
    %v7876 = vpop.f32.mrb[0].mxu0
    %v7877 = vadd.f32 0.0, %v7876
    %v7878 = vpop.f32.mrb[0].mxu0
    %v7879 = vadd.f32 0.0, %v7878
    %7880 = vdwg.mxu0
    %7881 = vmatprep.subr.mxu0 %v1391
    %7882 = vmatpush1.msra.mxu0 %v1390
    %7883 = vmatprep.subr.mxu0 %v1395
    %7884 = vmatpush1.msra.mxu0 %v1394
    %7885 = vmatprep.subr.mxu0 %v1399
    %7886 = vmatpush1.msra.mxu0 %v1398
    %7887 = vmatprep.subr.mxu0 %v1403
    %7888 = vmatpush1.msra.mxu0 %v1402
    %7889 = vmatprep.subr.mxu0 %v1407
    %7890 = vmatpush1.msra.mxu0 %v1406
    %7891 = vmatprep.subr.mxu0 %v1411
    %7892 = vmatpush1.msra.mxu0 %v1410
    %7893 = vmatprep.subr.mxu0 %v1415
    %7894 = vmatpush1.msra.mxu0 %v1414
    %7895 = vmatprep.subr.mxu0 %v1419
    %7896 = vmatpush1.msra.mxu0 %v1418
    %7897 = vmatprep.subr.mxu0 %v1423
    %7898 = vmatpush1.msra.mxu0 %v1422
    %7899 = vmatprep.subr.mxu0 %v1427
    %7900 = vmatpush1.msra.mxu0 %v1426
    %7901 = vmatprep.subr.mxu0 %v1431
    %7902 = vmatpush1.msra.mxu0 %v1430
    %7903 = vmatprep.subr.mxu0 %v1435
    %7904 = vmatpush1.msra.mxu0 %v1434
    %7905 = vmatprep.subr.mxu0 %v1439
    %7906 = vmatpush1.msra.mxu0 %v1438
    %7907 = vmatprep.subr.mxu0 %v1443
    %7908 = vmatpush1.msra.mxu0 %v1442
    %7909 = vmatprep.subr.mxu0 %v1447
    %7910 = vmatpush1.msra.mxu0 %v1446
    %7911 = vmatprep.subr.mxu0 %v1451
    %7912 = vmatpush1.msra.mxu0 %v1450
    %7913 = vmatprep.subr.mxu0 0.0
    %7914 = vmatpush1.msra.mxu0 0.0
    %7915 = vmatprep.subr.mxu0 0.0
    %7916 = vmatpush1.msra.mxu0 0.0
    %7917 = vmatprep.subr.mxu0 0.0
    %7918 = vmatpush1.msra.mxu0 0.0
    %7919 = vmatprep.subr.mxu0 0.0
    %7920 = vmatpush1.msra.mxu0 0.0
    %7921 = vmatprep.subr.mxu0 0.0
    %7922 = vmatpush1.msra.mxu0 0.0
    %7923 = vmatprep.subr.mxu0 0.0
    %7924 = vmatpush1.msra.mxu0 0.0
    %7925 = vmatprep.subr.mxu0 0.0
    %7926 = vmatpush1.msra.mxu0 0.0
    %7927 = vmatprep.subr.mxu0 0.0
    %7928 = vmatpush1.msra.mxu0 0.0
    %7929 = vmatprep.subr.mxu0 0.0
    %7930 = vmatpush1.msra.mxu0 0.0
    %7931 = vmatprep.subr.mxu0 0.0
    %7932 = vmatpush1.msra.mxu0 0.0
    %7933 = vmatprep.subr.mxu0 0.0
    %7934 = vmatpush1.msra.mxu0 0.0
    %7935 = vmatprep.subr.mxu0 0.0
    %7936 = vmatpush1.msra.mxu0 0.0
    %7937 = vmatprep.subr.mxu0 0.0
    %7938 = vmatpush1.msra.mxu0 0.0
    %7939 = vmatprep.subr.mxu0 0.0
    %7940 = vmatpush1.msra.mxu0 0.0
    %7941 = vmatprep.subr.mxu0 0.0
    %7942 = vmatpush1.msra.mxu0 0.0
    %7943 = vmatprep.subr.mxu0 0.0
    %7944 = vmatpush1.msra.mxu0 0.0
    %7945 = vmatprep.mubr.f32.mxu0 0.0
    %7946 = vmatmul.mubr.f32.gmra.mrb[0].mxu0 %v7738
    %v7947 = vpop.f32.mrb[0].mxu0
    %v7948 = vadd.f32 %v7806, %v7947
    %v7949 = vpop.f32.mrb[0].mxu0
    %v7950 = vadd.f32 %v7808, %v7949
    %7951 = vdwg.mxu0
    %7952 = vmatprep.subr.mxu0 %v1393
    %7953 = vmatpush1.msra.mxu0 %v1392
    %7954 = vmatprep.subr.mxu0 %v1397
    %7955 = vmatpush1.msra.mxu0 %v1396
    %7956 = vmatprep.subr.mxu0 %v1401
    %7957 = vmatpush1.msra.mxu0 %v1400
    %7958 = vmatprep.subr.mxu0 %v1405
    %7959 = vmatpush1.msra.mxu0 %v1404
    %7960 = vmatprep.subr.mxu0 %v1409
    %7961 = vmatpush1.msra.mxu0 %v1408
    %7962 = vmatprep.subr.mxu0 %v1413
    %7963 = vmatpush1.msra.mxu0 %v1412
    %7964 = vmatprep.subr.mxu0 %v1417
    %7965 = vmatpush1.msra.mxu0 %v1416
    %7966 = vmatprep.subr.mxu0 %v1421
    %7967 = vmatpush1.msra.mxu0 %v1420
    %7968 = vmatprep.subr.mxu0 %v1425
    %7969 = vmatpush1.msra.mxu0 %v1424
    %7970 = vmatprep.subr.mxu0 %v1429
    %7971 = vmatpush1.msra.mxu0 %v1428
    %7972 = vmatprep.subr.mxu0 %v1433
    %7973 = vmatpush1.msra.mxu0 %v1432
    %7974 = vmatprep.subr.mxu0 %v1437
    %7975 = vmatpush1.msra.mxu0 %v1436
    %7976 = vmatprep.subr.mxu0 %v1441
    %7977 = vmatpush1.msra.mxu0 %v1440
    %7978 = vmatprep.subr.mxu0 %v1445
    %7979 = vmatpush1.msra.mxu0 %v1444
    %7980 = vmatprep.subr.mxu0 %v1449
    %7981 = vmatpush1.msra.mxu0 %v1448
    %7982 = vmatprep.subr.mxu0 %v1453
    %7983 = vmatpush1.msra.mxu0 %v1452
    %7984 = vmatprep.subr.mxu0 0.0
    %7985 = vmatpush1.msra.mxu0 0.0
    %7986 = vmatprep.subr.mxu0 0.0
    %7987 = vmatpush1.msra.mxu0 0.0
    %7988 = vmatprep.subr.mxu0 0.0
    %7989 = vmatpush1.msra.mxu0 0.0
    %7990 = vmatprep.subr.mxu0 0.0
    %7991 = vmatpush1.msra.mxu0 0.0
    %7992 = vmatprep.subr.mxu0 0.0
    %7993 = vmatpush1.msra.mxu0 0.0
    %7994 = vmatprep.subr.mxu0 0.0
    %7995 = vmatpush1.msra.mxu0 0.0
    %7996 = vmatprep.subr.mxu0 0.0
    %7997 = vmatpush1.msra.mxu0 0.0
    %7998 = vmatprep.subr.mxu0 0.0
    %7999 = vmatpush1.msra.mxu0 0.0
    %8000 = vmatprep.subr.mxu0 0.0
    %8001 = vmatpush1.msra.mxu0 0.0
    %8002 = vmatprep.subr.mxu0 0.0
    %8003 = vmatpush1.msra.mxu0 0.0
    %8004 = vmatprep.subr.mxu0 0.0
    %8005 = vmatpush1.msra.mxu0 0.0
    %8006 = vmatprep.subr.mxu0 0.0
    %8007 = vmatpush1.msra.mxu0 0.0
    %8008 = vmatprep.subr.mxu0 0.0
    %8009 = vmatpush1.msra.mxu0 0.0
    %8010 = vmatprep.subr.mxu0 0.0
    %8011 = vmatpush1.msra.mxu0 0.0
    %8012 = vmatprep.subr.mxu0 0.0
    %8013 = vmatpush1.msra.mxu0 0.0
    %8014 = vmatprep.subr.mxu0 0.0
    %8015 = vmatpush1.msra.mxu0 0.0
    %8016 = vmatprep.mubr.f32.mxu0 0.0
    %8017 = vmatmul.mubr.f32.gmra.mrb[0].mxu0 %v7738
    %v8018 = vpop.f32.mrb[0].mxu0
    %v8019 = vadd.f32 %v7877, %v8018
    %v8020 = vpop.f32.mrb[0].mxu0
    %v8021 = vadd.f32 %v7879, %v8020
    %8022 = vdwg.mxu0
    %v8023 = vadd.f32 %v7948, %v1994
    %v8024 = vadd.f32 %v7950, %v1998
    %v8025 = vadd.f32 %v8019, %v2002
    %v8026 = vadd.f32 %v8021, %v2006
    %v8027 = vxor.u32 %v8023, 2147483648
    %v8028 = vmul.f32 %v8027, 1.442695
    %v8029 = vpow.pop %v8028
    %v8030 = vadd.f32 %v8029, 1.0
    %v8031 = vrcp.pop %v8030
    %v8032 = vmul.f32 1.0, %v8031
    %v8033 = vxor.u32 %v8024, 2147483648
    %v8034 = vmul.f32 %v8033, 1.442695
    %v8035 = vpow.pop %v8034
    %v8036 = vadd.f32 %v8035, 1.0
    %v8037 = vrcp.pop %v8036
    %v8038 = vmul.f32 1.0, %v8037
    %v8039 = vtanh.pop %v8025
    %v8040 = vxor.u32 %v8026, 2147483648
    %v8041 = vmul.f32 %v8040, 1.442695
    %v8042 = vpow.pop %v8041
    %v8043 = vadd.f32 %v8042, 1.0
    %v8044 = vrcp.pop %v8043
    %v8045 = vmul.f32 1.0, %v8044
    %v8046 = vmul.f32 %v8038, %v7546
    %v8047 = vmul.f32 %v8032, %v8039
    %v8048 = vadd.f32 %v8046, %v8047
    %v8049 = vtanh.pop %v8048
    %v8050 = vmul.f32 %v8045, %v8049
    %v8051 = vrot.slane %v1053, 5
    %v8052 = vrot.slane %v1055, 5
    %v8053 = vrot.slane %v1130, 5
    %v8054 = vrot.slane %v1132, 5
    %v8059 = vrot.slane %v1245, 4
    %v8060 = vrot.slane %v1247, 4
    %v8061 = vrot.slane %v1322, 4
    %v8062 = vrot.slane %v1324, 4
    %v8067 = vsel %vm1531, %v8051, %v8059
    %v8068 = vsel %vm1531, %v8052, %v8060
    %v8069 = vsel %vm1531, %v8053, %v8061
    %v8070 = vsel %vm1531, %v8054, %v8062
    %8071 = vmatprep.subr.mxu0 %v1327
    %8072 = vmatpush1.msra.mxu0 %v1326
    %8073 = vmatprep.subr.mxu0 %v1331
    %8074 = vmatpush1.msra.mxu0 %v1330
    %8075 = vmatprep.subr.mxu0 %v1335
    %8076 = vmatpush1.msra.mxu0 %v1334
    %8077 = vmatprep.subr.mxu0 %v1339
    %8078 = vmatpush1.msra.mxu0 %v1338
    %8079 = vmatprep.subr.mxu0 %v1343
    %8080 = vmatpush1.msra.mxu0 %v1342
    %8081 = vmatprep.subr.mxu0 %v1347
    %8082 = vmatpush1.msra.mxu0 %v1346
    %8083 = vmatprep.subr.mxu0 %v1351
    %8084 = vmatpush1.msra.mxu0 %v1350
    %8085 = vmatprep.subr.mxu0 %v1355
    %8086 = vmatpush1.msra.mxu0 %v1354
    %8087 = vmatprep.subr.mxu0 %v1359
    %8088 = vmatpush1.msra.mxu0 %v1358
    %8089 = vmatprep.subr.mxu0 %v1363
    %8090 = vmatpush1.msra.mxu0 %v1362
    %8091 = vmatprep.subr.mxu0 %v1367
    %8092 = vmatpush1.msra.mxu0 %v1366
    %8093 = vmatprep.subr.mxu0 %v1371
    %8094 = vmatpush1.msra.mxu0 %v1370
    %8095 = vmatprep.subr.mxu0 %v1375
    %8096 = vmatpush1.msra.mxu0 %v1374
    %8097 = vmatprep.subr.mxu0 %v1379
    %8098 = vmatpush1.msra.mxu0 %v1378
    %8099 = vmatprep.subr.mxu0 %v1383
    %8100 = vmatpush1.msra.mxu0 %v1382
    %8101 = vmatprep.subr.mxu0 %v1387
    %8102 = vmatpush1.msra.mxu0 %v1386
    %8103 = vmatprep.subr.mxu0 0.0
    %8104 = vmatpush1.msra.mxu0 0.0
    %8105 = vmatprep.subr.mxu0 0.0
    %8106 = vmatpush1.msra.mxu0 0.0
    %8107 = vmatprep.subr.mxu0 0.0
    %8108 = vmatpush1.msra.mxu0 0.0
    %8109 = vmatprep.subr.mxu0 0.0
    %8110 = vmatpush1.msra.mxu0 0.0
    %8111 = vmatprep.subr.mxu0 0.0
    %8112 = vmatpush1.msra.mxu0 0.0
    %8113 = vmatprep.subr.mxu0 0.0
    %8114 = vmatpush1.msra.mxu0 0.0
    %8115 = vmatprep.subr.mxu0 0.0
    %8116 = vmatpush1.msra.mxu0 0.0
    %8117 = vmatprep.subr.mxu0 0.0
    %8118 = vmatpush1.msra.mxu0 0.0
    %8119 = vmatprep.subr.mxu0 0.0
    %8120 = vmatpush1.msra.mxu0 0.0
    %8121 = vmatprep.subr.mxu0 0.0
    %8122 = vmatpush1.msra.mxu0 0.0
    %8123 = vmatprep.subr.mxu0 0.0
    %8124 = vmatpush1.msra.mxu0 0.0
    %8125 = vmatprep.subr.mxu0 0.0
    %8126 = vmatpush1.msra.mxu0 0.0
    %8127 = vmatprep.subr.mxu0 0.0
    %8128 = vmatpush1.msra.mxu0 0.0
    %8129 = vmatprep.subr.mxu0 0.0
    %8130 = vmatpush1.msra.mxu0 0.0
    %8131 = vmatprep.subr.mxu0 0.0
    %8132 = vmatpush1.msra.mxu0 0.0
    %8133 = vmatprep.subr.mxu0 0.0
    %8134 = vmatpush1.msra.mxu0 0.0
    %8135 = vmatprep.mubr.f32.mxu0 0.0
    %8136 = vmatmul.mubr.f32.gmra.mrb[0].mxu0 %v7738
    %v8137 = vpop.f32.mrb[0].mxu0
    %v8138 = vadd.f32 0.0, %v8137
    %v8139 = vpop.f32.mrb[0].mxu0
    %v8140 = vadd.f32 0.0, %v8139
    %8141 = vdwg.mxu0
    %8142 = vmatprep.subr.mxu0 %v1329
    %8143 = vmatpush1.msra.mxu0 %v1328
    %8144 = vmatprep.subr.mxu0 %v1333
    %8145 = vmatpush1.msra.mxu0 %v1332
    %8146 = vmatprep.subr.mxu0 %v1337
    %8147 = vmatpush1.msra.mxu0 %v1336
    %8148 = vmatprep.subr.mxu0 %v1341
    %8149 = vmatpush1.msra.mxu0 %v1340
    %8150 = vmatprep.subr.mxu0 %v1345
    %8151 = vmatpush1.msra.mxu0 %v1344
    %8152 = vmatprep.subr.mxu0 %v1349
    %8153 = vmatpush1.msra.mxu0 %v1348
    %8154 = vmatprep.subr.mxu0 %v1353
    %8155 = vmatpush1.msra.mxu0 %v1352
    %8156 = vmatprep.subr.mxu0 %v1357
    %8157 = vmatpush1.msra.mxu0 %v1356
    %8158 = vmatprep.subr.mxu0 %v1361
    %8159 = vmatpush1.msra.mxu0 %v1360
    %8160 = vmatprep.subr.mxu0 %v1365
    %8161 = vmatpush1.msra.mxu0 %v1364
    %8162 = vmatprep.subr.mxu0 %v1369
    %8163 = vmatpush1.msra.mxu0 %v1368
    %8164 = vmatprep.subr.mxu0 %v1373
    %8165 = vmatpush1.msra.mxu0 %v1372
    %8166 = vmatprep.subr.mxu0 %v1377
    %8167 = vmatpush1.msra.mxu0 %v1376
    %8168 = vmatprep.subr.mxu0 %v1381
    %8169 = vmatpush1.msra.mxu0 %v1380
    %8170 = vmatprep.subr.mxu0 %v1385
    %8171 = vmatpush1.msra.mxu0 %v1384
    %8172 = vmatprep.subr.mxu0 %v1389
    %8173 = vmatpush1.msra.mxu0 %v1388
    %8174 = vmatprep.subr.mxu0 0.0
    %8175 = vmatpush1.msra.mxu0 0.0
    %8176 = vmatprep.subr.mxu0 0.0
    %8177 = vmatpush1.msra.mxu0 0.0
    %8178 = vmatprep.subr.mxu0 0.0
    %8179 = vmatpush1.msra.mxu0 0.0
    %8180 = vmatprep.subr.mxu0 0.0
    %8181 = vmatpush1.msra.mxu0 0.0
    %8182 = vmatprep.subr.mxu0 0.0
    %8183 = vmatpush1.msra.mxu0 0.0
    %8184 = vmatprep.subr.mxu0 0.0
    %8185 = vmatpush1.msra.mxu0 0.0
    %8186 = vmatprep.subr.mxu0 0.0
    %8187 = vmatpush1.msra.mxu0 0.0
    %8188 = vmatprep.subr.mxu0 0.0
    %8189 = vmatpush1.msra.mxu0 0.0
    %8190 = vmatprep.subr.mxu0 0.0
    %8191 = vmatpush1.msra.mxu0 0.0
    %8192 = vmatprep.subr.mxu0 0.0
    %8193 = vmatpush1.msra.mxu0 0.0
    %8194 = vmatprep.subr.mxu0 0.0
    %8195 = vmatpush1.msra.mxu0 0.0
    %8196 = vmatprep.subr.mxu0 0.0
    %8197 = vmatpush1.msra.mxu0 0.0
    %8198 = vmatprep.subr.mxu0 0.0
    %8199 = vmatpush1.msra.mxu0 0.0
    %8200 = vmatprep.subr.mxu0 0.0
    %8201 = vmatpush1.msra.mxu0 0.0
    %8202 = vmatprep.subr.mxu0 0.0
    %8203 = vmatpush1.msra.mxu0 0.0
    %8204 = vmatprep.subr.mxu0 0.0
    %8205 = vmatpush1.msra.mxu0 0.0
    %8206 = vmatprep.mubr.f32.mxu0 0.0
    %8207 = vmatmul.mubr.f32.gmra.mrb[0].mxu0 %v7738
    %v8208 = vpop.f32.mrb[0].mxu0
    %v8209 = vadd.f32 0.0, %v8208
    %v8210 = vpop.f32.mrb[0].mxu0
    %v8211 = vadd.f32 0.0, %v8210
    %8212 = vdwg.mxu0
    %v8213 = vadd.f32 %v8067, %v8138
    %v8214 = vadd.f32 %v8068, %v8140
    %v8215 = vadd.f32 %v8069, %v8209
    %v8216 = vadd.f32 %v8070, %v8211
    %v8217 = vxor.u32 %v8213, 2147483648
    %v8218 = vmul.f32 %v8217, 1.442695
    %v8219 = vpow.pop %v8218
    %v8220 = vadd.f32 %v8219, 1.0
    %v8221 = vrcp.pop %v8220
    %v8222 = vmul.f32 1.0, %v8221
    %v8223 = vxor.u32 %v8214, 2147483648
    %v8224 = vmul.f32 %v8223, 1.442695
    %v8225 = vpow.pop %v8224
    %v8226 = vadd.f32 %v8225, 1.0
    %v8227 = vrcp.pop %v8226
    %v8228 = vmul.f32 1.0, %v8227
    %v8229 = vtanh.pop %v8215
    %v8230 = vxor.u32 %v8216, 2147483648
    %v8231 = vmul.f32 %v8230, 1.442695
    %v8232 = vpow.pop %v8231
    %v8233 = vadd.f32 %v8232, 1.0
    %v8234 = vrcp.pop %v8233
    %v8235 = vmul.f32 1.0, %v8234
    %v8236 = vmul.f32 %v8228, %v7736
    %v8237 = vmul.f32 %v8222, %v8229
    %v8238 = vadd.f32 %v8236, %v8237
    %v8239 = vtanh.pop %v8238
    %v8240 = vmul.f32 %v8235, %v8239
    %8241 = vmatprep.subr.mxu0 %v1455
    %8242 = vmatpush1.msra.mxu0 %v1454
    %8243 = vmatprep.subr.mxu0 %v1459
    %8244 = vmatpush1.msra.mxu0 %v1458
    %8245 = vmatprep.subr.mxu0 %v1463
    %8246 = vmatpush1.msra.mxu0 %v1462
    %8247 = vmatprep.subr.mxu0 %v1467
    %8248 = vmatpush1.msra.mxu0 %v1466
    %8249 = vmatprep.subr.mxu0 %v1471
    %8250 = vmatpush1.msra.mxu0 %v1470
    %8251 = vmatprep.subr.mxu0 %v1475
    %8252 = vmatpush1.msra.mxu0 %v1474
    %8253 = vmatprep.subr.mxu0 %v1479
    %8254 = vmatpush1.msra.mxu0 %v1478
    %8255 = vmatprep.subr.mxu0 %v1483
    %8256 = vmatpush1.msra.mxu0 %v1482
    %8257 = vmatprep.subr.mxu0 %v1487
    %8258 = vmatpush1.msra.mxu0 %v1486
    %8259 = vmatprep.subr.mxu0 %v1491
    %8260 = vmatpush1.msra.mxu0 %v1490
    %8261 = vmatprep.subr.mxu0 %v1495
    %8262 = vmatpush1.msra.mxu0 %v1494
    %8263 = vmatprep.subr.mxu0 %v1499
    %8264 = vmatpush1.msra.mxu0 %v1498
    %8265 = vmatprep.subr.mxu0 %v1503
    %8266 = vmatpush1.msra.mxu0 %v1502
    %8267 = vmatprep.subr.mxu0 %v1507
    %8268 = vmatpush1.msra.mxu0 %v1506
    %8269 = vmatprep.subr.mxu0 %v1511
    %8270 = vmatpush1.msra.mxu0 %v1510
    %8271 = vmatprep.subr.mxu0 %v1515
    %8272 = vmatpush1.msra.mxu0 %v1514
    %8273 = vmatprep.subr.mxu0 0.0
    %8274 = vmatpush1.msra.mxu0 0.0
    %8275 = vmatprep.subr.mxu0 0.0
    %8276 = vmatpush1.msra.mxu0 0.0
    %8277 = vmatprep.subr.mxu0 0.0
    %8278 = vmatpush1.msra.mxu0 0.0
    %8279 = vmatprep.subr.mxu0 0.0
    %8280 = vmatpush1.msra.mxu0 0.0
    %8281 = vmatprep.subr.mxu0 0.0
    %8282 = vmatpush1.msra.mxu0 0.0
    %8283 = vmatprep.subr.mxu0 0.0
    %8284 = vmatpush1.msra.mxu0 0.0
    %8285 = vmatprep.subr.mxu0 0.0
    %8286 = vmatpush1.msra.mxu0 0.0
    %8287 = vmatprep.subr.mxu0 0.0
    %8288 = vmatpush1.msra.mxu0 0.0
    %8289 = vmatprep.subr.mxu0 0.0
    %8290 = vmatpush1.msra.mxu0 0.0
    %8291 = vmatprep.subr.mxu0 0.0
    %8292 = vmatpush1.msra.mxu0 0.0
    %8293 = vmatprep.subr.mxu0 0.0
    %8294 = vmatpush1.msra.mxu0 0.0
    %8295 = vmatprep.subr.mxu0 0.0
    %8296 = vmatpush1.msra.mxu0 0.0
    %8297 = vmatprep.subr.mxu0 0.0
    %8298 = vmatpush1.msra.mxu0 0.0
    %8299 = vmatprep.subr.mxu0 0.0
    %8300 = vmatpush1.msra.mxu0 0.0
    %8301 = vmatprep.subr.mxu0 0.0
    %8302 = vmatpush1.msra.mxu0 0.0
    %8303 = vmatprep.subr.mxu0 0.0
    %8304 = vmatpush1.msra.mxu0 0.0
    %8305 = vmatprep.mubr.f32.mxu0 0.0
    %8306 = vmatmul.mubr.f32.gmra.mrb[0].mxu0 %v8050
    %v8307 = vpop.f32.mrb[0].mxu0
    %v8308 = vadd.f32 0.0, %v8307
    %v8309 = vpop.f32.mrb[0].mxu0
    %v8310 = vadd.f32 0.0, %v8309
    %8311 = vdwg.mxu0
    %8312 = vmatprep.subr.mxu0 %v1457
    %8313 = vmatpush1.msra.mxu0 %v1456
    %8314 = vmatprep.subr.mxu0 %v1461
    %8315 = vmatpush1.msra.mxu0 %v1460
    %8316 = vmatprep.subr.mxu0 %v1465
    %8317 = vmatpush1.msra.mxu0 %v1464
    %8318 = vmatprep.subr.mxu0 %v1469
    %8319 = vmatpush1.msra.mxu0 %v1468
    %8320 = vmatprep.subr.mxu0 %v1473
    %8321 = vmatpush1.msra.mxu0 %v1472
    %8322 = vmatprep.subr.mxu0 %v1477
    %8323 = vmatpush1.msra.mxu0 %v1476
    %8324 = vmatprep.subr.mxu0 %v1481
    %8325 = vmatpush1.msra.mxu0 %v1480
    %8326 = vmatprep.subr.mxu0 %v1485
    %8327 = vmatpush1.msra.mxu0 %v1484
    %8328 = vmatprep.subr.mxu0 %v1489
    %8329 = vmatpush1.msra.mxu0 %v1488
    %8330 = vmatprep.subr.mxu0 %v1493
    %8331 = vmatpush1.msra.mxu0 %v1492
    %8332 = vmatprep.subr.mxu0 %v1497
    %8333 = vmatpush1.msra.mxu0 %v1496
    %8334 = vmatprep.subr.mxu0 %v1501
    %8335 = vmatpush1.msra.mxu0 %v1500
    %8336 = vmatprep.subr.mxu0 %v1505
    %8337 = vmatpush1.msra.mxu0 %v1504
    %8338 = vmatprep.subr.mxu0 %v1509
    %8339 = vmatpush1.msra.mxu0 %v1508
    %8340 = vmatprep.subr.mxu0 %v1513
    %8341 = vmatpush1.msra.mxu0 %v1512
    %8342 = vmatprep.subr.mxu0 %v1517
    %8343 = vmatpush1.msra.mxu0 %v1516
    %8344 = vmatprep.subr.mxu0 0.0
    %8345 = vmatpush1.msra.mxu0 0.0
    %8346 = vmatprep.subr.mxu0 0.0
    %8347 = vmatpush1.msra.mxu0 0.0
    %8348 = vmatprep.subr.mxu0 0.0
    %8349 = vmatpush1.msra.mxu0 0.0
    %8350 = vmatprep.subr.mxu0 0.0
    %8351 = vmatpush1.msra.mxu0 0.0
    %8352 = vmatprep.subr.mxu0 0.0
    %8353 = vmatpush1.msra.mxu0 0.0
    %8354 = vmatprep.subr.mxu0 0.0
    %8355 = vmatpush1.msra.mxu0 0.0
    %8356 = vmatprep.subr.mxu0 0.0
    %8357 = vmatpush1.msra.mxu0 0.0
    %8358 = vmatprep.subr.mxu0 0.0
    %8359 = vmatpush1.msra.mxu0 0.0
    %8360 = vmatprep.subr.mxu0 0.0
    %8361 = vmatpush1.msra.mxu0 0.0
    %8362 = vmatprep.subr.mxu0 0.0
    %8363 = vmatpush1.msra.mxu0 0.0
    %8364 = vmatprep.subr.mxu0 0.0
    %8365 = vmatpush1.msra.mxu0 0.0
    %8366 = vmatprep.subr.mxu0 0.0
    %8367 = vmatpush1.msra.mxu0 0.0
    %8368 = vmatprep.subr.mxu0 0.0
    %8369 = vmatpush1.msra.mxu0 0.0
    %8370 = vmatprep.subr.mxu0 0.0
    %8371 = vmatpush1.msra.mxu0 0.0
    %8372 = vmatprep.subr.mxu0 0.0
    %8373 = vmatpush1.msra.mxu0 0.0
    %8374 = vmatprep.subr.mxu0 0.0
    %8375 = vmatpush1.msra.mxu0 0.0
    %8376 = vmatprep.mubr.f32.mxu0 0.0
    %8377 = vmatmul.mubr.f32.gmra.mrb[0].mxu0 %v8050
    %v8378 = vpop.f32.mrb[0].mxu0
    %v8379 = vadd.f32 0.0, %v8378
    %v8380 = vpop.f32.mrb[0].mxu0
    %v8381 = vadd.f32 0.0, %v8380
    %8382 = vdwg.mxu0
    %8383 = vmatprep.subr.mxu0 %v1391
    %8384 = vmatpush1.msra.mxu0 %v1390
    %8385 = vmatprep.subr.mxu0 %v1395
    %8386 = vmatpush1.msra.mxu0 %v1394
    %8387 = vmatprep.subr.mxu0 %v1399
    %8388 = vmatpush1.msra.mxu0 %v1398
    %8389 = vmatprep.subr.mxu0 %v1403
    %8390 = vmatpush1.msra.mxu0 %v1402
    %8391 = vmatprep.subr.mxu0 %v1407
    %8392 = vmatpush1.msra.mxu0 %v1406
    %8393 = vmatprep.subr.mxu0 %v1411
    %8394 = vmatpush1.msra.mxu0 %v1410
    %8395 = vmatprep.subr.mxu0 %v1415
    %8396 = vmatpush1.msra.mxu0 %v1414
    %8397 = vmatprep.subr.mxu0 %v1419
    %8398 = vmatpush1.msra.mxu0 %v1418
    %8399 = vmatprep.subr.mxu0 %v1423
    %8400 = vmatpush1.msra.mxu0 %v1422
    %8401 = vmatprep.subr.mxu0 %v1427
    %8402 = vmatpush1.msra.mxu0 %v1426
    %8403 = vmatprep.subr.mxu0 %v1431
    %8404 = vmatpush1.msra.mxu0 %v1430
    %8405 = vmatprep.subr.mxu0 %v1435
    %8406 = vmatpush1.msra.mxu0 %v1434
    %8407 = vmatprep.subr.mxu0 %v1439
    %8408 = vmatpush1.msra.mxu0 %v1438
    %8409 = vmatprep.subr.mxu0 %v1443
    %8410 = vmatpush1.msra.mxu0 %v1442
    %8411 = vmatprep.subr.mxu0 %v1447
    %8412 = vmatpush1.msra.mxu0 %v1446
    %8413 = vmatprep.subr.mxu0 %v1451
    %8414 = vmatpush1.msra.mxu0 %v1450
    %8415 = vmatprep.subr.mxu0 0.0
    %8416 = vmatpush1.msra.mxu0 0.0
    %8417 = vmatprep.subr.mxu0 0.0
    %8418 = vmatpush1.msra.mxu0 0.0
    %8419 = vmatprep.subr.mxu0 0.0
    %8420 = vmatpush1.msra.mxu0 0.0
    %8421 = vmatprep.subr.mxu0 0.0
    %8422 = vmatpush1.msra.mxu0 0.0
    %8423 = vmatprep.subr.mxu0 0.0
    %8424 = vmatpush1.msra.mxu0 0.0
    %8425 = vmatprep.subr.mxu0 0.0
    %8426 = vmatpush1.msra.mxu0 0.0
    %8427 = vmatprep.subr.mxu0 0.0
    %8428 = vmatpush1.msra.mxu0 0.0
    %8429 = vmatprep.subr.mxu0 0.0
    %8430 = vmatpush1.msra.mxu0 0.0
    %8431 = vmatprep.subr.mxu0 0.0
    %8432 = vmatpush1.msra.mxu0 0.0
    %8433 = vmatprep.subr.mxu0 0.0
    %8434 = vmatpush1.msra.mxu0 0.0
    %8435 = vmatprep.subr.mxu0 0.0
    %8436 = vmatpush1.msra.mxu0 0.0
    %8437 = vmatprep.subr.mxu0 0.0
    %8438 = vmatpush1.msra.mxu0 0.0
    %8439 = vmatprep.subr.mxu0 0.0
    %8440 = vmatpush1.msra.mxu0 0.0
    %8441 = vmatprep.subr.mxu0 0.0
    %8442 = vmatpush1.msra.mxu0 0.0
    %8443 = vmatprep.subr.mxu0 0.0
    %8444 = vmatpush1.msra.mxu0 0.0
    %8445 = vmatprep.subr.mxu0 0.0
    %8446 = vmatpush1.msra.mxu0 0.0
    %8447 = vmatprep.mubr.f32.mxu0 0.0
    %8448 = vmatmul.mubr.f32.gmra.mrb[0].mxu0 %v8240
    %v8449 = vpop.f32.mrb[0].mxu0
    %v8450 = vadd.f32 %v8308, %v8449
    %v8451 = vpop.f32.mrb[0].mxu0
    %v8452 = vadd.f32 %v8310, %v8451
    %8453 = vdwg.mxu0
    %8454 = vmatprep.subr.mxu0 %v1393
    %8455 = vmatpush1.msra.mxu0 %v1392
    %8456 = vmatprep.subr.mxu0 %v1397
    %8457 = vmatpush1.msra.mxu0 %v1396
    %8458 = vmatprep.subr.mxu0 %v1401
    %8459 = vmatpush1.msra.mxu0 %v1400
    %8460 = vmatprep.subr.mxu0 %v1405
    %8461 = vmatpush1.msra.mxu0 %v1404
    %8462 = vmatprep.subr.mxu0 %v1409
    %8463 = vmatpush1.msra.mxu0 %v1408
    %8464 = vmatprep.subr.mxu0 %v1413
    %8465 = vmatpush1.msra.mxu0 %v1412
    %8466 = vmatprep.subr.mxu0 %v1417
    %8467 = vmatpush1.msra.mxu0 %v1416
    %8468 = vmatprep.subr.mxu0 %v1421
    %8469 = vmatpush1.msra.mxu0 %v1420
    %8470 = vmatprep.subr.mxu0 %v1425
    %8471 = vmatpush1.msra.mxu0 %v1424
    %8472 = vmatprep.subr.mxu0 %v1429
    %8473 = vmatpush1.msra.mxu0 %v1428
    %8474 = vmatprep.subr.mxu0 %v1433
    %8475 = vmatpush1.msra.mxu0 %v1432
    %8476 = vmatprep.subr.mxu0 %v1437
    %8477 = vmatpush1.msra.mxu0 %v1436
    %8478 = vmatprep.subr.mxu0 %v1441
    %8479 = vmatpush1.msra.mxu0 %v1440
    %8480 = vmatprep.subr.mxu0 %v1445
    %8481 = vmatpush1.msra.mxu0 %v1444
    %8482 = vmatprep.subr.mxu0 %v1449
    %8483 = vmatpush1.msra.mxu0 %v1448
    %8484 = vmatprep.subr.mxu0 %v1453
    %8485 = vmatpush1.msra.mxu0 %v1452
    %8486 = vmatprep.subr.mxu0 0.0
    %8487 = vmatpush1.msra.mxu0 0.0
    %8488 = vmatprep.subr.mxu0 0.0
    %8489 = vmatpush1.msra.mxu0 0.0
    %8490 = vmatprep.subr.mxu0 0.0
    %8491 = vmatpush1.msra.mxu0 0.0
    %8492 = vmatprep.subr.mxu0 0.0
    %8493 = vmatpush1.msra.mxu0 0.0
    %8494 = vmatprep.subr.mxu0 0.0
    %8495 = vmatpush1.msra.mxu0 0.0
    %8496 = vmatprep.subr.mxu0 0.0
    %8497 = vmatpush1.msra.mxu0 0.0
    %8498 = vmatprep.subr.mxu0 0.0
    %8499 = vmatpush1.msra.mxu0 0.0
    %8500 = vmatprep.subr.mxu0 0.0
    %8501 = vmatpush1.msra.mxu0 0.0
    %8502 = vmatprep.subr.mxu0 0.0
    %8503 = vmatpush1.msra.mxu0 0.0
    %8504 = vmatprep.subr.mxu0 0.0
    %8505 = vmatpush1.msra.mxu0 0.0
    %8506 = vmatprep.subr.mxu0 0.0
    %8507 = vmatpush1.msra.mxu0 0.0
    %8508 = vmatprep.subr.mxu0 0.0
    %8509 = vmatpush1.msra.mxu0 0.0
    %8510 = vmatprep.subr.mxu0 0.0
    %8511 = vmatpush1.msra.mxu0 0.0
    %8512 = vmatprep.subr.mxu0 0.0
    %8513 = vmatpush1.msra.mxu0 0.0
    %8514 = vmatprep.subr.mxu0 0.0
    %8515 = vmatpush1.msra.mxu0 0.0
    %8516 = vmatprep.subr.mxu0 0.0
    %8517 = vmatpush1.msra.mxu0 0.0
    %8518 = vmatprep.mubr.f32.mxu0 0.0
    %8519 = vmatmul.mubr.f32.gmra.mrb[0].mxu0 %v8240
    %v8520 = vpop.f32.mrb[0].mxu0
    %v8521 = vadd.f32 %v8379, %v8520
    %v8522 = vpop.f32.mrb[0].mxu0
    %v8523 = vadd.f32 %v8381, %v8522
    %8524 = vdwg.mxu0
    %v8525 = vadd.f32 %v8450, %v1994
    %v8526 = vadd.f32 %v8452, %v1998
    %v8527 = vadd.f32 %v8521, %v2002
    %v8528 = vadd.f32 %v8523, %v2006
    %v8529 = vxor.u32 %v8525, 2147483648
    %v8530 = vmul.f32 %v8529, 1.442695
    %v8531 = vpow.pop %v8530
    %v8532 = vadd.f32 %v8531, 1.0
    %v8533 = vrcp.pop %v8532
    %v8534 = vmul.f32 1.0, %v8533
    %v8535 = vxor.u32 %v8526, 2147483648
    %v8536 = vmul.f32 %v8535, 1.442695
    %v8537 = vpow.pop %v8536
    %v8538 = vadd.f32 %v8537, 1.0
    %v8539 = vrcp.pop %v8538
    %v8540 = vmul.f32 1.0, %v8539
    %v8541 = vtanh.pop %v8527
    %v8542 = vxor.u32 %v8528, 2147483648
    %v8543 = vmul.f32 %v8542, 1.442695
    %v8544 = vpow.pop %v8543
    %v8545 = vadd.f32 %v8544, 1.0
    %v8546 = vrcp.pop %v8545
    %v8547 = vmul.f32 1.0, %v8546
    %v8548 = vmul.f32 %v8540, %v8048
    %v8549 = vmul.f32 %v8534, %v8541
    %v8550 = vadd.f32 %v8548, %v8549
    %v8551 = vtanh.pop %v8550
    %v8552 = vmul.f32 %v8547, %v8551
    %v8553 = vrot.slane %v1053, 6
    %v8554 = vrot.slane %v1055, 6
    %v8555 = vrot.slane %v1130, 6
    %v8556 = vrot.slane %v1132, 6
    %v8561 = vrot.slane %v1245, 5
    %v8562 = vrot.slane %v1247, 5
    %v8563 = vrot.slane %v1322, 5
    %v8564 = vrot.slane %v1324, 5
    %v8569 = vsel %vm1531, %v8553, %v8561
    %v8570 = vsel %vm1531, %v8554, %v8562
    %v8571 = vsel %vm1531, %v8555, %v8563
    %v8572 = vsel %vm1531, %v8556, %v8564
    %8573 = vmatprep.subr.mxu0 %v1327
    %8574 = vmatpush1.msra.mxu0 %v1326
    %8575 = vmatprep.subr.mxu0 %v1331
    %8576 = vmatpush1.msra.mxu0 %v1330
    %8577 = vmatprep.subr.mxu0 %v1335
    %8578 = vmatpush1.msra.mxu0 %v1334
    %8579 = vmatprep.subr.mxu0 %v1339
    %8580 = vmatpush1.msra.mxu0 %v1338
    %8581 = vmatprep.subr.mxu0 %v1343
    %8582 = vmatpush1.msra.mxu0 %v1342
    %8583 = vmatprep.subr.mxu0 %v1347
    %8584 = vmatpush1.msra.mxu0 %v1346
    %8585 = vmatprep.subr.mxu0 %v1351
    %8586 = vmatpush1.msra.mxu0 %v1350
    %8587 = vmatprep.subr.mxu0 %v1355
    %8588 = vmatpush1.msra.mxu0 %v1354
    %8589 = vmatprep.subr.mxu0 %v1359
    %8590 = vmatpush1.msra.mxu0 %v1358
    %8591 = vmatprep.subr.mxu0 %v1363
    %8592 = vmatpush1.msra.mxu0 %v1362
    %8593 = vmatprep.subr.mxu0 %v1367
    %8594 = vmatpush1.msra.mxu0 %v1366
    %8595 = vmatprep.subr.mxu0 %v1371
    %8596 = vmatpush1.msra.mxu0 %v1370
    %8597 = vmatprep.subr.mxu0 %v1375
    %8598 = vmatpush1.msra.mxu0 %v1374
    %8599 = vmatprep.subr.mxu0 %v1379
    %8600 = vmatpush1.msra.mxu0 %v1378
    %8601 = vmatprep.subr.mxu0 %v1383
    %8602 = vmatpush1.msra.mxu0 %v1382
    %8603 = vmatprep.subr.mxu0 %v1387
    %8604 = vmatpush1.msra.mxu0 %v1386
    %8605 = vmatprep.subr.mxu0 0.0
    %8606 = vmatpush1.msra.mxu0 0.0
    %8607 = vmatprep.subr.mxu0 0.0
    %8608 = vmatpush1.msra.mxu0 0.0
    %8609 = vmatprep.subr.mxu0 0.0
    %8610 = vmatpush1.msra.mxu0 0.0
    %8611 = vmatprep.subr.mxu0 0.0
    %8612 = vmatpush1.msra.mxu0 0.0
    %8613 = vmatprep.subr.mxu0 0.0
    %8614 = vmatpush1.msra.mxu0 0.0
    %8615 = vmatprep.subr.mxu0 0.0
    %8616 = vmatpush1.msra.mxu0 0.0
    %8617 = vmatprep.subr.mxu0 0.0
    %8618 = vmatpush1.msra.mxu0 0.0
    %8619 = vmatprep.subr.mxu0 0.0
    %8620 = vmatpush1.msra.mxu0 0.0
    %8621 = vmatprep.subr.mxu0 0.0
    %8622 = vmatpush1.msra.mxu0 0.0
    %8623 = vmatprep.subr.mxu0 0.0
    %8624 = vmatpush1.msra.mxu0 0.0
    %8625 = vmatprep.subr.mxu0 0.0
    %8626 = vmatpush1.msra.mxu0 0.0
    %8627 = vmatprep.subr.mxu0 0.0
    %8628 = vmatpush1.msra.mxu0 0.0
    %8629 = vmatprep.subr.mxu0 0.0
    %8630 = vmatpush1.msra.mxu0 0.0
    %8631 = vmatprep.subr.mxu0 0.0
    %8632 = vmatpush1.msra.mxu0 0.0
    %8633 = vmatprep.subr.mxu0 0.0
    %8634 = vmatpush1.msra.mxu0 0.0
    %8635 = vmatprep.subr.mxu0 0.0
    %8636 = vmatpush1.msra.mxu0 0.0
    %8637 = vmatprep.mubr.f32.mxu0 0.0
    %8638 = vmatmul.mubr.f32.gmra.mrb[0].mxu0 %v8240
    %v8639 = vpop.f32.mrb[0].mxu0
    %v8640 = vadd.f32 0.0, %v8639
    %v8641 = vpop.f32.mrb[0].mxu0
    %v8642 = vadd.f32 0.0, %v8641
    %8643 = vdwg.mxu0
    %8644 = vmatprep.subr.mxu0 %v1329
    %8645 = vmatpush1.msra.mxu0 %v1328
    %8646 = vmatprep.subr.mxu0 %v1333
    %8647 = vmatpush1.msra.mxu0 %v1332
    %8648 = vmatprep.subr.mxu0 %v1337
    %8649 = vmatpush1.msra.mxu0 %v1336
    %8650 = vmatprep.subr.mxu0 %v1341
    %8651 = vmatpush1.msra.mxu0 %v1340
    %8652 = vmatprep.subr.mxu0 %v1345
    %8653 = vmatpush1.msra.mxu0 %v1344
    %8654 = vmatprep.subr.mxu0 %v1349
    %8655 = vmatpush1.msra.mxu0 %v1348
    %8656 = vmatprep.subr.mxu0 %v1353
    %8657 = vmatpush1.msra.mxu0 %v1352
    %8658 = vmatprep.subr.mxu0 %v1357
    %8659 = vmatpush1.msra.mxu0 %v1356
    %8660 = vmatprep.subr.mxu0 %v1361
    %8661 = vmatpush1.msra.mxu0 %v1360
    %8662 = vmatprep.subr.mxu0 %v1365
    %8663 = vmatpush1.msra.mxu0 %v1364
    %8664 = vmatprep.subr.mxu0 %v1369
    %8665 = vmatpush1.msra.mxu0 %v1368
    %8666 = vmatprep.subr.mxu0 %v1373
    %8667 = vmatpush1.msra.mxu0 %v1372
    %8668 = vmatprep.subr.mxu0 %v1377
    %8669 = vmatpush1.msra.mxu0 %v1376
    %8670 = vmatprep.subr.mxu0 %v1381
    %8671 = vmatpush1.msra.mxu0 %v1380
    %8672 = vmatprep.subr.mxu0 %v1385
    %8673 = vmatpush1.msra.mxu0 %v1384
    %8674 = vmatprep.subr.mxu0 %v1389
    %8675 = vmatpush1.msra.mxu0 %v1388
    %8676 = vmatprep.subr.mxu0 0.0
    %8677 = vmatpush1.msra.mxu0 0.0
    %8678 = vmatprep.subr.mxu0 0.0
    %8679 = vmatpush1.msra.mxu0 0.0
    %8680 = vmatprep.subr.mxu0 0.0
    %8681 = vmatpush1.msra.mxu0 0.0
    %8682 = vmatprep.subr.mxu0 0.0
    %8683 = vmatpush1.msra.mxu0 0.0
    %8684 = vmatprep.subr.mxu0 0.0
    %8685 = vmatpush1.msra.mxu0 0.0
    %8686 = vmatprep.subr.mxu0 0.0
    %8687 = vmatpush1.msra.mxu0 0.0
    %8688 = vmatprep.subr.mxu0 0.0
    %8689 = vmatpush1.msra.mxu0 0.0
    %8690 = vmatprep.subr.mxu0 0.0
    %8691 = vmatpush1.msra.mxu0 0.0
    %8692 = vmatprep.subr.mxu0 0.0
    %8693 = vmatpush1.msra.mxu0 0.0
    %8694 = vmatprep.subr.mxu0 0.0
    %8695 = vmatpush1.msra.mxu0 0.0
    %8696 = vmatprep.subr.mxu0 0.0
    %8697 = vmatpush1.msra.mxu0 0.0
    %8698 = vmatprep.subr.mxu0 0.0
    %8699 = vmatpush1.msra.mxu0 0.0
    %8700 = vmatprep.subr.mxu0 0.0
    %8701 = vmatpush1.msra.mxu0 0.0
    %8702 = vmatprep.subr.mxu0 0.0
    %8703 = vmatpush1.msra.mxu0 0.0
    %8704 = vmatprep.subr.mxu0 0.0
    %8705 = vmatpush1.msra.mxu0 0.0
    %8706 = vmatprep.subr.mxu0 0.0
    %8707 = vmatpush1.msra.mxu0 0.0
    %8708 = vmatprep.mubr.f32.mxu0 0.0
    %8709 = vmatmul.mubr.f32.gmra.mrb[0].mxu0 %v8240
    %v8710 = vpop.f32.mrb[0].mxu0
    %v8711 = vadd.f32 0.0, %v8710
    %v8712 = vpop.f32.mrb[0].mxu0
    %v8713 = vadd.f32 0.0, %v8712
    %8714 = vdwg.mxu0
    %v8715 = vadd.f32 %v8569, %v8640
    %v8716 = vadd.f32 %v8570, %v8642
    %v8717 = vadd.f32 %v8571, %v8711
    %v8718 = vadd.f32 %v8572, %v8713
    %v8719 = vxor.u32 %v8715, 2147483648
    %v8720 = vmul.f32 %v8719, 1.442695
    %v8721 = vpow.pop %v8720
    %v8722 = vadd.f32 %v8721, 1.0
    %v8723 = vrcp.pop %v8722
    %v8724 = vmul.f32 1.0, %v8723
    %v8725 = vxor.u32 %v8716, 2147483648
    %v8726 = vmul.f32 %v8725, 1.442695
    %v8727 = vpow.pop %v8726
    %v8728 = vadd.f32 %v8727, 1.0
    %v8729 = vrcp.pop %v8728
    %v8730 = vmul.f32 1.0, %v8729
    %v8731 = vtanh.pop %v8717
    %v8732 = vxor.u32 %v8718, 2147483648
    %v8733 = vmul.f32 %v8732, 1.442695
    %v8734 = vpow.pop %v8733
    %v8735 = vadd.f32 %v8734, 1.0
    %v8736 = vrcp.pop %v8735
    %v8737 = vmul.f32 1.0, %v8736
    %v8738 = vmul.f32 %v8730, %v8238
    %v8739 = vmul.f32 %v8724, %v8731
    %v8740 = vadd.f32 %v8738, %v8739
    %v8741 = vtanh.pop %v8740
    %v8742 = vmul.f32 %v8737, %v8741
    %8743 = vmatprep.subr.mxu0 %v1455
    %8744 = vmatpush1.msra.mxu0 %v1454
    %8745 = vmatprep.subr.mxu0 %v1459
    %8746 = vmatpush1.msra.mxu0 %v1458
    %8747 = vmatprep.subr.mxu0 %v1463
    %8748 = vmatpush1.msra.mxu0 %v1462
    %8749 = vmatprep.subr.mxu0 %v1467
    %8750 = vmatpush1.msra.mxu0 %v1466
    %8751 = vmatprep.subr.mxu0 %v1471
    %8752 = vmatpush1.msra.mxu0 %v1470
    %8753 = vmatprep.subr.mxu0 %v1475
    %8754 = vmatpush1.msra.mxu0 %v1474
    %8755 = vmatprep.subr.mxu0 %v1479
    %8756 = vmatpush1.msra.mxu0 %v1478
    %8757 = vmatprep.subr.mxu0 %v1483
    %8758 = vmatpush1.msra.mxu0 %v1482
    %8759 = vmatprep.subr.mxu0 %v1487
    %8760 = vmatpush1.msra.mxu0 %v1486
    %8761 = vmatprep.subr.mxu0 %v1491
    %8762 = vmatpush1.msra.mxu0 %v1490
    %8763 = vmatprep.subr.mxu0 %v1495
    %8764 = vmatpush1.msra.mxu0 %v1494
    %8765 = vmatprep.subr.mxu0 %v1499
    %8766 = vmatpush1.msra.mxu0 %v1498
    %8767 = vmatprep.subr.mxu0 %v1503
    %8768 = vmatpush1.msra.mxu0 %v1502
    %8769 = vmatprep.subr.mxu0 %v1507
    %8770 = vmatpush1.msra.mxu0 %v1506
    %8771 = vmatprep.subr.mxu0 %v1511
    %8772 = vmatpush1.msra.mxu0 %v1510
    %8773 = vmatprep.subr.mxu0 %v1515
    %8774 = vmatpush1.msra.mxu0 %v1514
    %8775 = vmatprep.subr.mxu0 0.0
    %8776 = vmatpush1.msra.mxu0 0.0
    %8777 = vmatprep.subr.mxu0 0.0
    %8778 = vmatpush1.msra.mxu0 0.0
    %8779 = vmatprep.subr.mxu0 0.0
    %8780 = vmatpush1.msra.mxu0 0.0
    %8781 = vmatprep.subr.mxu0 0.0
    %8782 = vmatpush1.msra.mxu0 0.0
    %8783 = vmatprep.subr.mxu0 0.0
    %8784 = vmatpush1.msra.mxu0 0.0
    %8785 = vmatprep.subr.mxu0 0.0
    %8786 = vmatpush1.msra.mxu0 0.0
    %8787 = vmatprep.subr.mxu0 0.0
    %8788 = vmatpush1.msra.mxu0 0.0
    %8789 = vmatprep.subr.mxu0 0.0
    %8790 = vmatpush1.msra.mxu0 0.0
    %8791 = vmatprep.subr.mxu0 0.0
    %8792 = vmatpush1.msra.mxu0 0.0
    %8793 = vmatprep.subr.mxu0 0.0
    %8794 = vmatpush1.msra.mxu0 0.0
    %8795 = vmatprep.subr.mxu0 0.0
    %8796 = vmatpush1.msra.mxu0 0.0
    %8797 = vmatprep.subr.mxu0 0.0
    %8798 = vmatpush1.msra.mxu0 0.0
    %8799 = vmatprep.subr.mxu0 0.0
    %8800 = vmatpush1.msra.mxu0 0.0
    %8801 = vmatprep.subr.mxu0 0.0
    %8802 = vmatpush1.msra.mxu0 0.0
    %8803 = vmatprep.subr.mxu0 0.0
    %8804 = vmatpush1.msra.mxu0 0.0
    %8805 = vmatprep.subr.mxu0 0.0
    %8806 = vmatpush1.msra.mxu0 0.0
    %8807 = vmatprep.mubr.f32.mxu0 0.0
    %8808 = vmatmul.mubr.f32.gmra.mrb[0].mxu0 %v8552
    %v8809 = vpop.f32.mrb[0].mxu0
    %v8810 = vadd.f32 0.0, %v8809
    %v8811 = vpop.f32.mrb[0].mxu0
    %v8812 = vadd.f32 0.0, %v8811
    %8813 = vdwg.mxu0
    %8814 = vmatprep.subr.mxu0 %v1457
    %8815 = vmatpush1.msra.mxu0 %v1456
    %8816 = vmatprep.subr.mxu0 %v1461
    %8817 = vmatpush1.msra.mxu0 %v1460
    %8818 = vmatprep.subr.mxu0 %v1465
    %8819 = vmatpush1.msra.mxu0 %v1464
    %8820 = vmatprep.subr.mxu0 %v1469
    %8821 = vmatpush1.msra.mxu0 %v1468
    %8822 = vmatprep.subr.mxu0 %v1473
    %8823 = vmatpush1.msra.mxu0 %v1472
    %8824 = vmatprep.subr.mxu0 %v1477
    %8825 = vmatpush1.msra.mxu0 %v1476
    %8826 = vmatprep.subr.mxu0 %v1481
    %8827 = vmatpush1.msra.mxu0 %v1480
    %8828 = vmatprep.subr.mxu0 %v1485
    %8829 = vmatpush1.msra.mxu0 %v1484
    %8830 = vmatprep.subr.mxu0 %v1489
    %8831 = vmatpush1.msra.mxu0 %v1488
    %8832 = vmatprep.subr.mxu0 %v1493
    %8833 = vmatpush1.msra.mxu0 %v1492
    %8834 = vmatprep.subr.mxu0 %v1497
    %8835 = vmatpush1.msra.mxu0 %v1496
    %8836 = vmatprep.subr.mxu0 %v1501
    %8837 = vmatpush1.msra.mxu0 %v1500
    %8838 = vmatprep.subr.mxu0 %v1505
    %8839 = vmatpush1.msra.mxu0 %v1504
    %8840 = vmatprep.subr.mxu0 %v1509
    %8841 = vmatpush1.msra.mxu0 %v1508
    %8842 = vmatprep.subr.mxu0 %v1513
    %8843 = vmatpush1.msra.mxu0 %v1512
    %8844 = vmatprep.subr.mxu0 %v1517
    %8845 = vmatpush1.msra.mxu0 %v1516
    %8846 = vmatprep.subr.mxu0 0.0
    %8847 = vmatpush1.msra.mxu0 0.0
    %8848 = vmatprep.subr.mxu0 0.0
    %8849 = vmatpush1.msra.mxu0 0.0
    %8850 = vmatprep.subr.mxu0 0.0
    %8851 = vmatpush1.msra.mxu0 0.0
    %8852 = vmatprep.subr.mxu0 0.0
    %8853 = vmatpush1.msra.mxu0 0.0
    %8854 = vmatprep.subr.mxu0 0.0
    %8855 = vmatpush1.msra.mxu0 0.0
    %8856 = vmatprep.subr.mxu0 0.0
    %8857 = vmatpush1.msra.mxu0 0.0
    %8858 = vmatprep.subr.mxu0 0.0
    %8859 = vmatpush1.msra.mxu0 0.0
    %8860 = vmatprep.subr.mxu0 0.0
    %8861 = vmatpush1.msra.mxu0 0.0
    %8862 = vmatprep.subr.mxu0 0.0
    %8863 = vmatpush1.msra.mxu0 0.0
    %8864 = vmatprep.subr.mxu0 0.0
    %8865 = vmatpush1.msra.mxu0 0.0
    %8866 = vmatprep.subr.mxu0 0.0
    %8867 = vmatpush1.msra.mxu0 0.0
    %8868 = vmatprep.subr.mxu0 0.0
    %8869 = vmatpush1.msra.mxu0 0.0
    %8870 = vmatprep.subr.mxu0 0.0
    %8871 = vmatpush1.msra.mxu0 0.0
    %8872 = vmatprep.subr.mxu0 0.0
    %8873 = vmatpush1.msra.mxu0 0.0
    %8874 = vmatprep.subr.mxu0 0.0
    %8875 = vmatpush1.msra.mxu0 0.0
    %8876 = vmatprep.subr.mxu0 0.0
    %8877 = vmatpush1.msra.mxu0 0.0
    %8878 = vmatprep.mubr.f32.mxu0 0.0
    %8879 = vmatmul.mubr.f32.gmra.mrb[0].mxu0 %v8552
    %v8880 = vpop.f32.mrb[0].mxu0
    %v8881 = vadd.f32 0.0, %v8880
    %v8882 = vpop.f32.mrb[0].mxu0
    %v8883 = vadd.f32 0.0, %v8882
    %8884 = vdwg.mxu0
    %8885 = vmatprep.subr.mxu0 %v1391
    %8886 = vmatpush1.msra.mxu0 %v1390
    %8887 = vmatprep.subr.mxu0 %v1395
    %8888 = vmatpush1.msra.mxu0 %v1394
    %8889 = vmatprep.subr.mxu0 %v1399
    %8890 = vmatpush1.msra.mxu0 %v1398
    %8891 = vmatprep.subr.mxu0 %v1403
    %8892 = vmatpush1.msra.mxu0 %v1402
    %8893 = vmatprep.subr.mxu0 %v1407
    %8894 = vmatpush1.msra.mxu0 %v1406
    %8895 = vmatprep.subr.mxu0 %v1411
    %8896 = vmatpush1.msra.mxu0 %v1410
    %8897 = vmatprep.subr.mxu0 %v1415
    %8898 = vmatpush1.msra.mxu0 %v1414
    %8899 = vmatprep.subr.mxu0 %v1419
    %8900 = vmatpush1.msra.mxu0 %v1418
    %8901 = vmatprep.subr.mxu0 %v1423
    %8902 = vmatpush1.msra.mxu0 %v1422
    %8903 = vmatprep.subr.mxu0 %v1427
    %8904 = vmatpush1.msra.mxu0 %v1426
    %8905 = vmatprep.subr.mxu0 %v1431
    %8906 = vmatpush1.msra.mxu0 %v1430
    %8907 = vmatprep.subr.mxu0 %v1435
    %8908 = vmatpush1.msra.mxu0 %v1434
    %8909 = vmatprep.subr.mxu0 %v1439
    %8910 = vmatpush1.msra.mxu0 %v1438
    %8911 = vmatprep.subr.mxu0 %v1443
    %8912 = vmatpush1.msra.mxu0 %v1442
    %8913 = vmatprep.subr.mxu0 %v1447
    %8914 = vmatpush1.msra.mxu0 %v1446
    %8915 = vmatprep.subr.mxu0 %v1451
    %8916 = vmatpush1.msra.mxu0 %v1450
    %8917 = vmatprep.subr.mxu0 0.0
    %8918 = vmatpush1.msra.mxu0 0.0
    %8919 = vmatprep.subr.mxu0 0.0
    %8920 = vmatpush1.msra.mxu0 0.0
    %8921 = vmatprep.subr.mxu0 0.0
    %8922 = vmatpush1.msra.mxu0 0.0
    %8923 = vmatprep.subr.mxu0 0.0
    %8924 = vmatpush1.msra.mxu0 0.0
    %8925 = vmatprep.subr.mxu0 0.0
    %8926 = vmatpush1.msra.mxu0 0.0
    %8927 = vmatprep.subr.mxu0 0.0
    %8928 = vmatpush1.msra.mxu0 0.0
    %8929 = vmatprep.subr.mxu0 0.0
    %8930 = vmatpush1.msra.mxu0 0.0
    %8931 = vmatprep.subr.mxu0 0.0
    %8932 = vmatpush1.msra.mxu0 0.0
    %8933 = vmatprep.subr.mxu0 0.0
    %8934 = vmatpush1.msra.mxu0 0.0
    %8935 = vmatprep.subr.mxu0 0.0
    %8936 = vmatpush1.msra.mxu0 0.0
    %8937 = vmatprep.subr.mxu0 0.0
    %8938 = vmatpush1.msra.mxu0 0.0
    %8939 = vmatprep.subr.mxu0 0.0
    %8940 = vmatpush1.msra.mxu0 0.0
    %8941 = vmatprep.subr.mxu0 0.0
    %8942 = vmatpush1.msra.mxu0 0.0
    %8943 = vmatprep.subr.mxu0 0.0
    %8944 = vmatpush1.msra.mxu0 0.0
    %8945 = vmatprep.subr.mxu0 0.0
    %8946 = vmatpush1.msra.mxu0 0.0
    %8947 = vmatprep.subr.mxu0 0.0
    %8948 = vmatpush1.msra.mxu0 0.0
    %8949 = vmatprep.mubr.f32.mxu0 0.0
    %8950 = vmatmul.mubr.f32.gmra.mrb[0].mxu0 %v8742
    %v8951 = vpop.f32.mrb[0].mxu0
    %v8952 = vadd.f32 %v8810, %v8951
    %v8953 = vpop.f32.mrb[0].mxu0
    %v8954 = vadd.f32 %v8812, %v8953
    %8955 = vdwg.mxu0
    %8956 = vmatprep.subr.mxu0 %v1393
    %8957 = vmatpush1.msra.mxu0 %v1392
    %8958 = vmatprep.subr.mxu0 %v1397
    %8959 = vmatpush1.msra.mxu0 %v1396
    %8960 = vmatprep.subr.mxu0 %v1401
    %8961 = vmatpush1.msra.mxu0 %v1400
    %8962 = vmatprep.subr.mxu0 %v1405
    %8963 = vmatpush1.msra.mxu0 %v1404
    %8964 = vmatprep.subr.mxu0 %v1409
    %8965 = vmatpush1.msra.mxu0 %v1408
    %8966 = vmatprep.subr.mxu0 %v1413
    %8967 = vmatpush1.msra.mxu0 %v1412
    %8968 = vmatprep.subr.mxu0 %v1417
    %8969 = vmatpush1.msra.mxu0 %v1416
    %8970 = vmatprep.subr.mxu0 %v1421
    %8971 = vmatpush1.msra.mxu0 %v1420
    %8972 = vmatprep.subr.mxu0 %v1425
    %8973 = vmatpush1.msra.mxu0 %v1424
    %8974 = vmatprep.subr.mxu0 %v1429
    %8975 = vmatpush1.msra.mxu0 %v1428
    %8976 = vmatprep.subr.mxu0 %v1433
    %8977 = vmatpush1.msra.mxu0 %v1432
    %8978 = vmatprep.subr.mxu0 %v1437
    %8979 = vmatpush1.msra.mxu0 %v1436
    %8980 = vmatprep.subr.mxu0 %v1441
    %8981 = vmatpush1.msra.mxu0 %v1440
    %8982 = vmatprep.subr.mxu0 %v1445
    %8983 = vmatpush1.msra.mxu0 %v1444
    %8984 = vmatprep.subr.mxu0 %v1449
    %8985 = vmatpush1.msra.mxu0 %v1448
    %8986 = vmatprep.subr.mxu0 %v1453
    %8987 = vmatpush1.msra.mxu0 %v1452
    %8988 = vmatprep.subr.mxu0 0.0
    %8989 = vmatpush1.msra.mxu0 0.0
    %8990 = vmatprep.subr.mxu0 0.0
    %8991 = vmatpush1.msra.mxu0 0.0
    %8992 = vmatprep.subr.mxu0 0.0
    %8993 = vmatpush1.msra.mxu0 0.0
    %8994 = vmatprep.subr.mxu0 0.0
    %8995 = vmatpush1.msra.mxu0 0.0
    %8996 = vmatprep.subr.mxu0 0.0
    %8997 = vmatpush1.msra.mxu0 0.0
    %8998 = vmatprep.subr.mxu0 0.0
    %8999 = vmatpush1.msra.mxu0 0.0
    %9000 = vmatprep.subr.mxu0 0.0
    %9001 = vmatpush1.msra.mxu0 0.0
    %9002 = vmatprep.subr.mxu0 0.0
    %9003 = vmatpush1.msra.mxu0 0.0
    %9004 = vmatprep.subr.mxu0 0.0
    %9005 = vmatpush1.msra.mxu0 0.0
    %9006 = vmatprep.subr.mxu0 0.0
    %9007 = vmatpush1.msra.mxu0 0.0
    %9008 = vmatprep.subr.mxu0 0.0
    %9009 = vmatpush1.msra.mxu0 0.0
    %9010 = vmatprep.subr.mxu0 0.0
    %9011 = vmatpush1.msra.mxu0 0.0
    %9012 = vmatprep.subr.mxu0 0.0
    %9013 = vmatpush1.msra.mxu0 0.0
    %9014 = vmatprep.subr.mxu0 0.0
    %9015 = vmatpush1.msra.mxu0 0.0
    %9016 = vmatprep.subr.mxu0 0.0
    %9017 = vmatpush1.msra.mxu0 0.0
    %9018 = vmatprep.subr.mxu0 0.0
    %9019 = vmatpush1.msra.mxu0 0.0
    %9020 = vmatprep.mubr.f32.mxu0 0.0
    %9021 = vmatmul.mubr.f32.gmra.mrb[0].mxu0 %v8742
    %v9022 = vpop.f32.mrb[0].mxu0
    %v9023 = vadd.f32 %v8881, %v9022
    %v9024 = vpop.f32.mrb[0].mxu0
    %v9025 = vadd.f32 %v8883, %v9024
    %9026 = vdwg.mxu0
    %v9027 = vadd.f32 %v8952, %v1994
    %v9028 = vadd.f32 %v8954, %v1998
    %v9029 = vadd.f32 %v9023, %v2002
    %v9030 = vadd.f32 %v9025, %v2006
    %v9031 = vxor.u32 %v9027, 2147483648
    %v9032 = vmul.f32 %v9031, 1.442695
    %v9033 = vpow.pop %v9032
    %v9034 = vadd.f32 %v9033, 1.0
    %v9035 = vrcp.pop %v9034
    %v9036 = vmul.f32 1.0, %v9035
    %v9037 = vxor.u32 %v9028, 2147483648
    %v9038 = vmul.f32 %v9037, 1.442695
    %v9039 = vpow.pop %v9038
    %v9040 = vadd.f32 %v9039, 1.0
    %v9041 = vrcp.pop %v9040
    %v9042 = vmul.f32 1.0, %v9041
    %v9043 = vtanh.pop %v9029
    %v9044 = vxor.u32 %v9030, 2147483648
    %v9045 = vmul.f32 %v9044, 1.442695
    %v9046 = vpow.pop %v9045
    %v9047 = vadd.f32 %v9046, 1.0
    %v9048 = vrcp.pop %v9047
    %v9049 = vmul.f32 1.0, %v9048
    %v9050 = vmul.f32 %v9042, %v8550
    %v9051 = vmul.f32 %v9036, %v9043
    %v9052 = vadd.f32 %v9050, %v9051
    %v9053 = vtanh.pop %v9052
    %v9054 = vmul.f32 %v9049, %v9053
    %v9055 = vrot.slane %v1053, 7
    %v9056 = vrot.slane %v1055, 7
    %v9057 = vrot.slane %v1130, 7
    %v9058 = vrot.slane %v1132, 7
    %v9063 = vrot.slane %v1245, 6
    %v9064 = vrot.slane %v1247, 6
    %v9065 = vrot.slane %v1322, 6
    %v9066 = vrot.slane %v1324, 6
    %v9071 = vsel %vm1531, %v9055, %v9063
    %v9072 = vsel %vm1531, %v9056, %v9064
    %v9073 = vsel %vm1531, %v9057, %v9065
    %v9074 = vsel %vm1531, %v9058, %v9066
    %9075 = vmatprep.subr.mxu0 %v1327
    %9076 = vmatpush1.msra.mxu0 %v1326
    %9077 = vmatprep.subr.mxu0 %v1331
    %9078 = vmatpush1.msra.mxu0 %v1330
    %9079 = vmatprep.subr.mxu0 %v1335
    %9080 = vmatpush1.msra.mxu0 %v1334
    %9081 = vmatprep.subr.mxu0 %v1339
    %9082 = vmatpush1.msra.mxu0 %v1338
    %9083 = vmatprep.subr.mxu0 %v1343
    %9084 = vmatpush1.msra.mxu0 %v1342
    %9085 = vmatprep.subr.mxu0 %v1347
    %9086 = vmatpush1.msra.mxu0 %v1346
    %9087 = vmatprep.subr.mxu0 %v1351
    %9088 = vmatpush1.msra.mxu0 %v1350
    %9089 = vmatprep.subr.mxu0 %v1355
    %9090 = vmatpush1.msra.mxu0 %v1354
    %9091 = vmatprep.subr.mxu0 %v1359
    %9092 = vmatpush1.msra.mxu0 %v1358
    %9093 = vmatprep.subr.mxu0 %v1363
    %9094 = vmatpush1.msra.mxu0 %v1362
    %9095 = vmatprep.subr.mxu0 %v1367
    %9096 = vmatpush1.msra.mxu0 %v1366
    %9097 = vmatprep.subr.mxu0 %v1371
    %9098 = vmatpush1.msra.mxu0 %v1370
    %9099 = vmatprep.subr.mxu0 %v1375
    %9100 = vmatpush1.msra.mxu0 %v1374
    %9101 = vmatprep.subr.mxu0 %v1379
    %9102 = vmatpush1.msra.mxu0 %v1378
    %9103 = vmatprep.subr.mxu0 %v1383
    %9104 = vmatpush1.msra.mxu0 %v1382
    %9105 = vmatprep.subr.mxu0 %v1387
    %9106 = vmatpush1.msra.mxu0 %v1386
    %9107 = vmatprep.subr.mxu0 0.0
    %9108 = vmatpush1.msra.mxu0 0.0
    %9109 = vmatprep.subr.mxu0 0.0
    %9110 = vmatpush1.msra.mxu0 0.0
    %9111 = vmatprep.subr.mxu0 0.0
    %9112 = vmatpush1.msra.mxu0 0.0
    %9113 = vmatprep.subr.mxu0 0.0
    %9114 = vmatpush1.msra.mxu0 0.0
    %9115 = vmatprep.subr.mxu0 0.0
    %9116 = vmatpush1.msra.mxu0 0.0
    %9117 = vmatprep.subr.mxu0 0.0
    %9118 = vmatpush1.msra.mxu0 0.0
    %9119 = vmatprep.subr.mxu0 0.0
    %9120 = vmatpush1.msra.mxu0 0.0
    %9121 = vmatprep.subr.mxu0 0.0
    %9122 = vmatpush1.msra.mxu0 0.0
    %9123 = vmatprep.subr.mxu0 0.0
    %9124 = vmatpush1.msra.mxu0 0.0
    %9125 = vmatprep.subr.mxu0 0.0
    %9126 = vmatpush1.msra.mxu0 0.0
    %9127 = vmatprep.subr.mxu0 0.0
    %9128 = vmatpush1.msra.mxu0 0.0
    %9129 = vmatprep.subr.mxu0 0.0
    %9130 = vmatpush1.msra.mxu0 0.0
    %9131 = vmatprep.subr.mxu0 0.0
    %9132 = vmatpush1.msra.mxu0 0.0
    %9133 = vmatprep.subr.mxu0 0.0
    %9134 = vmatpush1.msra.mxu0 0.0
    %9135 = vmatprep.subr.mxu0 0.0
    %9136 = vmatpush1.msra.mxu0 0.0
    %9137 = vmatprep.subr.mxu0 0.0
    %9138 = vmatpush1.msra.mxu0 0.0
    %9139 = vmatprep.mubr.f32.mxu0 0.0
    %9140 = vmatmul.mubr.f32.gmra.mrb[0].mxu0 %v8742
    %v9141 = vpop.f32.mrb[0].mxu0
    %v9142 = vadd.f32 0.0, %v9141
    %v9143 = vpop.f32.mrb[0].mxu0
    %v9144 = vadd.f32 0.0, %v9143
    %9145 = vdwg.mxu0
    %9146 = vmatprep.subr.mxu0 %v1329
    %9147 = vmatpush1.msra.mxu0 %v1328
    %9148 = vmatprep.subr.mxu0 %v1333
    %9149 = vmatpush1.msra.mxu0 %v1332
    %9150 = vmatprep.subr.mxu0 %v1337
    %9151 = vmatpush1.msra.mxu0 %v1336
    %9152 = vmatprep.subr.mxu0 %v1341
    %9153 = vmatpush1.msra.mxu0 %v1340
    %9154 = vmatprep.subr.mxu0 %v1345
    %9155 = vmatpush1.msra.mxu0 %v1344
    %9156 = vmatprep.subr.mxu0 %v1349
    %9157 = vmatpush1.msra.mxu0 %v1348
    %9158 = vmatprep.subr.mxu0 %v1353
    %9159 = vmatpush1.msra.mxu0 %v1352
    %9160 = vmatprep.subr.mxu0 %v1357
    %9161 = vmatpush1.msra.mxu0 %v1356
    %9162 = vmatprep.subr.mxu0 %v1361
    %9163 = vmatpush1.msra.mxu0 %v1360
    %9164 = vmatprep.subr.mxu0 %v1365
    %9165 = vmatpush1.msra.mxu0 %v1364
    %9166 = vmatprep.subr.mxu0 %v1369
    %9167 = vmatpush1.msra.mxu0 %v1368
    %9168 = vmatprep.subr.mxu0 %v1373
    %9169 = vmatpush1.msra.mxu0 %v1372
    %9170 = vmatprep.subr.mxu0 %v1377
    %9171 = vmatpush1.msra.mxu0 %v1376
    %9172 = vmatprep.subr.mxu0 %v1381
    %9173 = vmatpush1.msra.mxu0 %v1380
    %9174 = vmatprep.subr.mxu0 %v1385
    %9175 = vmatpush1.msra.mxu0 %v1384
    %9176 = vmatprep.subr.mxu0 %v1389
    %9177 = vmatpush1.msra.mxu0 %v1388
    %9178 = vmatprep.subr.mxu0 0.0
    %9179 = vmatpush1.msra.mxu0 0.0
    %9180 = vmatprep.subr.mxu0 0.0
    %9181 = vmatpush1.msra.mxu0 0.0
    %9182 = vmatprep.subr.mxu0 0.0
    %9183 = vmatpush1.msra.mxu0 0.0
    %9184 = vmatprep.subr.mxu0 0.0
    %9185 = vmatpush1.msra.mxu0 0.0
    %9186 = vmatprep.subr.mxu0 0.0
    %9187 = vmatpush1.msra.mxu0 0.0
    %9188 = vmatprep.subr.mxu0 0.0
    %9189 = vmatpush1.msra.mxu0 0.0
    %9190 = vmatprep.subr.mxu0 0.0
    %9191 = vmatpush1.msra.mxu0 0.0
    %9192 = vmatprep.subr.mxu0 0.0
    %9193 = vmatpush1.msra.mxu0 0.0
    %9194 = vmatprep.subr.mxu0 0.0
    %9195 = vmatpush1.msra.mxu0 0.0
    %9196 = vmatprep.subr.mxu0 0.0
    %9197 = vmatpush1.msra.mxu0 0.0
    %9198 = vmatprep.subr.mxu0 0.0
    %9199 = vmatpush1.msra.mxu0 0.0
    %9200 = vmatprep.subr.mxu0 0.0
    %9201 = vmatpush1.msra.mxu0 0.0
    %9202 = vmatprep.subr.mxu0 0.0
    %9203 = vmatpush1.msra.mxu0 0.0
    %9204 = vmatprep.subr.mxu0 0.0
    %9205 = vmatpush1.msra.mxu0 0.0
    %9206 = vmatprep.subr.mxu0 0.0
    %9207 = vmatpush1.msra.mxu0 0.0
    %9208 = vmatprep.subr.mxu0 0.0
    %9209 = vmatpush1.msra.mxu0 0.0
    %9210 = vmatprep.mubr.f32.mxu0 0.0
    %9211 = vmatmul.mubr.f32.gmra.mrb[0].mxu0 %v8742
    %v9212 = vpop.f32.mrb[0].mxu0
    %v9213 = vadd.f32 0.0, %v9212
    %v9214 = vpop.f32.mrb[0].mxu0
    %v9215 = vadd.f32 0.0, %v9214
    %9216 = vdwg.mxu0
    %v9217 = vadd.f32 %v9071, %v9142
    %v9218 = vadd.f32 %v9072, %v9144
    %v9219 = vadd.f32 %v9073, %v9213
    %v9220 = vadd.f32 %v9074, %v9215
    %v9221 = vxor.u32 %v9217, 2147483648
    %v9222 = vmul.f32 %v9221, 1.442695
    %v9223 = vpow.pop %v9222
    %v9224 = vadd.f32 %v9223, 1.0
    %v9225 = vrcp.pop %v9224
    %v9226 = vmul.f32 1.0, %v9225
    %v9227 = vxor.u32 %v9218, 2147483648
    %v9228 = vmul.f32 %v9227, 1.442695
    %v9229 = vpow.pop %v9228
    %v9230 = vadd.f32 %v9229, 1.0
    %v9231 = vrcp.pop %v9230
    %v9232 = vmul.f32 1.0, %v9231
    %v9233 = vtanh.pop %v9219
    %v9234 = vxor.u32 %v9220, 2147483648
    %v9235 = vmul.f32 %v9234, 1.442695
    %v9236 = vpow.pop %v9235
    %v9237 = vadd.f32 %v9236, 1.0
    %v9238 = vrcp.pop %v9237
    %v9239 = vmul.f32 1.0, %v9238
    %v9240 = vmul.f32 %v9232, %v8740
    %v9241 = vmul.f32 %v9226, %v9233
    %v9242 = vadd.f32 %v9240, %v9241
    %v9243 = vtanh.pop %v9242
    %v9244 = vmul.f32 %v9239, %v9243
    %9245 = vmatprep.subr.mxu0 %v1455
    %9246 = vmatpush1.msra.mxu0 %v1454
    %9247 = vmatprep.subr.mxu0 %v1459
    %9248 = vmatpush1.msra.mxu0 %v1458
    %9249 = vmatprep.subr.mxu0 %v1463
    %9250 = vmatpush1.msra.mxu0 %v1462
    %9251 = vmatprep.subr.mxu0 %v1467
    %9252 = vmatpush1.msra.mxu0 %v1466
    %9253 = vmatprep.subr.mxu0 %v1471
    %9254 = vmatpush1.msra.mxu0 %v1470
    %9255 = vmatprep.subr.mxu0 %v1475
    %9256 = vmatpush1.msra.mxu0 %v1474
    %9257 = vmatprep.subr.mxu0 %v1479
    %9258 = vmatpush1.msra.mxu0 %v1478
    %9259 = vmatprep.subr.mxu0 %v1483
    %9260 = vmatpush1.msra.mxu0 %v1482
    %9261 = vmatprep.subr.mxu0 %v1487
    %9262 = vmatpush1.msra.mxu0 %v1486
    %9263 = vmatprep.subr.mxu0 %v1491
    %9264 = vmatpush1.msra.mxu0 %v1490
    %9265 = vmatprep.subr.mxu0 %v1495
    %9266 = vmatpush1.msra.mxu0 %v1494
    %9267 = vmatprep.subr.mxu0 %v1499
    %9268 = vmatpush1.msra.mxu0 %v1498
    %9269 = vmatprep.subr.mxu0 %v1503
    %9270 = vmatpush1.msra.mxu0 %v1502
    %9271 = vmatprep.subr.mxu0 %v1507
    %9272 = vmatpush1.msra.mxu0 %v1506
    %9273 = vmatprep.subr.mxu0 %v1511
    %9274 = vmatpush1.msra.mxu0 %v1510
    %9275 = vmatprep.subr.mxu0 %v1515
    %9276 = vmatpush1.msra.mxu0 %v1514
    %9277 = vmatprep.subr.mxu0 0.0
    %9278 = vmatpush1.msra.mxu0 0.0
    %9279 = vmatprep.subr.mxu0 0.0
    %9280 = vmatpush1.msra.mxu0 0.0
    %9281 = vmatprep.subr.mxu0 0.0
    %9282 = vmatpush1.msra.mxu0 0.0
    %9283 = vmatprep.subr.mxu0 0.0
    %9284 = vmatpush1.msra.mxu0 0.0
    %9285 = vmatprep.subr.mxu0 0.0
    %9286 = vmatpush1.msra.mxu0 0.0
    %9287 = vmatprep.subr.mxu0 0.0
    %9288 = vmatpush1.msra.mxu0 0.0
    %9289 = vmatprep.subr.mxu0 0.0
    %9290 = vmatpush1.msra.mxu0 0.0
    %9291 = vmatprep.subr.mxu0 0.0
    %9292 = vmatpush1.msra.mxu0 0.0
    %9293 = vmatprep.subr.mxu0 0.0
    %9294 = vmatpush1.msra.mxu0 0.0
    %9295 = vmatprep.subr.mxu0 0.0
    %9296 = vmatpush1.msra.mxu0 0.0
    %9297 = vmatprep.subr.mxu0 0.0
    %9298 = vmatpush1.msra.mxu0 0.0
    %9299 = vmatprep.subr.mxu0 0.0
    %9300 = vmatpush1.msra.mxu0 0.0
    %9301 = vmatprep.subr.mxu0 0.0
    %9302 = vmatpush1.msra.mxu0 0.0
    %9303 = vmatprep.subr.mxu0 0.0
    %9304 = vmatpush1.msra.mxu0 0.0
    %9305 = vmatprep.subr.mxu0 0.0
    %9306 = vmatpush1.msra.mxu0 0.0
    %9307 = vmatprep.subr.mxu0 0.0
    %9308 = vmatpush1.msra.mxu0 0.0
    %9309 = vmatprep.mubr.f32.mxu0 0.0
    %9310 = vmatmul.mubr.f32.gmra.mrb[0].mxu0 %v9054
    %v9311 = vpop.f32.mrb[0].mxu0
    %v9312 = vadd.f32 0.0, %v9311
    %v9313 = vpop.f32.mrb[0].mxu0
    %v9314 = vadd.f32 0.0, %v9313
    %9315 = vdwg.mxu0
    %9316 = vmatprep.subr.mxu0 %v1457
    %9317 = vmatpush1.msra.mxu0 %v1456
    %9318 = vmatprep.subr.mxu0 %v1461
    %9319 = vmatpush1.msra.mxu0 %v1460
    %9320 = vmatprep.subr.mxu0 %v1465
    %9321 = vmatpush1.msra.mxu0 %v1464
    %9322 = vmatprep.subr.mxu0 %v1469
    %9323 = vmatpush1.msra.mxu0 %v1468
    %9324 = vmatprep.subr.mxu0 %v1473
    %9325 = vmatpush1.msra.mxu0 %v1472
    %9326 = vmatprep.subr.mxu0 %v1477
    %9327 = vmatpush1.msra.mxu0 %v1476
    %9328 = vmatprep.subr.mxu0 %v1481
    %9329 = vmatpush1.msra.mxu0 %v1480
    %9330 = vmatprep.subr.mxu0 %v1485
    %9331 = vmatpush1.msra.mxu0 %v1484
    %9332 = vmatprep.subr.mxu0 %v1489
    %9333 = vmatpush1.msra.mxu0 %v1488
    %9334 = vmatprep.subr.mxu0 %v1493
    %9335 = vmatpush1.msra.mxu0 %v1492
    %9336 = vmatprep.subr.mxu0 %v1497
    %9337 = vmatpush1.msra.mxu0 %v1496
    %9338 = vmatprep.subr.mxu0 %v1501
    %9339 = vmatpush1.msra.mxu0 %v1500
    %9340 = vmatprep.subr.mxu0 %v1505
    %9341 = vmatpush1.msra.mxu0 %v1504
    %9342 = vmatprep.subr.mxu0 %v1509
    %9343 = vmatpush1.msra.mxu0 %v1508
    %9344 = vmatprep.subr.mxu0 %v1513
    %9345 = vmatpush1.msra.mxu0 %v1512
    %9346 = vmatprep.subr.mxu0 %v1517
    %9347 = vmatpush1.msra.mxu0 %v1516
    %9348 = vmatprep.subr.mxu0 0.0
    %9349 = vmatpush1.msra.mxu0 0.0
    %9350 = vmatprep.subr.mxu0 0.0
    %9351 = vmatpush1.msra.mxu0 0.0
    %9352 = vmatprep.subr.mxu0 0.0
    %9353 = vmatpush1.msra.mxu0 0.0
    %9354 = vmatprep.subr.mxu0 0.0
    %9355 = vmatpush1.msra.mxu0 0.0
    %9356 = vmatprep.subr.mxu0 0.0
    %9357 = vmatpush1.msra.mxu0 0.0
    %9358 = vmatprep.subr.mxu0 0.0
    %9359 = vmatpush1.msra.mxu0 0.0
    %9360 = vmatprep.subr.mxu0 0.0
    %9361 = vmatpush1.msra.mxu0 0.0
    %9362 = vmatprep.subr.mxu0 0.0
    %9363 = vmatpush1.msra.mxu0 0.0
    %9364 = vmatprep.subr.mxu0 0.0
    %9365 = vmatpush1.msra.mxu0 0.0
    %9366 = vmatprep.subr.mxu0 0.0
    %9367 = vmatpush1.msra.mxu0 0.0
    %9368 = vmatprep.subr.mxu0 0.0
    %9369 = vmatpush1.msra.mxu0 0.0
    %9370 = vmatprep.subr.mxu0 0.0
    %9371 = vmatpush1.msra.mxu0 0.0
    %9372 = vmatprep.subr.mxu0 0.0
    %9373 = vmatpush1.msra.mxu0 0.0
    %9374 = vmatprep.subr.mxu0 0.0
    %9375 = vmatpush1.msra.mxu0 0.0
    %9376 = vmatprep.subr.mxu0 0.0
    %9377 = vmatpush1.msra.mxu0 0.0
    %9378 = vmatprep.subr.mxu0 0.0
    %9379 = vmatpush1.msra.mxu0 0.0
    %9380 = vmatprep.mubr.f32.mxu0 0.0
    %9381 = vmatmul.mubr.f32.gmra.mrb[0].mxu0 %v9054
    %v9382 = vpop.f32.mrb[0].mxu0
    %v9383 = vadd.f32 0.0, %v9382
    %v9384 = vpop.f32.mrb[0].mxu0
    %v9385 = vadd.f32 0.0, %v9384
    %9386 = vdwg.mxu0
    %9387 = vmatprep.subr.mxu0 %v1391
    %9388 = vmatpush1.msra.mxu0 %v1390
    %9389 = vmatprep.subr.mxu0 %v1395
    %9390 = vmatpush1.msra.mxu0 %v1394
    %9391 = vmatprep.subr.mxu0 %v1399
    %9392 = vmatpush1.msra.mxu0 %v1398
    %9393 = vmatprep.subr.mxu0 %v1403
    %9394 = vmatpush1.msra.mxu0 %v1402
    %9395 = vmatprep.subr.mxu0 %v1407
    %9396 = vmatpush1.msra.mxu0 %v1406
    %9397 = vmatprep.subr.mxu0 %v1411
    %9398 = vmatpush1.msra.mxu0 %v1410
    %9399 = vmatprep.subr.mxu0 %v1415
    %9400 = vmatpush1.msra.mxu0 %v1414
    %9401 = vmatprep.subr.mxu0 %v1419
    %9402 = vmatpush1.msra.mxu0 %v1418
    %9403 = vmatprep.subr.mxu0 %v1423
    %9404 = vmatpush1.msra.mxu0 %v1422
    %9405 = vmatprep.subr.mxu0 %v1427
    %9406 = vmatpush1.msra.mxu0 %v1426
    %9407 = vmatprep.subr.mxu0 %v1431
    %9408 = vmatpush1.msra.mxu0 %v1430
    %9409 = vmatprep.subr.mxu0 %v1435
    %9410 = vmatpush1.msra.mxu0 %v1434
    %9411 = vmatprep.subr.mxu0 %v1439
    %9412 = vmatpush1.msra.mxu0 %v1438
    %9413 = vmatprep.subr.mxu0 %v1443
    %9414 = vmatpush1.msra.mxu0 %v1442
    %9415 = vmatprep.subr.mxu0 %v1447
    %9416 = vmatpush1.msra.mxu0 %v1446
    %9417 = vmatprep.subr.mxu0 %v1451
    %9418 = vmatpush1.msra.mxu0 %v1450
    %9419 = vmatprep.subr.mxu0 0.0
    %9420 = vmatpush1.msra.mxu0 0.0
    %9421 = vmatprep.subr.mxu0 0.0
    %9422 = vmatpush1.msra.mxu0 0.0
    %9423 = vmatprep.subr.mxu0 0.0
    %9424 = vmatpush1.msra.mxu0 0.0
    %9425 = vmatprep.subr.mxu0 0.0
    %9426 = vmatpush1.msra.mxu0 0.0
    %9427 = vmatprep.subr.mxu0 0.0
    %9428 = vmatpush1.msra.mxu0 0.0
    %9429 = vmatprep.subr.mxu0 0.0
    %9430 = vmatpush1.msra.mxu0 0.0
    %9431 = vmatprep.subr.mxu0 0.0
    %9432 = vmatpush1.msra.mxu0 0.0
    %9433 = vmatprep.subr.mxu0 0.0
    %9434 = vmatpush1.msra.mxu0 0.0
    %9435 = vmatprep.subr.mxu0 0.0
    %9436 = vmatpush1.msra.mxu0 0.0
    %9437 = vmatprep.subr.mxu0 0.0
    %9438 = vmatpush1.msra.mxu0 0.0
    %9439 = vmatprep.subr.mxu0 0.0
    %9440 = vmatpush1.msra.mxu0 0.0
    %9441 = vmatprep.subr.mxu0 0.0
    %9442 = vmatpush1.msra.mxu0 0.0
    %9443 = vmatprep.subr.mxu0 0.0
    %9444 = vmatpush1.msra.mxu0 0.0
    %9445 = vmatprep.subr.mxu0 0.0
    %9446 = vmatpush1.msra.mxu0 0.0
    %9447 = vmatprep.subr.mxu0 0.0
    %9448 = vmatpush1.msra.mxu0 0.0
    %9449 = vmatprep.subr.mxu0 0.0
    %9450 = vmatpush1.msra.mxu0 0.0
    %9451 = vmatprep.mubr.f32.mxu0 0.0
    %9452 = vmatmul.mubr.f32.gmra.mrb[0].mxu0 %v9244
    %v9453 = vpop.f32.mrb[0].mxu0
    %v9454 = vadd.f32 %v9312, %v9453
    %v9455 = vpop.f32.mrb[0].mxu0
    %v9456 = vadd.f32 %v9314, %v9455
    %9457 = vdwg.mxu0
    %9458 = vmatprep.subr.mxu0 %v1393
    %9459 = vmatpush1.msra.mxu0 %v1392
    %9460 = vmatprep.subr.mxu0 %v1397
    %9461 = vmatpush1.msra.mxu0 %v1396
    %9462 = vmatprep.subr.mxu0 %v1401
    %9463 = vmatpush1.msra.mxu0 %v1400
    %9464 = vmatprep.subr.mxu0 %v1405
    %9465 = vmatpush1.msra.mxu0 %v1404
    %9466 = vmatprep.subr.mxu0 %v1409
    %9467 = vmatpush1.msra.mxu0 %v1408
    %9468 = vmatprep.subr.mxu0 %v1413
    %9469 = vmatpush1.msra.mxu0 %v1412
    %9470 = vmatprep.subr.mxu0 %v1417
    %9471 = vmatpush1.msra.mxu0 %v1416
    %9472 = vmatprep.subr.mxu0 %v1421
    %9473 = vmatpush1.msra.mxu0 %v1420
    %9474 = vmatprep.subr.mxu0 %v1425
    %9475 = vmatpush1.msra.mxu0 %v1424
    %9476 = vmatprep.subr.mxu0 %v1429
    %9477 = vmatpush1.msra.mxu0 %v1428
    %9478 = vmatprep.subr.mxu0 %v1433
    %9479 = vmatpush1.msra.mxu0 %v1432
    %9480 = vmatprep.subr.mxu0 %v1437
    %9481 = vmatpush1.msra.mxu0 %v1436
    %9482 = vmatprep.subr.mxu0 %v1441
    %9483 = vmatpush1.msra.mxu0 %v1440
    %9484 = vmatprep.subr.mxu0 %v1445
    %9485 = vmatpush1.msra.mxu0 %v1444
    %9486 = vmatprep.subr.mxu0 %v1449
    %9487 = vmatpush1.msra.mxu0 %v1448
    %9488 = vmatprep.subr.mxu0 %v1453
    %9489 = vmatpush1.msra.mxu0 %v1452
    %9490 = vmatprep.subr.mxu0 0.0
    %9491 = vmatpush1.msra.mxu0 0.0
    %9492 = vmatprep.subr.mxu0 0.0
    %9493 = vmatpush1.msra.mxu0 0.0
    %9494 = vmatprep.subr.mxu0 0.0
    %9495 = vmatpush1.msra.mxu0 0.0
    %9496 = vmatprep.subr.mxu0 0.0
    %9497 = vmatpush1.msra.mxu0 0.0
    %9498 = vmatprep.subr.mxu0 0.0
    %9499 = vmatpush1.msra.mxu0 0.0
    %9500 = vmatprep.subr.mxu0 0.0
    %9501 = vmatpush1.msra.mxu0 0.0
    %9502 = vmatprep.subr.mxu0 0.0
    %9503 = vmatpush1.msra.mxu0 0.0
    %9504 = vmatprep.subr.mxu0 0.0
    %9505 = vmatpush1.msra.mxu0 0.0
    %9506 = vmatprep.subr.mxu0 0.0
    %9507 = vmatpush1.msra.mxu0 0.0
    %9508 = vmatprep.subr.mxu0 0.0
    %9509 = vmatpush1.msra.mxu0 0.0
    %9510 = vmatprep.subr.mxu0 0.0
    %9511 = vmatpush1.msra.mxu0 0.0
    %9512 = vmatprep.subr.mxu0 0.0
    %9513 = vmatpush1.msra.mxu0 0.0
    %9514 = vmatprep.subr.mxu0 0.0
    %9515 = vmatpush1.msra.mxu0 0.0
    %9516 = vmatprep.subr.mxu0 0.0
    %9517 = vmatpush1.msra.mxu0 0.0
    %9518 = vmatprep.subr.mxu0 0.0
    %9519 = vmatpush1.msra.mxu0 0.0
    %9520 = vmatprep.subr.mxu0 0.0
    %9521 = vmatpush1.msra.mxu0 0.0
    %9522 = vmatprep.mubr.f32.mxu0 0.0
    %9523 = vmatmul.mubr.f32.gmra.mrb[0].mxu0 %v9244
    %v9524 = vpop.f32.mrb[0].mxu0
    %v9525 = vadd.f32 %v9383, %v9524
    %v9526 = vpop.f32.mrb[0].mxu0
    %v9527 = vadd.f32 %v9385, %v9526
    %9528 = vdwg.mxu0
    %v9529 = vadd.f32 %v9454, %v1994
    %v9530 = vadd.f32 %v9456, %v1998
    %v9531 = vadd.f32 %v9525, %v2002
    %v9532 = vadd.f32 %v9527, %v2006
    %v9533 = vxor.u32 %v9529, 2147483648
    %v9534 = vmul.f32 %v9533, 1.442695
    %v9535 = vpow.pop %v9534
    %v9536 = vadd.f32 %v9535, 1.0
    %v9537 = vrcp.pop %v9536
    %v9538 = vmul.f32 1.0, %v9537
    %v9539 = vxor.u32 %v9530, 2147483648
    %v9540 = vmul.f32 %v9539, 1.442695
    %v9541 = vpow.pop %v9540
    %v9542 = vadd.f32 %v9541, 1.0
    %v9543 = vrcp.pop %v9542
    %v9544 = vmul.f32 1.0, %v9543
    %v9545 = vtanh.pop %v9531
    %v9546 = vxor.u32 %v9532, 2147483648
    %v9547 = vmul.f32 %v9546, 1.442695
    %v9548 = vpow.pop %v9547
    %v9549 = vadd.f32 %v9548, 1.0
    %v9550 = vrcp.pop %v9549
    %v9551 = vmul.f32 1.0, %v9550
    %v9552 = vmul.f32 %v9544, %v9052
    %v9553 = vmul.f32 %v9538, %v9545
    %v9554 = vadd.f32 %v9552, %v9553
    %v9555 = vtanh.pop %v9554
    %v9556 = vmul.f32 %v9551, %v9555
    %v9557 = vld [vmem:[%s11] sm:$0xff]
    %v9558 = vld [vmem:[%s11 + $0x8] sm:$0xff]
    %v9559 = vld [vmem:[%s11 + $0x10] sm:$0xff]
    %v9560 = vld [vmem:[%s11 + $0x18] sm:$0xff]
    %v9561 = vld [vmem:[%s11 + $0x20] sm:$0xff]
    %v9562 = vld [vmem:[%s11 + $0x28] sm:$0xff]
    %v9563 = vld [vmem:[%s11 + $0x30] sm:$0xff]
    %v9564 = vld [vmem:[%s11 + $0x38] sm:$0xff]
    %v9565 = vld [vmem:[%s11 + $0x40] sm:$0xff]
    %v9566 = vld [vmem:[%s11 + $0x48] sm:$0xff]
    %v9567 = vld [vmem:[%s11 + $0x50] sm:$0xff]
    %v9568 = vld [vmem:[%s11 + $0x58] sm:$0xff]
    %v9569 = vld [vmem:[%s11 + $0x60] sm:$0xff]
    %v9570 = vld [vmem:[%s11 + $0x68] sm:$0xff]
    %v9571 = vld [vmem:[%s11 + $0x70] sm:$0xff]
    %v9572 = vld [vmem:[%s11 + $0x78] sm:$0xff]
    %v9573 = vld [vmem:[%s12] sm:$0x1]
    %v9575 = vlaneseq
    %v9576 = vshrl.u32 %v9575, 7
    %v9577 = vsub.s32 0, %v9576
    %v9578 = vrot.slane %v9573, %v9577
    %9580 = vmatprep.subr.mxu0 0.0
    %9581 = vmatpush1.msra.mxu0 %v9557
    %9582 = vmatprep.subr.mxu0 0.0
    %9583 = vmatpush1.msra.mxu0 %v9558
    %9584 = vmatprep.subr.mxu0 0.0
    %9585 = vmatpush1.msra.mxu0 %v9559
    %9586 = vmatprep.subr.mxu0 0.0
    %9587 = vmatpush1.msra.mxu0 %v9560
    %9588 = vmatprep.subr.mxu0 0.0
    %9589 = vmatpush1.msra.mxu0 %v9561
    %9590 = vmatprep.subr.mxu0 0.0
    %9591 = vmatpush1.msra.mxu0 %v9562
    %9592 = vmatprep.subr.mxu0 0.0
    %9593 = vmatpush1.msra.mxu0 %v9563
    %9594 = vmatprep.subr.mxu0 0.0
    %9595 = vmatpush1.msra.mxu0 %v9564
    %9596 = vmatprep.subr.mxu0 0.0
    %9597 = vmatpush1.msra.mxu0 %v9565
    %9598 = vmatprep.subr.mxu0 0.0
    %9599 = vmatpush1.msra.mxu0 %v9566
    %9600 = vmatprep.subr.mxu0 0.0
    %9601 = vmatpush1.msra.mxu0 %v9567
    %9602 = vmatprep.subr.mxu0 0.0
    %9603 = vmatpush1.msra.mxu0 %v9568
    %9604 = vmatprep.subr.mxu0 0.0
    %9605 = vmatpush1.msra.mxu0 %v9569
    %9606 = vmatprep.subr.mxu0 0.0
    %9607 = vmatpush1.msra.mxu0 %v9570
    %9608 = vmatprep.subr.mxu0 0.0
    %9609 = vmatpush1.msra.mxu0 %v9571
    %9610 = vmatprep.subr.mxu0 0.0
    %9611 = vmatpush1.msra.mxu0 %v9572
    %9612 = vmatprep.subr.mxu0 0.0
    %9613 = vmatpush1.msra.mxu0 0.0
    %9614 = vmatprep.subr.mxu0 0.0
    %9615 = vmatpush1.msra.mxu0 0.0
    %9616 = vmatprep.subr.mxu0 0.0
    %9617 = vmatpush1.msra.mxu0 0.0
    %9618 = vmatprep.subr.mxu0 0.0
    %9619 = vmatpush1.msra.mxu0 0.0
    %9620 = vmatprep.subr.mxu0 0.0
    %9621 = vmatpush1.msra.mxu0 0.0
    %9622 = vmatprep.subr.mxu0 0.0
    %9623 = vmatpush1.msra.mxu0 0.0
    %9624 = vmatprep.subr.mxu0 0.0
    %9625 = vmatpush1.msra.mxu0 0.0
    %9626 = vmatprep.subr.mxu0 0.0
    %9627 = vmatpush1.msra.mxu0 0.0
    %9628 = vmatprep.subr.mxu0 0.0
    %9629 = vmatpush1.msra.mxu0 0.0
    %9630 = vmatprep.subr.mxu0 0.0
    %9631 = vmatpush1.msra.mxu0 0.0
    %9632 = vmatprep.subr.mxu0 0.0
    %9633 = vmatpush1.msra.mxu0 0.0
    %9634 = vmatprep.subr.mxu0 0.0
    %9635 = vmatpush1.msra.mxu0 0.0
    %9636 = vmatprep.subr.mxu0 0.0
    %9637 = vmatpush1.msra.mxu0 0.0
    %9638 = vmatprep.subr.mxu0 0.0
    %9639 = vmatpush1.msra.mxu0 0.0
    %9640 = vmatprep.subr.mxu0 0.0
    %9641 = vmatpush1.msra.mxu0 0.0
    %9642 = vmatprep.subr.mxu0 0.0
    %9643 = vmatpush1.msra.mxu0 0.0
    %9644 = vmatprep.mubr.f32.mxu0 0.0
    %9645 = vmatmul.mubr.f32.gmra.mrb[0].mxu0 %v9556
    %v9646 = vpop.f32.mrb[0].mxu0
    %v9647 = vadd.f32 %v9578, %v9646
    %v9648 = vpop.f32.mrb[0].mxu0
    %9649 = vdwg.mxu0
    %vm9650 = vcmask 25600
    %9651 = vst.msk [vmem:[#allocation8] sm:$0x3] %vm9650, %v9647
    // Predicated region
    $region66: #{st_gat_forward.1} parent=1 // pred_check
      _
    $region67: #{st_gat_forward.1} parent=1 // pred_check_branch
      %9653 = sbr.rel (0) target = $region69
    $region68: #{st_gat_forward.1} parent=1 // pred_region
      %s9655 = ssub.s32 32, 32
      %9656 = vsyncadd [#allocation4], %s9655
      %s9658 = sshll.u32 [#allocation8], 4
      %s9659 = int_to_ptr.vmem [resolvable:$true] %s9658
      %9661 = dma.vmem_to_hbm [thread:$0]  %s9659, 32, %s13, [#allocation4]
    $region69: #{st_gat_forward.1} parent=1 // pred_fallthru
      _
    // Predicated region
    $region70: #{st_gat_forward.1} parent=1 // pred_check
      _
    $region71: #{st_gat_forward.1} parent=1 // pred_check_branch
      %9663 = sbr.rel (0) target = $region73
    $region72: #{st_gat_forward.1} parent=1 // pred_region
      %9664 = dma.done [#allocation4], 32
    $region73: #{st_gat_forward.1} parent=1 // pred_fallthru
      _
    %9665 = vsyncpa [#allocation3], 1
    %9666 = vsyncpa [#allocation6], 1
    %9667 = vsyncpa [#allocation4], 1

</llo_original>
